<compile_context>
chip_gen: v7x
topology: tpu7x:2x2x1
jax: 0.10.0
libtpu: 0.0.40
codegen_flags: <defaults>
</compile_context>

<pallas_src>
import numpy as np
import jax
import jax.numpy as jnp
from jax import lax
from jax.experimental import pallas as pl
from jax.experimental.pallas import tpu as pltpu

KSIZE = 4
LRELU_SLOPE = 0.2
EPS = 1e-5  # nn.InstanceNorm2d default eps


def _make_down_block_call(N, H, W, C, C_out, *, norm, pool, fuse_pred):
    """One DownBlock2d (conv4x4 + [instance-norm] + leaky-relu + [avg-pool 2x2]),
    optionally fused with the final 1x1 prediction conv, as a single pallas_call."""
    Ho, Wo = H - KSIZE + 1, W - KSIZE + 1
    M_rows = Ho * W - (KSIZE - 1)         # width-padded rows covering all valid outputs
    Hp, Wp = Ho // 2, Wo // 2
    Mout = Hp * Wp if pool else Ho * Wo
    KK = KSIZE * KSIZE
    assert not (pool and fuse_pred)       # last block never pools in this module

    def kernel(*refs):
        it = iter(refs)
        x_ref = next(it)                  # (1, H*W, C)      bf16
        w_ref = next(it)                  # (KK, C, C_out)   bf16
        b_ref = next(it)                  # (1, C_out)       f32
        if norm:
            g_ref = next(it)              # (1, C_out)
            bt_ref = next(it)             # (1, C_out)
            m_ref = next(it)              # (M_rows, 1) valid-column mask
        if fuse_pred:
            w1_ref = next(it)             # (1, C_out) 1x1 conv weight
            b1_ref = next(it)             # (1, 1)
        o_ref = next(it)                  # (1, Mout, C_out) bf16
        if fuse_pred:
            p_ref = next(it)              # (1, Ho*Wo, 1)    f32
        if pool:
            scr = next(it)                # VMEM (M_rows, C_out) f32

        # ---- 4x4 VALID conv as 16 shifted-slice matmuls (bf16 x bf16 -> f32 acc) ----
        acc = jnp.zeros((M_rows, C_out), jnp.float32)
        for ky in range(KSIZE):
            for kx in range(KSIZE):
                off = ky * W + kx
                xs = x_ref[0, pl.ds(off, M_rows), :]            # (M_rows, C) bf16
                acc = acc + jnp.dot(xs, w_ref[ky * KSIZE + kx],
                                    preferred_element_type=jnp.float32)
        y = acc + b_ref[...]

        # ---- InstanceNorm2d (single masked pass, stats in f32) ----
        if norm:
            mask = m_ref[...]                                    # (M_rows, 1)
            inv_cnt = 1.0 / float(Ho * Wo)
            ym = y * mask
            mean = jnp.sum(ym, axis=0, keepdims=True) * inv_cnt  # (1, C_out)
            ex2 = jnp.sum(ym * y, axis=0, keepdims=True) * inv_cnt
            var = ex2 - mean * mean
            y = (y - mean) * lax.rsqrt(var + EPS)
            y = y * g_ref[...] + bt_ref[...]

        # ---- LeakyReLU(0.2) ----
        y = jnp.where(y >= 0, y, LRELU_SLOPE * y)

        if pool:
            # avg_pool2d((2,2)): 2x2 window sums via stride-2 sublane loads (VPU only).
            scr[...] = y
            for hp in range(Hp):
                r0 = 2 * hp * W
                r1 = r0 + W
                win = (scr[pl.ds(r0, Wp, stride=2), :]
                       + scr[pl.ds(r0 + 1, Wp, stride=2), :]
                       + scr[pl.ds(r1, Wp, stride=2), :]
                       + scr[pl.ds(r1 + 1, Wp, stride=2), :])
                o_ref[0, pl.ds(hp * Wp, Wp), :] = (0.25 * win).astype(o_ref.dtype)
        else:
            # compact the valid columns (wo < Wo) out of the width-padded layout
            for ho in range(Ho):
                o_ref[0, pl.ds(ho * Wo, Wo), :] = \
                    y[ho * W:ho * W + Wo, :].astype(o_ref.dtype)
            if fuse_pred:
                # fused final 1x1 conv (C_out -> 1) as an elementwise mul + lane reduce
                pred = jnp.sum(y * w1_ref[...], axis=1, keepdims=True) + b1_ref[...]
                for ho in range(Ho):
                    p_ref[0, pl.ds(ho * Wo, Wo), :] = pred[ho * W:ho * W + Wo, :]

    in_specs = [
        pl.BlockSpec((1, H * W, C), lambda n: (n, 0, 0)),
        pl.BlockSpec((KK, C, C_out), lambda n: (0, 0, 0)),
        pl.BlockSpec((1, C_out), lambda n: (0, 0)),
    ]
    if norm:
        in_specs += [pl.BlockSpec((1, C_out), lambda n: (0, 0)),
                     pl.BlockSpec((1, C_out), lambda n: (0, 0)),
                     pl.BlockSpec((M_rows, 1), lambda n: (0, 0))]
    if fuse_pred:
        in_specs += [pl.BlockSpec((1, C_out), lambda n: (0, 0)),
                     pl.BlockSpec((1, 1), lambda n: (0, 0))]

    if fuse_pred:
        out_shape = (jax.ShapeDtypeStruct((N, Mout, C_out), jnp.bfloat16),
                     jax.ShapeDtypeStruct((N, Ho * Wo, 1), jnp.float32))
        out_specs = [pl.BlockSpec((1, Mout, C_out), lambda n: (n, 0, 0)),
                     pl.BlockSpec((1, Ho * Wo, 1), lambda n: (n, 0, 0))]
    else:
        out_shape = jax.ShapeDtypeStruct((N, Mout, C_out), jnp.bfloat16)
        out_specs = pl.BlockSpec((1, Mout, C_out), lambda n: (n, 0, 0))

    scratch = [pltpu.VMEM((M_rows, C_out), jnp.float32)] if pool else []

    return pl.pallas_call(
        kernel,
        out_shape=out_shape,
        grid_spec=pltpu.PrefetchScalarGridSpec(
            num_scalar_prefetch=0,
            grid=(N,),
            in_specs=in_specs,
            out_specs=out_specs,
            scratch_shapes=scratch),
        compiler_params=pltpu.CompilerParams(dimension_semantics=("parallel",)),
    )


def init_discriminator_params(key, num_channels, block_expansion, num_blocks, max_features):
    """Deterministic synthetic parameters, mirroring Discriminator.__init__ shapes."""
    blocks = []
    for i in range(num_blocks):
        in_f = num_channels if i == 0 else min(max_features, block_expansion * 2 ** i)
        out_f = min(max_features, block_expansion * 2 ** (i + 1))
        key, kw, kb, kg, kbt = jax.random.split(key, 5)
        blk = dict(
            w=0.2 * jax.random.normal(kw, (out_f, in_f, KSIZE, KSIZE), jnp.float32),
            b=0.1 * jax.random.normal(kb, (out_f,), jnp.float32),
            norm=(i != 0),
            pool=(i != num_blocks - 1),
        )
        if blk["norm"]:
            blk["gamma"] = 1.0 + 0.05 * jax.random.normal(kg, (out_f,), jnp.float32)
            blk["beta"] = 0.05 * jax.random.normal(kbt, (out_f,), jnp.float32)
        blocks.append(blk)
    key, kw, kb = jax.random.split(key, 3)
    last_out = min(max_features, block_expansion * 2 ** num_blocks)
    conv_w = 0.2 * jax.random.normal(kw, (1, last_out, 1, 1), jnp.float32)
    conv_b = 0.1 * jax.random.normal(kb, (1,), jnp.float32)
    return dict(blocks=blocks, conv_w=conv_w, conv_b=conv_b)


def discriminator_forward(params, x_nchw):
    """Discriminator.forward (use_kp=False, sn=False)."""
    # TODO(synk): use_kp path (bilinear F.interpolate + channel concat) not implemented.
    # TODO(synk): spectral_norm (sn=True) reparametrization not implemented; weights used as-is.
    N, C, H, W = x_nchw.shape
    x = jnp.transpose(x_nchw, (0, 2, 3, 1)).reshape(N, H * W, C).astype(jnp.bfloat16)

    feature_maps = []          # list of (flat_feat, H, W, C)
    pred_flat = None
    nb = len(params["blocks"])
    for bi, blk in enumerate(params["blocks"]):
        C_out = blk["w"].shape[0]
        Ho, Wo = H - KSIZE + 1, W - KSIZE + 1
        M_rows = Ho * W - (KSIZE - 1)
        fuse_pred = (bi == nb - 1)

        w_r = jnp.transpose(blk["w"], (2, 3, 1, 0)).reshape(KSIZE * KSIZE, C, C_out)
        args = [x, w_r.astype(jnp.bfloat16),
                blk["b"].reshape(1, C_out).astype(jnp.float32)]
        if blk["norm"]:
            mask = ((np.arange(M_rows) % W) < Wo).astype(np.float32).reshape(M_rows, 1)
            args += [blk["gamma"].reshape(1, C_out).astype(jnp.float32),
                     blk["beta"].reshape(1, C_out).astype(jnp.float32),
                     jnp.asarray(mask)]
        if fuse_pred:
            args += [params["conv_w"].reshape(1, C_out).astype(jnp.float32),
                     params["conv_b"].reshape(1, 1).astype(jnp.float32)]

        call = _make_down_block_call(N, H, W, C, C_out,
                                     norm=blk["norm"], pool=blk["pool"],
                                     fuse_pred=fuse_pred)
        out = call(*args)
        if fuse_pred:
            feat, pred_flat = out
        else:
            feat = out

        if blk["pool"]:
            H, W = Ho // 2, Wo // 2
        else:
            H, W = Ho, Wo
        C = C_out
        x = feat                                   # (N, H*W, C) bf16 -> next block input
        feature_maps.append((feat, H, W, C))

    # Convert to NCHW float32 once, for interface parity with the PyTorch module.
    fms = [jnp.transpose(f.reshape(N, h, w, c).astype(jnp.float32), (0, 3, 1, 2))
           for (f, h, w, c) in feature_maps]
    Hl, Wl = feature_maps[-1][1], feature_maps[-1][2]
    prediction_map = jnp.transpose(pred_flat.reshape(N, Hl, Wl, 1), (0, 3, 1, 2))
    return fms, prediction_map


def multi_scale_discriminator_forward(ms_params, x_nchw):
    """MultiScaleDiscriminator.forward: same input fed to every per-scale Discriminator."""
    features, scores = [], []
    for scale in ms_params["scales"]:
        disc_params = ms_params["discs"][str(scale).replace('.', '-')]
        fm, pm = discriminator_forward(disc_params, x_nchw)
        features.append(fm)
        scores.append(pm)
    return features, scores


# ---------------- pure-JAX reference (for correctness check only) ----------------
def _ref_discriminator(params, x_nchw):
    x = jnp.transpose(x_nchw, (0, 2, 3, 1))
    fms = []
    for blk in params["blocks"]:
        w_hwio = jnp.transpose(blk["w"], (2, 3, 1, 0))
        y = lax.conv_general_dilated(x, w_hwio, (1, 1), "VALID",
                                     dimension_numbers=("NHWC", "HWIO", "NHWC"),
                                     precision=lax.Precision.HIGHEST)
        y = y + blk["b"]
        if blk["norm"]:
            mu = y.mean(axis=(1, 2), keepdims=True)
            var = ((y - mu) ** 2).mean(axis=(1, 2), keepdims=True)
            y = (y - mu) * lax.rsqrt(var + EPS)
            y = y * blk["gamma"] + blk["beta"]
        y = jnp.where(y >= 0, y, LRELU_SLOPE * y)
        if blk["pool"]:
            N, H, W, C = y.shape
            y = y[:, :2 * (H // 2), :2 * (W // 2), :]
            y = y.reshape(N, H // 2, 2, W // 2, 2, C).mean(axis=(2, 4))
        fms.append(jnp.transpose(y, (0, 3, 1, 2)))
        x = y
    w_hwio = jnp.transpose(params["conv_w"], (2, 3, 1, 0))
    p = lax.conv_general_dilated(x, w_hwio, (1, 1), "VALID",
                                 dimension_numbers=("NHWC", "HWIO", "NHWC"),
                                 precision=lax.Precision.HIGHEST) + params["conv_b"]
    return fms, jnp.transpose(p, (0, 3, 1, 2))


if __name__ == "__main__":
    # Small synthetic config:
    # MultiScaleDiscriminator(scales=[1], num_channels=4, block_expansion=8,
    #                         num_blocks=2, max_features=32, sn=False, use_kp=False)
    scales = [1]
    num_channels, block_expansion, num_blocks, max_features = 4, 8, 2, 32

    key = jax.random.PRNGKey(0)
    key, kx = jax.random.split(key)
    x = jax.random.normal(kx, (2, num_channels, 16, 16), jnp.float32)  # NCHW like PyTorch

    discs = {}
    for scale in scales:
        key, kd = jax.random.split(key)
        discs[str(scale).replace('.', '-')] = init_discriminator_params(
            kd, num_channels, block_expansion, num_blocks, max_features)
    ms_params = dict(scales=scales, discs=discs)

    fwd = jax.jit(lambda inp: multi_scale_discriminator_forward(ms_params, inp))
    features, scores = fwd(x)
    features = jax.block_until_ready(features)
    scores = jax.block_until_ready(scores)

    # sanity check against a pure-JAX f32 reference (tolerance covers bf16 kernel compute)
    for scale, fm_list, score in zip(scales, features, scores):
        ref_fm, ref_p = _ref_discriminator(discs[str(scale).replace('.', '-')], x)
        for a, b in zip(fm_list, ref_fm):
            np.testing.assert_allclose(np.asarray(a, np.float32), np.asarray(b, np.float32),
                                       rtol=5e-2, atol=5e-2)
        np.testing.assert_allclose(np.asarray(score, np.float32), np.asarray(ref_p, np.float32),
                                   rtol=5e-2, atol=5e-2)

    print("KERNEL_OK")
</pallas_src>

<mosaic_0001>
module attributes {stable_mosaic.version = 11 : i64} {
  func.func @kernel(%arg0: i32, %arg1: memref<1x36x16xbf16, #tpu.memory_space<vmem>>, %arg2: memref<16x16x32xbf16, #tpu.memory_space<vmem>>, %arg3: memref<1x32xf32, #tpu.memory_space<vmem>>, %arg4: memref<1x32xf32, #tpu.memory_space<vmem>>, %arg5: memref<1x32xf32, #tpu.memory_space<vmem>>, %arg6: memref<15x1xf32, #tpu.memory_space<vmem>>, %arg7: memref<1x32xf32, #tpu.memory_space<vmem>>, %arg8: memref<1x1xf32, #tpu.memory_space<vmem>>, %arg9: memref<1x9x32xbf16, #tpu.memory_space<vmem>>, %arg10: memref<1x9x1xf32, #tpu.memory_space<vmem>>) attributes {dimension_semantics = [#tpu.dimension_semantics<parallel>], iteration_bounds = array<i64: 2>, scalar_prefetch = 0 : i64, scratch_operands = 0 : i64, tpu.core_type = #tpu.core_type<tc>, window_params = [{transform_indices = @transform_0, window_bounds = array<i64: 1, 36, 16>}, {pipeline_mode = #tpu.pipeline_mode<synchronous>, transform_indices = @transform_1, window_bounds = array<i64: 16, 16, 32>}, {pipeline_mode = #tpu.pipeline_mode<synchronous>, transform_indices = @transform_2, window_bounds = array<i64: 1, 32>}, {pipeline_mode = #tpu.pipeline_mode<synchronous>, transform_indices = @transform_3, window_bounds = array<i64: 1, 32>}, {pipeline_mode = #tpu.pipeline_mode<synchronous>, transform_indices = @transform_4, window_bounds = array<i64: 1, 32>}, {pipeline_mode = #tpu.pipeline_mode<synchronous>, transform_indices = @transform_5, window_bounds = array<i64: 15, 1>}, {pipeline_mode = #tpu.pipeline_mode<synchronous>, transform_indices = @transform_6, window_bounds = array<i64: 1, 32>}, {pipeline_mode = #tpu.pipeline_mode<synchronous>, transform_indices = @transform_7, window_bounds = array<i64: 1, 1>}, {transform_indices = @transform_8, window_bounds = array<i64: 1, 9, 32>}, {transform_indices = @transform_9, window_bounds = array<i64: 1, 9, 1>}]} {
    %cst = arith.constant 0.000000e+00 : f32
    %0 = vector.broadcast %cst : f32 to vector<15x32xf32>
    %c0 = arith.constant 0 : index
    %c0_0 = arith.constant 0 : index
    %c0_1 = arith.constant 0 : index
    %1 = vector.load %arg1[%c0, %c0_0, %c0_1] : memref<1x36x16xbf16, #tpu.memory_space<vmem>>, vector<1x15x16xbf16>
    %2 = vector.shape_cast %1 : vector<1x15x16xbf16> to vector<15x16xbf16>
    %c0_2 = arith.constant 0 : index
    %c0_3 = arith.constant 0 : index
    %c0_4 = arith.constant 0 : index
    %3 = vector.load %arg2[%c0_2, %c0_3, %c0_4] : memref<16x16x32xbf16, #tpu.memory_space<vmem>>, vector<1x16x32xbf16>
    %4 = vector.shape_cast %3 : vector<1x16x32xbf16> to vector<16x32xbf16>
    %cst_5 = arith.constant dense<0.000000e+00> : vector<15x32xf32>
    %5 = tpu.matmul %2, %4, %cst_5 {dimension_numbers = #tpu.dot_dimension_numbers<[1], [0], [0], [1], [0, 0, 1, 1], [], []>} : vector<15x16xbf16>, vector<16x32xbf16>, vector<15x32xf32> -> vector<15x32xf32>
    %6 = arith.addf %0, %5 : vector<15x32xf32>
    %c0_6 = arith.constant 0 : index
    %c1 = arith.constant 1 : index
    %c0_7 = arith.constant 0 : index
    %7 = vector.load %arg1[%c0_6, %c1, %c0_7] : memref<1x36x16xbf16, #tpu.memory_space<vmem>>, vector<1x15x16xbf16>
    %8 = vector.shape_cast %7 : vector<1x15x16xbf16> to vector<15x16xbf16>
    %c1_8 = arith.constant 1 : index
    %c0_9 = arith.constant 0 : index
    %c0_10 = arith.constant 0 : index
    %9 = vector.load %arg2[%c1_8, %c0_9, %c0_10] : memref<16x16x32xbf16, #tpu.memory_space<vmem>>, vector<1x16x32xbf16>
    %10 = vector.shape_cast %9 : vector<1x16x32xbf16> to vector<16x32xbf16>
    %cst_11 = arith.constant dense<0.000000e+00> : vector<15x32xf32>
    %11 = tpu.matmul %8, %10, %cst_11 {dimension_numbers = #tpu.dot_dimension_numbers<[1], [0], [0], [1], [0, 0, 1, 1], [], []>} : vector<15x16xbf16>, vector<16x32xbf16>, vector<15x32xf32> -> vector<15x32xf32>
    %12 = arith.addf %6, %11 : vector<15x32xf32>
    %c0_12 = arith.constant 0 : index
    %c2 = arith.constant 2 : index
    %c0_13 = arith.constant 0 : index
    %13 = vector.load %arg1[%c0_12, %c2, %c0_13] : memref<1x36x16xbf16, #tpu.memory_space<vmem>>, vector<1x15x16xbf16>
    %14 = vector.shape_cast %13 : vector<1x15x16xbf16> to vector<15x16xbf16>
    %c2_14 = arith.constant 2 : index
    %c0_15 = arith.constant 0 : index
    %c0_16 = arith.constant 0 : index
    %15 = vector.load %arg2[%c2_14, %c0_15, %c0_16] : memref<16x16x32xbf16, #tpu.memory_space<vmem>>, vector<1x16x32xbf16>
    %16 = vector.shape_cast %15 : vector<1x16x32xbf16> to vector<16x32xbf16>
    %cst_17 = arith.constant dense<0.000000e+00> : vector<15x32xf32>
    %17 = tpu.matmul %14, %16, %cst_17 {dimension_numbers = #tpu.dot_dimension_numbers<[1], [0], [0], [1], [0, 0, 1, 1], [], []>} : vector<15x16xbf16>, vector<16x32xbf16>, vector<15x32xf32> -> vector<15x32xf32>
    %18 = arith.addf %12, %17 : vector<15x32xf32>
    %c0_18 = arith.constant 0 : index
    %c3 = arith.constant 3 : index
    %c0_19 = arith.constant 0 : index
    %19 = vector.load %arg1[%c0_18, %c3, %c0_19] : memref<1x36x16xbf16, #tpu.memory_space<vmem>>, vector<1x15x16xbf16>
    %20 = vector.shape_cast %19 : vector<1x15x16xbf16> to vector<15x16xbf16>
    %c3_20 = arith.constant 3 : index
    %c0_21 = arith.constant 0 : index
    %c0_22 = arith.constant 0 : index
    %21 = vector.load %arg2[%c3_20, %c0_21, %c0_22] : memref<16x16x32xbf16, #tpu.memory_space<vmem>>, vector<1x16x32xbf16>
    %22 = vector.shape_cast %21 : vector<1x16x32xbf16> to vector<16x32xbf16>
    %cst_23 = arith.constant dense<0.000000e+00> : vector<15x32xf32>
    %23 = tpu.matmul %20, %22, %cst_23 {dimension_numbers = #tpu.dot_dimension_numbers<[1], [0], [0], [1], [0, 0, 1, 1], [], []>} : vector<15x16xbf16>, vector<16x32xbf16>, vector<15x32xf32> -> vector<15x32xf32>
    %24 = arith.addf %18, %23 : vector<15x32xf32>
    %c0_24 = arith.constant 0 : index
    %c6 = arith.constant 6 : index
    %c0_25 = arith.constant 0 : index
    %25 = vector.load %arg1[%c0_24, %c6, %c0_25] : memref<1x36x16xbf16, #tpu.memory_space<vmem>>, vector<1x15x16xbf16>
    %26 = vector.shape_cast %25 : vector<1x15x16xbf16> to vector<15x16xbf16>
    %c4 = arith.constant 4 : index
    %c0_26 = arith.constant 0 : index
    %c0_27 = arith.constant 0 : index
    %27 = vector.load %arg2[%c4, %c0_26, %c0_27] : memref<16x16x32xbf16, #tpu.memory_space<vmem>>, vector<1x16x32xbf16>
    %28 = vector.shape_cast %27 : vector<1x16x32xbf16> to vector<16x32xbf16>
    %cst_28 = arith.constant dense<0.000000e+00> : vector<15x32xf32>
    %29 = tpu.matmul %26, %28, %cst_28 {dimension_numbers = #tpu.dot_dimension_numbers<[1], [0], [0], [1], [0, 0, 1, 1], [], []>} : vector<15x16xbf16>, vector<16x32xbf16>, vector<15x32xf32> -> vector<15x32xf32>
    %30 = arith.addf %24, %29 : vector<15x32xf32>
    %c0_29 = arith.constant 0 : index
    %c7 = arith.constant 7 : index
    %c0_30 = arith.constant 0 : index
    %31 = vector.load %arg1[%c0_29, %c7, %c0_30] : memref<1x36x16xbf16, #tpu.memory_space<vmem>>, vector<1x15x16xbf16>
    %32 = vector.shape_cast %31 : vector<1x15x16xbf16> to vector<15x16xbf16>
    %c5 = arith.constant 5 : index
    %c0_31 = arith.constant 0 : index
    %c0_32 = arith.constant 0 : index
    %33 = vector.load %arg2[%c5, %c0_31, %c0_32] : memref<16x16x32xbf16, #tpu.memory_space<vmem>>, vector<1x16x32xbf16>
    %34 = vector.shape_cast %33 : vector<1x16x32xbf16> to vector<16x32xbf16>
    %cst_33 = arith.constant dense<0.000000e+00> : vector<15x32xf32>
    %35 = tpu.matmul %32, %34, %cst_33 {dimension_numbers = #tpu.dot_dimension_numbers<[1], [0], [0], [1], [0, 0, 1, 1], [], []>} : vector<15x16xbf16>, vector<16x32xbf16>, vector<15x32xf32> -> vector<15x32xf32>
    %36 = arith.addf %30, %35 : vector<15x32xf32>
    %c0_34 = arith.constant 0 : index
    %c8 = arith.constant 8 : index
    %c0_35 = arith.constant 0 : index
    %37 = vector.load %arg1[%c0_34, %c8, %c0_35] : memref<1x36x16xbf16, #tpu.memory_space<vmem>>, vector<1x15x16xbf16>
    %38 = vector.shape_cast %37 : vector<1x15x16xbf16> to vector<15x16xbf16>
    %c6_36 = arith.constant 6 : index
    %c0_37 = arith.constant 0 : index
    %c0_38 = arith.constant 0 : index
    %39 = vector.load %arg2[%c6_36, %c0_37, %c0_38] : memref<16x16x32xbf16, #tpu.memory_space<vmem>>, vector<1x16x32xbf16>
    %40 = vector.shape_cast %39 : vector<1x16x32xbf16> to vector<16x32xbf16>
    %cst_39 = arith.constant dense<0.000000e+00> : vector<15x32xf32>
    %41 = tpu.matmul %38, %40, %cst_39 {dimension_numbers = #tpu.dot_dimension_numbers<[1], [0], [0], [1], [0, 0, 1, 1], [], []>} : vector<15x16xbf16>, vector<16x32xbf16>, vector<15x32xf32> -> vector<15x32xf32>
    %42 = arith.addf %36, %41 : vector<15x32xf32>
    %c0_40 = arith.constant 0 : index
    %c9 = arith.constant 9 : index
    %c0_41 = arith.constant 0 : index
    %43 = vector.load %arg1[%c0_40, %c9, %c0_41] : memref<1x36x16xbf16, #tpu.memory_space<vmem>>, vector<1x15x16xbf16>
    %44 = vector.shape_cast %43 : vector<1x15x16xbf16> to vector<15x16xbf16>
    %c7_42 = arith.constant 7 : index
    %c0_43 = arith.constant 0 : index
    %c0_44 = arith.constant 0 : index
    %45 = vector.load %arg2[%c7_42, %c0_43, %c0_44] : memref<16x16x32xbf16, #tpu.memory_space<vmem>>, vector<1x16x32xbf16>
    %46 = vector.shape_cast %45 : vector<1x16x32xbf16> to vector<16x32xbf16>
    %cst_45 = arith.constant dense<0.000000e+00> : vector<15x32xf32>
    %47 = tpu.matmul %44, %46, %cst_45 {dimension_numbers = #tpu.dot_dimension_numbers<[1], [0], [0], [1], [0, 0, 1, 1], [], []>} : vector<15x16xbf16>, vector<16x32xbf16>, vector<15x32xf32> -> vector<15x32xf32>
    %48 = arith.addf %42, %47 : vector<15x32xf32>
    %c0_46 = arith.constant 0 : index
    %c12 = arith.constant 12 : index
    %c0_47 = arith.constant 0 : index
    %49 = vector.load %arg1[%c0_46, %c12, %c0_47] : memref<1x36x16xbf16, #tpu.memory_space<vmem>>, vector<1x15x16xbf16>
    %50 = vector.shape_cast %49 : vector<1x15x16xbf16> to vector<15x16xbf16>
    %c8_48 = arith.constant 8 : index
    %c0_49 = arith.constant 0 : index
    %c0_50 = arith.constant 0 : index
    %51 = vector.load %arg2[%c8_48, %c0_49, %c0_50] : memref<16x16x32xbf16, #tpu.memory_space<vmem>>, vector<1x16x32xbf16>
    %52 = vector.shape_cast %51 : vector<1x16x32xbf16> to vector<16x32xbf16>
    %cst_51 = arith.constant dense<0.000000e+00> : vector<15x32xf32>
    %53 = tpu.matmul %50, %52, %cst_51 {dimension_numbers = #tpu.dot_dimension_numbers<[1], [0], [0], [1], [0, 0, 1, 1], [], []>} : vector<15x16xbf16>, vector<16x32xbf16>, vector<15x32xf32> -> vector<15x32xf32>
    %54 = arith.addf %48, %53 : vector<15x32xf32>
    %c0_52 = arith.constant 0 : index
    %c13 = arith.constant 13 : index
    %c0_53 = arith.constant 0 : index
    %55 = vector.load %arg1[%c0_52, %c13, %c0_53] : memref<1x36x16xbf16, #tpu.memory_space<vmem>>, vector<1x15x16xbf16>
    %56 = vector.shape_cast %55 : vector<1x15x16xbf16> to vector<15x16xbf16>
    %c9_54 = arith.constant 9 : index
    %c0_55 = arith.constant 0 : index
    %c0_56 = arith.constant 0 : index
    %57 = vector.load %arg2[%c9_54, %c0_55, %c0_56] : memref<16x16x32xbf16, #tpu.memory_space<vmem>>, vector<1x16x32xbf16>
    %58 = vector.shape_cast %57 : vector<1x16x32xbf16> to vector<16x32xbf16>
    %cst_57 = arith.constant dense<0.000000e+00> : vector<15x32xf32>
    %59 = tpu.matmul %56, %58, %cst_57 {dimension_numbers = #tpu.dot_dimension_numbers<[1], [0], [0], [1], [0, 0, 1, 1], [], []>} : vector<15x16xbf16>, vector<16x32xbf16>, vector<15x32xf32> -> vector<15x32xf32>
    %60 = arith.addf %54, %59 : vector<15x32xf32>
    %c0_58 = arith.constant 0 : index
    %c14 = arith.constant 14 : index
    %c0_59 = arith.constant 0 : index
    %61 = vector.load %arg1[%c0_58, %c14, %c0_59] : memref<1x36x16xbf16, #tpu.memory_space<vmem>>, vector<1x15x16xbf16>
    %62 = vector.shape_cast %61 : vector<1x15x16xbf16> to vector<15x16xbf16>
    %c10 = arith.constant 10 : index
    %c0_60 = arith.constant 0 : index
    %c0_61 = arith.constant 0 : index
    %63 = vector.load %arg2[%c10, %c0_60, %c0_61] : memref<16x16x32xbf16, #tpu.memory_space<vmem>>, vector<1x16x32xbf16>
    %64 = vector.shape_cast %63 : vector<1x16x32xbf16> to vector<16x32xbf16>
    %cst_62 = arith.constant dense<0.000000e+00> : vector<15x32xf32>
    %65 = tpu.matmul %62, %64, %cst_62 {dimension_numbers = #tpu.dot_dimension_numbers<[1], [0], [0], [1], [0, 0, 1, 1], [], []>} : vector<15x16xbf16>, vector<16x32xbf16>, vector<15x32xf32> -> vector<15x32xf32>
    %66 = arith.addf %60, %65 : vector<15x32xf32>
    %c0_63 = arith.constant 0 : index
    %c15 = arith.constant 15 : index
    %c0_64 = arith.constant 0 : index
    %67 = vector.load %arg1[%c0_63, %c15, %c0_64] : memref<1x36x16xbf16, #tpu.memory_space<vmem>>, vector<1x15x16xbf16>
    %68 = vector.shape_cast %67 : vector<1x15x16xbf16> to vector<15x16xbf16>
    %c11 = arith.constant 11 : index
    %c0_65 = arith.constant 0 : index
    %c0_66 = arith.constant 0 : index
    %69 = vector.load %arg2[%c11, %c0_65, %c0_66] : memref<16x16x32xbf16, #tpu.memory_space<vmem>>, vector<1x16x32xbf16>
    %70 = vector.shape_cast %69 : vector<1x16x32xbf16> to vector<16x32xbf16>
    %cst_67 = arith.constant dense<0.000000e+00> : vector<15x32xf32>
    %71 = tpu.matmul %68, %70, %cst_67 {dimension_numbers = #tpu.dot_dimension_numbers<[1], [0], [0], [1], [0, 0, 1, 1], [], []>} : vector<15x16xbf16>, vector<16x32xbf16>, vector<15x32xf32> -> vector<15x32xf32>
    %72 = arith.addf %66, %71 : vector<15x32xf32>
    %c0_68 = arith.constant 0 : index
    %c18 = arith.constant 18 : index
    %c0_69 = arith.constant 0 : index
    %73 = vector.load %arg1[%c0_68, %c18, %c0_69] : memref<1x36x16xbf16, #tpu.memory_space<vmem>>, vector<1x15x16xbf16>
    %74 = vector.shape_cast %73 : vector<1x15x16xbf16> to vector<15x16xbf16>
    %c12_70 = arith.constant 12 : index
    %c0_71 = arith.constant 0 : index
    %c0_72 = arith.constant 0 : index
    %75 = vector.load %arg2[%c12_70, %c0_71, %c0_72] : memref<16x16x32xbf16, #tpu.memory_space<vmem>>, vector<1x16x32xbf16>
    %76 = vector.shape_cast %75 : vector<1x16x32xbf16> to vector<16x32xbf16>
    %cst_73 = arith.constant dense<0.000000e+00> : vector<15x32xf32>
    %77 = tpu.matmul %74, %76, %cst_73 {dimension_numbers = #tpu.dot_dimension_numbers<[1], [0], [0], [1], [0, 0, 1, 1], [], []>} : vector<15x16xbf16>, vector<16x32xbf16>, vector<15x32xf32> -> vector<15x32xf32>
    %78 = arith.addf %72, %77 : vector<15x32xf32>
    %c0_74 = arith.constant 0 : index
    %c19 = arith.constant 19 : index
    %c0_75 = arith.constant 0 : index
    %79 = vector.load %arg1[%c0_74, %c19, %c0_75] : memref<1x36x16xbf16, #tpu.memory_space<vmem>>, vector<1x15x16xbf16>
    %80 = vector.shape_cast %79 : vector<1x15x16xbf16> to vector<15x16xbf16>
    %c13_76 = arith.constant 13 : index
    %c0_77 = arith.constant 0 : index
    %c0_78 = arith.constant 0 : index
    %81 = vector.load %arg2[%c13_76, %c0_77, %c0_78] : memref<16x16x32xbf16, #tpu.memory_space<vmem>>, vector<1x16x32xbf16>
    %82 = vector.shape_cast %81 : vector<1x16x32xbf16> to vector<16x32xbf16>
    %cst_79 = arith.constant dense<0.000000e+00> : vector<15x32xf32>
    %83 = tpu.matmul %80, %82, %cst_79 {dimension_numbers = #tpu.dot_dimension_numbers<[1], [0], [0], [1], [0, 0, 1, 1], [], []>} : vector<15x16xbf16>, vector<16x32xbf16>, vector<15x32xf32> -> vector<15x32xf32>
    %84 = arith.addf %78, %83 : vector<15x32xf32>
    %c0_80 = arith.constant 0 : index
    %c20 = arith.constant 20 : index
    %c0_81 = arith.constant 0 : index
    %85 = vector.load %arg1[%c0_80, %c20, %c0_81] : memref<1x36x16xbf16, #tpu.memory_space<vmem>>, vector<1x15x16xbf16>
    %86 = vector.shape_cast %85 : vector<1x15x16xbf16> to vector<15x16xbf16>
    %c14_82 = arith.constant 14 : index
    %c0_83 = arith.constant 0 : index
    %c0_84 = arith.constant 0 : index
    %87 = vector.load %arg2[%c14_82, %c0_83, %c0_84] : memref<16x16x32xbf16, #tpu.memory_space<vmem>>, vector<1x16x32xbf16>
    %88 = vector.shape_cast %87 : vector<1x16x32xbf16> to vector<16x32xbf16>
    %cst_85 = arith.constant dense<0.000000e+00> : vector<15x32xf32>
    %89 = tpu.matmul %86, %88, %cst_85 {dimension_numbers = #tpu.dot_dimension_numbers<[1], [0], [0], [1], [0, 0, 1, 1], [], []>} : vector<15x16xbf16>, vector<16x32xbf16>, vector<15x32xf32> -> vector<15x32xf32>
    %90 = arith.addf %84, %89 : vector<15x32xf32>
    %c0_86 = arith.constant 0 : index
    %c21 = arith.constant 21 : index
    %c0_87 = arith.constant 0 : index
    %91 = vector.load %arg1[%c0_86, %c21, %c0_87] : memref<1x36x16xbf16, #tpu.memory_space<vmem>>, vector<1x15x16xbf16>
    %92 = vector.shape_cast %91 : vector<1x15x16xbf16> to vector<15x16xbf16>
    %c15_88 = arith.constant 15 : index
    %c0_89 = arith.constant 0 : index
    %c0_90 = arith.constant 0 : index
    %93 = vector.load %arg2[%c15_88, %c0_89, %c0_90] : memref<16x16x32xbf16, #tpu.memory_space<vmem>>, vector<1x16x32xbf16>
    %94 = vector.shape_cast %93 : vector<1x16x32xbf16> to vector<16x32xbf16>
    %cst_91 = arith.constant dense<0.000000e+00> : vector<15x32xf32>
    %95 = tpu.matmul %92, %94, %cst_91 {dimension_numbers = #tpu.dot_dimension_numbers<[1], [0], [0], [1], [0, 0, 1, 1], [], []>} : vector<15x16xbf16>, vector<16x32xbf16>, vector<15x32xf32> -> vector<15x32xf32>
    %96 = arith.addf %90, %95 : vector<15x32xf32>
    %c0_92 = arith.constant 0 : index
    %c0_93 = arith.constant 0 : index
    %97 = vector.load %arg3[%c0_92, %c0_93] : memref<1x32xf32, #tpu.memory_space<vmem>>, vector<1x32xf32>
    %98 = vector.broadcast %97 : vector<1x32xf32> to vector<15x32xf32>
    %99 = arith.addf %96, %98 : vector<15x32xf32>
    %c0_94 = arith.constant 0 : index
    %c0_95 = arith.constant 0 : index
    %100 = vector.load %arg6[%c0_94, %c0_95] : memref<15x1xf32, #tpu.memory_space<vmem>>, vector<15x1xf32>
    %101 = vector.broadcast %100 : vector<15x1xf32> to vector<15x32xf32>
    %102 = arith.mulf %99, %101 : vector<15x32xf32>
    %cst_96 = arith.constant dense<0.000000e+00> : vector<32xf32>
    %103 = vector.multi_reduction <add>, %102, %cst_96 [0] : vector<15x32xf32> to vector<32xf32>
    %104 = vector.shape_cast %103 : vector<32xf32> to vector<1x32xf32>
    %cst_97 = arith.constant 0.111111112 : f32
    %105 = vector.broadcast %cst_97 : f32 to vector<1x32xf32>
    %106 = arith.mulf %104, %105 : vector<1x32xf32>
    %107 = arith.mulf %102, %99 : vector<15x32xf32>
    %cst_98 = arith.constant dense<0.000000e+00> : vector<32xf32>
    %108 = vector.multi_reduction <add>, %107, %cst_98 [0] : vector<15x32xf32> to vector<32xf32>
    %109 = vector.shape_cast %108 : vector<32xf32> to vector<1x32xf32>
    %cst_99 = arith.constant 0.111111112 : f32
    %110 = vector.broadcast %cst_99 : f32 to vector<1x32xf32>
    %111 = arith.mulf %109, %110 : vector<1x32xf32>
    %112 = arith.mulf %106, %106 : vector<1x32xf32>
    %113 = arith.subf %111, %112 : vector<1x32xf32>
    %114 = vector.broadcast %106 : vector<1x32xf32> to vector<15x32xf32>
    %115 = arith.subf %99, %114 : vector<15x32xf32>
    %cst_100 = arith.constant 9.99999974E-6 : f32
    %116 = vector.broadcast %cst_100 : f32 to vector<1x32xf32>
    %117 = arith.addf %113, %116 : vector<1x32xf32>
    %118 = math.rsqrt %117 : vector<1x32xf32>
    %119 = vector.broadcast %118 : vector<1x32xf32> to vector<15x32xf32>
    %120 = arith.mulf %115, %119 : vector<15x32xf32>
    %c0_101 = arith.constant 0 : index
    %c0_102 = arith.constant 0 : index
    %121 = vector.load %arg4[%c0_101, %c0_102] : memref<1x32xf32, #tpu.memory_space<vmem>>, vector<1x32xf32>
    %122 = vector.broadcast %121 : vector<1x32xf32> to vector<15x32xf32>
    %123 = arith.mulf %120, %122 : vector<15x32xf32>
    %c0_103 = arith.constant 0 : index
    %c0_104 = arith.constant 0 : index
    %124 = vector.load %arg5[%c0_103, %c0_104] : memref<1x32xf32, #tpu.memory_space<vmem>>, vector<1x32xf32>
    %125 = vector.broadcast %124 : vector<1x32xf32> to vector<15x32xf32>
    %126 = arith.addf %123, %125 : vector<15x32xf32>
    %cst_105 = arith.constant 0.000000e+00 : f32
    %127 = vector.broadcast %cst_105 : f32 to vector<15x32xf32>
    %128 = arith.cmpf oge, %126, %127 : vector<15x32xf32>
    %cst_106 = arith.constant 2.000000e-01 : f32
    %129 = vector.broadcast %cst_106 : f32 to vector<15x32xf32>
    %130 = arith.mulf %129, %126 : vector<15x32xf32>
    %131 = arith.select %128, %126, %130 : vector<15x32xi1>, vector<15x32xf32>
    %132 = vector.extract_strided_slice %131 {offsets = [0, 0], sizes = [3, 32], strides = [1, 1]} : vector<15x32xf32> to vector<3x32xf32>
    %133 = arith.truncf %132 : vector<3x32xf32> to vector<3x32xbf16>
    %c0_107 = arith.constant 0 : index
    %c0_108 = arith.constant 0 : index
    %c0_109 = arith.constant 0 : index
    %134 = vector.load %arg9[%c0_107, %c0_108, %c0_109] : memref<1x9x32xbf16, #tpu.memory_space<vmem>>, vector<1x3x32xbf16>
    %135 = vector.shape_cast %134 : vector<1x3x32xbf16> to vector<3x32xbf16>
    %136 = vector.shape_cast %133 : vector<3x32xbf16> to vector<1x3x32xbf16>
    tpu.vector_store %arg9[%c0_107, %c0_108, %c0_109], %136 {strides = array<i32>} : memref<1x9x32xbf16, #tpu.memory_space<vmem>>, vector<1x3x32xbf16>,
    %137 = vector.extract_strided_slice %131 {offsets = [6, 0], sizes = [3, 32], strides = [1, 1]} : vector<15x32xf32> to vector<3x32xf32>
    %138 = arith.truncf %137 : vector<3x32xf32> to vector<3x32xbf16>
    %c0_110 = arith.constant 0 : index
    %c3_111 = arith.constant 3 : index
    %c0_112 = arith.constant 0 : index
    %139 = vector.load %arg9[%c0_110, %c3_111, %c0_112] : memref<1x9x32xbf16, #tpu.memory_space<vmem>>, vector<1x3x32xbf16>
    %140 = vector.shape_cast %139 : vector<1x3x32xbf16> to vector<3x32xbf16>
    %141 = vector.shape_cast %138 : vector<3x32xbf16> to vector<1x3x32xbf16>
    tpu.vector_store %arg9[%c0_110, %c3_111, %c0_112], %141 {strides = array<i32>} : memref<1x9x32xbf16, #tpu.memory_space<vmem>>, vector<1x3x32xbf16>,
    %142 = vector.extract_strided_slice %131 {offsets = [12, 0], sizes = [3, 32], strides = [1, 1]} : vector<15x32xf32> to vector<3x32xf32>
    %143 = arith.truncf %142 : vector<3x32xf32> to vector<3x32xbf16>
    %c0_113 = arith.constant 0 : index
    %c6_114 = arith.constant 6 : index
    %c0_115 = arith.constant 0 : index
    %144 = vector.load %arg9[%c0_113, %c6_114, %c0_115] : memref<1x9x32xbf16, #tpu.memory_space<vmem>>, vector<1x3x32xbf16>
    %145 = vector.shape_cast %144 : vector<1x3x32xbf16> to vector<3x32xbf16>
    %146 = vector.shape_cast %143 : vector<3x32xbf16> to vector<1x3x32xbf16>
    tpu.vector_store %arg9[%c0_113, %c6_114, %c0_115], %146 {strides = array<i32>} : memref<1x9x32xbf16, #tpu.memory_space<vmem>>, vector<1x3x32xbf16>,
    %c0_116 = arith.constant 0 : index
    %c0_117 = arith.constant 0 : index
    %147 = vector.load %arg7[%c0_116, %c0_117] : memref<1x32xf32, #tpu.memory_space<vmem>>, vector<1x32xf32>
    %148 = vector.broadcast %147 : vector<1x32xf32> to vector<15x32xf32>
    %149 = arith.mulf %131, %148 : vector<15x32xf32>
    %cst_118 = arith.constant dense<0.000000e+00> : vector<15xf32>
    %150 = vector.multi_reduction <add>, %149, %cst_118 [1] : vector<15x32xf32> to vector<15xf32>
    %151 = vector.shape_cast %150 : vector<15xf32> to vector<15x1xf32>
    %c0_119 = arith.constant 0 : index
    %c0_120 = arith.constant 0 : index
    %152 = vector.load %arg8[%c0_119, %c0_120] : memref<1x1xf32, #tpu.memory_space<vmem>>, vector<1x1xf32>
    %153 = vector.broadcast %152 : vector<1x1xf32> to vector<15x1xf32>
    %154 = arith.addf %151, %153 : vector<15x1xf32>
    %155 = vector.extract_strided_slice %154 {offsets = [0, 0], sizes = [3, 1], strides = [1, 1]} : vector<15x1xf32> to vector<3x1xf32>
    %c0_121 = arith.constant 0 : index
    %c0_122 = arith.constant 0 : index
    %c0_123 = arith.constant 0 : index
    %156 = vector.load %arg10[%c0_121, %c0_122, %c0_123] : memref<1x9x1xf32, #tpu.memory_space<vmem>>, vector<1x3x1xf32>
    %157 = vector.shape_cast %156 : vector<1x3x1xf32> to vector<3x1xf32>
    %158 = vector.shape_cast %155 : vector<3x1xf32> to vector<1x3x1xf32>
    tpu.vector_store %arg10[%c0_121, %c0_122, %c0_123], %158 {strides = array<i32>} : memref<1x9x1xf32, #tpu.memory_space<vmem>>, vector<1x3x1xf32>,
    %159 = vector.extract_strided_slice %154 {offsets = [6, 0], sizes = [3, 1], strides = [1, 1]} : vector<15x1xf32> to vector<3x1xf32>
    %c0_124 = arith.constant 0 : index
    %c3_125 = arith.constant 3 : index
    %c0_126 = arith.constant 0 : index
    %160 = vector.load %arg10[%c0_124, %c3_125, %c0_126] : memref<1x9x1xf32, #tpu.memory_space<vmem>>, vector<1x3x1xf32>
    %161 = vector.shape_cast %160 : vector<1x3x1xf32> to vector<3x1xf32>
    %162 = vector.shape_cast %159 : vector<3x1xf32> to vector<1x3x1xf32>
    tpu.vector_store %arg10[%c0_124, %c3_125, %c0_126], %162 {strides = array<i32>} : memref<1x9x1xf32, #tpu.memory_space<vmem>>, vector<1x3x1xf32>,
    %163 = vector.extract_strided_slice %154 {offsets = [12, 0], sizes = [3, 1], strides = [1, 1]} : vector<15x1xf32> to vector<3x1xf32>
    %c0_127 = arith.constant 0 : index
    %c6_128 = arith.constant 6 : index
    %c0_129 = arith.constant 0 : index
    %164 = vector.load %arg10[%c0_127, %c6_128, %c0_129] : memref<1x9x1xf32, #tpu.memory_space<vmem>>, vector<1x3x1xf32>
    %165 = vector.shape_cast %164 : vector<1x3x1xf32> to vector<3x1xf32>
    %166 = vector.shape_cast %163 : vector<3x1xf32> to vector<1x3x1xf32>
    tpu.vector_store %arg10[%c0_127, %c6_128, %c0_129], %166 {strides = array<i32>} : memref<1x9x1xf32, #tpu.memory_space<vmem>>, vector<1x3x1xf32>,
    return
  }
  func.func @transform_0(%arg0: i32) -> (i32, i32, i32) {
    %c0_i32 = arith.constant 0 : i32
    %c0_i32_0 = arith.constant 0 : i32
    %c0_i32_1 = arith.constant 0 : i32
    return %arg0, %c0_i32, %c0_i32_0 : i32, i32, i32
  }
  func.func @transform_1(%arg0: i32) -> (i32, i32, i32) {
    %c0_i32 = arith.constant 0 : i32
    %c0_i32_0 = arith.constant 0 : i32
    %c0_i32_1 = arith.constant 0 : i32
    %c0_i32_2 = arith.constant 0 : i32
    return %c0_i32, %c0_i32_0, %c0_i32_1 : i32, i32, i32
  }
  func.func @transform_2(%arg0: i32) -> (i32, i32) {
    %c0_i32 = arith.constant 0 : i32
    %c0_i32_0 = arith.constant 0 : i32
    %c0_i32_1 = arith.constant 0 : i32
    return %c0_i32, %c0_i32_0 : i32, i32
  }
  func.func @transform_3(%arg0: i32) -> (i32, i32) {
    %c0_i32 = arith.constant 0 : i32
    %c0_i32_0 = arith.constant 0 : i32
    %c0_i32_1 = arith.constant 0 : i32
    return %c0_i32, %c0_i32_0 : i32, i32
  }
  func.func @transform_4(%arg0: i32) -> (i32, i32) {
    %c0_i32 = arith.constant 0 : i32
    %c0_i32_0 = arith.constant 0 : i32
    %c0_i32_1 = arith.constant 0 : i32
    return %c0_i32, %c0_i32_0 : i32, i32
  }
  func.func @transform_5(%arg0: i32) -> (i32, i32) {
    %c0_i32 = arith.constant 0 : i32
    %c0_i32_0 = arith.constant 0 : i32
    %c0_i32_1 = arith.constant 0 : i32
    return %c0_i32, %c0_i32_0 : i32, i32
  }
  func.func @transform_6(%arg0: i32) -> (i32, i32) {
    %c0_i32 = arith.constant 0 : i32
    %c0_i32_0 = arith.constant 0 : i32
    %c0_i32_1 = arith.constant 0 : i32
    return %c0_i32, %c0_i32_0 : i32, i32
  }
  func.func @transform_7(%arg0: i32) -> (i32, i32) {
    %c0_i32 = arith.constant 0 : i32
    %c0_i32_0 = arith.constant 0 : i32
    %c0_i32_1 = arith.constant 0 : i32
    return %c0_i32, %c0_i32_0 : i32, i32
  }
  func.func @transform_8(%arg0: i32) -> (i32, i32, i32) {
    %c0_i32 = arith.constant 0 : i32
    %c0_i32_0 = arith.constant 0 : i32
    %c0_i32_1 = arith.constant 0 : i32
    return %arg0, %c0_i32, %c0_i32_0 : i32, i32, i32
  }
  func.func @transform_9(%arg0: i32) -> (i32, i32, i32) {
    %c0_i32 = arith.constant 0 : i32
    %c0_i32_0 = arith.constant 0 : i32
    %c0_i32_1 = arith.constant 0 : i32
    return %arg0, %c0_i32, %c0_i32_0 : i32, i32, i32
  }
}

module attributes {stable_mosaic.version = 11 : i64} {
  func.func @kernel(%arg0: i32, %arg1: memref<1x256x4xbf16, #tpu.memory_space<vmem>>, %arg2: memref<16x4x16xbf16, #tpu.memory_space<vmem>>, %arg3: memref<1x16xf32, #tpu.memory_space<vmem>>, %arg4: memref<1x36x16xbf16, #tpu.memory_space<vmem>>, %arg5: memref<205x16xf32, #tpu.memory_space<vmem>>) attributes {dimension_semantics = [#tpu.dimension_semantics<parallel>], iteration_bounds = array<i64: 2>, scalar_prefetch = 0 : i64, scratch_operands = 1 : i64, tpu.core_type = #tpu.core_type<tc>, window_params = [{transform_indices = @transform_0, window_bounds = array<i64: 1, 256, 4>}, {pipeline_mode = #tpu.pipeline_mode<synchronous>, transform_indices = @transform_1, window_bounds = array<i64: 16, 4, 16>}, {pipeline_mode = #tpu.pipeline_mode<synchronous>, transform_indices = @transform_2, window_bounds = array<i64: 1, 16>}, {transform_indices = @transform_3, window_bounds = array<i64: 1, 36, 16>}]} {
    %cst = arith.constant 0.000000e+00 : f32
    %0 = vector.broadcast %cst : f32 to vector<205x16xf32>
    %c0 = arith.constant 0 : index
    %c0_0 = arith.constant 0 : index
    %c0_1 = arith.constant 0 : index
    %1 = vector.load %arg1[%c0, %c0_0, %c0_1] : memref<1x256x4xbf16, #tpu.memory_space<vmem>>, vector<1x205x4xbf16>
    %2 = vector.shape_cast %1 : vector<1x205x4xbf16> to vector<205x4xbf16>
    %c0_2 = arith.constant 0 : index
    %c0_3 = arith.constant 0 : index
    %c0_4 = arith.constant 0 : index
    %3 = vector.load %arg2[%c0_2, %c0_3, %c0_4] : memref<16x4x16xbf16, #tpu.memory_space<vmem>>, vector<1x4x16xbf16>
    %4 = vector.shape_cast %3 : vector<1x4x16xbf16> to vector<4x16xbf16>
    %cst_5 = arith.constant dense<0.000000e+00> : vector<205x16xf32>
    %5 = tpu.matmul %2, %4, %cst_5 {dimension_numbers = #tpu.dot_dimension_numbers<[1], [0], [0], [1], [0, 0, 1, 1], [], []>} : vector<205x4xbf16>, vector<4x16xbf16>, vector<205x16xf32> -> vector<205x16xf32>
    %6 = arith.addf %0, %5 : vector<205x16xf32>
    %c0_6 = arith.constant 0 : index
    %c1 = arith.constant 1 : index
    %c0_7 = arith.constant 0 : index
    %7 = vector.load %arg1[%c0_6, %c1, %c0_7] : memref<1x256x4xbf16, #tpu.memory_space<vmem>>, vector<1x205x4xbf16>
    %8 = vector.shape_cast %7 : vector<1x205x4xbf16> to vector<205x4xbf16>
    %c1_8 = arith.constant 1 : index
    %c0_9 = arith.constant 0 : index
    %c0_10 = arith.constant 0 : index
    %9 = vector.load %arg2[%c1_8, %c0_9, %c0_10] : memref<16x4x16xbf16, #tpu.memory_space<vmem>>, vector<1x4x16xbf16>
    %10 = vector.shape_cast %9 : vector<1x4x16xbf16> to vector<4x16xbf16>
    %cst_11 = arith.constant dense<0.000000e+00> : vector<205x16xf32>
    %11 = tpu.matmul %8, %10, %cst_11 {dimension_numbers = #tpu.dot_dimension_numbers<[1], [0], [0], [1], [0, 0, 1, 1], [], []>} : vector<205x4xbf16>, vector<4x16xbf16>, vector<205x16xf32> -> vector<205x16xf32>
    %12 = arith.addf %6, %11 : vector<205x16xf32>
    %c0_12 = arith.constant 0 : index
    %c2 = arith.constant 2 : index
    %c0_13 = arith.constant 0 : index
    %13 = vector.load %arg1[%c0_12, %c2, %c0_13] : memref<1x256x4xbf16, #tpu.memory_space<vmem>>, vector<1x205x4xbf16>
    %14 = vector.shape_cast %13 : vector<1x205x4xbf16> to vector<205x4xbf16>
    %c2_14 = arith.constant 2 : index
    %c0_15 = arith.constant 0 : index
    %c0_16 = arith.constant 0 : index
    %15 = vector.load %arg2[%c2_14, %c0_15, %c0_16] : memref<16x4x16xbf16, #tpu.memory_space<vmem>>, vector<1x4x16xbf16>
    %16 = vector.shape_cast %15 : vector<1x4x16xbf16> to vector<4x16xbf16>
    %cst_17 = arith.constant dense<0.000000e+00> : vector<205x16xf32>
    %17 = tpu.matmul %14, %16, %cst_17 {dimension_numbers = #tpu.dot_dimension_numbers<[1], [0], [0], [1], [0, 0, 1, 1], [], []>} : vector<205x4xbf16>, vector<4x16xbf16>, vector<205x16xf32> -> vector<205x16xf32>
    %18 = arith.addf %12, %17 : vector<205x16xf32>
    %c0_18 = arith.constant 0 : index
    %c3 = arith.constant 3 : index
    %c0_19 = arith.constant 0 : index
    %19 = vector.load %arg1[%c0_18, %c3, %c0_19] : memref<1x256x4xbf16, #tpu.memory_space<vmem>>, vector<1x205x4xbf16>
    %20 = vector.shape_cast %19 : vector<1x205x4xbf16> to vector<205x4xbf16>
    %c3_20 = arith.constant 3 : index
    %c0_21 = arith.constant 0 : index
    %c0_22 = arith.constant 0 : index
    %21 = vector.load %arg2[%c3_20, %c0_21, %c0_22] : memref<16x4x16xbf16, #tpu.memory_space<vmem>>, vector<1x4x16xbf16>
    %22 = vector.shape_cast %21 : vector<1x4x16xbf16> to vector<4x16xbf16>
    %cst_23 = arith.constant dense<0.000000e+00> : vector<205x16xf32>
    %23 = tpu.matmul %20, %22, %cst_23 {dimension_numbers = #tpu.dot_dimension_numbers<[1], [0], [0], [1], [0, 0, 1, 1], [], []>} : vector<205x4xbf16>, vector<4x16xbf16>, vector<205x16xf32> -> vector<205x16xf32>
    %24 = arith.addf %18, %23 : vector<205x16xf32>
    %c0_24 = arith.constant 0 : index
    %c16 = arith.constant 16 : index
    %c0_25 = arith.constant 0 : index
    %25 = vector.load %arg1[%c0_24, %c16, %c0_25] : memref<1x256x4xbf16, #tpu.memory_space<vmem>>, vector<1x205x4xbf16>
    %26 = vector.shape_cast %25 : vector<1x205x4xbf16> to vector<205x4xbf16>
    %c4 = arith.constant 4 : index
    %c0_26 = arith.constant 0 : index
    %c0_27 = arith.constant 0 : index
    %27 = vector.load %arg2[%c4, %c0_26, %c0_27] : memref<16x4x16xbf16, #tpu.memory_space<vmem>>, vector<1x4x16xbf16>
    %28 = vector.shape_cast %27 : vector<1x4x16xbf16> to vector<4x16xbf16>
    %cst_28 = arith.constant dense<0.000000e+00> : vector<205x16xf32>
    %29 = tpu.matmul %26, %28, %cst_28 {dimension_numbers = #tpu.dot_dimension_numbers<[1], [0], [0], [1], [0, 0, 1, 1], [], []>} : vector<205x4xbf16>, vector<4x16xbf16>, vector<205x16xf32> -> vector<205x16xf32>
    %30 = arith.addf %24, %29 : vector<205x16xf32>
    %c0_29 = arith.constant 0 : index
    %c17 = arith.constant 17 : index
    %c0_30 = arith.constant 0 : index
    %31 = vector.load %arg1[%c0_29, %c17, %c0_30] : memref<1x256x4xbf16, #tpu.memory_space<vmem>>, vector<1x205x4xbf16>
    %32 = vector.shape_cast %31 : vector<1x205x4xbf16> to vector<205x4xbf16>
    %c5 = arith.constant 5 : index
    %c0_31 = arith.constant 0 : index
    %c0_32 = arith.constant 0 : index
    %33 = vector.load %arg2[%c5, %c0_31, %c0_32] : memref<16x4x16xbf16, #tpu.memory_space<vmem>>, vector<1x4x16xbf16>
    %34 = vector.shape_cast %33 : vector<1x4x16xbf16> to vector<4x16xbf16>
    %cst_33 = arith.constant dense<0.000000e+00> : vector<205x16xf32>
    %35 = tpu.matmul %32, %34, %cst_33 {dimension_numbers = #tpu.dot_dimension_numbers<[1], [0], [0], [1], [0, 0, 1, 1], [], []>} : vector<205x4xbf16>, vector<4x16xbf16>, vector<205x16xf32> -> vector<205x16xf32>
    %36 = arith.addf %30, %35 : vector<205x16xf32>
    %c0_34 = arith.constant 0 : index
    %c18 = arith.constant 18 : index
    %c0_35 = arith.constant 0 : index
    %37 = vector.load %arg1[%c0_34, %c18, %c0_35] : memref<1x256x4xbf16, #tpu.memory_space<vmem>>, vector<1x205x4xbf16>
    %38 = vector.shape_cast %37 : vector<1x205x4xbf16> to vector<205x4xbf16>
    %c6 = arith.constant 6 : index
    %c0_36 = arith.constant 0 : index
    %c0_37 = arith.constant 0 : index
    %39 = vector.load %arg2[%c6, %c0_36, %c0_37] : memref<16x4x16xbf16, #tpu.memory_space<vmem>>, vector<1x4x16xbf16>
    %40 = vector.shape_cast %39 : vector<1x4x16xbf16> to vector<4x16xbf16>
    %cst_38 = arith.constant dense<0.000000e+00> : vector<205x16xf32>
    %41 = tpu.matmul %38, %40, %cst_38 {dimension_numbers = #tpu.dot_dimension_numbers<[1], [0], [0], [1], [0, 0, 1, 1], [], []>} : vector<205x4xbf16>, vector<4x16xbf16>, vector<205x16xf32> -> vector<205x16xf32>
    %42 = arith.addf %36, %41 : vector<205x16xf32>
    %c0_39 = arith.constant 0 : index
    %c19 = arith.constant 19 : index
    %c0_40 = arith.constant 0 : index
    %43 = vector.load %arg1[%c0_39, %c19, %c0_40] : memref<1x256x4xbf16, #tpu.memory_space<vmem>>, vector<1x205x4xbf16>
    %44 = vector.shape_cast %43 : vector<1x205x4xbf16> to vector<205x4xbf16>
    %c7 = arith.constant 7 : index
    %c0_41 = arith.constant 0 : index
    %c0_42 = arith.constant 0 : index
    %45 = vector.load %arg2[%c7, %c0_41, %c0_42] : memref<16x4x16xbf16, #tpu.memory_space<vmem>>, vector<1x4x16xbf16>
    %46 = vector.shape_cast %45 : vector<1x4x16xbf16> to vector<4x16xbf16>
    %cst_43 = arith.constant dense<0.000000e+00> : vector<205x16xf32>
    %47 = tpu.matmul %44, %46, %cst_43 {dimension_numbers = #tpu.dot_dimension_numbers<[1], [0], [0], [1], [0, 0, 1, 1], [], []>} : vector<205x4xbf16>, vector<4x16xbf16>, vector<205x16xf32> -> vector<205x16xf32>
    %48 = arith.addf %42, %47 : vector<205x16xf32>
    %c0_44 = arith.constant 0 : index
    %c32 = arith.constant 32 : index
    %c0_45 = arith.constant 0 : index
    %49 = vector.load %arg1[%c0_44, %c32, %c0_45] : memref<1x256x4xbf16, #tpu.memory_space<vmem>>, vector<1x205x4xbf16>
    %50 = vector.shape_cast %49 : vector<1x205x4xbf16> to vector<205x4xbf16>
    %c8 = arith.constant 8 : index
    %c0_46 = arith.constant 0 : index
    %c0_47 = arith.constant 0 : index
    %51 = vector.load %arg2[%c8, %c0_46, %c0_47] : memref<16x4x16xbf16, #tpu.memory_space<vmem>>, vector<1x4x16xbf16>
    %52 = vector.shape_cast %51 : vector<1x4x16xbf16> to vector<4x16xbf16>
    %cst_48 = arith.constant dense<0.000000e+00> : vector<205x16xf32>
    %53 = tpu.matmul %50, %52, %cst_48 {dimension_numbers = #tpu.dot_dimension_numbers<[1], [0], [0], [1], [0, 0, 1, 1], [], []>} : vector<205x4xbf16>, vector<4x16xbf16>, vector<205x16xf32> -> vector<205x16xf32>
    %54 = arith.addf %48, %53 : vector<205x16xf32>
    %c0_49 = arith.constant 0 : index
    %c33 = arith.constant 33 : index
    %c0_50 = arith.constant 0 : index
    %55 = vector.load %arg1[%c0_49, %c33, %c0_50] : memref<1x256x4xbf16, #tpu.memory_space<vmem>>, vector<1x205x4xbf16>
    %56 = vector.shape_cast %55 : vector<1x205x4xbf16> to vector<205x4xbf16>
    %c9 = arith.constant 9 : index
    %c0_51 = arith.constant 0 : index
    %c0_52 = arith.constant 0 : index
    %57 = vector.load %arg2[%c9, %c0_51, %c0_52] : memref<16x4x16xbf16, #tpu.memory_space<vmem>>, vector<1x4x16xbf16>
    %58 = vector.shape_cast %57 : vector<1x4x16xbf16> to vector<4x16xbf16>
    %cst_53 = arith.constant dense<0.000000e+00> : vector<205x16xf32>
    %59 = tpu.matmul %56, %58, %cst_53 {dimension_numbers = #tpu.dot_dimension_numbers<[1], [0], [0], [1], [0, 0, 1, 1], [], []>} : vector<205x4xbf16>, vector<4x16xbf16>, vector<205x16xf32> -> vector<205x16xf32>
    %60 = arith.addf %54, %59 : vector<205x16xf32>
    %c0_54 = arith.constant 0 : index
    %c34 = arith.constant 34 : index
    %c0_55 = arith.constant 0 : index
    %61 = vector.load %arg1[%c0_54, %c34, %c0_55] : memref<1x256x4xbf16, #tpu.memory_space<vmem>>, vector<1x205x4xbf16>
    %62 = vector.shape_cast %61 : vector<1x205x4xbf16> to vector<205x4xbf16>
    %c10 = arith.constant 10 : index
    %c0_56 = arith.constant 0 : index
    %c0_57 = arith.constant 0 : index
    %63 = vector.load %arg2[%c10, %c0_56, %c0_57] : memref<16x4x16xbf16, #tpu.memory_space<vmem>>, vector<1x4x16xbf16>
    %64 = vector.shape_cast %63 : vector<1x4x16xbf16> to vector<4x16xbf16>
    %cst_58 = arith.constant dense<0.000000e+00> : vector<205x16xf32>
    %65 = tpu.matmul %62, %64, %cst_58 {dimension_numbers = #tpu.dot_dimension_numbers<[1], [0], [0], [1], [0, 0, 1, 1], [], []>} : vector<205x4xbf16>, vector<4x16xbf16>, vector<205x16xf32> -> vector<205x16xf32>
    %66 = arith.addf %60, %65 : vector<205x16xf32>
    %c0_59 = arith.constant 0 : index
    %c35 = arith.constant 35 : index
    %c0_60 = arith.constant 0 : index
    %67 = vector.load %arg1[%c0_59, %c35, %c0_60] : memref<1x256x4xbf16, #tpu.memory_space<vmem>>, vector<1x205x4xbf16>
    %68 = vector.shape_cast %67 : vector<1x205x4xbf16> to vector<205x4xbf16>
    %c11 = arith.constant 11 : index
    %c0_61 = arith.constant 0 : index
    %c0_62 = arith.constant 0 : index
    %69 = vector.load %arg2[%c11, %c0_61, %c0_62] : memref<16x4x16xbf16, #tpu.memory_space<vmem>>, vector<1x4x16xbf16>
    %70 = vector.shape_cast %69 : vector<1x4x16xbf16> to vector<4x16xbf16>
    %cst_63 = arith.constant dense<0.000000e+00> : vector<205x16xf32>
    %71 = tpu.matmul %68, %70, %cst_63 {dimension_numbers = #tpu.dot_dimension_numbers<[1], [0], [0], [1], [0, 0, 1, 1], [], []>} : vector<205x4xbf16>, vector<4x16xbf16>, vector<205x16xf32> -> vector<205x16xf32>
    %72 = arith.addf %66, %71 : vector<205x16xf32>
    %c0_64 = arith.constant 0 : index
    %c48 = arith.constant 48 : index
    %c0_65 = arith.constant 0 : index
    %73 = vector.load %arg1[%c0_64, %c48, %c0_65] : memref<1x256x4xbf16, #tpu.memory_space<vmem>>, vector<1x205x4xbf16>
    %74 = vector.shape_cast %73 : vector<1x205x4xbf16> to vector<205x4xbf16>
    %c12 = arith.constant 12 : index
    %c0_66 = arith.constant 0 : index
    %c0_67 = arith.constant 0 : index
    %75 = vector.load %arg2[%c12, %c0_66, %c0_67] : memref<16x4x16xbf16, #tpu.memory_space<vmem>>, vector<1x4x16xbf16>
    %76 = vector.shape_cast %75 : vector<1x4x16xbf16> to vector<4x16xbf16>
    %cst_68 = arith.constant dense<0.000000e+00> : vector<205x16xf32>
    %77 = tpu.matmul %74, %76, %cst_68 {dimension_numbers = #tpu.dot_dimension_numbers<[1], [0], [0], [1], [0, 0, 1, 1], [], []>} : vector<205x4xbf16>, vector<4x16xbf16>, vector<205x16xf32> -> vector<205x16xf32>
    %78 = arith.addf %72, %77 : vector<205x16xf32>
    %c0_69 = arith.constant 0 : index
    %c49 = arith.constant 49 : index
    %c0_70 = arith.constant 0 : index
    %79 = vector.load %arg1[%c0_69, %c49, %c0_70] : memref<1x256x4xbf16, #tpu.memory_space<vmem>>, vector<1x205x4xbf16>
    %80 = vector.shape_cast %79 : vector<1x205x4xbf16> to vector<205x4xbf16>
    %c13 = arith.constant 13 : index
    %c0_71 = arith.constant 0 : index
    %c0_72 = arith.constant 0 : index
    %81 = vector.load %arg2[%c13, %c0_71, %c0_72] : memref<16x4x16xbf16, #tpu.memory_space<vmem>>, vector<1x4x16xbf16>
    %82 = vector.shape_cast %81 : vector<1x4x16xbf16> to vector<4x16xbf16>
    %cst_73 = arith.constant dense<0.000000e+00> : vector<205x16xf32>
    %83 = tpu.matmul %80, %82, %cst_73 {dimension_numbers = #tpu.dot_dimension_numbers<[1], [0], [0], [1], [0, 0, 1, 1], [], []>} : vector<205x4xbf16>, vector<4x16xbf16>, vector<205x16xf32> -> vector<205x16xf32>
    %84 = arith.addf %78, %83 : vector<205x16xf32>
    %c0_74 = arith.constant 0 : index
    %c50 = arith.constant 50 : index
    %c0_75 = arith.constant 0 : index
    %85 = vector.load %arg1[%c0_74, %c50, %c0_75] : memref<1x256x4xbf16, #tpu.memory_space<vmem>>, vector<1x205x4xbf16>
    %86 = vector.shape_cast %85 : vector<1x205x4xbf16> to vector<205x4xbf16>
    %c14 = arith.constant 14 : index
    %c0_76 = arith.constant 0 : index
    %c0_77 = arith.constant 0 : index
    %87 = vector.load %arg2[%c14, %c0_76, %c0_77] : memref<16x4x16xbf16, #tpu.memory_space<vmem>>, vector<1x4x16xbf16>
    %88 = vector.shape_cast %87 : vector<1x4x16xbf16> to vector<4x16xbf16>
    %cst_78 = arith.constant dense<0.000000e+00> : vector<205x16xf32>
    %89 = tpu.matmul %86, %88, %cst_78 {dimension_numbers = #tpu.dot_dimension_numbers<[1], [0], [0], [1], [0, 0, 1, 1], [], []>} : vector<205x4xbf16>, vector<4x16xbf16>, vector<205x16xf32> -> vector<205x16xf32>
    %90 = arith.addf %84, %89 : vector<205x16xf32>
    %c0_79 = arith.constant 0 : index
    %c51 = arith.constant 51 : index
    %c0_80 = arith.constant 0 : index
    %91 = vector.load %arg1[%c0_79, %c51, %c0_80] : memref<1x256x4xbf16, #tpu.memory_space<vmem>>, vector<1x205x4xbf16>
    %92 = vector.shape_cast %91 : vector<1x205x4xbf16> to vector<205x4xbf16>
    %c15 = arith.constant 15 : index
    %c0_81 = arith.constant 0 : index
    %c0_82 = arith.constant 0 : index
    %93 = vector.load %arg2[%c15, %c0_81, %c0_82] : memref<16x4x16xbf16, #tpu.memory_space<vmem>>, vector<1x4x16xbf16>
    %94 = vector.shape_cast %93 : vector<1x4x16xbf16> to vector<4x16xbf16>
    %cst_83 = arith.constant dense<0.000000e+00> : vector<205x16xf32>
    %95 = tpu.matmul %92, %94, %cst_83 {dimension_numbers = #tpu.dot_dimension_numbers<[1], [0], [0], [1], [0, 0, 1, 1], [], []>} : vector<205x4xbf16>, vector<4x16xbf16>, vector<205x16xf32> -> vector<205x16xf32>
    %96 = arith.addf %90, %95 : vector<205x16xf32>
    %c0_84 = arith.constant 0 : index
    %c0_85 = arith.constant 0 : index
    %97 = vector.load %arg3[%c0_84, %c0_85] : memref<1x16xf32, #tpu.memory_space<vmem>>, vector<1x16xf32>
    %98 = vector.broadcast %97 : vector<1x16xf32> to vector<205x16xf32>
    %99 = arith.addf %96, %98 : vector<205x16xf32>
    %cst_86 = arith.constant 0.000000e+00 : f32
    %100 = vector.broadcast %cst_86 : f32 to vector<205x16xf32>
    %101 = arith.cmpf oge, %99, %100 : vector<205x16xf32>
    %cst_87 = arith.constant 2.000000e-01 : f32
    %102 = vector.broadcast %cst_87 : f32 to vector<205x16xf32>
    %103 = arith.mulf %102, %99 : vector<205x16xf32>
    %104 = arith.select %101, %99, %103 : vector<205x16xi1>, vector<205x16xf32>
    %c0_88 = arith.constant 0 : index
    %c0_89 = arith.constant 0 : index
    %105 = vector.load %arg5[%c0_88, %c0_89] : memref<205x16xf32, #tpu.memory_space<vmem>>, vector<205x16xf32>
    tpu.vector_store %arg5[%c0_88, %c0_89], %104 {strides = array<i32>} : memref<205x16xf32, #tpu.memory_space<vmem>>, vector<205x16xf32>,
    %c0_90 = arith.constant 0 : index
    %c0_91 = arith.constant 0 : index
    %106 = tpu.strided_load %arg5[%c0_90, %c0_91] {strides = array<i32: 2, 1>} : memref<205x16xf32, #tpu.memory_space<vmem>>, vector<6x16xf32>
    %c1_92 = arith.constant 1 : index
    %c0_93 = arith.constant 0 : index
    %107 = tpu.strided_load %arg5[%c1_92, %c0_93] {strides = array<i32: 2, 1>} : memref<205x16xf32, #tpu.memory_space<vmem>>, vector<6x16xf32>
    %108 = arith.addf %106, %107 : vector<6x16xf32>
    %c16_94 = arith.constant 16 : index
    %c0_95 = arith.constant 0 : index
    %109 = tpu.strided_load %arg5[%c16_94, %c0_95] {strides = array<i32: 2, 1>} : memref<205x16xf32, #tpu.memory_space<vmem>>, vector<6x16xf32>
    %110 = arith.addf %108, %109 : vector<6x16xf32>
    %c17_96 = arith.constant 17 : index
    %c0_97 = arith.constant 0 : index
    %111 = tpu.strided_load %arg5[%c17_96, %c0_97] {strides = array<i32: 2, 1>} : memref<205x16xf32, #tpu.memory_space<vmem>>, vector<6x16xf32>
    %112 = arith.addf %110, %111 : vector<6x16xf32>
    %cst_98 = arith.constant 2.500000e-01 : f32
    %113 = vector.broadcast %cst_98 : f32 to vector<6x16xf32>
    %114 = arith.mulf %113, %112 : vector<6x16xf32>
    %115 = arith.truncf %114 : vector<6x16xf32> to vector<6x16xbf16>
    %c0_99 = arith.constant 0 : index
    %c0_100 = arith.constant 0 : index
    %c0_101 = arith.constant 0 : index
    %116 = vector.load %arg4[%c0_99, %c0_100, %c0_101] : memref<1x36x16xbf16, #tpu.memory_space<vmem>>, vector<1x6x16xbf16>
    %117 = vector.shape_cast %116 : vector<1x6x16xbf16> to vector<6x16xbf16>
    %118 = vector.shape_cast %115 : vector<6x16xbf16> to vector<1x6x16xbf16>
    tpu.vector_store %arg4[%c0_99, %c0_100, %c0_101], %118 {strides = array<i32>} : memref<1x36x16xbf16, #tpu.memory_space<vmem>>, vector<1x6x16xbf16>,
    %c32_102 = arith.constant 32 : index
    %c0_103 = arith.constant 0 : index
    %119 = tpu.strided_load %arg5[%c32_102, %c0_103] {strides = array<i32: 2, 1>} : memref<205x16xf32, #tpu.memory_space<vmem>>, vector<6x16xf32>
    %c33_104 = arith.constant 33 : index
    %c0_105 = arith.constant 0 : index
    %120 = tpu.strided_load %arg5[%c33_104, %c0_105] {strides = array<i32: 2, 1>} : memref<205x16xf32, #tpu.memory_space<vmem>>, vector<6x16xf32>
    %121 = arith.addf %119, %120 : vector<6x16xf32>
    %c48_106 = arith.constant 48 : index
    %c0_107 = arith.constant 0 : index
    %122 = tpu.strided_load %arg5[%c48_106, %c0_107] {strides = array<i32: 2, 1>} : memref<205x16xf32, #tpu.memory_space<vmem>>, vector<6x16xf32>
    %123 = arith.addf %121, %122 : vector<6x16xf32>
    %c49_108 = arith.constant 49 : index
    %c0_109 = arith.constant 0 : index
    %124 = tpu.strided_load %arg5[%c49_108, %c0_109] {strides = array<i32: 2, 1>} : memref<205x16xf32, #tpu.memory_space<vmem>>, vector<6x16xf32>
    %125 = arith.addf %123, %124 : vector<6x16xf32>
    %cst_110 = arith.constant 2.500000e-01 : f32
    %126 = vector.broadcast %cst_110 : f32 to vector<6x16xf32>
    %127 = arith.mulf %126, %125 : vector<6x16xf32>
    %128 = arith.truncf %127 : vector<6x16xf32> to vector<6x16xbf16>
    %c0_111 = arith.constant 0 : index
    %c6_112 = arith.constant 6 : index
    %c0_113 = arith.constant 0 : index
    %129 = vector.load %arg4[%c0_111, %c6_112, %c0_113] : memref<1x36x16xbf16, #tpu.memory_space<vmem>>, vector<1x6x16xbf16>
    %130 = vector.shape_cast %129 : vector<1x6x16xbf16> to vector<6x16xbf16>
    %131 = vector.shape_cast %128 : vector<6x16xbf16> to vector<1x6x16xbf16>
    tpu.vector_store %arg4[%c0_111, %c6_112, %c0_113], %131 {strides = array<i32>} : memref<1x36x16xbf16, #tpu.memory_space<vmem>>, vector<1x6x16xbf16>,
    %c64 = arith.constant 64 : index
    %c0_114 = arith.constant 0 : index
    %132 = tpu.strided_load %arg5[%c64, %c0_114] {strides = array<i32: 2, 1>} : memref<205x16xf32, #tpu.memory_space<vmem>>, vector<6x16xf32>
    %c65 = arith.constant 65 : index
    %c0_115 = arith.constant 0 : index
    %133 = tpu.strided_load %arg5[%c65, %c0_115] {strides = array<i32: 2, 1>} : memref<205x16xf32, #tpu.memory_space<vmem>>, vector<6x16xf32>
    %134 = arith.addf %132, %133 : vector<6x16xf32>
    %c80 = arith.constant 80 : index
    %c0_116 = arith.constant 0 : index
    %135 = tpu.strided_load %arg5[%c80, %c0_116] {strides = array<i32: 2, 1>} : memref<205x16xf32, #tpu.memory_space<vmem>>, vector<6x16xf32>
    %136 = arith.addf %134, %135 : vector<6x16xf32>
    %c81 = arith.constant 81 : index
    %c0_117 = arith.constant 0 : index
    %137 = tpu.strided_load %arg5[%c81, %c0_117] {strides = array<i32: 2, 1>} : memref<205x16xf32, #tpu.memory_space<vmem>>, vector<6x16xf32>
    %138 = arith.addf %136, %137 : vector<6x16xf32>
    %cst_118 = arith.constant 2.500000e-01 : f32
    %139 = vector.broadcast %cst_118 : f32 to vector<6x16xf32>
    %140 = arith.mulf %139, %138 : vector<6x16xf32>
    %141 = arith.truncf %140 : vector<6x16xf32> to vector<6x16xbf16>
    %c0_119 = arith.constant 0 : index
    %c12_120 = arith.constant 12 : index
    %c0_121 = arith.constant 0 : index
    %142 = vector.load %arg4[%c0_119, %c12_120, %c0_121] : memref<1x36x16xbf16, #tpu.memory_space<vmem>>, vector<1x6x16xbf16>
    %143 = vector.shape_cast %142 : vector<1x6x16xbf16> to vector<6x16xbf16>
    %144 = vector.shape_cast %141 : vector<6x16xbf16> to vector<1x6x16xbf16>
    tpu.vector_store %arg4[%c0_119, %c12_120, %c0_121], %144 {strides = array<i32>} : memref<1x36x16xbf16, #tpu.memory_space<vmem>>, vector<1x6x16xbf16>,
    %c96 = arith.constant 96 : index
    %c0_122 = arith.constant 0 : index
    %145 = tpu.strided_load %arg5[%c96, %c0_122] {strides = array<i32: 2, 1>} : memref<205x16xf32, #tpu.memory_space<vmem>>, vector<6x16xf32>
    %c97 = arith.constant 97 : index
    %c0_123 = arith.constant 0 : index
    %146 = tpu.strided_load %arg5[%c97, %c0_123] {strides = array<i32: 2, 1>} : memref<205x16xf32, #tpu.memory_space<vmem>>, vector<6x16xf32>
    %147 = arith.addf %145, %146 : vector<6x16xf32>
    %c112 = arith.constant 112 : index
    %c0_124 = arith.constant 0 : index
    %148 = tpu.strided_load %arg5[%c112, %c0_124] {strides = array<i32: 2, 1>} : memref<205x16xf32, #tpu.memory_space<vmem>>, vector<6x16xf32>
    %149 = arith.addf %147, %148 : vector<6x16xf32>
    %c113 = arith.constant 113 : index
    %c0_125 = arith.constant 0 : index
    %150 = tpu.strided_load %arg5[%c113, %c0_125] {strides = array<i32: 2, 1>} : memref<205x16xf32, #tpu.memory_space<vmem>>, vector<6x16xf32>
    %151 = arith.addf %149, %150 : vector<6x16xf32>
    %cst_126 = arith.constant 2.500000e-01 : f32
    %152 = vector.broadcast %cst_126 : f32 to vector<6x16xf32>
    %153 = arith.mulf %152, %151 : vector<6x16xf32>
    %154 = arith.truncf %153 : vector<6x16xf32> to vector<6x16xbf16>
    %c0_127 = arith.constant 0 : index
    %c18_128 = arith.constant 18 : index
    %c0_129 = arith.constant 0 : index
    %155 = vector.load %arg4[%c0_127, %c18_128, %c0_129] : memref<1x36x16xbf16, #tpu.memory_space<vmem>>, vector<1x6x16xbf16>
    %156 = vector.shape_cast %155 : vector<1x6x16xbf16> to vector<6x16xbf16>
    %157 = vector.shape_cast %154 : vector<6x16xbf16> to vector<1x6x16xbf16>
    tpu.vector_store %arg4[%c0_127, %c18_128, %c0_129], %157 {strides = array<i32>} : memref<1x36x16xbf16, #tpu.memory_space<vmem>>, vector<1x6x16xbf16>,
    %c128 = arith.constant 128 : index
    %c0_130 = arith.constant 0 : index
    %158 = tpu.strided_load %arg5[%c128, %c0_130] {strides = array<i32: 2, 1>} : memref<205x16xf32, #tpu.memory_space<vmem>>, vector<6x16xf32>
    %c129 = arith.constant 129 : index
    %c0_131 = arith.constant 0 : index
    %159 = tpu.strided_load %arg5[%c129, %c0_131] {strides = array<i32: 2, 1>} : memref<205x16xf32, #tpu.memory_space<vmem>>, vector<6x16xf32>
    %160 = arith.addf %158, %159 : vector<6x16xf32>
    %c144 = arith.constant 144 : index
    %c0_132 = arith.constant 0 : index
    %161 = tpu.strided_load %arg5[%c144, %c0_132] {strides = array<i32: 2, 1>} : memref<205x16xf32, #tpu.memory_space<vmem>>, vector<6x16xf32>
    %162 = arith.addf %160, %161 : vector<6x16xf32>
    %c145 = arith.constant 145 : index
    %c0_133 = arith.constant 0 : index
    %163 = tpu.strided_load %arg5[%c145, %c0_133] {strides = array<i32: 2, 1>} : memref<205x16xf32, #tpu.memory_space<vmem>>, vector<6x16xf32>
    %164 = arith.addf %162, %163 : vector<6x16xf32>
    %cst_134 = arith.constant 2.500000e-01 : f32
    %165 = vector.broadcast %cst_134 : f32 to vector<6x16xf32>
    %166 = arith.mulf %165, %164 : vector<6x16xf32>
    %167 = arith.truncf %166 : vector<6x16xf32> to vector<6x16xbf16>
    %c0_135 = arith.constant 0 : index
    %c24 = arith.constant 24 : index
    %c0_136 = arith.constant 0 : index
    %168 = vector.load %arg4[%c0_135, %c24, %c0_136] : memref<1x36x16xbf16, #tpu.memory_space<vmem>>, vector<1x6x16xbf16>
    %169 = vector.shape_cast %168 : vector<1x6x16xbf16> to vector<6x16xbf16>
    %170 = vector.shape_cast %167 : vector<6x16xbf16> to vector<1x6x16xbf16>
    tpu.vector_store %arg4[%c0_135, %c24, %c0_136], %170 {strides = array<i32>} : memref<1x36x16xbf16, #tpu.memory_space<vmem>>, vector<1x6x16xbf16>,
    %c160 = arith.constant 160 : index
    %c0_137 = arith.constant 0 : index
    %171 = tpu.strided_load %arg5[%c160, %c0_137] {strides = array<i32: 2, 1>} : memref<205x16xf32, #tpu.memory_space<vmem>>, vector<6x16xf32>
    %c161 = arith.constant 161 : index
    %c0_138 = arith.constant 0 : index
    %172 = tpu.strided_load %arg5[%c161, %c0_138] {strides = array<i32: 2, 1>} : memref<205x16xf32, #tpu.memory_space<vmem>>, vector<6x16xf32>
    %173 = arith.addf %171, %172 : vector<6x16xf32>
    %c176 = arith.constant 176 : index
    %c0_139 = arith.constant 0 : index
    %174 = tpu.strided_load %arg5[%c176, %c0_139] {strides = array<i32: 2, 1>} : memref<205x16xf32, #tpu.memory_space<vmem>>, vector<6x16xf32>
    %175 = arith.addf %173, %174 : vector<6x16xf32>
    %c177 = arith.constant 177 : index
    %c0_140 = arith.constant 0 : index
    %176 = tpu.strided_load %arg5[%c177, %c0_140] {strides = array<i32: 2, 1>} : memref<205x16xf32, #tpu.memory_space<vmem>>, vector<6x16xf32>
    %177 = arith.addf %175, %176 : vector<6x16xf32>
    %cst_141 = arith.constant 2.500000e-01 : f32
    %178 = vector.broadcast %cst_141 : f32 to vector<6x16xf32>
    %179 = arith.mulf %178, %177 : vector<6x16xf32>
    %180 = arith.truncf %179 : vector<6x16xf32> to vector<6x16xbf16>
    %c0_142 = arith.constant 0 : index
    %c30 = arith.constant 30 : index
    %c0_143 = arith.constant 0 : index
    %181 = vector.load %arg4[%c0_142, %c30, %c0_143] : memref<1x36x16xbf16, #tpu.memory_space<vmem>>, vector<1x6x16xbf16>
    %182 = vector.shape_cast %181 : vector<1x6x16xbf16> to vector<6x16xbf16>
    %183 = vector.shape_cast %180 : vector<6x16xbf16> to vector<1x6x16xbf16>
    tpu.vector_store %arg4[%c0_142, %c30, %c0_143], %183 {strides = array<i32>} : memref<1x36x16xbf16, #tpu.memory_space<vmem>>, vector<1x6x16xbf16>,
    return
  }
  func.func @transform_0(%arg0: i32) -> (i32, i32, i32) {
    %c0_i32 = arith.constant 0 : i32
    %c0_i32_0 = arith.constant 0 : i32
    %c0_i32_1 = arith.constant 0 : i32
    return %arg0, %c0_i32, %c0_i32_0 : i32, i32, i32
  }
  func.func @transform_1(%arg0: i32) -> (i32, i32, i32) {
    %c0_i32 = arith.constant 0 : i32
    %c0_i32_0 = arith.constant 0 : i32
    %c0_i32_1 = arith.constant 0 : i32
    %c0_i32_2 = arith.constant 0 : i32
    return %c0_i32, %c0_i32_0, %c0_i32_1 : i32, i32, i32
  }
  func.func @transform_2(%arg0: i32) -> (i32, i32) {
    %c0_i32 = arith.constant 0 : i32
    %c0_i32_0 = arith.constant 0 : i32
    %c0_i32_1 = arith.constant 0 : i32
    return %c0_i32, %c0_i32_0 : i32, i32
  }
  func.func @transform_3(%arg0: i32) -> (i32, i32, i32) {
    %c0_i32 = arith.constant 0 : i32
    %c0_i32_0 = arith.constant 0 : i32
    %c0_i32_1 = arith.constant 0 : i32
    return %arg0, %c0_i32, %c0_i32_0 : i32, i32, i32
  }
}

</mosaic_0001>

<llo_original>
// kernel: _lambda_.3
$region0: #{_lambda_.3}
  #allocation0 [shape = 'u32[]', space=smem, size = 0x4, offset = 0x4, fixed_abs, tag = 'smem constant byte address 0x4 - core index']
  #allocation1 [shape = 'u32[144,128]{1,0:T(1,128)}', space=vmem, size = 0x12000, scoped, tag = 'internal scratch']
  #allocation2 [shape = 'f32[1,1]{1,0:T(1,128)S(1)}', space=vmem, size = 0x200, scoped, tag = 'scoped memory for _lambda_.3']
  %s0 = inlined_call_operand.vmem [shape: bf16[2,36,16], index: 0, kind: input, shape index: {}]
  %s1 = inlined_call_operand.vmem [shape: bf16[16,16,32], index: 1, kind: input, shape index: {}]
  %s2 = inlined_call_operand.vmem [shape: f32[1,32], index: 2, kind: input, shape index: {}]
  %s3 = inlined_call_operand.vmem [shape: f32[1,32], index: 3, kind: input, shape index: {}]
  %s4 = inlined_call_operand.vmem [shape: f32[1,32], index: 4, kind: input, shape index: {}]
  %s5 = inlined_call_operand.vmem [shape: f32[15,1], index: 5, kind: input, shape index: {}]
  %s6 = inlined_call_operand.vmem [shape: f32[1,32], index: 6, kind: input, shape index: {}]
  %s7 = inlined_call_operand.<no memory space> [shape: f32[1,1], index: 7, kind: input, shape index: {}]
  %s8 = inlined_call_operand.vmem [shape: bf16[2,9,32], index: 8, kind: output, shape index: {0}]
  %s9 = inlined_call_operand.vmem [shape: f32[2,9,1], index: 9, kind: output, shape index: {1}]
  %10 = xla_tuple %s8, %s9
  %s11 = sld [smem:[#allocation0]]
  $region73: #{_lambda_.3} parent=0
    _
  %s13 = ssub.s32 1, %s11
  %s14 = scalar_select 0, %s13, %s11
  %v15 = vstv %s7
  %16 = vst [vmem:[#allocation2] sm:$0x1] %v15
  loop: start=0, step=1, limit=4
  $region2: #{_lambda_.3} parent=0 // loop_pre_header
    _
  $region3: #{_lambda_.3} parent=0 // loop_header
    %s18 = sphi 0, %s22
    %p19 = scmp.ge.s32.totalorder %s18, 4
    %s28 = sphi 0, %s30
    %s31 = sphi 0, %s28
    %s32 = sphi 0, %s31
    %s48 = sphi 0, %s32
    %s52 = sphi 0, %s52
    %s54 = sphi 0, %s52
    %s55 = sphi 0, %s54
    %s69 = sphi 0, %s55
    %s73 = sphi 0, %s73
    %s75 = sphi 0, %s73
    %s76 = sphi 0, %s75
    %s90 = sphi 0, %s76
    %s94 = sphi 0, %s94
    %s96 = sphi 0, %s94
    %s97 = sphi 0, %s96
    %s111 = sphi 0, %s97
    %s115 = sphi 0, %s115
    %s117 = sphi 0, %s115
    %s118 = sphi 0, %s117
    %s132 = sphi 0, %s118
    %s136 = sphi 0, %s136
    %s138 = sphi 0, %s136
    %s139 = sphi 0, %s138
    %s153 = sphi 0, %s139
    %s157 = sphi 0, %s157
    %s159 = sphi 0, %s157
    %s160 = sphi 0, %s159
    %s174 = sphi 0, %s160
    %s178 = sphi 0, %s178
    %s180 = sphi 0, %s178
    %s181 = sphi 0, %s180
    %s195 = sphi 0, %s181
    %s201 = sphi 0, %s203
    %s204 = sphi 0, %s201
    %s205 = sphi 0, %s204
    %s221 = sphi 0, %s205
    %s227 = sphi 0, %s229
    %s230 = sphi 0, %s227
    %s231 = sphi 0, %s230
    %s247 = sphi 0, %s231
  $region4: #{_lambda_.3} parent=0 // loop_header_branch
    %21 = sbr.rel (%p19) target = $region8
  $region5: #{_lambda_.3} parent=0 // loop_body
    %s23 = ssub.s32 %s18, 1
    %s24 = ssub.s32 %s18, 2
    %s25 = sadd.s32 %s18, 1
    %s26 = ssub.s32 %s18, %s25
    %p27 = scmp.eq.s32.totalorder %s26, 0
    %s29 = sadd.s32 %s28, 1
    %s30 = scalar_select %p27, %s28, %s29
    %p33 = pneg %p27
    %p34 = scmp.eq.s32.totalorder %s18, 1
    %p35 = por %p33, %p34
    %p36 = scmp.ne.s32.totalorder %s28, %s31
    %p37 = scmp.eq.s32.totalorder %s18, 0
    %p38 = por %p36, %p37
    %p39 = scmp.ne.s32.totalorder %s28, %s31
    %p40 = scmp.eq.s32.totalorder %s23, 1
    %p41 = por %p39, %p40
    %p42 = scmp.ne.s32.totalorder %s31, %s32
    %p43 = scmp.eq.s32.totalorder %s23, 0
    %p44 = por %p42, %p43
    %p45 = scmp.ne.s32.totalorder %s31, %s32
    %p46 = scmp.eq.s32.totalorder %s24, 1
    %p47 = por %p45, %p46
    %p49 = scmp.ne.s32.totalorder %s32, %s48
    %p50 = scmp.eq.s32.totalorder %s24, 0
    %p51 = por %p49, %p50
    %s53 = sadd.s32 %s52, 1
    %p56 = scmp.eq.s32.totalorder %s18, 1
    %p57 = scmp.ne.s32.totalorder %s52, %s54
    %p58 = scmp.eq.s32.totalorder %s18, 0
    %p59 = por %p57, %p58
    %p60 = scmp.ne.s32.totalorder %s52, %s54
    %p61 = scmp.eq.s32.totalorder %s23, 1
    %p62 = por %p60, %p61
    %p63 = scmp.ne.s32.totalorder %s54, %s55
    %p64 = scmp.eq.s32.totalorder %s23, 0
    %p65 = por %p63, %p64
    %p66 = scmp.ne.s32.totalorder %s54, %s55
    %p67 = scmp.eq.s32.totalorder %s24, 1
    %p68 = por %p66, %p67
    %p70 = scmp.ne.s32.totalorder %s55, %s69
    %p71 = scmp.eq.s32.totalorder %s24, 0
    %p72 = por %p70, %p71
    %s74 = sadd.s32 %s73, 1
    %p77 = scmp.eq.s32.totalorder %s18, 1
    %p78 = scmp.ne.s32.totalorder %s73, %s75
    %p79 = scmp.eq.s32.totalorder %s18, 0
    %p80 = por %p78, %p79
    %p81 = scmp.ne.s32.totalorder %s73, %s75
    %p82 = scmp.eq.s32.totalorder %s23, 1
    %p83 = por %p81, %p82
    %p84 = scmp.ne.s32.totalorder %s75, %s76
    %p85 = scmp.eq.s32.totalorder %s23, 0
    %p86 = por %p84, %p85
    %p87 = scmp.ne.s32.totalorder %s75, %s76
    %p88 = scmp.eq.s32.totalorder %s24, 1
    %p89 = por %p87, %p88
    %p91 = scmp.ne.s32.totalorder %s76, %s90
    %p92 = scmp.eq.s32.totalorder %s24, 0
    %p93 = por %p91, %p92
    %s95 = sadd.s32 %s94, 1
    %p98 = scmp.eq.s32.totalorder %s18, 1
    %p99 = scmp.ne.s32.totalorder %s94, %s96
    %p100 = scmp.eq.s32.totalorder %s18, 0
    %p101 = por %p99, %p100
    %p102 = scmp.ne.s32.totalorder %s94, %s96
    %p103 = scmp.eq.s32.totalorder %s23, 1
    %p104 = por %p102, %p103
    %p105 = scmp.ne.s32.totalorder %s96, %s97
    %p106 = scmp.eq.s32.totalorder %s23, 0
    %p107 = por %p105, %p106
    %p108 = scmp.ne.s32.totalorder %s96, %s97
    %p109 = scmp.eq.s32.totalorder %s24, 1
    %p110 = por %p108, %p109
    %p112 = scmp.ne.s32.totalorder %s97, %s111
    %p113 = scmp.eq.s32.totalorder %s24, 0
    %p114 = por %p112, %p113
    %s116 = sadd.s32 %s115, 1
    %p119 = scmp.eq.s32.totalorder %s18, 1
    %p120 = scmp.ne.s32.totalorder %s115, %s117
    %p121 = scmp.eq.s32.totalorder %s18, 0
    %p122 = por %p120, %p121
    %p123 = scmp.ne.s32.totalorder %s115, %s117
    %p124 = scmp.eq.s32.totalorder %s23, 1
    %p125 = por %p123, %p124
    %p126 = scmp.ne.s32.totalorder %s117, %s118
    %p127 = scmp.eq.s32.totalorder %s23, 0
    %p128 = por %p126, %p127
    %p129 = scmp.ne.s32.totalorder %s117, %s118
    %p130 = scmp.eq.s32.totalorder %s24, 1
    %p131 = por %p129, %p130
    %p133 = scmp.ne.s32.totalorder %s118, %s132
    %p134 = scmp.eq.s32.totalorder %s24, 0
    %p135 = por %p133, %p134
    %s137 = sadd.s32 %s136, 1
    %p140 = scmp.eq.s32.totalorder %s18, 1
    %p141 = scmp.ne.s32.totalorder %s136, %s138
    %p142 = scmp.eq.s32.totalorder %s18, 0
    %p143 = por %p141, %p142
    %p144 = scmp.ne.s32.totalorder %s136, %s138
    %p145 = scmp.eq.s32.totalorder %s23, 1
    %p146 = por %p144, %p145
    %p147 = scmp.ne.s32.totalorder %s138, %s139
    %p148 = scmp.eq.s32.totalorder %s23, 0
    %p149 = por %p147, %p148
    %p150 = scmp.ne.s32.totalorder %s138, %s139
    %p151 = scmp.eq.s32.totalorder %s24, 1
    %p152 = por %p150, %p151
    %p154 = scmp.ne.s32.totalorder %s139, %s153
    %p155 = scmp.eq.s32.totalorder %s24, 0
    %p156 = por %p154, %p155
    %s158 = sadd.s32 %s157, 1
    %p161 = scmp.eq.s32.totalorder %s18, 1
    %p162 = scmp.ne.s32.totalorder %s157, %s159
    %p163 = scmp.eq.s32.totalorder %s18, 0
    %p164 = por %p162, %p163
    %p165 = scmp.ne.s32.totalorder %s157, %s159
    %p166 = scmp.eq.s32.totalorder %s23, 1
    %p167 = por %p165, %p166
    %p168 = scmp.ne.s32.totalorder %s159, %s160
    %p169 = scmp.eq.s32.totalorder %s23, 0
    %p170 = por %p168, %p169
    %p171 = scmp.ne.s32.totalorder %s159, %s160
    %p172 = scmp.eq.s32.totalorder %s24, 1
    %p173 = por %p171, %p172
    %p175 = scmp.ne.s32.totalorder %s160, %s174
    %p176 = scmp.eq.s32.totalorder %s24, 0
    %p177 = por %p175, %p176
    %s179 = sadd.s32 %s178, 1
    %p182 = scmp.eq.s32.totalorder %s18, 1
    %p183 = scmp.ne.s32.totalorder %s178, %s180
    %p184 = scmp.eq.s32.totalorder %s18, 0
    %p185 = por %p183, %p184
    %p186 = scmp.ne.s32.totalorder %s178, %s180
    %p187 = scmp.eq.s32.totalorder %s23, 1
    %p188 = por %p186, %p187
    %p189 = scmp.ne.s32.totalorder %s180, %s181
    %p190 = scmp.eq.s32.totalorder %s23, 0
    %p191 = por %p189, %p190
    %p192 = scmp.ne.s32.totalorder %s180, %s181
    %p193 = scmp.eq.s32.totalorder %s24, 1
    %p194 = por %p192, %p193
    %p196 = scmp.ne.s32.totalorder %s181, %s195
    %p197 = scmp.eq.s32.totalorder %s24, 0
    %p198 = por %p196, %p197
    %s199 = ssub.s32 %s18, %s25
    %p200 = scmp.eq.s32.totalorder %s199, 0
    %s202 = sadd.s32 %s201, 1
    %s203 = scalar_select %p200, %s201, %s202
    %p206 = pneg %p200
    %p207 = scmp.eq.s32.totalorder %s18, 1
    %p208 = por %p206, %p207
    %p209 = scmp.ne.s32.totalorder %s201, %s204
    %p210 = scmp.eq.s32.totalorder %s18, 0
    %p211 = por %p209, %p210
    %p212 = scmp.ne.s32.totalorder %s201, %s204
    %p213 = scmp.eq.s32.totalorder %s23, 1
    %p214 = por %p212, %p213
    %p215 = scmp.ne.s32.totalorder %s204, %s205
    %p216 = scmp.eq.s32.totalorder %s23, 0
    %p217 = por %p215, %p216
    %p218 = scmp.ne.s32.totalorder %s204, %s205
    %p219 = scmp.eq.s32.totalorder %s24, 1
    %p220 = por %p218, %p219
    %p222 = scmp.ne.s32.totalorder %s205, %s221
    %p223 = scmp.eq.s32.totalorder %s24, 0
    %p224 = por %p222, %p223
    %s225 = ssub.s32 %s18, %s25
    %p226 = scmp.eq.s32.totalorder %s225, 0
    %s228 = sadd.s32 %s227, 1
    %s229 = scalar_select %p226, %s227, %s228
    %p232 = pneg %p226
    %p233 = scmp.eq.s32.totalorder %s18, 1
    %p234 = por %p232, %p233
    %p235 = scmp.ne.s32.totalorder %s227, %s230
    %p236 = scmp.eq.s32.totalorder %s18, 0
    %p237 = por %p235, %p236
    %p238 = scmp.ne.s32.totalorder %s227, %s230
    %p239 = scmp.eq.s32.totalorder %s23, 1
    %p240 = por %p238, %p239
    %p241 = scmp.ne.s32.totalorder %s230, %s231
    %p242 = scmp.eq.s32.totalorder %s23, 0
    %p243 = por %p241, %p242
    %p244 = scmp.ne.s32.totalorder %s230, %s231
    %p245 = scmp.eq.s32.totalorder %s24, 1
    %p246 = por %p244, %p245
    %p248 = scmp.ne.s32.totalorder %s231, %s247
    %p249 = scmp.eq.s32.totalorder %s24, 0
    %p250 = por %p248, %p249
    %p251 = scmp.le.s32.totalorder 1, %s18
    %p252 = scmp.lt.s32.totalorder %s18, 3
    %p253 = pnand %p251, %p252
    %p254 = pneg %p253
    // Predicated region
    $region9: #{_lambda_.3} parent=5 // pred_check
      _
    $region10: #{_lambda_.3} parent=5 // pred_check_branch
      %256 = sbr.rel (%p253) target = $region12
    $region11: #{_lambda_.3} parent=5 // pred_region
      %s257 = ssub.s32 %s18, 1
      // Predicated region
      $region13: #{_lambda_.3} parent=11 // pred_check
        %p258 = pneg %p65
      $region14: #{_lambda_.3} parent=11 // pred_check_branch
        %260 = sbr.rel (%p258) target = $region16
      $region15: #{_lambda_.3} parent=11 // pred_region
        _
      $region16: #{_lambda_.3} parent=11 // pred_fallthru
        _
      // Predicated region
      $region17: #{_lambda_.3} parent=11 // pred_check
        %p261 = pneg %p86
      $region18: #{_lambda_.3} parent=11 // pred_check_branch
        %263 = sbr.rel (%p261) target = $region20
      $region19: #{_lambda_.3} parent=11 // pred_region
        _
      $region20: #{_lambda_.3} parent=11 // pred_fallthru
        _
      // Predicated region
      $region21: #{_lambda_.3} parent=11 // pred_check
        %p264 = pneg %p107
      $region22: #{_lambda_.3} parent=11 // pred_check_branch
        %266 = sbr.rel (%p264) target = $region24
      $region23: #{_lambda_.3} parent=11 // pred_region
        _
      $region24: #{_lambda_.3} parent=11 // pred_fallthru
        _
      // Predicated region
      $region25: #{_lambda_.3} parent=11 // pred_check
        %p267 = pneg %p128
      $region26: #{_lambda_.3} parent=11 // pred_check_branch
        %269 = sbr.rel (%p267) target = $region28
      $region27: #{_lambda_.3} parent=11 // pred_region
        _
      $region28: #{_lambda_.3} parent=11 // pred_fallthru
        _
      // Predicated region
      $region29: #{_lambda_.3} parent=11 // pred_check
        %p270 = pneg %p149
      $region30: #{_lambda_.3} parent=11 // pred_check_branch
        %272 = sbr.rel (%p270) target = $region32
      $region31: #{_lambda_.3} parent=11 // pred_region
        _
      $region32: #{_lambda_.3} parent=11 // pred_fallthru
        _
      // Predicated region
      $region33: #{_lambda_.3} parent=11 // pred_check
        %p273 = pneg %p170
      $region34: #{_lambda_.3} parent=11 // pred_check_branch
        %275 = sbr.rel (%p273) target = $region36
      $region35: #{_lambda_.3} parent=11 // pred_region
        _
      $region36: #{_lambda_.3} parent=11 // pred_fallthru
        _
      // Predicated region
      $region37: #{_lambda_.3} parent=11 // pred_check
        %p276 = pneg %p191
      $region38: #{_lambda_.3} parent=11 // pred_check_branch
        %278 = sbr.rel (%p276) target = $region40
      $region39: #{_lambda_.3} parent=11 // pred_region
        _
      $region40: #{_lambda_.3} parent=11 // pred_fallthru
        _
    $region12: #{_lambda_.3} parent=5 // pred_fallthru
      _
    %p279 = scmp.lt.s32.totalorder %s18, 2
    // Predicated region
    $region41: #{_lambda_.3} parent=5 // pred_check
      %p280 = pneg %p279
    $region42: #{_lambda_.3} parent=5 // pred_check_branch
      %282 = sbr.rel (%p280) target = $region44
    $region43: #{_lambda_.3} parent=5 // pred_region
      // Predicated region
      $region45: #{_lambda_.3} parent=43 // pred_check
        %p283 = pneg %p38
      $region46: #{_lambda_.3} parent=43 // pred_check_branch
        %285 = sbr.rel (%p283) target = $region48
      $region47: #{_lambda_.3} parent=43 // pred_region
        %p286 = scmp.lt.s32.totalorder %s18, 1
        %s287 = scalar_select %p286, %s18, 1
        %s288 = smul.addr %s287, 5
        %s289 = smul.addr %s288, 4
        %s290 = scalar_lea.vmem %s0, %s289
      $region48: #{_lambda_.3} parent=43 // pred_fallthru
        _
    $region44: #{_lambda_.3} parent=5 // pred_fallthru
      _
    %p291 = scmp.le.s32.totalorder 1, %s18
    %p292 = scmp.lt.s32.totalorder %s18, 3
    %p293 = pnand %p291, %p292
    %p294 = pneg %p293
    // Predicated region
    $region49: #{_lambda_.3} parent=5 // pred_check
      _
    $region50: #{_lambda_.3} parent=5 // pred_check_branch
      %296 = sbr.rel (%p293) target = $region52
    $region51: #{_lambda_.3} parent=5 // pred_region
      %s297 = ssub.s32 %s18, 1
      %p298 = scmp.lt.s32.totalorder %s23, 1
      %s299 = scalar_select %p298, %s23, 1
      %s300 = smul.addr %s299, 5
      %s301 = smul.addr %s300, 4
      %s302 = scalar_lea.vmem %s0, %s301
      %p303 = pneg %p44
      %p304 = pneg %p41
      %p305 = pneg %p65
      %p306 = pneg %p62
      %p307 = pneg %p86
      %p308 = pneg %p83
      %p309 = pneg %p107
      %p310 = pneg %p104
      %p311 = pneg %p128
      %p312 = pneg %p125
      %p313 = pneg %p149
      %p314 = pneg %p146
      %p315 = pneg %p170
      %p316 = pneg %p167
      %p317 = pneg %p191
      %p318 = pneg %p188
      %p319 = pneg %p217
      %p320 = pneg %p214
      %p321 = scmp.lt.s32.totalorder %s23, 1
      %s322 = scalar_select %p321, %s23, 1
      %s323 = smul.addr %s322, 2
      %s324 = smul.addr %s323, 4
      %s325 = scalar_lea.vmem %s8, %s324
      %p326 = pneg %p243
      %p327 = pneg %p240
      %p328 = scmp.lt.s32.totalorder %s23, 1
      %s329 = scalar_select %p328, %s23, 1
      %s330 = smul.addr %s329, 2
      %s331 = smul.addr %s330, 8
      %s332 = scalar_lea.vmem %s9, %s331
      %p333 = scmp.lt.s32.totalorder %s23, 1
      %s334 = scalar_select %p333, %s23, 1
      %s335 = smul.addr %s334, 5
      %s336 = smul.addr %s335, 4
      %s337 = scalar_lea.vmem %s0, %s336
      %p338 = scmp.lt.s32.totalorder %s23, 1
      %s339 = scalar_select %p338, %s23, 1
      %s340 = smul.addr %s339, 2
      %s341 = smul.addr %s340, 4
      %s342 = scalar_lea.vmem %s8, %s341
      %p343 = scmp.lt.s32.totalorder %s23, 1
      %s344 = scalar_select %p343, %s23, 1
      %s345 = smul.addr %s344, 2
      %s346 = smul.addr %s345, 8
      %s347 = scalar_lea.vmem %s9, %s346
      %v349 = vld [vmem:[%s337] sm:$0xf]
      %v350 = vld [vmem:[%s337 + $0x4] sm:$0xf]
      %v351 = vld [vmem:[%s1] sm:$0xf]
      %v352 = vld [vmem:[%s1 + $0x4] sm:$0xf]
      %s353 = scalar_lea.vmem %s1, 8
      %v354 = vld [vmem:[%s353] sm:$0xf]
      %v355 = vld [vmem:[%s353 + $0x4] sm:$0xf]
      %v358 = vunpack.c.l.b16 %v349
      %v359 = vunpack.c.l.b16 %v350
      %v360 = vpack.c.b16 %v359, %v358
      %v362 = vshrl.u32 %v360, 16
      %v364 = vshll.u32 %v360, 16
      %v366 = vrot.slane %v364, 1
      %v367 = vor.u32 %v362, %v366
      %v370 = vunpack.c.l.b16 %v354
      %v371 = vunpack.c.l.b16 %v355
      %v372 = vpack.c.b16 %v371, %v370
      %vm374 = vcmask 130048
      %v376 = vsel %vm374, %v367, 0
      %378 = vmatprep.subr.bf16.mxu0 0
      %379 = vmatpush1.bf16.msra.mxu0 %v372
      %380 = vmatprep.subr.bf16.mxu0 0
      %381 = vmatpush1.bf16.msra.mxu0 0
      %382 = vmatprep.subr.bf16.mxu0 0
      %383 = vmatpush1.bf16.msra.mxu0 0
      %384 = vmatprep.subr.bf16.mxu0 0
      %385 = vmatpush1.bf16.msra.mxu0 0
      %386 = vmatprep.subr.bf16.mxu0 0
      %387 = vmatpush1.bf16.msra.mxu0 0
      %388 = vmatprep.subr.bf16.mxu0 0
      %389 = vmatpush1.bf16.msra.mxu0 0
      %390 = vmatprep.subr.bf16.mxu0 0
      %391 = vmatpush1.bf16.msra.mxu0 0
      %392 = vmatprep.subr.bf16.mxu0 0
      %393 = vmatpush1.bf16.msra.mxu0 0
      %394 = vmatprep.subr.bf16.mxu0 0
      %395 = vmatpush1.bf16.msra.mxu0 0
      %396 = vmatprep.subr.bf16.mxu0 0
      %397 = vmatpush1.bf16.msra.mxu0 0
      %398 = vmatprep.subr.bf16.mxu0 0
      %399 = vmatpush1.bf16.msra.mxu0 0
      %400 = vmatprep.subr.bf16.mxu0 0
      %401 = vmatpush1.bf16.msra.mxu0 0
      %402 = vmatprep.subr.bf16.mxu0 0
      %403 = vmatpush1.bf16.msra.mxu0 0
      %404 = vmatprep.subr.bf16.mxu0 0
      %405 = vmatpush1.bf16.msra.mxu0 0
      %406 = vmatprep.subr.bf16.mxu0 0
      %407 = vmatpush1.bf16.msra.mxu0 0
      %408 = vmatprep.subr.bf16.mxu0 0
      %409 = vmatpush1.bf16.msra.mxu0 0
      %410 = vmatprep.mubr.bf16.mxu0 0
      %411 = vmatmul.mubr.bf16.gmra.mrb[0].mxu0 %v376
      %v412 = vpop.f32.mrb[0].mxu0
      %v413 = vadd.f32 0.0, %v412
      %v414 = vpop.f32.mrb[0].mxu0
      %v415 = vpop.f32.mrb[0].mxu0
      %v416 = vadd.f32 0.0, %v415
      %v417 = vpop.f32.mrb[0].mxu0
      %418 = vdwg.mxu0
      %v421 = vunpack.c.l.b16 %v351
      %v422 = vunpack.c.l.b16 %v352
      %v423 = vpack.c.b16 %v422, %v421
      %v425 = vsel %vm374, %v360, 0
      %427 = vmatprep.subr.bf16.mxu0 0
      %428 = vmatpush1.bf16.msra.mxu0 %v423
      %429 = vmatprep.subr.bf16.mxu0 0
      %430 = vmatpush1.bf16.msra.mxu0 0
      %431 = vmatprep.subr.bf16.mxu0 0
      %432 = vmatpush1.bf16.msra.mxu0 0
      %433 = vmatprep.subr.bf16.mxu0 0
      %434 = vmatpush1.bf16.msra.mxu0 0
      %435 = vmatprep.subr.bf16.mxu0 0
      %436 = vmatpush1.bf16.msra.mxu0 0
      %437 = vmatprep.subr.bf16.mxu0 0
      %438 = vmatpush1.bf16.msra.mxu0 0
      %439 = vmatprep.subr.bf16.mxu0 0
      %440 = vmatpush1.bf16.msra.mxu0 0
      %441 = vmatprep.subr.bf16.mxu0 0
      %442 = vmatpush1.bf16.msra.mxu0 0
      %443 = vmatprep.subr.bf16.mxu0 0
      %444 = vmatpush1.bf16.msra.mxu0 0
      %445 = vmatprep.subr.bf16.mxu0 0
      %446 = vmatpush1.bf16.msra.mxu0 0
      %447 = vmatprep.subr.bf16.mxu0 0
      %448 = vmatpush1.bf16.msra.mxu0 0
      %449 = vmatprep.subr.bf16.mxu0 0
      %450 = vmatpush1.bf16.msra.mxu0 0
      %451 = vmatprep.subr.bf16.mxu0 0
      %452 = vmatpush1.bf16.msra.mxu0 0
      %453 = vmatprep.subr.bf16.mxu0 0
      %454 = vmatpush1.bf16.msra.mxu0 0
      %455 = vmatprep.subr.bf16.mxu0 0
      %456 = vmatpush1.bf16.msra.mxu0 0
      %457 = vmatprep.subr.bf16.mxu0 0
      %458 = vmatpush1.bf16.msra.mxu0 0
      %459 = vmatprep.mubr.bf16.mxu0 0
      %460 = vmatmul.mubr.bf16.gmra.mrb[0].mxu0 %v425
      %v461 = vpop.f32.mrb[0].mxu0
      %v462 = vadd.f32 %v413, %v461
      %v463 = vpop.f32.mrb[0].mxu0
      %v464 = vpop.f32.mrb[0].mxu0
      %v465 = vadd.f32 %v416, %v464
      %v466 = vpop.f32.mrb[0].mxu0
      %467 = vdwg.mxu0
      %v468 = vld [vmem:[%s337] sm:$0xe]
      %v469 = vld [vmem:[%s337 + $0x4] sm:$0xf]
      %v470 = vld [vmem:[%s337 + $0x8] sm:$0x1]
      %s471 = scalar_lea.vmem %s1, 16
      %v472 = vld [vmem:[%s471] sm:$0xf]
      %v473 = vld [vmem:[%s471 + $0x4] sm:$0xf]
      %v477 = vunpack.c.l.b16 %v468
      %v478 = vunpack.c.l.b16 %v469
      %v479 = vunpack.c.l.b16 %v470
      %v480 = vpack.c.b16 %v478, %v477
      %v481 = vpack.c.b16 %v479, %v479
      %vm482 = vcmask 1046528
      %v483 = vrot.slane %v480, 1
      %v484 = vrot.slane %v481, 1
      %v485 = vsel %vm482, %v483, %v484
      %v488 = vunpack.c.l.b16 %v472
      %v489 = vunpack.c.l.b16 %v473
      %v490 = vpack.c.b16 %v489, %v488
      %v493 = vsel %vm374, %v485, 0
      %495 = vmatprep.subr.bf16.mxu0 0
      %496 = vmatpush1.bf16.msra.mxu0 %v490
      %497 = vmatprep.subr.bf16.mxu0 0
      %498 = vmatpush1.bf16.msra.mxu0 0
      %499 = vmatprep.subr.bf16.mxu0 0
      %500 = vmatpush1.bf16.msra.mxu0 0
      %501 = vmatprep.subr.bf16.mxu0 0
      %502 = vmatpush1.bf16.msra.mxu0 0
      %503 = vmatprep.subr.bf16.mxu0 0
      %504 = vmatpush1.bf16.msra.mxu0 0
      %505 = vmatprep.subr.bf16.mxu0 0
      %506 = vmatpush1.bf16.msra.mxu0 0
      %507 = vmatprep.subr.bf16.mxu0 0
      %508 = vmatpush1.bf16.msra.mxu0 0
      %509 = vmatprep.subr.bf16.mxu0 0
      %510 = vmatpush1.bf16.msra.mxu0 0
      %511 = vmatprep.subr.bf16.mxu0 0
      %512 = vmatpush1.bf16.msra.mxu0 0
      %513 = vmatprep.subr.bf16.mxu0 0
      %514 = vmatpush1.bf16.msra.mxu0 0
      %515 = vmatprep.subr.bf16.mxu0 0
      %516 = vmatpush1.bf16.msra.mxu0 0
      %517 = vmatprep.subr.bf16.mxu0 0
      %518 = vmatpush1.bf16.msra.mxu0 0
      %519 = vmatprep.subr.bf16.mxu0 0
      %520 = vmatpush1.bf16.msra.mxu0 0
      %521 = vmatprep.subr.bf16.mxu0 0
      %522 = vmatpush1.bf16.msra.mxu0 0
      %523 = vmatprep.subr.bf16.mxu0 0
      %524 = vmatpush1.bf16.msra.mxu0 0
      %525 = vmatprep.subr.bf16.mxu0 0
      %526 = vmatpush1.bf16.msra.mxu0 0
      %527 = vmatprep.mubr.bf16.mxu0 0
      %528 = vmatmul.mubr.bf16.gmra.mrb[0].mxu0 %v493
      %v529 = vpop.f32.mrb[0].mxu0
      %v530 = vadd.f32 0.0, %v529
      %v531 = vpop.f32.mrb[0].mxu0
      %v532 = vpop.f32.mrb[0].mxu0
      %v533 = vadd.f32 0.0, %v532
      %v534 = vpop.f32.mrb[0].mxu0
      %535 = vdwg.mxu0
      %v536 = vadd.f32 %v462, %v530
      %v537 = vadd.f32 %v465, %v533
      %s538 = scalar_lea.vmem %s1, 24
      %v539 = vld [vmem:[%s538] sm:$0xf]
      %v540 = vld [vmem:[%s538 + $0x4] sm:$0xf]
      %vm541 = vsmask.f32 6400
      %v543 = vshrl.u32 %v480, 16
      %v545 = vrot.slane %v543, 1
      %v546 = vshll.u32 %v480, 16
      %v548 = vrot.slane %v546, 2
      %v549 = vor.u32 %v545, %v548
      %v551 = vshrl.u32 %v481, 16
      %v553 = vrot.slane %v551, 1
      %v554 = vshll.u32 %v481, 16
      %v556 = vrot.slane %v554, 2
      %v557 = vor.u32 %v553, %v556
      %v558 = vsel %vm541, %v549, %v557
      %v561 = vunpack.c.l.b16 %v539
      %v562 = vunpack.c.l.b16 %v540
      %v563 = vpack.c.b16 %v562, %v561
      %v566 = vsel %vm374, %v558, 0
      %568 = vmatprep.subr.bf16.mxu0 0
      %569 = vmatpush1.bf16.msra.mxu0 %v563
      %570 = vmatprep.subr.bf16.mxu0 0
      %571 = vmatpush1.bf16.msra.mxu0 0
      %572 = vmatprep.subr.bf16.mxu0 0
      %573 = vmatpush1.bf16.msra.mxu0 0
      %574 = vmatprep.subr.bf16.mxu0 0
      %575 = vmatpush1.bf16.msra.mxu0 0
      %576 = vmatprep.subr.bf16.mxu0 0
      %577 = vmatpush1.bf16.msra.mxu0 0
      %578 = vmatprep.subr.bf16.mxu0 0
      %579 = vmatpush1.bf16.msra.mxu0 0
      %580 = vmatprep.subr.bf16.mxu0 0
      %581 = vmatpush1.bf16.msra.mxu0 0
      %582 = vmatprep.subr.bf16.mxu0 0
      %583 = vmatpush1.bf16.msra.mxu0 0
      %584 = vmatprep.subr.bf16.mxu0 0
      %585 = vmatpush1.bf16.msra.mxu0 0
      %586 = vmatprep.subr.bf16.mxu0 0
      %587 = vmatpush1.bf16.msra.mxu0 0
      %588 = vmatprep.subr.bf16.mxu0 0
      %589 = vmatpush1.bf16.msra.mxu0 0
      %590 = vmatprep.subr.bf16.mxu0 0
      %591 = vmatpush1.bf16.msra.mxu0 0
      %592 = vmatprep.subr.bf16.mxu0 0
      %593 = vmatpush1.bf16.msra.mxu0 0
      %594 = vmatprep.subr.bf16.mxu0 0
      %595 = vmatpush1.bf16.msra.mxu0 0
      %596 = vmatprep.subr.bf16.mxu0 0
      %597 = vmatpush1.bf16.msra.mxu0 0
      %598 = vmatprep.subr.bf16.mxu0 0
      %599 = vmatpush1.bf16.msra.mxu0 0
      %600 = vmatprep.mubr.bf16.mxu0 0
      %601 = vmatmul.mubr.bf16.gmra.mrb[0].mxu0 %v566
      %v602 = vpop.f32.mrb[0].mxu0
      %v603 = vadd.f32 0.0, %v602
      %v604 = vpop.f32.mrb[0].mxu0
      %v605 = vpop.f32.mrb[0].mxu0
      %v606 = vadd.f32 0.0, %v605
      %v607 = vpop.f32.mrb[0].mxu0
      %608 = vdwg.mxu0
      %v609 = vadd.f32 %v536, %v603
      %v610 = vadd.f32 %v537, %v606
      %v611 = vld [vmem:[%s337] sm:$0x8]
      %v612 = vld [vmem:[%s337 + $0x8] sm:$0x7]
      %s613 = scalar_lea.vmem %s1, 32
      %v614 = vld [vmem:[%s613] sm:$0xf]
      %v615 = vld [vmem:[%s613 + $0x4] sm:$0xf]
      %v618 = vunpack.c.l.b16 %v611
      %v619 = vunpack.c.l.b16 %v612
      %v620 = vpack.c.b16 %v478, %v618
      %v621 = vpack.c.b16 %v619, %v619
      %vm622 = vcmask 1044480
      %v623 = vrot.slane %v620, 3
      %v624 = vrot.slane %v621, 3
      %v625 = vsel %vm622, %v623, %v624
      %v628 = vunpack.c.l.b16 %v614
      %v629 = vunpack.c.l.b16 %v615
      %v630 = vpack.c.b16 %v629, %v628
      %v633 = vsel %vm374, %v625, 0
      %635 = vmatprep.subr.bf16.mxu0 0
      %636 = vmatpush1.bf16.msra.mxu0 %v630
      %637 = vmatprep.subr.bf16.mxu0 0
      %638 = vmatpush1.bf16.msra.mxu0 0
      %639 = vmatprep.subr.bf16.mxu0 0
      %640 = vmatpush1.bf16.msra.mxu0 0
      %641 = vmatprep.subr.bf16.mxu0 0
      %642 = vmatpush1.bf16.msra.mxu0 0
      %643 = vmatprep.subr.bf16.mxu0 0
      %644 = vmatpush1.bf16.msra.mxu0 0
      %645 = vmatprep.subr.bf16.mxu0 0
      %646 = vmatpush1.bf16.msra.mxu0 0
      %647 = vmatprep.subr.bf16.mxu0 0
      %648 = vmatpush1.bf16.msra.mxu0 0
      %649 = vmatprep.subr.bf16.mxu0 0
      %650 = vmatpush1.bf16.msra.mxu0 0
      %651 = vmatprep.subr.bf16.mxu0 0
      %652 = vmatpush1.bf16.msra.mxu0 0
      %653 = vmatprep.subr.bf16.mxu0 0
      %654 = vmatpush1.bf16.msra.mxu0 0
      %655 = vmatprep.subr.bf16.mxu0 0
      %656 = vmatpush1.bf16.msra.mxu0 0
      %657 = vmatprep.subr.bf16.mxu0 0
      %658 = vmatpush1.bf16.msra.mxu0 0
      %659 = vmatprep.subr.bf16.mxu0 0
      %660 = vmatpush1.bf16.msra.mxu0 0
      %661 = vmatprep.subr.bf16.mxu0 0
      %662 = vmatpush1.bf16.msra.mxu0 0
      %663 = vmatprep.subr.bf16.mxu0 0
      %664 = vmatpush1.bf16.msra.mxu0 0
      %665 = vmatprep.subr.bf16.mxu0 0
      %666 = vmatpush1.bf16.msra.mxu0 0
      %667 = vmatprep.mubr.bf16.mxu0 0
      %668 = vmatmul.mubr.bf16.gmra.mrb[0].mxu0 %v633
      %v669 = vpop.f32.mrb[0].mxu0
      %v670 = vadd.f32 0.0, %v669
      %v671 = vpop.f32.mrb[0].mxu0
      %v672 = vpop.f32.mrb[0].mxu0
      %v673 = vadd.f32 0.0, %v672
      %v674 = vpop.f32.mrb[0].mxu0
      %675 = vdwg.mxu0
      %v676 = vadd.f32 %v609, %v670
      %v677 = vadd.f32 %v610, %v673
      %s678 = scalar_lea.vmem %s1, 40
      %v679 = vld [vmem:[%s678] sm:$0xf]
      %v680 = vld [vmem:[%s678 + $0x4] sm:$0xf]
      %vm681 = vsmask.f32 4352
      %v683 = vshrl.u32 %v620, 16
      %v685 = vrot.slane %v683, 3
      %v686 = vshll.u32 %v620, 16
      %v688 = vrot.slane %v686, 4
      %v689 = vor.u32 %v685, %v688
      %v691 = vshrl.u32 %v621, 16
      %v693 = vrot.slane %v691, 3
      %v694 = vshll.u32 %v621, 16
      %v696 = vrot.slane %v694, 4
      %v697 = vor.u32 %v693, %v696
      %v698 = vsel %vm681, %v689, %v697
      %v701 = vunpack.c.l.b16 %v679
      %v702 = vunpack.c.l.b16 %v680
      %v703 = vpack.c.b16 %v702, %v701
      %v706 = vsel %vm374, %v698, 0
      %708 = vmatprep.subr.bf16.mxu0 0
      %709 = vmatpush1.bf16.msra.mxu0 %v703
      %710 = vmatprep.subr.bf16.mxu0 0
      %711 = vmatpush1.bf16.msra.mxu0 0
      %712 = vmatprep.subr.bf16.mxu0 0
      %713 = vmatpush1.bf16.msra.mxu0 0
      %714 = vmatprep.subr.bf16.mxu0 0
      %715 = vmatpush1.bf16.msra.mxu0 0
      %716 = vmatprep.subr.bf16.mxu0 0
      %717 = vmatpush1.bf16.msra.mxu0 0
      %718 = vmatprep.subr.bf16.mxu0 0
      %719 = vmatpush1.bf16.msra.mxu0 0
      %720 = vmatprep.subr.bf16.mxu0 0
      %721 = vmatpush1.bf16.msra.mxu0 0
      %722 = vmatprep.subr.bf16.mxu0 0
      %723 = vmatpush1.bf16.msra.mxu0 0
      %724 = vmatprep.subr.bf16.mxu0 0
      %725 = vmatpush1.bf16.msra.mxu0 0
      %726 = vmatprep.subr.bf16.mxu0 0
      %727 = vmatpush1.bf16.msra.mxu0 0
      %728 = vmatprep.subr.bf16.mxu0 0
      %729 = vmatpush1.bf16.msra.mxu0 0
      %730 = vmatprep.subr.bf16.mxu0 0
      %731 = vmatpush1.bf16.msra.mxu0 0
      %732 = vmatprep.subr.bf16.mxu0 0
      %733 = vmatpush1.bf16.msra.mxu0 0
      %734 = vmatprep.subr.bf16.mxu0 0
      %735 = vmatpush1.bf16.msra.mxu0 0
      %736 = vmatprep.subr.bf16.mxu0 0
      %737 = vmatpush1.bf16.msra.mxu0 0
      %738 = vmatprep.subr.bf16.mxu0 0
      %739 = vmatpush1.bf16.msra.mxu0 0
      %740 = vmatprep.mubr.bf16.mxu0 0
      %741 = vmatmul.mubr.bf16.gmra.mrb[0].mxu0 %v706
      %v742 = vpop.f32.mrb[0].mxu0
      %v743 = vadd.f32 0.0, %v742
      %v744 = vpop.f32.mrb[0].mxu0
      %v745 = vpop.f32.mrb[0].mxu0
      %v746 = vadd.f32 0.0, %v745
      %v747 = vpop.f32.mrb[0].mxu0
      %748 = vdwg.mxu0
      %v749 = vadd.f32 %v676, %v743
      %v750 = vadd.f32 %v677, %v746
      %v751 = vld [vmem:[%s337 + $0x8] sm:$0xf]
      %s752 = scalar_lea.vmem %s1, 48
      %v753 = vld [vmem:[%s752] sm:$0xf]
      %v754 = vld [vmem:[%s752 + $0x4] sm:$0xf]
      %v756 = vunpack.c.l.b16 %v751
      %v757 = vpack.c.b16 %v756, %v478
      %v760 = vunpack.c.l.b16 %v753
      %v761 = vunpack.c.l.b16 %v754
      %v762 = vpack.c.b16 %v761, %v760
      %v765 = vsel %vm374, %v757, 0
      %767 = vmatprep.subr.bf16.mxu0 0
      %768 = vmatpush1.bf16.msra.mxu0 %v762
      %769 = vmatprep.subr.bf16.mxu0 0
      %770 = vmatpush1.bf16.msra.mxu0 0
      %771 = vmatprep.subr.bf16.mxu0 0
      %772 = vmatpush1.bf16.msra.mxu0 0
      %773 = vmatprep.subr.bf16.mxu0 0
      %774 = vmatpush1.bf16.msra.mxu0 0
      %775 = vmatprep.subr.bf16.mxu0 0
      %776 = vmatpush1.bf16.msra.mxu0 0
      %777 = vmatprep.subr.bf16.mxu0 0
      %778 = vmatpush1.bf16.msra.mxu0 0
      %779 = vmatprep.subr.bf16.mxu0 0
      %780 = vmatpush1.bf16.msra.mxu0 0
      %781 = vmatprep.subr.bf16.mxu0 0
      %782 = vmatpush1.bf16.msra.mxu0 0
      %783 = vmatprep.subr.bf16.mxu0 0
      %784 = vmatpush1.bf16.msra.mxu0 0
      %785 = vmatprep.subr.bf16.mxu0 0
      %786 = vmatpush1.bf16.msra.mxu0 0
      %787 = vmatprep.subr.bf16.mxu0 0
      %788 = vmatpush1.bf16.msra.mxu0 0
      %789 = vmatprep.subr.bf16.mxu0 0
      %790 = vmatpush1.bf16.msra.mxu0 0
      %791 = vmatprep.subr.bf16.mxu0 0
      %792 = vmatpush1.bf16.msra.mxu0 0
      %793 = vmatprep.subr.bf16.mxu0 0
      %794 = vmatpush1.bf16.msra.mxu0 0
      %795 = vmatprep.subr.bf16.mxu0 0
      %796 = vmatpush1.bf16.msra.mxu0 0
      %797 = vmatprep.subr.bf16.mxu0 0
      %798 = vmatpush1.bf16.msra.mxu0 0
      %799 = vmatprep.mubr.bf16.mxu0 0
      %800 = vmatmul.mubr.bf16.gmra.mrb[0].mxu0 %v765
      %v801 = vpop.f32.mrb[0].mxu0
      %v802 = vadd.f32 0.0, %v801
      %v803 = vpop.f32.mrb[0].mxu0
      %v804 = vpop.f32.mrb[0].mxu0
      %v805 = vadd.f32 0.0, %v804
      %v806 = vpop.f32.mrb[0].mxu0
      %807 = vdwg.mxu0
      %v808 = vadd.f32 %v749, %v802
      %v809 = vadd.f32 %v750, %v805
      %s810 = scalar_lea.vmem %s1, 56
      %v811 = vld [vmem:[%s810] sm:$0xf]
      %v812 = vld [vmem:[%s810 + $0x4] sm:$0xf]
      %v813 = vshrl.u32 %v757, 16
      %v815 = vshll.u32 %v757, 16
      %v817 = vrot.slane %v815, 1
      %v818 = vor.u32 %v813, %v817
      %v821 = vunpack.c.l.b16 %v811
      %v822 = vunpack.c.l.b16 %v812
      %v823 = vpack.c.b16 %v822, %v821
      %v826 = vsel %vm374, %v818, 0
      %828 = vmatprep.subr.bf16.mxu0 0
      %829 = vmatpush1.bf16.msra.mxu0 %v823
      %830 = vmatprep.subr.bf16.mxu0 0
      %831 = vmatpush1.bf16.msra.mxu0 0
      %832 = vmatprep.subr.bf16.mxu0 0
      %833 = vmatpush1.bf16.msra.mxu0 0
      %834 = vmatprep.subr.bf16.mxu0 0
      %835 = vmatpush1.bf16.msra.mxu0 0
      %836 = vmatprep.subr.bf16.mxu0 0
      %837 = vmatpush1.bf16.msra.mxu0 0
      %838 = vmatprep.subr.bf16.mxu0 0
      %839 = vmatpush1.bf16.msra.mxu0 0
      %840 = vmatprep.subr.bf16.mxu0 0
      %841 = vmatpush1.bf16.msra.mxu0 0
      %842 = vmatprep.subr.bf16.mxu0 0
      %843 = vmatpush1.bf16.msra.mxu0 0
      %844 = vmatprep.subr.bf16.mxu0 0
      %845 = vmatpush1.bf16.msra.mxu0 0
      %846 = vmatprep.subr.bf16.mxu0 0
      %847 = vmatpush1.bf16.msra.mxu0 0
      %848 = vmatprep.subr.bf16.mxu0 0
      %849 = vmatpush1.bf16.msra.mxu0 0
      %850 = vmatprep.subr.bf16.mxu0 0
      %851 = vmatpush1.bf16.msra.mxu0 0
      %852 = vmatprep.subr.bf16.mxu0 0
      %853 = vmatpush1.bf16.msra.mxu0 0
      %854 = vmatprep.subr.bf16.mxu0 0
      %855 = vmatpush1.bf16.msra.mxu0 0
      %856 = vmatprep.subr.bf16.mxu0 0
      %857 = vmatpush1.bf16.msra.mxu0 0
      %858 = vmatprep.subr.bf16.mxu0 0
      %859 = vmatpush1.bf16.msra.mxu0 0
      %860 = vmatprep.mubr.bf16.mxu0 0
      %861 = vmatmul.mubr.bf16.gmra.mrb[0].mxu0 %v826
      %v862 = vpop.f32.mrb[0].mxu0
      %v863 = vadd.f32 0.0, %v862
      %v864 = vpop.f32.mrb[0].mxu0
      %v865 = vpop.f32.mrb[0].mxu0
      %v866 = vadd.f32 0.0, %v865
      %v867 = vpop.f32.mrb[0].mxu0
      %868 = vdwg.mxu0
      %v869 = vadd.f32 %v808, %v863
      %v870 = vadd.f32 %v809, %v866
      %v871 = vld [vmem:[%s337 + $0x4] sm:$0xc]
      %v872 = vld [vmem:[%s337 + $0x8] sm:$0xf]
      %v873 = vld [vmem:[%s337 + $0xc] sm:$0x3]
      %s874 = scalar_lea.vmem %s1, 64
      %v875 = vld [vmem:[%s874] sm:$0xf]
      %v876 = vld [vmem:[%s874 + $0x4] sm:$0xf]
      %v880 = vunpack.c.l.b16 %v871
      %v881 = vunpack.c.l.b16 %v872
      %v882 = vunpack.c.l.b16 %v873
      %v883 = vpack.c.b16 %v881, %v880
      %v884 = vpack.c.b16 %v882, %v882
      %vm885 = vcmask 1045504
      %v886 = vrot.slane %v883, 2
      %v887 = vrot.slane %v884, 2
      %v888 = vsel %vm885, %v886, %v887
      %v891 = vunpack.c.l.b16 %v875
      %v892 = vunpack.c.l.b16 %v876
      %v893 = vpack.c.b16 %v892, %v891
      %v896 = vsel %vm374, %v888, 0
      %898 = vmatprep.subr.bf16.mxu0 0
      %899 = vmatpush1.bf16.msra.mxu0 %v893
      %900 = vmatprep.subr.bf16.mxu0 0
      %901 = vmatpush1.bf16.msra.mxu0 0
      %902 = vmatprep.subr.bf16.mxu0 0
      %903 = vmatpush1.bf16.msra.mxu0 0
      %904 = vmatprep.subr.bf16.mxu0 0
      %905 = vmatpush1.bf16.msra.mxu0 0
      %906 = vmatprep.subr.bf16.mxu0 0
      %907 = vmatpush1.bf16.msra.mxu0 0
      %908 = vmatprep.subr.bf16.mxu0 0
      %909 = vmatpush1.bf16.msra.mxu0 0
      %910 = vmatprep.subr.bf16.mxu0 0
      %911 = vmatpush1.bf16.msra.mxu0 0
      %912 = vmatprep.subr.bf16.mxu0 0
      %913 = vmatpush1.bf16.msra.mxu0 0
      %914 = vmatprep.subr.bf16.mxu0 0
      %915 = vmatpush1.bf16.msra.mxu0 0
      %916 = vmatprep.subr.bf16.mxu0 0
      %917 = vmatpush1.bf16.msra.mxu0 0
      %918 = vmatprep.subr.bf16.mxu0 0
      %919 = vmatpush1.bf16.msra.mxu0 0
      %920 = vmatprep.subr.bf16.mxu0 0
      %921 = vmatpush1.bf16.msra.mxu0 0
      %922 = vmatprep.subr.bf16.mxu0 0
      %923 = vmatpush1.bf16.msra.mxu0 0
      %924 = vmatprep.subr.bf16.mxu0 0
      %925 = vmatpush1.bf16.msra.mxu0 0
      %926 = vmatprep.subr.bf16.mxu0 0
      %927 = vmatpush1.bf16.msra.mxu0 0
      %928 = vmatprep.subr.bf16.mxu0 0
      %929 = vmatpush1.bf16.msra.mxu0 0
      %930 = vmatprep.mubr.bf16.mxu0 0
      %931 = vmatmul.mubr.bf16.gmra.mrb[0].mxu0 %v896
      %v932 = vpop.f32.mrb[0].mxu0
      %v933 = vadd.f32 0.0, %v932
      %v934 = vpop.f32.mrb[0].mxu0
      %v935 = vpop.f32.mrb[0].mxu0
      %v936 = vadd.f32 0.0, %v935
      %v937 = vpop.f32.mrb[0].mxu0
      %938 = vdwg.mxu0
      %v939 = vadd.f32 %v869, %v933
      %v940 = vadd.f32 %v870, %v936
      %s941 = scalar_lea.vmem %s1, 72
      %v942 = vld [vmem:[%s941] sm:$0xf]
      %v943 = vld [vmem:[%s941 + $0x4] sm:$0xf]
      %vm944 = vsmask.f32 5376
      %v946 = vshrl.u32 %v883, 16
      %v948 = vrot.slane %v946, 2
      %v949 = vshll.u32 %v883, 16
      %v951 = vrot.slane %v949, 3
      %v952 = vor.u32 %v948, %v951
      %v954 = vshrl.u32 %v884, 16
      %v956 = vrot.slane %v954, 2
      %v957 = vshll.u32 %v884, 16
      %v959 = vrot.slane %v957, 3
      %v960 = vor.u32 %v956, %v959
      %v961 = vsel %vm944, %v952, %v960
      %v964 = vunpack.c.l.b16 %v942
      %v965 = vunpack.c.l.b16 %v943
      %v966 = vpack.c.b16 %v965, %v964
      %v969 = vsel %vm374, %v961, 0
      %971 = vmatprep.subr.bf16.mxu0 0
      %972 = vmatpush1.bf16.msra.mxu0 %v966
      %973 = vmatprep.subr.bf16.mxu0 0
      %974 = vmatpush1.bf16.msra.mxu0 0
      %975 = vmatprep.subr.bf16.mxu0 0
      %976 = vmatpush1.bf16.msra.mxu0 0
      %977 = vmatprep.subr.bf16.mxu0 0
      %978 = vmatpush1.bf16.msra.mxu0 0
      %979 = vmatprep.subr.bf16.mxu0 0
      %980 = vmatpush1.bf16.msra.mxu0 0
      %981 = vmatprep.subr.bf16.mxu0 0
      %982 = vmatpush1.bf16.msra.mxu0 0
      %983 = vmatprep.subr.bf16.mxu0 0
      %984 = vmatpush1.bf16.msra.mxu0 0
      %985 = vmatprep.subr.bf16.mxu0 0
      %986 = vmatpush1.bf16.msra.mxu0 0
      %987 = vmatprep.subr.bf16.mxu0 0
      %988 = vmatpush1.bf16.msra.mxu0 0
      %989 = vmatprep.subr.bf16.mxu0 0
      %990 = vmatpush1.bf16.msra.mxu0 0
      %991 = vmatprep.subr.bf16.mxu0 0
      %992 = vmatpush1.bf16.msra.mxu0 0
      %993 = vmatprep.subr.bf16.mxu0 0
      %994 = vmatpush1.bf16.msra.mxu0 0
      %995 = vmatprep.subr.bf16.mxu0 0
      %996 = vmatpush1.bf16.msra.mxu0 0
      %997 = vmatprep.subr.bf16.mxu0 0
      %998 = vmatpush1.bf16.msra.mxu0 0
      %999 = vmatprep.subr.bf16.mxu0 0
      %1000 = vmatpush1.bf16.msra.mxu0 0
      %1001 = vmatprep.subr.bf16.mxu0 0
      %1002 = vmatpush1.bf16.msra.mxu0 0
      %1003 = vmatprep.mubr.bf16.mxu0 0
      %1004 = vmatmul.mubr.bf16.gmra.mrb[0].mxu0 %v969
      %v1005 = vpop.f32.mrb[0].mxu0
      %v1006 = vadd.f32 0.0, %v1005
      %v1007 = vpop.f32.mrb[0].mxu0
      %v1008 = vpop.f32.mrb[0].mxu0
      %v1009 = vadd.f32 0.0, %v1008
      %v1010 = vpop.f32.mrb[0].mxu0
      %1011 = vdwg.mxu0
      %v1012 = vadd.f32 %v939, %v1006
      %v1013 = vadd.f32 %v940, %v1009
      %v1014 = vld [vmem:[%s337 + $0x4] sm:$0x8]
      %v1015 = vld [vmem:[%s337 + $0xc] sm:$0x7]
      %s1016 = scalar_lea.vmem %s1, 80
      %v1017 = vld [vmem:[%s1016] sm:$0xf]
      %v1018 = vld [vmem:[%s1016 + $0x4] sm:$0xf]
      %v1021 = vunpack.c.l.b16 %v1014
      %v1022 = vunpack.c.l.b16 %v1015
      %v1023 = vpack.c.b16 %v881, %v1021
      %v1024 = vpack.c.b16 %v1022, %v1022
      %v1025 = vrot.slane %v1023, 3
      %v1026 = vrot.slane %v1024, 3
      %v1027 = vsel %vm622, %v1025, %v1026
      %v1030 = vunpack.c.l.b16 %v1017
      %v1031 = vunpack.c.l.b16 %v1018
      %v1032 = vpack.c.b16 %v1031, %v1030
      %v1035 = vsel %vm374, %v1027, 0
      %1037 = vmatprep.subr.bf16.mxu0 0
      %1038 = vmatpush1.bf16.msra.mxu0 %v1032
      %1039 = vmatprep.subr.bf16.mxu0 0
      %1040 = vmatpush1.bf16.msra.mxu0 0
      %1041 = vmatprep.subr.bf16.mxu0 0
      %1042 = vmatpush1.bf16.msra.mxu0 0
      %1043 = vmatprep.subr.bf16.mxu0 0
      %1044 = vmatpush1.bf16.msra.mxu0 0
      %1045 = vmatprep.subr.bf16.mxu0 0
      %1046 = vmatpush1.bf16.msra.mxu0 0
      %1047 = vmatprep.subr.bf16.mxu0 0
      %1048 = vmatpush1.bf16.msra.mxu0 0
      %1049 = vmatprep.subr.bf16.mxu0 0
      %1050 = vmatpush1.bf16.msra.mxu0 0
      %1051 = vmatprep.subr.bf16.mxu0 0
      %1052 = vmatpush1.bf16.msra.mxu0 0
      %1053 = vmatprep.subr.bf16.mxu0 0
      %1054 = vmatpush1.bf16.msra.mxu0 0
      %1055 = vmatprep.subr.bf16.mxu0 0
      %1056 = vmatpush1.bf16.msra.mxu0 0
      %1057 = vmatprep.subr.bf16.mxu0 0
      %1058 = vmatpush1.bf16.msra.mxu0 0
      %1059 = vmatprep.subr.bf16.mxu0 0
      %1060 = vmatpush1.bf16.msra.mxu0 0
      %1061 = vmatprep.subr.bf16.mxu0 0
      %1062 = vmatpush1.bf16.msra.mxu0 0
      %1063 = vmatprep.subr.bf16.mxu0 0
      %1064 = vmatpush1.bf16.msra.mxu0 0
      %1065 = vmatprep.subr.bf16.mxu0 0
      %1066 = vmatpush1.bf16.msra.mxu0 0
      %1067 = vmatprep.subr.bf16.mxu0 0
      %1068 = vmatpush1.bf16.msra.mxu0 0
      %1069 = vmatprep.mubr.bf16.mxu0 0
      %1070 = vmatmul.mubr.bf16.gmra.mrb[0].mxu0 %v1035
      %v1071 = vpop.f32.mrb[0].mxu0
      %v1072 = vadd.f32 0.0, %v1071
      %v1073 = vpop.f32.mrb[0].mxu0
      %v1074 = vpop.f32.mrb[0].mxu0
      %v1075 = vadd.f32 0.0, %v1074
      %v1076 = vpop.f32.mrb[0].mxu0
      %1077 = vdwg.mxu0
      %v1078 = vadd.f32 %v1012, %v1072
      %v1079 = vadd.f32 %v1013, %v1075
      %s1080 = scalar_lea.vmem %s1, 88
      %v1081 = vld [vmem:[%s1080] sm:$0xf]
      %v1082 = vld [vmem:[%s1080 + $0x4] sm:$0xf]
      %v1084 = vshrl.u32 %v1023, 16
      %v1086 = vrot.slane %v1084, 3
      %v1087 = vshll.u32 %v1023, 16
      %v1089 = vrot.slane %v1087, 4
      %v1090 = vor.u32 %v1086, %v1089
      %v1092 = vshrl.u32 %v1024, 16
      %v1094 = vrot.slane %v1092, 3
      %v1095 = vshll.u32 %v1024, 16
      %v1097 = vrot.slane %v1095, 4
      %v1098 = vor.u32 %v1094, %v1097
      %v1099 = vsel %vm681, %v1090, %v1098
      %v1102 = vunpack.c.l.b16 %v1081
      %v1103 = vunpack.c.l.b16 %v1082
      %v1104 = vpack.c.b16 %v1103, %v1102
      %v1107 = vsel %vm374, %v1099, 0
      %1109 = vmatprep.subr.bf16.mxu0 0
      %1110 = vmatpush1.bf16.msra.mxu0 %v1104
      %1111 = vmatprep.subr.bf16.mxu0 0
      %1112 = vmatpush1.bf16.msra.mxu0 0
      %1113 = vmatprep.subr.bf16.mxu0 0
      %1114 = vmatpush1.bf16.msra.mxu0 0
      %1115 = vmatprep.subr.bf16.mxu0 0
      %1116 = vmatpush1.bf16.msra.mxu0 0
      %1117 = vmatprep.subr.bf16.mxu0 0
      %1118 = vmatpush1.bf16.msra.mxu0 0
      %1119 = vmatprep.subr.bf16.mxu0 0
      %1120 = vmatpush1.bf16.msra.mxu0 0
      %1121 = vmatprep.subr.bf16.mxu0 0
      %1122 = vmatpush1.bf16.msra.mxu0 0
      %1123 = vmatprep.subr.bf16.mxu0 0
      %1124 = vmatpush1.bf16.msra.mxu0 0
      %1125 = vmatprep.subr.bf16.mxu0 0
      %1126 = vmatpush1.bf16.msra.mxu0 0
      %1127 = vmatprep.subr.bf16.mxu0 0
      %1128 = vmatpush1.bf16.msra.mxu0 0
      %1129 = vmatprep.subr.bf16.mxu0 0
      %1130 = vmatpush1.bf16.msra.mxu0 0
      %1131 = vmatprep.subr.bf16.mxu0 0
      %1132 = vmatpush1.bf16.msra.mxu0 0
      %1133 = vmatprep.subr.bf16.mxu0 0
      %1134 = vmatpush1.bf16.msra.mxu0 0
      %1135 = vmatprep.subr.bf16.mxu0 0
      %1136 = vmatpush1.bf16.msra.mxu0 0
      %1137 = vmatprep.subr.bf16.mxu0 0
      %1138 = vmatpush1.bf16.msra.mxu0 0
      %1139 = vmatprep.subr.bf16.mxu0 0
      %1140 = vmatpush1.bf16.msra.mxu0 0
      %1141 = vmatprep.mubr.bf16.mxu0 0
      %1142 = vmatmul.mubr.bf16.gmra.mrb[0].mxu0 %v1107
      %v1143 = vpop.f32.mrb[0].mxu0
      %v1144 = vadd.f32 0.0, %v1143
      %v1145 = vpop.f32.mrb[0].mxu0
      %v1146 = vpop.f32.mrb[0].mxu0
      %v1147 = vadd.f32 0.0, %v1146
      %v1148 = vpop.f32.mrb[0].mxu0
      %1149 = vdwg.mxu0
      %v1150 = vadd.f32 %v1078, %v1144
      %v1151 = vadd.f32 %v1079, %v1147
      %v1152 = vld [vmem:[%s337 + $0x8] sm:$0xe]
      %v1153 = vld [vmem:[%s337 + $0xc] sm:$0xf]
      %v1154 = vld [vmem:[%s337 + $0x10] sm:$0x1]
      %s1155 = scalar_lea.vmem %s1, 96
      %v1156 = vld [vmem:[%s1155] sm:$0xf]
      %v1157 = vld [vmem:[%s1155 + $0x4] sm:$0xf]
      %v1161 = vunpack.c.l.b16 %v1152
      %v1162 = vunpack.c.l.b16 %v1153
      %v1163 = vunpack.c.l.b16 %v1154
      %v1164 = vpack.c.b16 %v1162, %v1161
      %v1165 = vpack.c.b16 %v1163, %v1163
      %v1166 = vrot.slane %v1164, 1
      %v1167 = vrot.slane %v1165, 1
      %v1168 = vsel %vm482, %v1166, %v1167
      %v1171 = vunpack.c.l.b16 %v1156
      %v1172 = vunpack.c.l.b16 %v1157
      %v1173 = vpack.c.b16 %v1172, %v1171
      %v1176 = vsel %vm374, %v1168, 0
      %1178 = vmatprep.subr.bf16.mxu0 0
      %1179 = vmatpush1.bf16.msra.mxu0 %v1173
      %1180 = vmatprep.subr.bf16.mxu0 0
      %1181 = vmatpush1.bf16.msra.mxu0 0
      %1182 = vmatprep.subr.bf16.mxu0 0
      %1183 = vmatpush1.bf16.msra.mxu0 0
      %1184 = vmatprep.subr.bf16.mxu0 0
      %1185 = vmatpush1.bf16.msra.mxu0 0
      %1186 = vmatprep.subr.bf16.mxu0 0
      %1187 = vmatpush1.bf16.msra.mxu0 0
      %1188 = vmatprep.subr.bf16.mxu0 0
      %1189 = vmatpush1.bf16.msra.mxu0 0
      %1190 = vmatprep.subr.bf16.mxu0 0
      %1191 = vmatpush1.bf16.msra.mxu0 0
      %1192 = vmatprep.subr.bf16.mxu0 0
      %1193 = vmatpush1.bf16.msra.mxu0 0
      %1194 = vmatprep.subr.bf16.mxu0 0
      %1195 = vmatpush1.bf16.msra.mxu0 0
      %1196 = vmatprep.subr.bf16.mxu0 0
      %1197 = vmatpush1.bf16.msra.mxu0 0
      %1198 = vmatprep.subr.bf16.mxu0 0
      %1199 = vmatpush1.bf16.msra.mxu0 0
      %1200 = vmatprep.subr.bf16.mxu0 0
      %1201 = vmatpush1.bf16.msra.mxu0 0
      %1202 = vmatprep.subr.bf16.mxu0 0
      %1203 = vmatpush1.bf16.msra.mxu0 0
      %1204 = vmatprep.subr.bf16.mxu0 0
      %1205 = vmatpush1.bf16.msra.mxu0 0
      %1206 = vmatprep.subr.bf16.mxu0 0
      %1207 = vmatpush1.bf16.msra.mxu0 0
      %1208 = vmatprep.subr.bf16.mxu0 0
      %1209 = vmatpush1.bf16.msra.mxu0 0
      %1210 = vmatprep.mubr.bf16.mxu0 0
      %1211 = vmatmul.mubr.bf16.gmra.mrb[0].mxu0 %v1176
      %v1212 = vpop.f32.mrb[0].mxu0
      %v1213 = vadd.f32 0.0, %v1212
      %v1214 = vpop.f32.mrb[0].mxu0
      %v1215 = vpop.f32.mrb[0].mxu0
      %v1216 = vadd.f32 0.0, %v1215
      %v1217 = vpop.f32.mrb[0].mxu0
      %1218 = vdwg.mxu0
      %v1219 = vadd.f32 %v1150, %v1213
      %v1220 = vadd.f32 %v1151, %v1216
      %s1221 = scalar_lea.vmem %s1, 104
      %v1222 = vld [vmem:[%s1221] sm:$0xf]
      %v1223 = vld [vmem:[%s1221 + $0x4] sm:$0xf]
      %v1225 = vshrl.u32 %v1164, 16
      %v1227 = vrot.slane %v1225, 1
      %v1228 = vshll.u32 %v1164, 16
      %v1230 = vrot.slane %v1228, 2
      %v1231 = vor.u32 %v1227, %v1230
      %v1233 = vshrl.u32 %v1165, 16
      %v1235 = vrot.slane %v1233, 1
      %v1236 = vshll.u32 %v1165, 16
      %v1238 = vrot.slane %v1236, 2
      %v1239 = vor.u32 %v1235, %v1238
      %v1240 = vsel %vm541, %v1231, %v1239
      %v1243 = vunpack.c.l.b16 %v1222
      %v1244 = vunpack.c.l.b16 %v1223
      %v1245 = vpack.c.b16 %v1244, %v1243
      %v1248 = vsel %vm374, %v1240, 0
      %1250 = vmatprep.subr.bf16.mxu0 0
      %1251 = vmatpush1.bf16.msra.mxu0 %v1245
      %1252 = vmatprep.subr.bf16.mxu0 0
      %1253 = vmatpush1.bf16.msra.mxu0 0
      %1254 = vmatprep.subr.bf16.mxu0 0
      %1255 = vmatpush1.bf16.msra.mxu0 0
      %1256 = vmatprep.subr.bf16.mxu0 0
      %1257 = vmatpush1.bf16.msra.mxu0 0
      %1258 = vmatprep.subr.bf16.mxu0 0
      %1259 = vmatpush1.bf16.msra.mxu0 0
      %1260 = vmatprep.subr.bf16.mxu0 0
      %1261 = vmatpush1.bf16.msra.mxu0 0
      %1262 = vmatprep.subr.bf16.mxu0 0
      %1263 = vmatpush1.bf16.msra.mxu0 0
      %1264 = vmatprep.subr.bf16.mxu0 0
      %1265 = vmatpush1.bf16.msra.mxu0 0
      %1266 = vmatprep.subr.bf16.mxu0 0
      %1267 = vmatpush1.bf16.msra.mxu0 0
      %1268 = vmatprep.subr.bf16.mxu0 0
      %1269 = vmatpush1.bf16.msra.mxu0 0
      %1270 = vmatprep.subr.bf16.mxu0 0
      %1271 = vmatpush1.bf16.msra.mxu0 0
      %1272 = vmatprep.subr.bf16.mxu0 0
      %1273 = vmatpush1.bf16.msra.mxu0 0
      %1274 = vmatprep.subr.bf16.mxu0 0
      %1275 = vmatpush1.bf16.msra.mxu0 0
      %1276 = vmatprep.subr.bf16.mxu0 0
      %1277 = vmatpush1.bf16.msra.mxu0 0
      %1278 = vmatprep.subr.bf16.mxu0 0
      %1279 = vmatpush1.bf16.msra.mxu0 0
      %1280 = vmatprep.subr.bf16.mxu0 0
      %1281 = vmatpush1.bf16.msra.mxu0 0
      %1282 = vmatprep.mubr.bf16.mxu0 0
      %1283 = vmatmul.mubr.bf16.gmra.mrb[0].mxu0 %v1248
      %v1284 = vpop.f32.mrb[0].mxu0
      %v1285 = vadd.f32 0.0, %v1284
      %v1286 = vpop.f32.mrb[0].mxu0
      %v1287 = vpop.f32.mrb[0].mxu0
      %v1288 = vadd.f32 0.0, %v1287
      %v1289 = vpop.f32.mrb[0].mxu0
      %1290 = vdwg.mxu0
      %v1291 = vadd.f32 %v1219, %v1285
      %v1292 = vadd.f32 %v1220, %v1288
      %v1293 = vld [vmem:[%s337 + $0x8] sm:$0xc]
      %v1294 = vld [vmem:[%s337 + $0x10] sm:$0x3]
      %s1295 = scalar_lea.vmem %s1, 112
      %v1296 = vld [vmem:[%s1295] sm:$0xf]
      %v1297 = vld [vmem:[%s1295 + $0x4] sm:$0xf]
      %v1300 = vunpack.c.l.b16 %v1293
      %v1301 = vunpack.c.l.b16 %v1294
      %v1302 = vpack.c.b16 %v1162, %v1300
      %v1303 = vpack.c.b16 %v1301, %v1301
      %v1304 = vrot.slane %v1302, 2
      %v1305 = vrot.slane %v1303, 2
      %v1306 = vsel %vm885, %v1304, %v1305
      %v1309 = vunpack.c.l.b16 %v1296
      %v1310 = vunpack.c.l.b16 %v1297
      %v1311 = vpack.c.b16 %v1310, %v1309
      %v1314 = vsel %vm374, %v1306, 0
      %1316 = vmatprep.subr.bf16.mxu0 0
      %1317 = vmatpush1.bf16.msra.mxu0 %v1311
      %1318 = vmatprep.subr.bf16.mxu0 0
      %1319 = vmatpush1.bf16.msra.mxu0 0
      %1320 = vmatprep.subr.bf16.mxu0 0
      %1321 = vmatpush1.bf16.msra.mxu0 0
      %1322 = vmatprep.subr.bf16.mxu0 0
      %1323 = vmatpush1.bf16.msra.mxu0 0
      %1324 = vmatprep.subr.bf16.mxu0 0
      %1325 = vmatpush1.bf16.msra.mxu0 0
      %1326 = vmatprep.subr.bf16.mxu0 0
      %1327 = vmatpush1.bf16.msra.mxu0 0
      %1328 = vmatprep.subr.bf16.mxu0 0
      %1329 = vmatpush1.bf16.msra.mxu0 0
      %1330 = vmatprep.subr.bf16.mxu0 0
      %1331 = vmatpush1.bf16.msra.mxu0 0
      %1332 = vmatprep.subr.bf16.mxu0 0
      %1333 = vmatpush1.bf16.msra.mxu0 0
      %1334 = vmatprep.subr.bf16.mxu0 0
      %1335 = vmatpush1.bf16.msra.mxu0 0
      %1336 = vmatprep.subr.bf16.mxu0 0
      %1337 = vmatpush1.bf16.msra.mxu0 0
      %1338 = vmatprep.subr.bf16.mxu0 0
      %1339 = vmatpush1.bf16.msra.mxu0 0
      %1340 = vmatprep.subr.bf16.mxu0 0
      %1341 = vmatpush1.bf16.msra.mxu0 0
      %1342 = vmatprep.subr.bf16.mxu0 0
      %1343 = vmatpush1.bf16.msra.mxu0 0
      %1344 = vmatprep.subr.bf16.mxu0 0
      %1345 = vmatpush1.bf16.msra.mxu0 0
      %1346 = vmatprep.subr.bf16.mxu0 0
      %1347 = vmatpush1.bf16.msra.mxu0 0
      %1348 = vmatprep.mubr.bf16.mxu0 0
      %1349 = vmatmul.mubr.bf16.gmra.mrb[0].mxu0 %v1314
      %v1350 = vpop.f32.mrb[0].mxu0
      %v1351 = vadd.f32 0.0, %v1350
      %v1352 = vpop.f32.mrb[0].mxu0
      %v1353 = vpop.f32.mrb[0].mxu0
      %v1354 = vadd.f32 0.0, %v1353
      %v1355 = vpop.f32.mrb[0].mxu0
      %1356 = vdwg.mxu0
      %v1357 = vadd.f32 %v1291, %v1351
      %v1358 = vadd.f32 %v1292, %v1354
      %s1359 = scalar_lea.vmem %s1, 120
      %v1360 = vld [vmem:[%s1359] sm:$0xf]
      %v1361 = vld [vmem:[%s1359 + $0x4] sm:$0xf]
      %v1363 = vshrl.u32 %v1302, 16
      %v1365 = vrot.slane %v1363, 2
      %v1366 = vshll.u32 %v1302, 16
      %v1368 = vrot.slane %v1366, 3
      %v1369 = vor.u32 %v1365, %v1368
      %v1371 = vshrl.u32 %v1303, 16
      %v1373 = vrot.slane %v1371, 2
      %v1374 = vshll.u32 %v1303, 16
      %v1376 = vrot.slane %v1374, 3
      %v1377 = vor.u32 %v1373, %v1376
      %v1378 = vsel %vm944, %v1369, %v1377
      %v1381 = vunpack.c.l.b16 %v1360
      %v1382 = vunpack.c.l.b16 %v1361
      %v1383 = vpack.c.b16 %v1382, %v1381
      %v1386 = vsel %vm374, %v1378, 0
      %1388 = vmatprep.subr.bf16.mxu0 0
      %1389 = vmatpush1.bf16.msra.mxu0 %v1383
      %1390 = vmatprep.subr.bf16.mxu0 0
      %1391 = vmatpush1.bf16.msra.mxu0 0
      %1392 = vmatprep.subr.bf16.mxu0 0
      %1393 = vmatpush1.bf16.msra.mxu0 0
      %1394 = vmatprep.subr.bf16.mxu0 0
      %1395 = vmatpush1.bf16.msra.mxu0 0
      %1396 = vmatprep.subr.bf16.mxu0 0
      %1397 = vmatpush1.bf16.msra.mxu0 0
      %1398 = vmatprep.subr.bf16.mxu0 0
      %1399 = vmatpush1.bf16.msra.mxu0 0
      %1400 = vmatprep.subr.bf16.mxu0 0
      %1401 = vmatpush1.bf16.msra.mxu0 0
      %1402 = vmatprep.subr.bf16.mxu0 0
      %1403 = vmatpush1.bf16.msra.mxu0 0
      %1404 = vmatprep.subr.bf16.mxu0 0
      %1405 = vmatpush1.bf16.msra.mxu0 0
      %1406 = vmatprep.subr.bf16.mxu0 0
      %1407 = vmatpush1.bf16.msra.mxu0 0
      %1408 = vmatprep.subr.bf16.mxu0 0
      %1409 = vmatpush1.bf16.msra.mxu0 0
      %1410 = vmatprep.subr.bf16.mxu0 0
      %1411 = vmatpush1.bf16.msra.mxu0 0
      %1412 = vmatprep.subr.bf16.mxu0 0
      %1413 = vmatpush1.bf16.msra.mxu0 0
      %1414 = vmatprep.subr.bf16.mxu0 0
      %1415 = vmatpush1.bf16.msra.mxu0 0
      %1416 = vmatprep.subr.bf16.mxu0 0
      %1417 = vmatpush1.bf16.msra.mxu0 0
      %1418 = vmatprep.subr.bf16.mxu0 0
      %1419 = vmatpush1.bf16.msra.mxu0 0
      %1420 = vmatprep.mubr.bf16.mxu0 0
      %1421 = vmatmul.mubr.bf16.gmra.mrb[0].mxu0 %v1386
      %v1422 = vpop.f32.mrb[0].mxu0
      %v1423 = vadd.f32 0.0, %v1422
      %v1424 = vpop.f32.mrb[0].mxu0
      %v1425 = vpop.f32.mrb[0].mxu0
      %v1426 = vadd.f32 0.0, %v1425
      %v1427 = vpop.f32.mrb[0].mxu0
      %1428 = vdwg.mxu0
      %v1429 = vadd.f32 %v1357, %v1423
      %v1430 = vadd.f32 %v1358, %v1426
      %v1431 = vld [vmem:[%s2] sm:$0x1]
      %v1433 = vlaneseq
      %v1434 = vshrl.u32 %v1433, 7
      %v1435 = vsub.s32 0, %v1434
      %v1436 = vrot.slane %v1431, %v1435
      %v1438 = vadd.f32 %v1429, %v1436
      %v1439 = vadd.f32 %v1430, %v1436
      %v1440 = vld [vmem:[%s5] sm:$0xff]
      %v1441 = vld [vmem:[%s5 + $0x8] sm:$0x7f]
      %1443 = vset.pattern.permute.xlu0 0
      %1444 = vperm.xlu0 %1443, %v1440
      %v1445 = vpop.permute.xlu0 %1444
      %1448 = vset.pattern.permute.xlu0 0
      %1449 = vperm.xlu0 %1448, %v1441
      %v1450 = vpop.permute.xlu0 %1449
      %v1452 = vmul.f32 %v1438, %v1445
      %v1453 = vmul.f32 %v1439, %v1450
      %vm1454 = vcmask 261120
      %v1455 = vsel %vm1454, %v1452, 0.0
      %vm1456 = vcmask 260096
      %v1457 = vsel %vm1456, %v1453, 0.0
      %v1458 = vadd.f32 %v1455, %v1457
      %v1459 = vrot.slane %v1458, 4
      %v1460 = vadd.f32 %v1458, %v1459
      %v1461 = vrot.slane %v1460, 2
      %v1462 = vadd.f32 %v1460, %v1461
      %v1463 = vrot.slane %v1462, 1
      %v1464 = vadd.f32 %v1462, %v1463
      %v1465 = vmul.f32 %v1464, 0.11111111
      %v1466 = vmul.f32 %v1452, %v1438
      %v1467 = vmul.f32 %v1453, %v1439
      %v1468 = vsel %vm1454, %v1466, 0.0
      %v1469 = vsel %vm1456, %v1467, 0.0
      %v1470 = vadd.f32 %v1468, %v1469
      %v1471 = vrot.slane %v1470, 4
      %v1472 = vadd.f32 %v1470, %v1471
      %v1473 = vrot.slane %v1472, 2
      %v1474 = vadd.f32 %v1472, %v1473
      %v1475 = vrot.slane %v1474, 1
      %v1476 = vadd.f32 %v1474, %v1475
      %v1477 = vmul.f32 %v1476, 0.11111111
      %v1478 = vmul.f32 %v1465, %v1465
      %v1479 = vsub.f32 %v1477, %v1478
      %v1480 = vsub.f32 %v1438, %v1465
      %v1481 = vsub.f32 %v1439, %v1465
      %v1482 = vadd.f32 %v1479, 1e-05
      %v1483 = vrsqrt.pop %v1482
      %v1484 = vmul.f32 %v1480, %v1483
      %v1485 = vmul.f32 %v1481, %v1483
      %v1486 = vld [vmem:[%s3] sm:$0x1]
      %v1488 = vlaneseq
      %v1489 = vshrl.u32 %v1488, 7
      %v1490 = vsub.s32 0, %v1489
      %v1491 = vrot.slane %v1486, %v1490
      %v1493 = vmul.f32 %v1484, %v1491
      %v1494 = vmul.f32 %v1485, %v1491
      %v1495 = vld [vmem:[%s4] sm:$0x1]
      %v1497 = vlaneseq
      %v1498 = vshrl.u32 %v1497, 7
      %v1499 = vsub.s32 0, %v1498
      %v1500 = vrot.slane %v1495, %v1499
      %v1502 = vadd.f32 %v1493, %v1500
      %v1503 = vadd.f32 %v1494, %v1500
      %vm1504 = vcmp.ge.f32.partialorder %v1502, 0.0
      %vm1505 = vcmp.ge.f32.partialorder %v1503, 0.0
      %v1506 = vmul.f32 %v1502, 0.2
      %v1507 = vmul.f32 %v1503, 0.2
      %v1508 = vsel %vm1504, %v1502, %v1506
      %v1509 = vsel %vm1505, %v1503, %v1507
      %v1510 = vpack.c.bf16 %v1508, %v1508
      %vm1511 = vcmask 254976
      %vm1512 = vsmask.f32 1280
      %vm1513 = vmand %vm1511, %vm1512
      %v1514 = vld [vmem:[%s342] sm:$0x3]
      %v1515 = vsel %vm1513, %v1510, %v1514
      %1516 = vst [vmem:[%s342] sm:$0x3] %v1515
      %v1517 = vpack.c.bf16 %v1509, %v1508
      %v1519 = vunpack.c.l.b16 %v1517
      %v1520 = vunpack.c.h.b16 %v1517
      %v1521 = vpack.c.b16 %v1519, %v1519
      %v1522 = vpack.c.b16 %v1520, %v1520
      %vm1523 = vsmask.f32 2304
      %vm1524 = vsmask.f32 6416
      %vm1525 = vmor %vm1523, %vm1524
      %v1527 = vshrl.u32 %v1521, 16
      %v1529 = vrot.slane %v1527, 5
      %v1530 = vshll.u32 %v1521, 16
      %v1532 = vrot.slane %v1530, 6
      %v1533 = vor.u32 %v1529, %v1532
      %v1534 = vrot.slane %v1533, 4
      %v1536 = vshll.u32 %v1522, 16
      %v1538 = vrot.slane %v1536, 6
      %v1539 = vsel %vm1525, %v1534, %v1538
      %vm1541 = vcmask 256001
      %vm1542 = vsmask.f32 7942
      %vm1543 = vmand %vm1541, %vm1542
      %v1544 = vld [vmem:[%s342] sm:$0x6]
      %v1545 = vsel %vm1543, %v1539, %v1544
      %1546 = vst [vmem:[%s342] sm:$0x6] %v1545
      %v1547 = vpack.c.bf16 %v1509, %v1509
      %v1549 = vunpack.c.l.b16 %v1547
      %v1550 = vpack.c.b16 %v1549, %v1549
      %v1551 = vrot.slane %v1550, 7
      %v1552 = vrot.slane %v1551, 4
      %vm1555 = vcmask 257027
      %1556 = vst.msk [vmem:[%s342] sm:$0x8] %vm1555, %v1551
      %vm1557 = vcmask 253952
      %vm1558 = vsmask.f32 256
      %vm1559 = vmand %vm1557, %vm1558
      %v1560 = vld [vmem:[%s342 + $0x4] sm:$0x1]
      %v1561 = vsel %vm1559, %v1552, %v1560
      %1562 = vst [vmem:[%s342 + $0x4] sm:$0x1] %v1561
      %v1563 = vld [vmem:[%s6] sm:$0x1]
      %v1565 = vlaneseq
      %v1566 = vshrl.u32 %v1565, 7
      %v1567 = vsub.s32 0, %v1566
      %v1568 = vrot.slane %v1563, %v1567
      %v1570 = vmul.f32 %v1508, %v1568
      %v1571 = vmul.f32 %v1509, %v1568
      %v1572 = vsel %vm1454, %v1570, 0.0
      %1573 = vadd.xlane.f32.xlu0 %v1572
      %v1574 = vpop.xlane.xlu0 %1573
      %v1575 = vsel %vm1456, %v1571, 0.0
      %1576 = vadd.xlane.f32.xlu0 %v1575
      %v1577 = vpop.xlane.xlu0 %1576
      %v1578 = vld [vmem:[#allocation2] sm:$0x1]
      %v1580 = vlaneseq
      %v1581 = vshrl.u32 %v1580, 7
      %v1582 = vsub.s32 0, %v1581
      %v1583 = vrot.slane %v1578, %v1582
      %v1585 = vadd.f32 %v1574, %v1583
      %v1586 = vadd.f32 %v1577, %v1583
      %vm1587 = vcmask 2048
      %1588 = vst.msk [vmem:[%s347] sm:$0x7] %vm1587, %v1585
      %vm1589 = vcmask 7174
      %1590 = vst.msk [vmem:[%s347 - $0x3] sm:$0xc0] %vm1589, %v1585
      %vm1591 = vcmask 0
      %1592 = vst.msk [vmem:[%s347 + $0x5] sm:$0x1] %vm1591, %v1586
      %vm1593 = vcmask 6148
      %1594 = vst.msk [vmem:[%s347 + $0x2] sm:$0x70] %vm1593, %v1586
      %p1595 = scmp.lt.s32.totalorder %s23, 1
      %s1596 = scalar_select %p1595, %s23, 1
      %s1597 = smul.addr %s1596, 2
      %s1598 = smul.addr %s1597, 4
      %s1599 = scalar_lea.vmem %s8, %s1598
      %p1600 = scmp.lt.s32.totalorder %s23, 1
      %s1601 = scalar_select %p1600, %s23, 1
      %s1602 = smul.addr %s1601, 2
      %s1603 = smul.addr %s1602, 8
      %s1604 = scalar_lea.vmem %s9, %s1603
      // Predicated region
      $region53: #{_lambda_.3} parent=51 // pred_check
        %p1605 = pneg %p214
      $region54: #{_lambda_.3} parent=51 // pred_check_branch
        %1607 = sbr.rel (%p1605) target = $region56
      $region55: #{_lambda_.3} parent=51 // pred_region
        _
      $region56: #{_lambda_.3} parent=51 // pred_fallthru
        _
      // Predicated region
      $region57: #{_lambda_.3} parent=51 // pred_check
        %p1608 = pneg %p240
      $region58: #{_lambda_.3} parent=51 // pred_check_branch
        %1610 = sbr.rel (%p1608) target = $region60
      $region59: #{_lambda_.3} parent=51 // pred_region
        _
      $region60: #{_lambda_.3} parent=51 // pred_fallthru
        _
    $region52: #{_lambda_.3} parent=5 // pred_fallthru
      _
    %p1611 = scmp.le.s32.totalorder 2, %s18
    // Predicated region
    $region61: #{_lambda_.3} parent=5 // pred_check
      %p1612 = pneg %p1611
    $region62: #{_lambda_.3} parent=5 // pred_check_branch
      %1614 = sbr.rel (%p1612) target = $region64
    $region63: #{_lambda_.3} parent=5 // pred_region
      %s1615 = ssub.s32 %s18, 2
      // Predicated region
      $region65: #{_lambda_.3} parent=63 // pred_check
        %p1616 = pneg %p220
      $region66: #{_lambda_.3} parent=63 // pred_check_branch
        %1618 = sbr.rel (%p1616) target = $region68
      $region67: #{_lambda_.3} parent=63 // pred_region
        %p1619 = scmp.lt.s32.totalorder %s24, 1
        %s1620 = scalar_select %p1619, %s24, 1
        %s1621 = smul.addr %s1620, 2
        %s1622 = smul.addr %s1621, 4
        %s1623 = scalar_lea.vmem %s8, %s1622
      $region68: #{_lambda_.3} parent=63 // pred_fallthru
        _
      // Predicated region
      $region69: #{_lambda_.3} parent=63 // pred_check
        %p1624 = pneg %p246
      $region70: #{_lambda_.3} parent=63 // pred_check_branch
        %1626 = sbr.rel (%p1624) target = $region72
      $region71: #{_lambda_.3} parent=63 // pred_region
        %p1627 = scmp.lt.s32.totalorder %s24, 1
        %s1628 = scalar_select %p1627, %s24, 1
        %s1629 = smul.addr %s1628, 2
        %s1630 = smul.addr %s1629, 8
        %s1631 = scalar_lea.vmem %s9, %s1630
      $region72: #{_lambda_.3} parent=63 // pred_fallthru
        _
    $region64: #{_lambda_.3} parent=5 // pred_fallthru
      _
  $region6: #{_lambda_.3} parent=0 // loop_footer
    %s22 = sadd.s32 1, %s18
  $region7: #{_lambda_.3} parent=0 // loop_footer_branch
    %17 = sbr.rel target = $region3
  $region8: #{_lambda_.3} parent=0 // loop_exit
    _

// kernel: _lambda_.2
$region0: #{_lambda_.2}
  #allocation0 [shape = 'u32[]', space=smem, size = 0x4, offset = 0x4, fixed_abs, tag = 'smem constant byte address 0x4 - core index']
  #allocation1 [shape = 'u32[144,128]{1,0:T(1,128)}', space=vmem, size = 0x12000, scoped, tag = 'internal scratch']
  #allocation2 [shape = 'f32[205,16]{1,0:T(8,128)}', space=vmem, size = 0x1a000, scoped, tag = 'scratch operand']
  %s0 = inlined_call_operand.vmem [shape: bf16[2,256,4], index: 0, kind: input, shape index: {}]
  %s1 = inlined_call_operand.vmem [shape: bf16[16,4,16], index: 1, kind: input, shape index: {}]
  %s2 = inlined_call_operand.vmem [shape: f32[1,16], index: 2, kind: input, shape index: {}]
  %s3 = inlined_call_operand.vmem [shape: bf16[2,36,16], index: 3, kind: output, shape index: {}]
  %s4 = sld [smem:[#allocation0]]
  $region45: #{_lambda_.2} parent=0
    _
  %s6 = ssub.s32 1, %s4
  %s7 = scalar_select 0, %s6, %s4
  loop: start=0, step=1, limit=4
  $region2: #{_lambda_.2} parent=0 // loop_pre_header
    _
  $region3: #{_lambda_.2} parent=0 // loop_header
    %s9 = sphi 0, %s13
    %p10 = scmp.ge.s32.totalorder %s9, 4
    %s19 = sphi 0, %s21
    %s22 = sphi 0, %s19
    %s23 = sphi 0, %s22
    %s39 = sphi 0, %s23
    %s43 = sphi 0, %s43
    %s45 = sphi 0, %s43
    %s46 = sphi 0, %s45
    %s60 = sphi 0, %s46
    %s64 = sphi 0, %s64
    %s66 = sphi 0, %s64
    %s67 = sphi 0, %s66
    %s81 = sphi 0, %s67
    %s87 = sphi 0, %s89
    %s90 = sphi 0, %s87
    %s91 = sphi 0, %s90
    %s107 = sphi 0, %s91
  $region4: #{_lambda_.2} parent=0 // loop_header_branch
    %12 = sbr.rel (%p10) target = $region8
  $region5: #{_lambda_.2} parent=0 // loop_body
    %s14 = ssub.s32 %s9, 1
    %s15 = ssub.s32 %s9, 2
    %s16 = sadd.s32 %s9, 1
    %s17 = ssub.s32 %s9, %s16
    %p18 = scmp.eq.s32.totalorder %s17, 0
    %s20 = sadd.s32 %s19, 1
    %s21 = scalar_select %p18, %s19, %s20
    %p24 = pneg %p18
    %p25 = scmp.eq.s32.totalorder %s9, 1
    %p26 = por %p24, %p25
    %p27 = scmp.ne.s32.totalorder %s19, %s22
    %p28 = scmp.eq.s32.totalorder %s9, 0
    %p29 = por %p27, %p28
    %p30 = scmp.ne.s32.totalorder %s19, %s22
    %p31 = scmp.eq.s32.totalorder %s14, 1
    %p32 = por %p30, %p31
    %p33 = scmp.ne.s32.totalorder %s22, %s23
    %p34 = scmp.eq.s32.totalorder %s14, 0
    %p35 = por %p33, %p34
    %p36 = scmp.ne.s32.totalorder %s22, %s23
    %p37 = scmp.eq.s32.totalorder %s15, 1
    %p38 = por %p36, %p37
    %p40 = scmp.ne.s32.totalorder %s23, %s39
    %p41 = scmp.eq.s32.totalorder %s15, 0
    %p42 = por %p40, %p41
    %s44 = sadd.s32 %s43, 1
    %p47 = scmp.eq.s32.totalorder %s9, 1
    %p48 = scmp.ne.s32.totalorder %s43, %s45
    %p49 = scmp.eq.s32.totalorder %s9, 0
    %p50 = por %p48, %p49
    %p51 = scmp.ne.s32.totalorder %s43, %s45
    %p52 = scmp.eq.s32.totalorder %s14, 1
    %p53 = por %p51, %p52
    %p54 = scmp.ne.s32.totalorder %s45, %s46
    %p55 = scmp.eq.s32.totalorder %s14, 0
    %p56 = por %p54, %p55
    %p57 = scmp.ne.s32.totalorder %s45, %s46
    %p58 = scmp.eq.s32.totalorder %s15, 1
    %p59 = por %p57, %p58
    %p61 = scmp.ne.s32.totalorder %s46, %s60
    %p62 = scmp.eq.s32.totalorder %s15, 0
    %p63 = por %p61, %p62
    %s65 = sadd.s32 %s64, 1
    %p68 = scmp.eq.s32.totalorder %s9, 1
    %p69 = scmp.ne.s32.totalorder %s64, %s66
    %p70 = scmp.eq.s32.totalorder %s9, 0
    %p71 = por %p69, %p70
    %p72 = scmp.ne.s32.totalorder %s64, %s66
    %p73 = scmp.eq.s32.totalorder %s14, 1
    %p74 = por %p72, %p73
    %p75 = scmp.ne.s32.totalorder %s66, %s67
    %p76 = scmp.eq.s32.totalorder %s14, 0
    %p77 = por %p75, %p76
    %p78 = scmp.ne.s32.totalorder %s66, %s67
    %p79 = scmp.eq.s32.totalorder %s15, 1
    %p80 = por %p78, %p79
    %p82 = scmp.ne.s32.totalorder %s67, %s81
    %p83 = scmp.eq.s32.totalorder %s15, 0
    %p84 = por %p82, %p83
    %s85 = ssub.s32 %s9, %s16
    %p86 = scmp.eq.s32.totalorder %s85, 0
    %s88 = sadd.s32 %s87, 1
    %s89 = scalar_select %p86, %s87, %s88
    %p92 = pneg %p86
    %p93 = scmp.eq.s32.totalorder %s9, 1
    %p94 = por %p92, %p93
    %p95 = scmp.ne.s32.totalorder %s87, %s90
    %p96 = scmp.eq.s32.totalorder %s9, 0
    %p97 = por %p95, %p96
    %p98 = scmp.ne.s32.totalorder %s87, %s90
    %p99 = scmp.eq.s32.totalorder %s14, 1
    %p100 = por %p98, %p99
    %p101 = scmp.ne.s32.totalorder %s90, %s91
    %p102 = scmp.eq.s32.totalorder %s14, 0
    %p103 = por %p101, %p102
    %p104 = scmp.ne.s32.totalorder %s90, %s91
    %p105 = scmp.eq.s32.totalorder %s15, 1
    %p106 = por %p104, %p105
    %p108 = scmp.ne.s32.totalorder %s91, %s107
    %p109 = scmp.eq.s32.totalorder %s15, 0
    %p110 = por %p108, %p109
    %p111 = scmp.le.s32.totalorder 1, %s9
    %p112 = scmp.lt.s32.totalorder %s9, 3
    %p113 = pnand %p111, %p112
    %p114 = pneg %p113
    // Predicated region
    $region9: #{_lambda_.2} parent=5 // pred_check
      _
    $region10: #{_lambda_.2} parent=5 // pred_check_branch
      %116 = sbr.rel (%p113) target = $region12
    $region11: #{_lambda_.2} parent=5 // pred_region
      %s117 = ssub.s32 %s9, 1
      // Predicated region
      $region13: #{_lambda_.2} parent=11 // pred_check
        %p118 = pneg %p56
      $region14: #{_lambda_.2} parent=11 // pred_check_branch
        %120 = sbr.rel (%p118) target = $region16
      $region15: #{_lambda_.2} parent=11 // pred_region
        _
      $region16: #{_lambda_.2} parent=11 // pred_fallthru
        _
      // Predicated region
      $region17: #{_lambda_.2} parent=11 // pred_check
        %p121 = pneg %p77
      $region18: #{_lambda_.2} parent=11 // pred_check_branch
        %123 = sbr.rel (%p121) target = $region20
      $region19: #{_lambda_.2} parent=11 // pred_region
        _
      $region20: #{_lambda_.2} parent=11 // pred_fallthru
        _
    $region12: #{_lambda_.2} parent=5 // pred_fallthru
      _
    %p124 = scmp.lt.s32.totalorder %s9, 2
    // Predicated region
    $region21: #{_lambda_.2} parent=5 // pred_check
      %p125 = pneg %p124
    $region22: #{_lambda_.2} parent=5 // pred_check_branch
      %127 = sbr.rel (%p125) target = $region24
    $region23: #{_lambda_.2} parent=5 // pred_region
      // Predicated region
      $region25: #{_lambda_.2} parent=23 // pred_check
        %p128 = pneg %p29
      $region26: #{_lambda_.2} parent=23 // pred_check_branch
        %130 = sbr.rel (%p128) target = $region28
      $region27: #{_lambda_.2} parent=23 // pred_region
        %p131 = scmp.lt.s32.totalorder %s9, 1
        %s132 = scalar_select %p131, %s9, 1
        %s133 = smul.addr %s132, 32
        %s134 = smul.addr %s133, 4
        %s135 = scalar_lea.vmem %s0, %s134
      $region28: #{_lambda_.2} parent=23 // pred_fallthru
        _
    $region24: #{_lambda_.2} parent=5 // pred_fallthru
      _
    %p136 = scmp.le.s32.totalorder 1, %s9
    %p137 = scmp.lt.s32.totalorder %s9, 3
    %p138 = pnand %p136, %p137
    %p139 = pneg %p138
    // Predicated region
    $region29: #{_lambda_.2} parent=5 // pred_check
      _
    $region30: #{_lambda_.2} parent=5 // pred_check_branch
      %141 = sbr.rel (%p138) target = $region32
    $region31: #{_lambda_.2} parent=5 // pred_region
      %s142 = ssub.s32 %s9, 1
      %p143 = scmp.lt.s32.totalorder %s14, 1
      %s144 = scalar_select %p143, %s14, 1
      %s145 = smul.addr %s144, 32
      %s146 = smul.addr %s145, 4
      %s147 = scalar_lea.vmem %s0, %s146
      %p148 = pneg %p35
      %p149 = pneg %p32
      %p150 = pneg %p56
      %p151 = pneg %p53
      %p152 = pneg %p77
      %p153 = pneg %p74
      %p154 = pneg %p103
      %p155 = pneg %p100
      %p156 = scmp.lt.s32.totalorder %s14, 1
      %s157 = scalar_select %p156, %s14, 1
      %s158 = smul.addr %s157, 5
      %s159 = smul.addr %s158, 4
      %s160 = scalar_lea.vmem %s3, %s159
      %p161 = scmp.lt.s32.totalorder %s14, 1
      %s162 = scalar_select %p161, %s14, 1
      %s163 = smul.addr %s162, 32
      %s164 = smul.addr %s163, 4
      %s165 = scalar_lea.vmem %s0, %s164
      %p166 = scmp.lt.s32.totalorder %s14, 1
      %s167 = scalar_select %p166, %s14, 1
      %s168 = smul.addr %s167, 5
      %s169 = smul.addr %s168, 4
      %s170 = scalar_lea.vmem %s3, %s169
      %v172 = vld [vmem:[%s165] sm:$0xf]
      %v173 = vld [vmem:[%s165 + $0x4] sm:$0xf]
      %v174 = vld [vmem:[%s165 + $0x8] sm:$0xf]
      %v175 = vld [vmem:[%s165 + $0xc] sm:$0xf]
      %v176 = vld [vmem:[%s165 + $0x10] sm:$0xf]
      %v177 = vld [vmem:[%s165 + $0x14] sm:$0xf]
      %v178 = vld [vmem:[%s165 + $0x18] sm:$0xf]
      %v179 = vld [vmem:[%s165 + $0x1c] sm:$0xf]
      %v180 = vld [vmem:[%s165 + $0x20] sm:$0xf]
      %v181 = vld [vmem:[%s165 + $0x24] sm:$0xf]
      %v182 = vld [vmem:[%s165 + $0x28] sm:$0xf]
      %v183 = vld [vmem:[%s165 + $0x2c] sm:$0xf]
      %v184 = vld [vmem:[%s165 + $0x30] sm:$0xf]
      %v185 = vld [vmem:[%s165 + $0x34] sm:$0xf]
      %v186 = vld [vmem:[%s165 + $0x38] sm:$0xf]
      %v187 = vld [vmem:[%s165 + $0x3c] sm:$0xf]
      %v188 = vld [vmem:[%s165 + $0x40] sm:$0xf]
      %v189 = vld [vmem:[%s165 + $0x44] sm:$0xf]
      %v190 = vld [vmem:[%s165 + $0x48] sm:$0xf]
      %v191 = vld [vmem:[%s165 + $0x4c] sm:$0xf]
      %v192 = vld [vmem:[%s165 + $0x50] sm:$0xf]
      %v193 = vld [vmem:[%s165 + $0x54] sm:$0xf]
      %v194 = vld [vmem:[%s165 + $0x58] sm:$0xf]
      %v195 = vld [vmem:[%s165 + $0x5c] sm:$0xf]
      %v196 = vld [vmem:[%s165 + $0x60] sm:$0xf]
      %v197 = vld [vmem:[%s165 + $0x64] sm:$0x7]
      %v198 = vld [vmem:[%s1] sm:$0x3]
      %s199 = scalar_lea.vmem %s1, 2
      %v200 = vld [vmem:[%s199] sm:$0x3]
      %v227 = vunpack.c.l.b16 %v172
      %v228 = vunpack.c.l.b16 %v173
      %v229 = vunpack.c.l.b16 %v174
      %v230 = vunpack.c.l.b16 %v175
      %v231 = vunpack.c.l.b16 %v176
      %v232 = vunpack.c.l.b16 %v177
      %v233 = vunpack.c.l.b16 %v178
      %v234 = vunpack.c.l.b16 %v179
      %v235 = vunpack.c.l.b16 %v180
      %v236 = vunpack.c.l.b16 %v181
      %v237 = vunpack.c.l.b16 %v182
      %v238 = vunpack.c.l.b16 %v183
      %v239 = vunpack.c.l.b16 %v184
      %v240 = vunpack.c.l.b16 %v185
      %v241 = vunpack.c.l.b16 %v186
      %v242 = vunpack.c.l.b16 %v187
      %v243 = vunpack.c.l.b16 %v188
      %v244 = vunpack.c.l.b16 %v189
      %v245 = vunpack.c.l.b16 %v190
      %v246 = vunpack.c.l.b16 %v191
      %v247 = vunpack.c.l.b16 %v192
      %v248 = vunpack.c.l.b16 %v193
      %v249 = vunpack.c.l.b16 %v194
      %v250 = vunpack.c.l.b16 %v195
      %v251 = vunpack.c.l.b16 %v196
      %v252 = vunpack.c.l.b16 %v197
      %v253 = vpack.c.b16 %v228, %v227
      %v254 = vpack.c.b16 %v230, %v229
      %v255 = vpack.c.b16 %v232, %v231
      %v256 = vpack.c.b16 %v234, %v233
      %v257 = vpack.c.b16 %v236, %v235
      %v258 = vpack.c.b16 %v238, %v237
      %v259 = vpack.c.b16 %v240, %v239
      %v260 = vpack.c.b16 %v242, %v241
      %v261 = vpack.c.b16 %v244, %v243
      %v262 = vpack.c.b16 %v246, %v245
      %v263 = vpack.c.b16 %v248, %v247
      %v264 = vpack.c.b16 %v250, %v249
      %v265 = vpack.c.b16 %v252, %v251
      %vm266 = vsmask.f32 7424
      %v268 = vshrl.u32 %v253, 16
      %v270 = vshll.u32 %v253, 16
      %v272 = vrot.slane %v270, 1
      %v273 = vor.u32 %v268, %v272
      %v275 = vshll.u32 %v254, 16
      %v277 = vrot.slane %v275, 1
      %v278 = vsel %vm266, %v273, %v277
      %v279 = vshrl.u32 %v254, 16
      %v281 = vor.u32 %v279, %v277
      %v283 = vshll.u32 %v255, 16
      %v285 = vrot.slane %v283, 1
      %v286 = vsel %vm266, %v281, %v285
      %v287 = vshrl.u32 %v255, 16
      %v289 = vor.u32 %v287, %v285
      %v291 = vshll.u32 %v256, 16
      %v293 = vrot.slane %v291, 1
      %v294 = vsel %vm266, %v289, %v293
      %v295 = vshrl.u32 %v256, 16
      %v297 = vor.u32 %v295, %v293
      %v299 = vshll.u32 %v257, 16
      %v301 = vrot.slane %v299, 1
      %v302 = vsel %vm266, %v297, %v301
      %v303 = vshrl.u32 %v257, 16
      %v305 = vor.u32 %v303, %v301
      %v307 = vshll.u32 %v258, 16
      %v309 = vrot.slane %v307, 1
      %v310 = vsel %vm266, %v305, %v309
      %v311 = vshrl.u32 %v258, 16
      %v313 = vor.u32 %v311, %v309
      %v315 = vshll.u32 %v259, 16
      %v317 = vrot.slane %v315, 1
      %v318 = vsel %vm266, %v313, %v317
      %v319 = vshrl.u32 %v259, 16
      %v321 = vor.u32 %v319, %v317
      %v323 = vshll.u32 %v260, 16
      %v325 = vrot.slane %v323, 1
      %v326 = vsel %vm266, %v321, %v325
      %v327 = vshrl.u32 %v260, 16
      %v329 = vor.u32 %v327, %v325
      %v331 = vshll.u32 %v261, 16
      %v333 = vrot.slane %v331, 1
      %v334 = vsel %vm266, %v329, %v333
      %v335 = vshrl.u32 %v261, 16
      %v337 = vor.u32 %v335, %v333
      %v339 = vshll.u32 %v262, 16
      %v341 = vrot.slane %v339, 1
      %v342 = vsel %vm266, %v337, %v341
      %v343 = vshrl.u32 %v262, 16
      %v345 = vor.u32 %v343, %v341
      %v347 = vshll.u32 %v263, 16
      %v349 = vrot.slane %v347, 1
      %v350 = vsel %vm266, %v345, %v349
      %v351 = vshrl.u32 %v263, 16
      %v353 = vor.u32 %v351, %v349
      %v355 = vshll.u32 %v264, 16
      %v357 = vrot.slane %v355, 1
      %v358 = vsel %vm266, %v353, %v357
      %v359 = vshrl.u32 %v264, 16
      %v361 = vor.u32 %v359, %v357
      %v363 = vshll.u32 %v265, 16
      %v365 = vrot.slane %v363, 1
      %v366 = vsel %vm266, %v361, %v365
      %v367 = vshrl.u32 %v265, 16
      %v369 = vor.u32 %v367, %v365
      %vm370 = vcmask 31744
      %v372 = vsel %vm370, %v278, 0
      %v375 = vsel %vm370, %v286, 0
      %v378 = vsel %vm370, %v294, 0
      %v381 = vsel %vm370, %v302, 0
      %v384 = vsel %vm370, %v310, 0
      %v387 = vsel %vm370, %v318, 0
      %v390 = vsel %vm370, %v326, 0
      %v393 = vsel %vm370, %v334, 0
      %v396 = vsel %vm370, %v342, 0
      %v399 = vsel %vm370, %v350, 0
      %v402 = vsel %vm370, %v358, 0
      %v405 = vsel %vm370, %v366, 0
      %v408 = vsel %vm370, %v369, 0
      %vm410 = vcmask 1041408
      %v412 = vsel %vm410, %v200, 0
      %414 = vmatprep.subr.bf16.mxu0 0
      %415 = vmatpush1.bf16.msra.mxu0 %v412
      %416 = vmatprep.subr.bf16.mxu0 0
      %417 = vmatpush1.bf16.msra.mxu0 0
      %418 = vmatprep.subr.bf16.mxu0 0
      %419 = vmatpush1.bf16.msra.mxu0 0
      %420 = vmatprep.subr.bf16.mxu0 0
      %421 = vmatpush1.bf16.msra.mxu0 0
      %422 = vmatprep.subr.bf16.mxu0 0
      %423 = vmatpush1.bf16.msra.mxu0 0
      %424 = vmatprep.subr.bf16.mxu0 0
      %425 = vmatpush1.bf16.msra.mxu0 0
      %426 = vmatprep.subr.bf16.mxu0 0
      %427 = vmatpush1.bf16.msra.mxu0 0
      %428 = vmatprep.subr.bf16.mxu0 0
      %429 = vmatpush1.bf16.msra.mxu0 0
      %430 = vmatprep.subr.bf16.mxu0 0
      %431 = vmatpush1.bf16.msra.mxu0 0
      %432 = vmatprep.subr.bf16.mxu0 0
      %433 = vmatpush1.bf16.msra.mxu0 0
      %434 = vmatprep.subr.bf16.mxu0 0
      %435 = vmatpush1.bf16.msra.mxu0 0
      %436 = vmatprep.subr.bf16.mxu0 0
      %437 = vmatpush1.bf16.msra.mxu0 0
      %438 = vmatprep.subr.bf16.mxu0 0
      %439 = vmatpush1.bf16.msra.mxu0 0
      %440 = vmatprep.subr.bf16.mxu0 0
      %441 = vmatpush1.bf16.msra.mxu0 0
      %442 = vmatprep.subr.bf16.mxu0 0
      %443 = vmatpush1.bf16.msra.mxu0 0
      %444 = vmatprep.subr.bf16.mxu0 0
      %445 = vmatpush1.bf16.msra.mxu0 0
      %446 = vmatprep.mubr.bf16.mxu0 0
      %447 = vmatmul.mubr.bf16.gmra.mrb[0].mxu0 %v372
      %v448 = vpop.f32.mrb[0].mxu0
      %v449 = vadd.f32 0.0, %v448
      %v450 = vpop.f32.mrb[0].mxu0
      %v451 = vpop.f32.mrb[0].mxu0
      %v452 = vadd.f32 0.0, %v451
      %v453 = vpop.f32.mrb[0].mxu0
      %454 = vmatprep.mubr.bf16.mxu0 0
      %455 = vmatmul.mubr.bf16.gmra.mrb[0].mxu0 %v375
      %v456 = vpop.f32.mrb[0].mxu0
      %v457 = vadd.f32 0.0, %v456
      %v458 = vpop.f32.mrb[0].mxu0
      %v459 = vpop.f32.mrb[0].mxu0
      %v460 = vadd.f32 0.0, %v459
      %v461 = vpop.f32.mrb[0].mxu0
      %462 = vmatprep.mubr.bf16.mxu0 0
      %463 = vmatmul.mubr.bf16.gmra.mrb[0].mxu0 %v378
      %v464 = vpop.f32.mrb[0].mxu0
      %v465 = vadd.f32 0.0, %v464
      %v466 = vpop.f32.mrb[0].mxu0
      %v467 = vpop.f32.mrb[0].mxu0
      %v468 = vadd.f32 0.0, %v467
      %v469 = vpop.f32.mrb[0].mxu0
      %470 = vmatprep.mubr.bf16.mxu0 0
      %471 = vmatmul.mubr.bf16.gmra.mrb[0].mxu0 %v381
      %v472 = vpop.f32.mrb[0].mxu0
      %v473 = vadd.f32 0.0, %v472
      %v474 = vpop.f32.mrb[0].mxu0
      %v475 = vpop.f32.mrb[0].mxu0
      %v476 = vadd.f32 0.0, %v475
      %v477 = vpop.f32.mrb[0].mxu0
      %478 = vmatprep.mubr.bf16.mxu0 0
      %479 = vmatmul.mubr.bf16.gmra.mrb[0].mxu0 %v384
      %v480 = vpop.f32.mrb[0].mxu0
      %v481 = vadd.f32 0.0, %v480
      %v482 = vpop.f32.mrb[0].mxu0
      %v483 = vpop.f32.mrb[0].mxu0
      %v484 = vadd.f32 0.0, %v483
      %v485 = vpop.f32.mrb[0].mxu0
      %486 = vmatprep.mubr.bf16.mxu0 0
      %487 = vmatmul.mubr.bf16.gmra.mrb[0].mxu0 %v387
      %v488 = vpop.f32.mrb[0].mxu0
      %v489 = vadd.f32 0.0, %v488
      %v490 = vpop.f32.mrb[0].mxu0
      %v491 = vpop.f32.mrb[0].mxu0
      %v492 = vadd.f32 0.0, %v491
      %v493 = vpop.f32.mrb[0].mxu0
      %494 = vmatprep.mubr.bf16.mxu0 0
      %495 = vmatmul.mubr.bf16.gmra.mrb[0].mxu0 %v390
      %v496 = vpop.f32.mrb[0].mxu0
      %v497 = vadd.f32 0.0, %v496
      %v498 = vpop.f32.mrb[0].mxu0
      %v499 = vpop.f32.mrb[0].mxu0
      %v500 = vadd.f32 0.0, %v499
      %v501 = vpop.f32.mrb[0].mxu0
      %502 = vmatprep.mubr.bf16.mxu0 0
      %503 = vmatmul.mubr.bf16.gmra.mrb[0].mxu0 %v393
      %v504 = vpop.f32.mrb[0].mxu0
      %v505 = vadd.f32 0.0, %v504
      %v506 = vpop.f32.mrb[0].mxu0
      %v507 = vpop.f32.mrb[0].mxu0
      %v508 = vadd.f32 0.0, %v507
      %v509 = vpop.f32.mrb[0].mxu0
      %510 = vmatprep.mubr.bf16.mxu0 0
      %511 = vmatmul.mubr.bf16.gmra.mrb[0].mxu0 %v396
      %v512 = vpop.f32.mrb[0].mxu0
      %v513 = vadd.f32 0.0, %v512
      %v514 = vpop.f32.mrb[0].mxu0
      %v515 = vpop.f32.mrb[0].mxu0
      %v516 = vadd.f32 0.0, %v515
      %v517 = vpop.f32.mrb[0].mxu0
      %518 = vmatprep.mubr.bf16.mxu0 0
      %519 = vmatmul.mubr.bf16.gmra.mrb[0].mxu0 %v399
      %v520 = vpop.f32.mrb[0].mxu0
      %v521 = vadd.f32 0.0, %v520
      %v522 = vpop.f32.mrb[0].mxu0
      %v523 = vpop.f32.mrb[0].mxu0
      %v524 = vadd.f32 0.0, %v523
      %v525 = vpop.f32.mrb[0].mxu0
      %526 = vmatprep.mubr.bf16.mxu0 0
      %527 = vmatmul.mubr.bf16.gmra.mrb[0].mxu0 %v402
      %v528 = vpop.f32.mrb[0].mxu0
      %v529 = vadd.f32 0.0, %v528
      %v530 = vpop.f32.mrb[0].mxu0
      %v531 = vpop.f32.mrb[0].mxu0
      %v532 = vadd.f32 0.0, %v531
      %v533 = vpop.f32.mrb[0].mxu0
      %534 = vmatprep.mubr.bf16.mxu0 0
      %535 = vmatmul.mubr.bf16.gmra.mrb[0].mxu0 %v405
      %v536 = vpop.f32.mrb[0].mxu0
      %v537 = vadd.f32 0.0, %v536
      %v538 = vpop.f32.mrb[0].mxu0
      %v539 = vpop.f32.mrb[0].mxu0
      %v540 = vadd.f32 0.0, %v539
      %v541 = vpop.f32.mrb[0].mxu0
      %542 = vmatprep.mubr.bf16.mxu0 0
      %543 = vmatmul.mubr.bf16.gmra.mrb[0].mxu0 %v408
      %v544 = vpop.f32.mrb[0].mxu0
      %v545 = vadd.f32 0.0, %v544
      %v546 = vpop.f32.mrb[0].mxu0
      %v547 = vpop.f32.mrb[0].mxu0
      %v548 = vadd.f32 0.0, %v547
      %v549 = vpop.f32.mrb[0].mxu0
      %550 = vdwg.mxu0
      %v551 = vsel %vm370, %v253, 0
      %v553 = vsel %vm370, %v254, 0
      %v555 = vsel %vm370, %v255, 0
      %v557 = vsel %vm370, %v256, 0
      %v559 = vsel %vm370, %v257, 0
      %v561 = vsel %vm370, %v258, 0
      %v563 = vsel %vm370, %v259, 0
      %v565 = vsel %vm370, %v260, 0
      %v567 = vsel %vm370, %v261, 0
      %v569 = vsel %vm370, %v262, 0
      %v571 = vsel %vm370, %v263, 0
      %v573 = vsel %vm370, %v264, 0
      %v575 = vsel %vm370, %v265, 0
      %v578 = vsel %vm410, %v198, 0
      %580 = vmatprep.subr.bf16.mxu0 0
      %581 = vmatpush1.bf16.msra.mxu0 %v578
      %582 = vmatprep.subr.bf16.mxu0 0
      %583 = vmatpush1.bf16.msra.mxu0 0
      %584 = vmatprep.subr.bf16.mxu0 0
      %585 = vmatpush1.bf16.msra.mxu0 0
      %586 = vmatprep.subr.bf16.mxu0 0
      %587 = vmatpush1.bf16.msra.mxu0 0
      %588 = vmatprep.subr.bf16.mxu0 0
      %589 = vmatpush1.bf16.msra.mxu0 0
      %590 = vmatprep.subr.bf16.mxu0 0
      %591 = vmatpush1.bf16.msra.mxu0 0
      %592 = vmatprep.subr.bf16.mxu0 0
      %593 = vmatpush1.bf16.msra.mxu0 0
      %594 = vmatprep.subr.bf16.mxu0 0
      %595 = vmatpush1.bf16.msra.mxu0 0
      %596 = vmatprep.subr.bf16.mxu0 0
      %597 = vmatpush1.bf16.msra.mxu0 0
      %598 = vmatprep.subr.bf16.mxu0 0
      %599 = vmatpush1.bf16.msra.mxu0 0
      %600 = vmatprep.subr.bf16.mxu0 0
      %601 = vmatpush1.bf16.msra.mxu0 0
      %602 = vmatprep.subr.bf16.mxu0 0
      %603 = vmatpush1.bf16.msra.mxu0 0
      %604 = vmatprep.subr.bf16.mxu0 0
      %605 = vmatpush1.bf16.msra.mxu0 0
      %606 = vmatprep.subr.bf16.mxu0 0
      %607 = vmatpush1.bf16.msra.mxu0 0
      %608 = vmatprep.subr.bf16.mxu0 0
      %609 = vmatpush1.bf16.msra.mxu0 0
      %610 = vmatprep.subr.bf16.mxu0 0
      %611 = vmatpush1.bf16.msra.mxu0 0
      %612 = vmatprep.mubr.bf16.mxu0 0
      %613 = vmatmul.mubr.bf16.gmra.mrb[0].mxu0 %v551
      %v614 = vpop.f32.mrb[0].mxu0
      %v615 = vadd.f32 %v449, %v614
      %v616 = vpop.f32.mrb[0].mxu0
      %v617 = vpop.f32.mrb[0].mxu0
      %v618 = vadd.f32 %v452, %v617
      %v619 = vpop.f32.mrb[0].mxu0
      %620 = vmatprep.mubr.bf16.mxu0 0
      %621 = vmatmul.mubr.bf16.gmra.mrb[0].mxu0 %v553
      %v622 = vpop.f32.mrb[0].mxu0
      %v623 = vadd.f32 %v457, %v622
      %v624 = vpop.f32.mrb[0].mxu0
      %v625 = vpop.f32.mrb[0].mxu0
      %v626 = vadd.f32 %v460, %v625
      %v627 = vpop.f32.mrb[0].mxu0
      %628 = vmatprep.mubr.bf16.mxu0 0
      %629 = vmatmul.mubr.bf16.gmra.mrb[0].mxu0 %v555
      %v630 = vpop.f32.mrb[0].mxu0
      %v631 = vadd.f32 %v465, %v630
      %v632 = vpop.f32.mrb[0].mxu0
      %v633 = vpop.f32.mrb[0].mxu0
      %v634 = vadd.f32 %v468, %v633
      %v635 = vpop.f32.mrb[0].mxu0
      %636 = vmatprep.mubr.bf16.mxu0 0
      %637 = vmatmul.mubr.bf16.gmra.mrb[0].mxu0 %v557
      %v638 = vpop.f32.mrb[0].mxu0
      %v639 = vadd.f32 %v473, %v638
      %v640 = vpop.f32.mrb[0].mxu0
      %v641 = vpop.f32.mrb[0].mxu0
      %v642 = vadd.f32 %v476, %v641
      %v643 = vpop.f32.mrb[0].mxu0
      %644 = vmatprep.mubr.bf16.mxu0 0
      %645 = vmatmul.mubr.bf16.gmra.mrb[0].mxu0 %v559
      %v646 = vpop.f32.mrb[0].mxu0
      %v647 = vadd.f32 %v481, %v646
      %v648 = vpop.f32.mrb[0].mxu0
      %v649 = vpop.f32.mrb[0].mxu0
      %v650 = vadd.f32 %v484, %v649
      %v651 = vpop.f32.mrb[0].mxu0
      %652 = vmatprep.mubr.bf16.mxu0 0
      %653 = vmatmul.mubr.bf16.gmra.mrb[0].mxu0 %v561
      %v654 = vpop.f32.mrb[0].mxu0
      %v655 = vadd.f32 %v489, %v654
      %v656 = vpop.f32.mrb[0].mxu0
      %v657 = vpop.f32.mrb[0].mxu0
      %v658 = vadd.f32 %v492, %v657
      %v659 = vpop.f32.mrb[0].mxu0
      %660 = vmatprep.mubr.bf16.mxu0 0
      %661 = vmatmul.mubr.bf16.gmra.mrb[0].mxu0 %v563
      %v662 = vpop.f32.mrb[0].mxu0
      %v663 = vadd.f32 %v497, %v662
      %v664 = vpop.f32.mrb[0].mxu0
      %v665 = vpop.f32.mrb[0].mxu0
      %v666 = vadd.f32 %v500, %v665
      %v667 = vpop.f32.mrb[0].mxu0
      %668 = vmatprep.mubr.bf16.mxu0 0
      %669 = vmatmul.mubr.bf16.gmra.mrb[0].mxu0 %v565
      %v670 = vpop.f32.mrb[0].mxu0
      %v671 = vadd.f32 %v505, %v670
      %v672 = vpop.f32.mrb[0].mxu0
      %v673 = vpop.f32.mrb[0].mxu0
      %v674 = vadd.f32 %v508, %v673
      %v675 = vpop.f32.mrb[0].mxu0
      %676 = vmatprep.mubr.bf16.mxu0 0
      %677 = vmatmul.mubr.bf16.gmra.mrb[0].mxu0 %v567
      %v678 = vpop.f32.mrb[0].mxu0
      %v679 = vadd.f32 %v513, %v678
      %v680 = vpop.f32.mrb[0].mxu0
      %v681 = vpop.f32.mrb[0].mxu0
      %v682 = vadd.f32 %v516, %v681
      %v683 = vpop.f32.mrb[0].mxu0
      %684 = vmatprep.mubr.bf16.mxu0 0
      %685 = vmatmul.mubr.bf16.gmra.mrb[0].mxu0 %v569
      %v686 = vpop.f32.mrb[0].mxu0
      %v687 = vadd.f32 %v521, %v686
      %v688 = vpop.f32.mrb[0].mxu0
      %v689 = vpop.f32.mrb[0].mxu0
      %v690 = vadd.f32 %v524, %v689
      %v691 = vpop.f32.mrb[0].mxu0
      %692 = vmatprep.mubr.bf16.mxu0 0
      %693 = vmatmul.mubr.bf16.gmra.mrb[0].mxu0 %v571
      %v694 = vpop.f32.mrb[0].mxu0
      %v695 = vadd.f32 %v529, %v694
      %v696 = vpop.f32.mrb[0].mxu0
      %v697 = vpop.f32.mrb[0].mxu0
      %v698 = vadd.f32 %v532, %v697
      %v699 = vpop.f32.mrb[0].mxu0
      %700 = vmatprep.mubr.bf16.mxu0 0
      %701 = vmatmul.mubr.bf16.gmra.mrb[0].mxu0 %v573
      %v702 = vpop.f32.mrb[0].mxu0
      %v703 = vadd.f32 %v537, %v702
      %v704 = vpop.f32.mrb[0].mxu0
      %v705 = vpop.f32.mrb[0].mxu0
      %v706 = vadd.f32 %v540, %v705
      %v707 = vpop.f32.mrb[0].mxu0
      %708 = vmatprep.mubr.bf16.mxu0 0
      %709 = vmatmul.mubr.bf16.gmra.mrb[0].mxu0 %v575
      %v710 = vpop.f32.mrb[0].mxu0
      %v711 = vadd.f32 %v545, %v710
      %v712 = vpop.f32.mrb[0].mxu0
      %v713 = vpop.f32.mrb[0].mxu0
      %v714 = vadd.f32 %v548, %v713
      %v715 = vpop.f32.mrb[0].mxu0
      %716 = vdwg.mxu0
      %v717 = vld [vmem:[%s165] sm:$0xe]
      %v718 = vld [vmem:[%s165 + $0x64] sm:$0xf]
      %s719 = scalar_lea.vmem %s1, 4
      %v720 = vld [vmem:[%s719] sm:$0x3]
      %v723 = vunpack.c.l.b16 %v717
      %v724 = vunpack.c.l.b16 %v718
      %v725 = vpack.c.b16 %v228, %v723
      %v726 = vpack.c.b16 %v724, %v251
      %vm727 = vcmask 1046528
      %v728 = vrot.slane %v725, 1
      %v729 = vrot.slane %v254, 1
      %v730 = vsel %vm727, %v728, %v729
      %v731 = vrot.slane %v255, 1
      %v732 = vsel %vm727, %v729, %v731
      %v733 = vrot.slane %v256, 1
      %v734 = vsel %vm727, %v731, %v733
      %v735 = vrot.slane %v257, 1
      %v736 = vsel %vm727, %v733, %v735
      %v737 = vrot.slane %v258, 1
      %v738 = vsel %vm727, %v735, %v737
      %v739 = vrot.slane %v259, 1
      %v740 = vsel %vm727, %v737, %v739
      %v741 = vrot.slane %v260, 1
      %v742 = vsel %vm727, %v739, %v741
      %v743 = vrot.slane %v261, 1
      %v744 = vsel %vm727, %v741, %v743
      %v745 = vrot.slane %v262, 1
      %v746 = vsel %vm727, %v743, %v745
      %v747 = vrot.slane %v263, 1
      %v748 = vsel %vm727, %v745, %v747
      %v749 = vrot.slane %v264, 1
      %v750 = vsel %vm727, %v747, %v749
      %v751 = vrot.slane %v726, 1
      %v752 = vsel %vm727, %v749, %v751
      %v754 = vsel %vm370, %v730, 0
      %v757 = vsel %vm370, %v732, 0
      %v760 = vsel %vm370, %v734, 0
      %v763 = vsel %vm370, %v736, 0
      %v766 = vsel %vm370, %v738, 0
      %v769 = vsel %vm370, %v740, 0
      %v772 = vsel %vm370, %v742, 0
      %v775 = vsel %vm370, %v744, 0
      %v778 = vsel %vm370, %v746, 0
      %v781 = vsel %vm370, %v748, 0
      %v784 = vsel %vm370, %v750, 0
      %v787 = vsel %vm370, %v752, 0
      %v790 = vsel %vm370, %v751, 0
      %v793 = vsel %vm410, %v720, 0
      %795 = vmatprep.subr.bf16.mxu0 0
      %796 = vmatpush1.bf16.msra.mxu0 %v793
      %797 = vmatprep.subr.bf16.mxu0 0
      %798 = vmatpush1.bf16.msra.mxu0 0
      %799 = vmatprep.subr.bf16.mxu0 0
      %800 = vmatpush1.bf16.msra.mxu0 0
      %801 = vmatprep.subr.bf16.mxu0 0
      %802 = vmatpush1.bf16.msra.mxu0 0
      %803 = vmatprep.subr.bf16.mxu0 0
      %804 = vmatpush1.bf16.msra.mxu0 0
      %805 = vmatprep.subr.bf16.mxu0 0
      %806 = vmatpush1.bf16.msra.mxu0 0
      %807 = vmatprep.subr.bf16.mxu0 0
      %808 = vmatpush1.bf16.msra.mxu0 0
      %809 = vmatprep.subr.bf16.mxu0 0
      %810 = vmatpush1.bf16.msra.mxu0 0
      %811 = vmatprep.subr.bf16.mxu0 0
      %812 = vmatpush1.bf16.msra.mxu0 0
      %813 = vmatprep.subr.bf16.mxu0 0
      %814 = vmatpush1.bf16.msra.mxu0 0
      %815 = vmatprep.subr.bf16.mxu0 0
      %816 = vmatpush1.bf16.msra.mxu0 0
      %817 = vmatprep.subr.bf16.mxu0 0
      %818 = vmatpush1.bf16.msra.mxu0 0
      %819 = vmatprep.subr.bf16.mxu0 0
      %820 = vmatpush1.bf16.msra.mxu0 0
      %821 = vmatprep.subr.bf16.mxu0 0
      %822 = vmatpush1.bf16.msra.mxu0 0
      %823 = vmatprep.subr.bf16.mxu0 0
      %824 = vmatpush1.bf16.msra.mxu0 0
      %825 = vmatprep.subr.bf16.mxu0 0
      %826 = vmatpush1.bf16.msra.mxu0 0
      %827 = vmatprep.mubr.bf16.mxu0 0
      %828 = vmatmul.mubr.bf16.gmra.mrb[0].mxu0 %v754
      %v829 = vpop.f32.mrb[0].mxu0
      %v830 = vadd.f32 0.0, %v829
      %v831 = vpop.f32.mrb[0].mxu0
      %v832 = vpop.f32.mrb[0].mxu0
      %v833 = vadd.f32 0.0, %v832
      %v834 = vpop.f32.mrb[0].mxu0
      %835 = vmatprep.mubr.bf16.mxu0 0
      %836 = vmatmul.mubr.bf16.gmra.mrb[0].mxu0 %v757
      %v837 = vpop.f32.mrb[0].mxu0
      %v838 = vadd.f32 0.0, %v837
      %v839 = vpop.f32.mrb[0].mxu0
      %v840 = vpop.f32.mrb[0].mxu0
      %v841 = vadd.f32 0.0, %v840
      %v842 = vpop.f32.mrb[0].mxu0
      %843 = vmatprep.mubr.bf16.mxu0 0
      %844 = vmatmul.mubr.bf16.gmra.mrb[0].mxu0 %v760
      %v845 = vpop.f32.mrb[0].mxu0
      %v846 = vadd.f32 0.0, %v845
      %v847 = vpop.f32.mrb[0].mxu0
      %v848 = vpop.f32.mrb[0].mxu0
      %v849 = vadd.f32 0.0, %v848
      %v850 = vpop.f32.mrb[0].mxu0
      %851 = vmatprep.mubr.bf16.mxu0 0
      %852 = vmatmul.mubr.bf16.gmra.mrb[0].mxu0 %v763
      %v853 = vpop.f32.mrb[0].mxu0
      %v854 = vadd.f32 0.0, %v853
      %v855 = vpop.f32.mrb[0].mxu0
      %v856 = vpop.f32.mrb[0].mxu0
      %v857 = vadd.f32 0.0, %v856
      %v858 = vpop.f32.mrb[0].mxu0
      %859 = vmatprep.mubr.bf16.mxu0 0
      %860 = vmatmul.mubr.bf16.gmra.mrb[0].mxu0 %v766
      %v861 = vpop.f32.mrb[0].mxu0
      %v862 = vadd.f32 0.0, %v861
      %v863 = vpop.f32.mrb[0].mxu0
      %v864 = vpop.f32.mrb[0].mxu0
      %v865 = vadd.f32 0.0, %v864
      %v866 = vpop.f32.mrb[0].mxu0
      %867 = vmatprep.mubr.bf16.mxu0 0
      %868 = vmatmul.mubr.bf16.gmra.mrb[0].mxu0 %v769
      %v869 = vpop.f32.mrb[0].mxu0
      %v870 = vadd.f32 0.0, %v869
      %v871 = vpop.f32.mrb[0].mxu0
      %v872 = vpop.f32.mrb[0].mxu0
      %v873 = vadd.f32 0.0, %v872
      %v874 = vpop.f32.mrb[0].mxu0
      %875 = vmatprep.mubr.bf16.mxu0 0
      %876 = vmatmul.mubr.bf16.gmra.mrb[0].mxu0 %v772
      %v877 = vpop.f32.mrb[0].mxu0
      %v878 = vadd.f32 0.0, %v877
      %v879 = vpop.f32.mrb[0].mxu0
      %v880 = vpop.f32.mrb[0].mxu0
      %v881 = vadd.f32 0.0, %v880
      %v882 = vpop.f32.mrb[0].mxu0
      %883 = vmatprep.mubr.bf16.mxu0 0
      %884 = vmatmul.mubr.bf16.gmra.mrb[0].mxu0 %v775
      %v885 = vpop.f32.mrb[0].mxu0
      %v886 = vadd.f32 0.0, %v885
      %v887 = vpop.f32.mrb[0].mxu0
      %v888 = vpop.f32.mrb[0].mxu0
      %v889 = vadd.f32 0.0, %v888
      %v890 = vpop.f32.mrb[0].mxu0
      %891 = vmatprep.mubr.bf16.mxu0 0
      %892 = vmatmul.mubr.bf16.gmra.mrb[0].mxu0 %v778
      %v893 = vpop.f32.mrb[0].mxu0
      %v894 = vadd.f32 0.0, %v893
      %v895 = vpop.f32.mrb[0].mxu0
      %v896 = vpop.f32.mrb[0].mxu0
      %v897 = vadd.f32 0.0, %v896
      %v898 = vpop.f32.mrb[0].mxu0
      %899 = vmatprep.mubr.bf16.mxu0 0
      %900 = vmatmul.mubr.bf16.gmra.mrb[0].mxu0 %v781
      %v901 = vpop.f32.mrb[0].mxu0
      %v902 = vadd.f32 0.0, %v901
      %v903 = vpop.f32.mrb[0].mxu0
      %v904 = vpop.f32.mrb[0].mxu0
      %v905 = vadd.f32 0.0, %v904
      %v906 = vpop.f32.mrb[0].mxu0
      %907 = vmatprep.mubr.bf16.mxu0 0
      %908 = vmatmul.mubr.bf16.gmra.mrb[0].mxu0 %v784
      %v909 = vpop.f32.mrb[0].mxu0
      %v910 = vadd.f32 0.0, %v909
      %v911 = vpop.f32.mrb[0].mxu0
      %v912 = vpop.f32.mrb[0].mxu0
      %v913 = vadd.f32 0.0, %v912
      %v914 = vpop.f32.mrb[0].mxu0
      %915 = vmatprep.mubr.bf16.mxu0 0
      %916 = vmatmul.mubr.bf16.gmra.mrb[0].mxu0 %v787
      %v917 = vpop.f32.mrb[0].mxu0
      %v918 = vadd.f32 0.0, %v917
      %v919 = vpop.f32.mrb[0].mxu0
      %v920 = vpop.f32.mrb[0].mxu0
      %v921 = vadd.f32 0.0, %v920
      %v922 = vpop.f32.mrb[0].mxu0
      %923 = vmatprep.mubr.bf16.mxu0 0
      %924 = vmatmul.mubr.bf16.gmra.mrb[0].mxu0 %v790
      %v925 = vpop.f32.mrb[0].mxu0
      %v926 = vadd.f32 0.0, %v925
      %v927 = vpop.f32.mrb[0].mxu0
      %v928 = vpop.f32.mrb[0].mxu0
      %v929 = vadd.f32 0.0, %v928
      %v930 = vpop.f32.mrb[0].mxu0
      %931 = vdwg.mxu0
      %v932 = vadd.f32 %v615, %v830
      %v933 = vadd.f32 %v618, %v833
      %v934 = vadd.f32 %v623, %v838
      %v935 = vadd.f32 %v626, %v841
      %v936 = vadd.f32 %v631, %v846
      %v937 = vadd.f32 %v634, %v849
      %v938 = vadd.f32 %v639, %v854
      %v939 = vadd.f32 %v642, %v857
      %v940 = vadd.f32 %v647, %v862
      %v941 = vadd.f32 %v650, %v865
      %v942 = vadd.f32 %v655, %v870
      %v943 = vadd.f32 %v658, %v873
      %v944 = vadd.f32 %v663, %v878
      %v945 = vadd.f32 %v666, %v881
      %v946 = vadd.f32 %v671, %v886
      %v947 = vadd.f32 %v674, %v889
      %v948 = vadd.f32 %v679, %v894
      %v949 = vadd.f32 %v682, %v897
      %v950 = vadd.f32 %v687, %v902
      %v951 = vadd.f32 %v690, %v905
      %v952 = vadd.f32 %v695, %v910
      %v953 = vadd.f32 %v698, %v913
      %v954 = vadd.f32 %v703, %v918
      %v955 = vadd.f32 %v706, %v921
      %v956 = vadd.f32 %v711, %v926
      %v957 = vadd.f32 %v714, %v929
      %s958 = scalar_lea.vmem %s1, 6
      %v959 = vld [vmem:[%s958] sm:$0x3]
      %vm960 = vsmask.f32 6400
      %v962 = vshrl.u32 %v725, 16
      %v964 = vrot.slane %v962, 1
      %v965 = vshll.u32 %v725, 16
      %v967 = vrot.slane %v965, 2
      %v968 = vor.u32 %v964, %v967
      %v969 = vrot.slane %v279, 1
      %v970 = vrot.slane %v275, 2
      %v971 = vor.u32 %v969, %v970
      %v972 = vsel %vm960, %v968, %v971
      %v973 = vrot.slane %v287, 1
      %v974 = vrot.slane %v283, 2
      %v975 = vor.u32 %v973, %v974
      %v976 = vsel %vm960, %v971, %v975
      %v977 = vrot.slane %v295, 1
      %v978 = vrot.slane %v291, 2
      %v979 = vor.u32 %v977, %v978
      %v980 = vsel %vm960, %v975, %v979
      %v981 = vrot.slane %v303, 1
      %v982 = vrot.slane %v299, 2
      %v983 = vor.u32 %v981, %v982
      %v984 = vsel %vm960, %v979, %v983
      %v985 = vrot.slane %v311, 1
      %v986 = vrot.slane %v307, 2
      %v987 = vor.u32 %v985, %v986
      %v988 = vsel %vm960, %v983, %v987
      %v989 = vrot.slane %v319, 1
      %v990 = vrot.slane %v315, 2
      %v991 = vor.u32 %v989, %v990
      %v992 = vsel %vm960, %v987, %v991
      %v993 = vrot.slane %v327, 1
      %v994 = vrot.slane %v323, 2
      %v995 = vor.u32 %v993, %v994
      %v996 = vsel %vm960, %v991, %v995
      %v997 = vrot.slane %v335, 1
      %v998 = vrot.slane %v331, 2
      %v999 = vor.u32 %v997, %v998
      %v1000 = vsel %vm960, %v995, %v999
      %v1001 = vrot.slane %v343, 1
      %v1002 = vrot.slane %v339, 2
      %v1003 = vor.u32 %v1001, %v1002
      %v1004 = vsel %vm960, %v999, %v1003
      %v1005 = vrot.slane %v351, 1
      %v1006 = vrot.slane %v347, 2
      %v1007 = vor.u32 %v1005, %v1006
      %v1008 = vsel %vm960, %v1003, %v1007
      %v1009 = vrot.slane %v359, 1
      %v1010 = vrot.slane %v355, 2
      %v1011 = vor.u32 %v1009, %v1010
      %v1012 = vsel %vm960, %v1007, %v1011
      %v1014 = vshrl.u32 %v726, 16
      %v1016 = vrot.slane %v1014, 1
      %v1017 = vshll.u32 %v726, 16
      %v1019 = vrot.slane %v1017, 2
      %v1020 = vor.u32 %v1016, %v1019
      %v1021 = vsel %vm960, %v1011, %v1020
      %v1023 = vsel %vm370, %v972, 0
      %v1026 = vsel %vm370, %v976, 0
      %v1029 = vsel %vm370, %v980, 0
      %v1032 = vsel %vm370, %v984, 0
      %v1035 = vsel %vm370, %v988, 0
      %v1038 = vsel %vm370, %v992, 0
      %v1041 = vsel %vm370, %v996, 0
      %v1044 = vsel %vm370, %v1000, 0
      %v1047 = vsel %vm370, %v1004, 0
      %v1050 = vsel %vm370, %v1008, 0
      %v1053 = vsel %vm370, %v1012, 0
      %v1056 = vsel %vm370, %v1021, 0
      %v1059 = vsel %vm370, %v1020, 0
      %v1062 = vsel %vm410, %v959, 0
      %1064 = vmatprep.subr.bf16.mxu0 0
      %1065 = vmatpush1.bf16.msra.mxu0 %v1062
      %1066 = vmatprep.subr.bf16.mxu0 0
      %1067 = vmatpush1.bf16.msra.mxu0 0
      %1068 = vmatprep.subr.bf16.mxu0 0
      %1069 = vmatpush1.bf16.msra.mxu0 0
      %1070 = vmatprep.subr.bf16.mxu0 0
      %1071 = vmatpush1.bf16.msra.mxu0 0
      %1072 = vmatprep.subr.bf16.mxu0 0
      %1073 = vmatpush1.bf16.msra.mxu0 0
      %1074 = vmatprep.subr.bf16.mxu0 0
      %1075 = vmatpush1.bf16.msra.mxu0 0
      %1076 = vmatprep.subr.bf16.mxu0 0
      %1077 = vmatpush1.bf16.msra.mxu0 0
      %1078 = vmatprep.subr.bf16.mxu0 0
      %1079 = vmatpush1.bf16.msra.mxu0 0
      %1080 = vmatprep.subr.bf16.mxu0 0
      %1081 = vmatpush1.bf16.msra.mxu0 0
      %1082 = vmatprep.subr.bf16.mxu0 0
      %1083 = vmatpush1.bf16.msra.mxu0 0
      %1084 = vmatprep.subr.bf16.mxu0 0
      %1085 = vmatpush1.bf16.msra.mxu0 0
      %1086 = vmatprep.subr.bf16.mxu0 0
      %1087 = vmatpush1.bf16.msra.mxu0 0
      %1088 = vmatprep.subr.bf16.mxu0 0
      %1089 = vmatpush1.bf16.msra.mxu0 0
      %1090 = vmatprep.subr.bf16.mxu0 0
      %1091 = vmatpush1.bf16.msra.mxu0 0
      %1092 = vmatprep.subr.bf16.mxu0 0
      %1093 = vmatpush1.bf16.msra.mxu0 0
      %1094 = vmatprep.subr.bf16.mxu0 0
      %1095 = vmatpush1.bf16.msra.mxu0 0
      %1096 = vmatprep.mubr.bf16.mxu0 0
      %1097 = vmatmul.mubr.bf16.gmra.mrb[0].mxu0 %v1023
      %v1098 = vpop.f32.mrb[0].mxu0
      %v1099 = vadd.f32 0.0, %v1098
      %v1100 = vpop.f32.mrb[0].mxu0
      %v1101 = vpop.f32.mrb[0].mxu0
      %v1102 = vadd.f32 0.0, %v1101
      %v1103 = vpop.f32.mrb[0].mxu0
      %1104 = vmatprep.mubr.bf16.mxu0 0
      %1105 = vmatmul.mubr.bf16.gmra.mrb[0].mxu0 %v1026
      %v1106 = vpop.f32.mrb[0].mxu0
      %v1107 = vadd.f32 0.0, %v1106
      %v1108 = vpop.f32.mrb[0].mxu0
      %v1109 = vpop.f32.mrb[0].mxu0
      %v1110 = vadd.f32 0.0, %v1109
      %v1111 = vpop.f32.mrb[0].mxu0
      %1112 = vmatprep.mubr.bf16.mxu0 0
      %1113 = vmatmul.mubr.bf16.gmra.mrb[0].mxu0 %v1029
      %v1114 = vpop.f32.mrb[0].mxu0
      %v1115 = vadd.f32 0.0, %v1114
      %v1116 = vpop.f32.mrb[0].mxu0
      %v1117 = vpop.f32.mrb[0].mxu0
      %v1118 = vadd.f32 0.0, %v1117
      %v1119 = vpop.f32.mrb[0].mxu0
      %1120 = vmatprep.mubr.bf16.mxu0 0
      %1121 = vmatmul.mubr.bf16.gmra.mrb[0].mxu0 %v1032
      %v1122 = vpop.f32.mrb[0].mxu0
      %v1123 = vadd.f32 0.0, %v1122
      %v1124 = vpop.f32.mrb[0].mxu0
      %v1125 = vpop.f32.mrb[0].mxu0
      %v1126 = vadd.f32 0.0, %v1125
      %v1127 = vpop.f32.mrb[0].mxu0
      %1128 = vmatprep.mubr.bf16.mxu0 0
      %1129 = vmatmul.mubr.bf16.gmra.mrb[0].mxu0 %v1035
      %v1130 = vpop.f32.mrb[0].mxu0
      %v1131 = vadd.f32 0.0, %v1130
      %v1132 = vpop.f32.mrb[0].mxu0
      %v1133 = vpop.f32.mrb[0].mxu0
      %v1134 = vadd.f32 0.0, %v1133
      %v1135 = vpop.f32.mrb[0].mxu0
      %1136 = vmatprep.mubr.bf16.mxu0 0
      %1137 = vmatmul.mubr.bf16.gmra.mrb[0].mxu0 %v1038
      %v1138 = vpop.f32.mrb[0].mxu0
      %v1139 = vadd.f32 0.0, %v1138
      %v1140 = vpop.f32.mrb[0].mxu0
      %v1141 = vpop.f32.mrb[0].mxu0
      %v1142 = vadd.f32 0.0, %v1141
      %v1143 = vpop.f32.mrb[0].mxu0
      %1144 = vmatprep.mubr.bf16.mxu0 0
      %1145 = vmatmul.mubr.bf16.gmra.mrb[0].mxu0 %v1041
      %v1146 = vpop.f32.mrb[0].mxu0
      %v1147 = vadd.f32 0.0, %v1146
      %v1148 = vpop.f32.mrb[0].mxu0
      %v1149 = vpop.f32.mrb[0].mxu0
      %v1150 = vadd.f32 0.0, %v1149
      %v1151 = vpop.f32.mrb[0].mxu0
      %1152 = vmatprep.mubr.bf16.mxu0 0
      %1153 = vmatmul.mubr.bf16.gmra.mrb[0].mxu0 %v1044
      %v1154 = vpop.f32.mrb[0].mxu0
      %v1155 = vadd.f32 0.0, %v1154
      %v1156 = vpop.f32.mrb[0].mxu0
      %v1157 = vpop.f32.mrb[0].mxu0
      %v1158 = vadd.f32 0.0, %v1157
      %v1159 = vpop.f32.mrb[0].mxu0
      %1160 = vmatprep.mubr.bf16.mxu0 0
      %1161 = vmatmul.mubr.bf16.gmra.mrb[0].mxu0 %v1047
      %v1162 = vpop.f32.mrb[0].mxu0
      %v1163 = vadd.f32 0.0, %v1162
      %v1164 = vpop.f32.mrb[0].mxu0
      %v1165 = vpop.f32.mrb[0].mxu0
      %v1166 = vadd.f32 0.0, %v1165
      %v1167 = vpop.f32.mrb[0].mxu0
      %1168 = vmatprep.mubr.bf16.mxu0 0
      %1169 = vmatmul.mubr.bf16.gmra.mrb[0].mxu0 %v1050
      %v1170 = vpop.f32.mrb[0].mxu0
      %v1171 = vadd.f32 0.0, %v1170
      %v1172 = vpop.f32.mrb[0].mxu0
      %v1173 = vpop.f32.mrb[0].mxu0
      %v1174 = vadd.f32 0.0, %v1173
      %v1175 = vpop.f32.mrb[0].mxu0
      %1176 = vmatprep.mubr.bf16.mxu0 0
      %1177 = vmatmul.mubr.bf16.gmra.mrb[0].mxu0 %v1053
      %v1178 = vpop.f32.mrb[0].mxu0
      %v1179 = vadd.f32 0.0, %v1178
      %v1180 = vpop.f32.mrb[0].mxu0
      %v1181 = vpop.f32.mrb[0].mxu0
      %v1182 = vadd.f32 0.0, %v1181
      %v1183 = vpop.f32.mrb[0].mxu0
      %1184 = vmatprep.mubr.bf16.mxu0 0
      %1185 = vmatmul.mubr.bf16.gmra.mrb[0].mxu0 %v1056
      %v1186 = vpop.f32.mrb[0].mxu0
      %v1187 = vadd.f32 0.0, %v1186
      %v1188 = vpop.f32.mrb[0].mxu0
      %v1189 = vpop.f32.mrb[0].mxu0
      %v1190 = vadd.f32 0.0, %v1189
      %v1191 = vpop.f32.mrb[0].mxu0
      %1192 = vmatprep.mubr.bf16.mxu0 0
      %1193 = vmatmul.mubr.bf16.gmra.mrb[0].mxu0 %v1059
      %v1194 = vpop.f32.mrb[0].mxu0
      %v1195 = vadd.f32 0.0, %v1194
      %v1196 = vpop.f32.mrb[0].mxu0
      %v1197 = vpop.f32.mrb[0].mxu0
      %v1198 = vadd.f32 0.0, %v1197
      %v1199 = vpop.f32.mrb[0].mxu0
      %1200 = vdwg.mxu0
      %v1201 = vadd.f32 %v932, %v1099
      %v1202 = vadd.f32 %v933, %v1102
      %v1203 = vadd.f32 %v934, %v1107
      %v1204 = vadd.f32 %v935, %v1110
      %v1205 = vadd.f32 %v936, %v1115
      %v1206 = vadd.f32 %v937, %v1118
      %v1207 = vadd.f32 %v938, %v1123
      %v1208 = vadd.f32 %v939, %v1126
      %v1209 = vadd.f32 %v940, %v1131
      %v1210 = vadd.f32 %v941, %v1134
      %v1211 = vadd.f32 %v942, %v1139
      %v1212 = vadd.f32 %v943, %v1142
      %v1213 = vadd.f32 %v944, %v1147
      %v1214 = vadd.f32 %v945, %v1150
      %v1215 = vadd.f32 %v946, %v1155
      %v1216 = vadd.f32 %v947, %v1158
      %v1217 = vadd.f32 %v948, %v1163
      %v1218 = vadd.f32 %v949, %v1166
      %v1219 = vadd.f32 %v950, %v1171
      %v1220 = vadd.f32 %v951, %v1174
      %v1221 = vadd.f32 %v952, %v1179
      %v1222 = vadd.f32 %v953, %v1182
      %v1223 = vadd.f32 %v954, %v1187
      %v1224 = vadd.f32 %v955, %v1190
      %v1225 = vadd.f32 %v956, %v1195
      %v1226 = vadd.f32 %v957, %v1198
      %v1227 = vld [vmem:[%s165 + $0x8] sm:$0xf]
      %v1228 = vld [vmem:[%s165 + $0xc] sm:$0xf]
      %v1229 = vld [vmem:[%s165 + $0x10] sm:$0xf]
      %v1230 = vld [vmem:[%s165 + $0x14] sm:$0xf]
      %v1231 = vld [vmem:[%s165 + $0x18] sm:$0xf]
      %v1232 = vld [vmem:[%s165 + $0x1c] sm:$0xf]
      %v1233 = vld [vmem:[%s165 + $0x20] sm:$0xf]
      %v1234 = vld [vmem:[%s165 + $0x24] sm:$0xf]
      %v1235 = vld [vmem:[%s165 + $0x28] sm:$0xf]
      %v1236 = vld [vmem:[%s165 + $0x2c] sm:$0xf]
      %v1237 = vld [vmem:[%s165 + $0x30] sm:$0xf]
      %v1238 = vld [vmem:[%s165 + $0x34] sm:$0xf]
      %v1239 = vld [vmem:[%s165 + $0x38] sm:$0xf]
      %v1240 = vld [vmem:[%s165 + $0x3c] sm:$0xf]
      %v1241 = vld [vmem:[%s165 + $0x40] sm:$0xf]
      %v1242 = vld [vmem:[%s165 + $0x44] sm:$0xf]
      %v1243 = vld [vmem:[%s165 + $0x48] sm:$0xf]
      %v1244 = vld [vmem:[%s165 + $0x4c] sm:$0xf]
      %v1245 = vld [vmem:[%s165 + $0x50] sm:$0xf]
      %v1246 = vld [vmem:[%s165 + $0x54] sm:$0xf]
      %v1247 = vld [vmem:[%s165 + $0x58] sm:$0xf]
      %v1248 = vld [vmem:[%s165 + $0x5c] sm:$0xf]
      %v1249 = vld [vmem:[%s165 + $0x60] sm:$0xf]
      %v1250 = vld [vmem:[%s165 + $0x64] sm:$0xf]
      %v1251 = vld [vmem:[%s165 + $0x68] sm:$0xf]
      %v1252 = vld [vmem:[%s165 + $0x6c] sm:$0x7]
      %s1253 = scalar_lea.vmem %s1, 8
      %v1254 = vld [vmem:[%s1253] sm:$0x3]
      %v1281 = vunpack.c.l.b16 %v1227
      %v1282 = vunpack.c.l.b16 %v1228
      %v1283 = vunpack.c.l.b16 %v1229
      %v1284 = vunpack.c.l.b16 %v1230
      %v1285 = vunpack.c.l.b16 %v1231
      %v1286 = vunpack.c.l.b16 %v1232
      %v1287 = vunpack.c.l.b16 %v1233
      %v1288 = vunpack.c.l.b16 %v1234
      %v1289 = vunpack.c.l.b16 %v1235
      %v1290 = vunpack.c.l.b16 %v1236
      %v1291 = vunpack.c.l.b16 %v1237
      %v1292 = vunpack.c.l.b16 %v1238
      %v1293 = vunpack.c.l.b16 %v1239
      %v1294 = vunpack.c.l.b16 %v1240
      %v1295 = vunpack.c.l.b16 %v1241
      %v1296 = vunpack.c.l.b16 %v1242
      %v1297 = vunpack.c.l.b16 %v1243
      %v1298 = vunpack.c.l.b16 %v1244
      %v1299 = vunpack.c.l.b16 %v1245
      %v1300 = vunpack.c.l.b16 %v1246
      %v1301 = vunpack.c.l.b16 %v1247
      %v1302 = vunpack.c.l.b16 %v1248
      %v1303 = vunpack.c.l.b16 %v1249
      %v1304 = vunpack.c.l.b16 %v1250
      %v1305 = vunpack.c.l.b16 %v1251
      %v1306 = vunpack.c.l.b16 %v1252
      %v1307 = vpack.c.b16 %v1282, %v1281
      %v1308 = vpack.c.b16 %v1284, %v1283
      %v1309 = vpack.c.b16 %v1286, %v1285
      %v1310 = vpack.c.b16 %v1288, %v1287
      %v1311 = vpack.c.b16 %v1290, %v1289
      %v1312 = vpack.c.b16 %v1292, %v1291
      %v1313 = vpack.c.b16 %v1294, %v1293
      %v1314 = vpack.c.b16 %v1296, %v1295
      %v1315 = vpack.c.b16 %v1298, %v1297
      %v1316 = vpack.c.b16 %v1300, %v1299
      %v1317 = vpack.c.b16 %v1302, %v1301
      %v1318 = vpack.c.b16 %v1304, %v1303
      %v1319 = vpack.c.b16 %v1306, %v1305
      %v1321 = vsel %vm370, %v1307, 0
      %v1324 = vsel %vm370, %v1308, 0
      %v1327 = vsel %vm370, %v1309, 0
      %v1330 = vsel %vm370, %v1310, 0
      %v1333 = vsel %vm370, %v1311, 0
      %v1336 = vsel %vm370, %v1312, 0
      %v1339 = vsel %vm370, %v1313, 0
      %v1342 = vsel %vm370, %v1314, 0
      %v1345 = vsel %vm370, %v1315, 0
      %v1348 = vsel %vm370, %v1316, 0
      %v1351 = vsel %vm370, %v1317, 0
      %v1354 = vsel %vm370, %v1318, 0
      %v1357 = vsel %vm370, %v1319, 0
      %v1360 = vsel %vm410, %v1254, 0
      %1362 = vmatprep.subr.bf16.mxu0 0
      %1363 = vmatpush1.bf16.msra.mxu0 %v1360
      %1364 = vmatprep.subr.bf16.mxu0 0
      %1365 = vmatpush1.bf16.msra.mxu0 0
      %1366 = vmatprep.subr.bf16.mxu0 0
      %1367 = vmatpush1.bf16.msra.mxu0 0
      %1368 = vmatprep.subr.bf16.mxu0 0
      %1369 = vmatpush1.bf16.msra.mxu0 0
      %1370 = vmatprep.subr.bf16.mxu0 0
      %1371 = vmatpush1.bf16.msra.mxu0 0
      %1372 = vmatprep.subr.bf16.mxu0 0
      %1373 = vmatpush1.bf16.msra.mxu0 0
      %1374 = vmatprep.subr.bf16.mxu0 0
      %1375 = vmatpush1.bf16.msra.mxu0 0
      %1376 = vmatprep.subr.bf16.mxu0 0
      %1377 = vmatpush1.bf16.msra.mxu0 0
      %1378 = vmatprep.subr.bf16.mxu0 0
      %1379 = vmatpush1.bf16.msra.mxu0 0
      %1380 = vmatprep.subr.bf16.mxu0 0
      %1381 = vmatpush1.bf16.msra.mxu0 0
      %1382 = vmatprep.subr.bf16.mxu0 0
      %1383 = vmatpush1.bf16.msra.mxu0 0
      %1384 = vmatprep.subr.bf16.mxu0 0
      %1385 = vmatpush1.bf16.msra.mxu0 0
      %1386 = vmatprep.subr.bf16.mxu0 0
      %1387 = vmatpush1.bf16.msra.mxu0 0
      %1388 = vmatprep.subr.bf16.mxu0 0
      %1389 = vmatpush1.bf16.msra.mxu0 0
      %1390 = vmatprep.subr.bf16.mxu0 0
      %1391 = vmatpush1.bf16.msra.mxu0 0
      %1392 = vmatprep.subr.bf16.mxu0 0
      %1393 = vmatpush1.bf16.msra.mxu0 0
      %1394 = vmatprep.mubr.bf16.mxu0 0
      %1395 = vmatmul.mubr.bf16.gmra.mrb[0].mxu0 %v1321
      %v1396 = vpop.f32.mrb[0].mxu0
      %v1397 = vadd.f32 0.0, %v1396
      %v1398 = vpop.f32.mrb[0].mxu0
      %v1399 = vpop.f32.mrb[0].mxu0
      %v1400 = vadd.f32 0.0, %v1399
      %v1401 = vpop.f32.mrb[0].mxu0
      %1402 = vmatprep.mubr.bf16.mxu0 0
      %1403 = vmatmul.mubr.bf16.gmra.mrb[0].mxu0 %v1324
      %v1404 = vpop.f32.mrb[0].mxu0
      %v1405 = vadd.f32 0.0, %v1404
      %v1406 = vpop.f32.mrb[0].mxu0
      %v1407 = vpop.f32.mrb[0].mxu0
      %v1408 = vadd.f32 0.0, %v1407
      %v1409 = vpop.f32.mrb[0].mxu0
      %1410 = vmatprep.mubr.bf16.mxu0 0
      %1411 = vmatmul.mubr.bf16.gmra.mrb[0].mxu0 %v1327
      %v1412 = vpop.f32.mrb[0].mxu0
      %v1413 = vadd.f32 0.0, %v1412
      %v1414 = vpop.f32.mrb[0].mxu0
      %v1415 = vpop.f32.mrb[0].mxu0
      %v1416 = vadd.f32 0.0, %v1415
      %v1417 = vpop.f32.mrb[0].mxu0
      %1418 = vmatprep.mubr.bf16.mxu0 0
      %1419 = vmatmul.mubr.bf16.gmra.mrb[0].mxu0 %v1330
      %v1420 = vpop.f32.mrb[0].mxu0
      %v1421 = vadd.f32 0.0, %v1420
      %v1422 = vpop.f32.mrb[0].mxu0
      %v1423 = vpop.f32.mrb[0].mxu0
      %v1424 = vadd.f32 0.0, %v1423
      %v1425 = vpop.f32.mrb[0].mxu0
      %1426 = vmatprep.mubr.bf16.mxu0 0
      %1427 = vmatmul.mubr.bf16.gmra.mrb[0].mxu0 %v1333
      %v1428 = vpop.f32.mrb[0].mxu0
      %v1429 = vadd.f32 0.0, %v1428
      %v1430 = vpop.f32.mrb[0].mxu0
      %v1431 = vpop.f32.mrb[0].mxu0
      %v1432 = vadd.f32 0.0, %v1431
      %v1433 = vpop.f32.mrb[0].mxu0
      %1434 = vmatprep.mubr.bf16.mxu0 0
      %1435 = vmatmul.mubr.bf16.gmra.mrb[0].mxu0 %v1336
      %v1436 = vpop.f32.mrb[0].mxu0
      %v1437 = vadd.f32 0.0, %v1436
      %v1438 = vpop.f32.mrb[0].mxu0
      %v1439 = vpop.f32.mrb[0].mxu0
      %v1440 = vadd.f32 0.0, %v1439
      %v1441 = vpop.f32.mrb[0].mxu0
      %1442 = vmatprep.mubr.bf16.mxu0 0
      %1443 = vmatmul.mubr.bf16.gmra.mrb[0].mxu0 %v1339
      %v1444 = vpop.f32.mrb[0].mxu0
      %v1445 = vadd.f32 0.0, %v1444
      %v1446 = vpop.f32.mrb[0].mxu0
      %v1447 = vpop.f32.mrb[0].mxu0
      %v1448 = vadd.f32 0.0, %v1447
      %v1449 = vpop.f32.mrb[0].mxu0
      %1450 = vmatprep.mubr.bf16.mxu0 0
      %1451 = vmatmul.mubr.bf16.gmra.mrb[0].mxu0 %v1342
      %v1452 = vpop.f32.mrb[0].mxu0
      %v1453 = vadd.f32 0.0, %v1452
      %v1454 = vpop.f32.mrb[0].mxu0
      %v1455 = vpop.f32.mrb[0].mxu0
      %v1456 = vadd.f32 0.0, %v1455
      %v1457 = vpop.f32.mrb[0].mxu0
      %1458 = vmatprep.mubr.bf16.mxu0 0
      %1459 = vmatmul.mubr.bf16.gmra.mrb[0].mxu0 %v1345
      %v1460 = vpop.f32.mrb[0].mxu0
      %v1461 = vadd.f32 0.0, %v1460
      %v1462 = vpop.f32.mrb[0].mxu0
      %v1463 = vpop.f32.mrb[0].mxu0
      %v1464 = vadd.f32 0.0, %v1463
      %v1465 = vpop.f32.mrb[0].mxu0
      %1466 = vmatprep.mubr.bf16.mxu0 0
      %1467 = vmatmul.mubr.bf16.gmra.mrb[0].mxu0 %v1348
      %v1468 = vpop.f32.mrb[0].mxu0
      %v1469 = vadd.f32 0.0, %v1468
      %v1470 = vpop.f32.mrb[0].mxu0
      %v1471 = vpop.f32.mrb[0].mxu0
      %v1472 = vadd.f32 0.0, %v1471
      %v1473 = vpop.f32.mrb[0].mxu0
      %1474 = vmatprep.mubr.bf16.mxu0 0
      %1475 = vmatmul.mubr.bf16.gmra.mrb[0].mxu0 %v1351
      %v1476 = vpop.f32.mrb[0].mxu0
      %v1477 = vadd.f32 0.0, %v1476
      %v1478 = vpop.f32.mrb[0].mxu0
      %v1479 = vpop.f32.mrb[0].mxu0
      %v1480 = vadd.f32 0.0, %v1479
      %v1481 = vpop.f32.mrb[0].mxu0
      %1482 = vmatprep.mubr.bf16.mxu0 0
      %1483 = vmatmul.mubr.bf16.gmra.mrb[0].mxu0 %v1354
      %v1484 = vpop.f32.mrb[0].mxu0
      %v1485 = vadd.f32 0.0, %v1484
      %v1486 = vpop.f32.mrb[0].mxu0
      %v1487 = vpop.f32.mrb[0].mxu0
      %v1488 = vadd.f32 0.0, %v1487
      %v1489 = vpop.f32.mrb[0].mxu0
      %1490 = vmatprep.mubr.bf16.mxu0 0
      %1491 = vmatmul.mubr.bf16.gmra.mrb[0].mxu0 %v1357
      %v1492 = vpop.f32.mrb[0].mxu0
      %v1493 = vadd.f32 0.0, %v1492
      %v1494 = vpop.f32.mrb[0].mxu0
      %v1495 = vpop.f32.mrb[0].mxu0
      %v1496 = vadd.f32 0.0, %v1495
      %v1497 = vpop.f32.mrb[0].mxu0
      %1498 = vdwg.mxu0
      %v1499 = vadd.f32 %v1201, %v1397
      %v1500 = vadd.f32 %v1202, %v1400
      %v1501 = vadd.f32 %v1203, %v1405
      %v1502 = vadd.f32 %v1204, %v1408
      %v1503 = vadd.f32 %v1205, %v1413
      %v1504 = vadd.f32 %v1206, %v1416
      %v1505 = vadd.f32 %v1207, %v1421
      %v1506 = vadd.f32 %v1208, %v1424
      %v1507 = vadd.f32 %v1209, %v1429
      %v1508 = vadd.f32 %v1210, %v1432
      %v1509 = vadd.f32 %v1211, %v1437
      %v1510 = vadd.f32 %v1212, %v1440
      %v1511 = vadd.f32 %v1213, %v1445
      %v1512 = vadd.f32 %v1214, %v1448
      %v1513 = vadd.f32 %v1215, %v1453
      %v1514 = vadd.f32 %v1216, %v1456
      %v1515 = vadd.f32 %v1217, %v1461
      %v1516 = vadd.f32 %v1218, %v1464
      %v1517 = vadd.f32 %v1219, %v1469
      %v1518 = vadd.f32 %v1220, %v1472
      %v1519 = vadd.f32 %v1221, %v1477
      %v1520 = vadd.f32 %v1222, %v1480
      %v1521 = vadd.f32 %v1223, %v1485
      %v1522 = vadd.f32 %v1224, %v1488
      %v1523 = vadd.f32 %v1225, %v1493
      %v1524 = vadd.f32 %v1226, %v1496
      %s1525 = scalar_lea.vmem %s1, 10
      %v1526 = vld [vmem:[%s1525] sm:$0x3]
      %v1527 = vshrl.u32 %v1307, 16
      %v1529 = vshll.u32 %v1307, 16
      %v1531 = vrot.slane %v1529, 1
      %v1532 = vor.u32 %v1527, %v1531
      %v1533 = vshll.u32 %v1308, 16
      %v1535 = vrot.slane %v1533, 1
      %v1536 = vsel %vm266, %v1532, %v1535
      %v1537 = vshrl.u32 %v1308, 16
      %v1539 = vor.u32 %v1537, %v1535
      %v1540 = vshll.u32 %v1309, 16
      %v1542 = vrot.slane %v1540, 1
      %v1543 = vsel %vm266, %v1539, %v1542
      %v1544 = vshrl.u32 %v1309, 16
      %v1546 = vor.u32 %v1544, %v1542
      %v1547 = vshll.u32 %v1310, 16
      %v1549 = vrot.slane %v1547, 1
      %v1550 = vsel %vm266, %v1546, %v1549
      %v1551 = vshrl.u32 %v1310, 16
      %v1553 = vor.u32 %v1551, %v1549
      %v1554 = vshll.u32 %v1311, 16
      %v1556 = vrot.slane %v1554, 1
      %v1557 = vsel %vm266, %v1553, %v1556
      %v1558 = vshrl.u32 %v1311, 16
      %v1560 = vor.u32 %v1558, %v1556
      %v1561 = vshll.u32 %v1312, 16
      %v1563 = vrot.slane %v1561, 1
      %v1564 = vsel %vm266, %v1560, %v1563
      %v1565 = vshrl.u32 %v1312, 16
      %v1567 = vor.u32 %v1565, %v1563
      %v1568 = vshll.u32 %v1313, 16
      %v1570 = vrot.slane %v1568, 1
      %v1571 = vsel %vm266, %v1567, %v1570
      %v1572 = vshrl.u32 %v1313, 16
      %v1574 = vor.u32 %v1572, %v1570
      %v1575 = vshll.u32 %v1314, 16
      %v1577 = vrot.slane %v1575, 1
      %v1578 = vsel %vm266, %v1574, %v1577
      %v1579 = vshrl.u32 %v1314, 16
      %v1581 = vor.u32 %v1579, %v1577
      %v1582 = vshll.u32 %v1315, 16
      %v1584 = vrot.slane %v1582, 1
      %v1585 = vsel %vm266, %v1581, %v1584
      %v1586 = vshrl.u32 %v1315, 16
      %v1588 = vor.u32 %v1586, %v1584
      %v1589 = vshll.u32 %v1316, 16
      %v1591 = vrot.slane %v1589, 1
      %v1592 = vsel %vm266, %v1588, %v1591
      %v1593 = vshrl.u32 %v1316, 16
      %v1595 = vor.u32 %v1593, %v1591
      %v1596 = vshll.u32 %v1317, 16
      %v1598 = vrot.slane %v1596, 1
      %v1599 = vsel %vm266, %v1595, %v1598
      %v1600 = vshrl.u32 %v1317, 16
      %v1602 = vor.u32 %v1600, %v1598
      %v1603 = vshll.u32 %v1318, 16
      %v1605 = vrot.slane %v1603, 1
      %v1606 = vsel %vm266, %v1602, %v1605
      %v1607 = vshrl.u32 %v1318, 16
      %v1609 = vor.u32 %v1607, %v1605
      %v1610 = vshll.u32 %v1319, 16
      %v1612 = vrot.slane %v1610, 1
      %v1613 = vsel %vm266, %v1609, %v1612
      %v1614 = vshrl.u32 %v1319, 16
      %v1616 = vor.u32 %v1614, %v1612
      %v1618 = vsel %vm370, %v1536, 0
      %v1621 = vsel %vm370, %v1543, 0
      %v1624 = vsel %vm370, %v1550, 0
      %v1627 = vsel %vm370, %v1557, 0
      %v1630 = vsel %vm370, %v1564, 0
      %v1633 = vsel %vm370, %v1571, 0
      %v1636 = vsel %vm370, %v1578, 0
      %v1639 = vsel %vm370, %v1585, 0
      %v1642 = vsel %vm370, %v1592, 0
      %v1645 = vsel %vm370, %v1599, 0
      %v1648 = vsel %vm370, %v1606, 0
      %v1651 = vsel %vm370, %v1613, 0
      %v1654 = vsel %vm370, %v1616, 0
      %v1657 = vsel %vm410, %v1526, 0
      %1659 = vmatprep.subr.bf16.mxu0 0
      %1660 = vmatpush1.bf16.msra.mxu0 %v1657
      %1661 = vmatprep.subr.bf16.mxu0 0
      %1662 = vmatpush1.bf16.msra.mxu0 0
      %1663 = vmatprep.subr.bf16.mxu0 0
      %1664 = vmatpush1.bf16.msra.mxu0 0
      %1665 = vmatprep.subr.bf16.mxu0 0
      %1666 = vmatpush1.bf16.msra.mxu0 0
      %1667 = vmatprep.subr.bf16.mxu0 0
      %1668 = vmatpush1.bf16.msra.mxu0 0
      %1669 = vmatprep.subr.bf16.mxu0 0
      %1670 = vmatpush1.bf16.msra.mxu0 0
      %1671 = vmatprep.subr.bf16.mxu0 0
      %1672 = vmatpush1.bf16.msra.mxu0 0
      %1673 = vmatprep.subr.bf16.mxu0 0
      %1674 = vmatpush1.bf16.msra.mxu0 0
      %1675 = vmatprep.subr.bf16.mxu0 0
      %1676 = vmatpush1.bf16.msra.mxu0 0
      %1677 = vmatprep.subr.bf16.mxu0 0
      %1678 = vmatpush1.bf16.msra.mxu0 0
      %1679 = vmatprep.subr.bf16.mxu0 0
      %1680 = vmatpush1.bf16.msra.mxu0 0
      %1681 = vmatprep.subr.bf16.mxu0 0
      %1682 = vmatpush1.bf16.msra.mxu0 0
      %1683 = vmatprep.subr.bf16.mxu0 0
      %1684 = vmatpush1.bf16.msra.mxu0 0
      %1685 = vmatprep.subr.bf16.mxu0 0
      %1686 = vmatpush1.bf16.msra.mxu0 0
      %1687 = vmatprep.subr.bf16.mxu0 0
      %1688 = vmatpush1.bf16.msra.mxu0 0
      %1689 = vmatprep.subr.bf16.mxu0 0
      %1690 = vmatpush1.bf16.msra.mxu0 0
      %1691 = vmatprep.mubr.bf16.mxu0 0
      %1692 = vmatmul.mubr.bf16.gmra.mrb[0].mxu0 %v1618
      %v1693 = vpop.f32.mrb[0].mxu0
      %v1694 = vadd.f32 0.0, %v1693
      %v1695 = vpop.f32.mrb[0].mxu0
      %v1696 = vpop.f32.mrb[0].mxu0
      %v1697 = vadd.f32 0.0, %v1696
      %v1698 = vpop.f32.mrb[0].mxu0
      %1699 = vmatprep.mubr.bf16.mxu0 0
      %1700 = vmatmul.mubr.bf16.gmra.mrb[0].mxu0 %v1621
      %v1701 = vpop.f32.mrb[0].mxu0
      %v1702 = vadd.f32 0.0, %v1701
      %v1703 = vpop.f32.mrb[0].mxu0
      %v1704 = vpop.f32.mrb[0].mxu0
      %v1705 = vadd.f32 0.0, %v1704
      %v1706 = vpop.f32.mrb[0].mxu0
      %1707 = vmatprep.mubr.bf16.mxu0 0
      %1708 = vmatmul.mubr.bf16.gmra.mrb[0].mxu0 %v1624
      %v1709 = vpop.f32.mrb[0].mxu0
      %v1710 = vadd.f32 0.0, %v1709
      %v1711 = vpop.f32.mrb[0].mxu0
      %v1712 = vpop.f32.mrb[0].mxu0
      %v1713 = vadd.f32 0.0, %v1712
      %v1714 = vpop.f32.mrb[0].mxu0
      %1715 = vmatprep.mubr.bf16.mxu0 0
      %1716 = vmatmul.mubr.bf16.gmra.mrb[0].mxu0 %v1627
      %v1717 = vpop.f32.mrb[0].mxu0
      %v1718 = vadd.f32 0.0, %v1717
      %v1719 = vpop.f32.mrb[0].mxu0
      %v1720 = vpop.f32.mrb[0].mxu0
      %v1721 = vadd.f32 0.0, %v1720
      %v1722 = vpop.f32.mrb[0].mxu0
      %1723 = vmatprep.mubr.bf16.mxu0 0
      %1724 = vmatmul.mubr.bf16.gmra.mrb[0].mxu0 %v1630
      %v1725 = vpop.f32.mrb[0].mxu0
      %v1726 = vadd.f32 0.0, %v1725
      %v1727 = vpop.f32.mrb[0].mxu0
      %v1728 = vpop.f32.mrb[0].mxu0
      %v1729 = vadd.f32 0.0, %v1728
      %v1730 = vpop.f32.mrb[0].mxu0
      %1731 = vmatprep.mubr.bf16.mxu0 0
      %1732 = vmatmul.mubr.bf16.gmra.mrb[0].mxu0 %v1633
      %v1733 = vpop.f32.mrb[0].mxu0
      %v1734 = vadd.f32 0.0, %v1733
      %v1735 = vpop.f32.mrb[0].mxu0
      %v1736 = vpop.f32.mrb[0].mxu0
      %v1737 = vadd.f32 0.0, %v1736
      %v1738 = vpop.f32.mrb[0].mxu0
      %1739 = vmatprep.mubr.bf16.mxu0 0
      %1740 = vmatmul.mubr.bf16.gmra.mrb[0].mxu0 %v1636
      %v1741 = vpop.f32.mrb[0].mxu0
      %v1742 = vadd.f32 0.0, %v1741
      %v1743 = vpop.f32.mrb[0].mxu0
      %v1744 = vpop.f32.mrb[0].mxu0
      %v1745 = vadd.f32 0.0, %v1744
      %v1746 = vpop.f32.mrb[0].mxu0
      %1747 = vmatprep.mubr.bf16.mxu0 0
      %1748 = vmatmul.mubr.bf16.gmra.mrb[0].mxu0 %v1639
      %v1749 = vpop.f32.mrb[0].mxu0
      %v1750 = vadd.f32 0.0, %v1749
      %v1751 = vpop.f32.mrb[0].mxu0
      %v1752 = vpop.f32.mrb[0].mxu0
      %v1753 = vadd.f32 0.0, %v1752
      %v1754 = vpop.f32.mrb[0].mxu0
      %1755 = vmatprep.mubr.bf16.mxu0 0
      %1756 = vmatmul.mubr.bf16.gmra.mrb[0].mxu0 %v1642
      %v1757 = vpop.f32.mrb[0].mxu0
      %v1758 = vadd.f32 0.0, %v1757
      %v1759 = vpop.f32.mrb[0].mxu0
      %v1760 = vpop.f32.mrb[0].mxu0
      %v1761 = vadd.f32 0.0, %v1760
      %v1762 = vpop.f32.mrb[0].mxu0
      %1763 = vmatprep.mubr.bf16.mxu0 0
      %1764 = vmatmul.mubr.bf16.gmra.mrb[0].mxu0 %v1645
      %v1765 = vpop.f32.mrb[0].mxu0
      %v1766 = vadd.f32 0.0, %v1765
      %v1767 = vpop.f32.mrb[0].mxu0
      %v1768 = vpop.f32.mrb[0].mxu0
      %v1769 = vadd.f32 0.0, %v1768
      %v1770 = vpop.f32.mrb[0].mxu0
      %1771 = vmatprep.mubr.bf16.mxu0 0
      %1772 = vmatmul.mubr.bf16.gmra.mrb[0].mxu0 %v1648
      %v1773 = vpop.f32.mrb[0].mxu0
      %v1774 = vadd.f32 0.0, %v1773
      %v1775 = vpop.f32.mrb[0].mxu0
      %v1776 = vpop.f32.mrb[0].mxu0
      %v1777 = vadd.f32 0.0, %v1776
      %v1778 = vpop.f32.mrb[0].mxu0
      %1779 = vmatprep.mubr.bf16.mxu0 0
      %1780 = vmatmul.mubr.bf16.gmra.mrb[0].mxu0 %v1651
      %v1781 = vpop.f32.mrb[0].mxu0
      %v1782 = vadd.f32 0.0, %v1781
      %v1783 = vpop.f32.mrb[0].mxu0
      %v1784 = vpop.f32.mrb[0].mxu0
      %v1785 = vadd.f32 0.0, %v1784
      %v1786 = vpop.f32.mrb[0].mxu0
      %1787 = vmatprep.mubr.bf16.mxu0 0
      %1788 = vmatmul.mubr.bf16.gmra.mrb[0].mxu0 %v1654
      %v1789 = vpop.f32.mrb[0].mxu0
      %v1790 = vadd.f32 0.0, %v1789
      %v1791 = vpop.f32.mrb[0].mxu0
      %v1792 = vpop.f32.mrb[0].mxu0
      %v1793 = vadd.f32 0.0, %v1792
      %v1794 = vpop.f32.mrb[0].mxu0
      %1795 = vdwg.mxu0
      %v1796 = vadd.f32 %v1499, %v1694
      %v1797 = vadd.f32 %v1500, %v1697
      %v1798 = vadd.f32 %v1501, %v1702
      %v1799 = vadd.f32 %v1502, %v1705
      %v1800 = vadd.f32 %v1503, %v1710
      %v1801 = vadd.f32 %v1504, %v1713
      %v1802 = vadd.f32 %v1505, %v1718
      %v1803 = vadd.f32 %v1506, %v1721
      %v1804 = vadd.f32 %v1507, %v1726
      %v1805 = vadd.f32 %v1508, %v1729
      %v1806 = vadd.f32 %v1509, %v1734
      %v1807 = vadd.f32 %v1510, %v1737
      %v1808 = vadd.f32 %v1511, %v1742
      %v1809 = vadd.f32 %v1512, %v1745
      %v1810 = vadd.f32 %v1513, %v1750
      %v1811 = vadd.f32 %v1514, %v1753
      %v1812 = vadd.f32 %v1515, %v1758
      %v1813 = vadd.f32 %v1516, %v1761
      %v1814 = vadd.f32 %v1517, %v1766
      %v1815 = vadd.f32 %v1518, %v1769
      %v1816 = vadd.f32 %v1519, %v1774
      %v1817 = vadd.f32 %v1520, %v1777
      %v1818 = vadd.f32 %v1521, %v1782
      %v1819 = vadd.f32 %v1522, %v1785
      %v1820 = vadd.f32 %v1523, %v1790
      %v1821 = vadd.f32 %v1524, %v1793
      %v1822 = vld [vmem:[%s165 + $0x8] sm:$0xe]
      %v1823 = vld [vmem:[%s165 + $0x6c] sm:$0xf]
      %s1824 = scalar_lea.vmem %s1, 12
      %v1825 = vld [vmem:[%s1824] sm:$0x3]
      %v1828 = vunpack.c.l.b16 %v1822
      %v1829 = vunpack.c.l.b16 %v1823
      %v1830 = vpack.c.b16 %v1282, %v1828
      %v1831 = vpack.c.b16 %v1829, %v1305
      %v1832 = vrot.slane %v1830, 1
      %v1833 = vrot.slane %v1308, 1
      %v1834 = vsel %vm727, %v1832, %v1833
      %v1835 = vrot.slane %v1309, 1
      %v1836 = vsel %vm727, %v1833, %v1835
      %v1837 = vrot.slane %v1310, 1
      %v1838 = vsel %vm727, %v1835, %v1837
      %v1839 = vrot.slane %v1311, 1
      %v1840 = vsel %vm727, %v1837, %v1839
      %v1841 = vrot.slane %v1312, 1
      %v1842 = vsel %vm727, %v1839, %v1841
      %v1843 = vrot.slane %v1313, 1
      %v1844 = vsel %vm727, %v1841, %v1843
      %v1845 = vrot.slane %v1314, 1
      %v1846 = vsel %vm727, %v1843, %v1845
      %v1847 = vrot.slane %v1315, 1
      %v1848 = vsel %vm727, %v1845, %v1847
      %v1849 = vrot.slane %v1316, 1
      %v1850 = vsel %vm727, %v1847, %v1849
      %v1851 = vrot.slane %v1317, 1
      %v1852 = vsel %vm727, %v1849, %v1851
      %v1853 = vrot.slane %v1318, 1
      %v1854 = vsel %vm727, %v1851, %v1853
      %v1855 = vrot.slane %v1831, 1
      %v1856 = vsel %vm727, %v1853, %v1855
      %v1858 = vsel %vm370, %v1834, 0
      %v1861 = vsel %vm370, %v1836, 0
      %v1864 = vsel %vm370, %v1838, 0
      %v1867 = vsel %vm370, %v1840, 0
      %v1870 = vsel %vm370, %v1842, 0
      %v1873 = vsel %vm370, %v1844, 0
      %v1876 = vsel %vm370, %v1846, 0
      %v1879 = vsel %vm370, %v1848, 0
      %v1882 = vsel %vm370, %v1850, 0
      %v1885 = vsel %vm370, %v1852, 0
      %v1888 = vsel %vm370, %v1854, 0
      %v1891 = vsel %vm370, %v1856, 0
      %v1894 = vsel %vm370, %v1855, 0
      %v1897 = vsel %vm410, %v1825, 0
      %1899 = vmatprep.subr.bf16.mxu0 0
      %1900 = vmatpush1.bf16.msra.mxu0 %v1897
      %1901 = vmatprep.subr.bf16.mxu0 0
      %1902 = vmatpush1.bf16.msra.mxu0 0
      %1903 = vmatprep.subr.bf16.mxu0 0
      %1904 = vmatpush1.bf16.msra.mxu0 0
      %1905 = vmatprep.subr.bf16.mxu0 0
      %1906 = vmatpush1.bf16.msra.mxu0 0
      %1907 = vmatprep.subr.bf16.mxu0 0
      %1908 = vmatpush1.bf16.msra.mxu0 0
      %1909 = vmatprep.subr.bf16.mxu0 0
      %1910 = vmatpush1.bf16.msra.mxu0 0
      %1911 = vmatprep.subr.bf16.mxu0 0
      %1912 = vmatpush1.bf16.msra.mxu0 0
      %1913 = vmatprep.subr.bf16.mxu0 0
      %1914 = vmatpush1.bf16.msra.mxu0 0
      %1915 = vmatprep.subr.bf16.mxu0 0
      %1916 = vmatpush1.bf16.msra.mxu0 0
      %1917 = vmatprep.subr.bf16.mxu0 0
      %1918 = vmatpush1.bf16.msra.mxu0 0
      %1919 = vmatprep.subr.bf16.mxu0 0
      %1920 = vmatpush1.bf16.msra.mxu0 0
      %1921 = vmatprep.subr.bf16.mxu0 0
      %1922 = vmatpush1.bf16.msra.mxu0 0
      %1923 = vmatprep.subr.bf16.mxu0 0
      %1924 = vmatpush1.bf16.msra.mxu0 0
      %1925 = vmatprep.subr.bf16.mxu0 0
      %1926 = vmatpush1.bf16.msra.mxu0 0
      %1927 = vmatprep.subr.bf16.mxu0 0
      %1928 = vmatpush1.bf16.msra.mxu0 0
      %1929 = vmatprep.subr.bf16.mxu0 0
      %1930 = vmatpush1.bf16.msra.mxu0 0
      %1931 = vmatprep.mubr.bf16.mxu0 0
      %1932 = vmatmul.mubr.bf16.gmra.mrb[0].mxu0 %v1858
      %v1933 = vpop.f32.mrb[0].mxu0
      %v1934 = vadd.f32 0.0, %v1933
      %v1935 = vpop.f32.mrb[0].mxu0
      %v1936 = vpop.f32.mrb[0].mxu0
      %v1937 = vadd.f32 0.0, %v1936
      %v1938 = vpop.f32.mrb[0].mxu0
      %1939 = vmatprep.mubr.bf16.mxu0 0
      %1940 = vmatmul.mubr.bf16.gmra.mrb[0].mxu0 %v1861
      %v1941 = vpop.f32.mrb[0].mxu0
      %v1942 = vadd.f32 0.0, %v1941
      %v1943 = vpop.f32.mrb[0].mxu0
      %v1944 = vpop.f32.mrb[0].mxu0
      %v1945 = vadd.f32 0.0, %v1944
      %v1946 = vpop.f32.mrb[0].mxu0
      %1947 = vmatprep.mubr.bf16.mxu0 0
      %1948 = vmatmul.mubr.bf16.gmra.mrb[0].mxu0 %v1864
      %v1949 = vpop.f32.mrb[0].mxu0
      %v1950 = vadd.f32 0.0, %v1949
      %v1951 = vpop.f32.mrb[0].mxu0
      %v1952 = vpop.f32.mrb[0].mxu0
      %v1953 = vadd.f32 0.0, %v1952
      %v1954 = vpop.f32.mrb[0].mxu0
      %1955 = vmatprep.mubr.bf16.mxu0 0
      %1956 = vmatmul.mubr.bf16.gmra.mrb[0].mxu0 %v1867
      %v1957 = vpop.f32.mrb[0].mxu0
      %v1958 = vadd.f32 0.0, %v1957
      %v1959 = vpop.f32.mrb[0].mxu0
      %v1960 = vpop.f32.mrb[0].mxu0
      %v1961 = vadd.f32 0.0, %v1960
      %v1962 = vpop.f32.mrb[0].mxu0
      %1963 = vmatprep.mubr.bf16.mxu0 0
      %1964 = vmatmul.mubr.bf16.gmra.mrb[0].mxu0 %v1870
      %v1965 = vpop.f32.mrb[0].mxu0
      %v1966 = vadd.f32 0.0, %v1965
      %v1967 = vpop.f32.mrb[0].mxu0
      %v1968 = vpop.f32.mrb[0].mxu0
      %v1969 = vadd.f32 0.0, %v1968
      %v1970 = vpop.f32.mrb[0].mxu0
      %1971 = vmatprep.mubr.bf16.mxu0 0
      %1972 = vmatmul.mubr.bf16.gmra.mrb[0].mxu0 %v1873
      %v1973 = vpop.f32.mrb[0].mxu0
      %v1974 = vadd.f32 0.0, %v1973
      %v1975 = vpop.f32.mrb[0].mxu0
      %v1976 = vpop.f32.mrb[0].mxu0
      %v1977 = vadd.f32 0.0, %v1976
      %v1978 = vpop.f32.mrb[0].mxu0
      %1979 = vmatprep.mubr.bf16.mxu0 0
      %1980 = vmatmul.mubr.bf16.gmra.mrb[0].mxu0 %v1876
      %v1981 = vpop.f32.mrb[0].mxu0
      %v1982 = vadd.f32 0.0, %v1981
      %v1983 = vpop.f32.mrb[0].mxu0
      %v1984 = vpop.f32.mrb[0].mxu0
      %v1985 = vadd.f32 0.0, %v1984
      %v1986 = vpop.f32.mrb[0].mxu0
      %1987 = vmatprep.mubr.bf16.mxu0 0
      %1988 = vmatmul.mubr.bf16.gmra.mrb[0].mxu0 %v1879
      %v1989 = vpop.f32.mrb[0].mxu0
      %v1990 = vadd.f32 0.0, %v1989
      %v1991 = vpop.f32.mrb[0].mxu0
      %v1992 = vpop.f32.mrb[0].mxu0
      %v1993 = vadd.f32 0.0, %v1992
      %v1994 = vpop.f32.mrb[0].mxu0
      %1995 = vmatprep.mubr.bf16.mxu0 0
      %1996 = vmatmul.mubr.bf16.gmra.mrb[0].mxu0 %v1882
      %v1997 = vpop.f32.mrb[0].mxu0
      %v1998 = vadd.f32 0.0, %v1997
      %v1999 = vpop.f32.mrb[0].mxu0
      %v2000 = vpop.f32.mrb[0].mxu0
      %v2001 = vadd.f32 0.0, %v2000
      %v2002 = vpop.f32.mrb[0].mxu0
      %2003 = vmatprep.mubr.bf16.mxu0 0
      %2004 = vmatmul.mubr.bf16.gmra.mrb[0].mxu0 %v1885
      %v2005 = vpop.f32.mrb[0].mxu0
      %v2006 = vadd.f32 0.0, %v2005
      %v2007 = vpop.f32.mrb[0].mxu0
      %v2008 = vpop.f32.mrb[0].mxu0
      %v2009 = vadd.f32 0.0, %v2008
      %v2010 = vpop.f32.mrb[0].mxu0
      %2011 = vmatprep.mubr.bf16.mxu0 0
      %2012 = vmatmul.mubr.bf16.gmra.mrb[0].mxu0 %v1888
      %v2013 = vpop.f32.mrb[0].mxu0
      %v2014 = vadd.f32 0.0, %v2013
      %v2015 = vpop.f32.mrb[0].mxu0
      %v2016 = vpop.f32.mrb[0].mxu0
      %v2017 = vadd.f32 0.0, %v2016
      %v2018 = vpop.f32.mrb[0].mxu0
      %2019 = vmatprep.mubr.bf16.mxu0 0
      %2020 = vmatmul.mubr.bf16.gmra.mrb[0].mxu0 %v1891
      %v2021 = vpop.f32.mrb[0].mxu0
      %v2022 = vadd.f32 0.0, %v2021
      %v2023 = vpop.f32.mrb[0].mxu0
      %v2024 = vpop.f32.mrb[0].mxu0
      %v2025 = vadd.f32 0.0, %v2024
      %v2026 = vpop.f32.mrb[0].mxu0
      %2027 = vmatprep.mubr.bf16.mxu0 0
      %2028 = vmatmul.mubr.bf16.gmra.mrb[0].mxu0 %v1894
      %v2029 = vpop.f32.mrb[0].mxu0
      %v2030 = vadd.f32 0.0, %v2029
      %v2031 = vpop.f32.mrb[0].mxu0
      %v2032 = vpop.f32.mrb[0].mxu0
      %v2033 = vadd.f32 0.0, %v2032
      %v2034 = vpop.f32.mrb[0].mxu0
      %2035 = vdwg.mxu0
      %v2036 = vadd.f32 %v1796, %v1934
      %v2037 = vadd.f32 %v1797, %v1937
      %v2038 = vadd.f32 %v1798, %v1942
      %v2039 = vadd.f32 %v1799, %v1945
      %v2040 = vadd.f32 %v1800, %v1950
      %v2041 = vadd.f32 %v1801, %v1953
      %v2042 = vadd.f32 %v1802, %v1958
      %v2043 = vadd.f32 %v1803, %v1961
      %v2044 = vadd.f32 %v1804, %v1966
      %v2045 = vadd.f32 %v1805, %v1969
      %v2046 = vadd.f32 %v1806, %v1974
      %v2047 = vadd.f32 %v1807, %v1977
      %v2048 = vadd.f32 %v1808, %v1982
      %v2049 = vadd.f32 %v1809, %v1985
      %v2050 = vadd.f32 %v1810, %v1990
      %v2051 = vadd.f32 %v1811, %v1993
      %v2052 = vadd.f32 %v1812, %v1998
      %v2053 = vadd.f32 %v1813, %v2001
      %v2054 = vadd.f32 %v1814, %v2006
      %v2055 = vadd.f32 %v1815, %v2009
      %v2056 = vadd.f32 %v1816, %v2014
      %v2057 = vadd.f32 %v1817, %v2017
      %v2058 = vadd.f32 %v1818, %v2022
      %v2059 = vadd.f32 %v1819, %v2025
      %v2060 = vadd.f32 %v1820, %v2030
      %v2061 = vadd.f32 %v1821, %v2033
      %s2062 = scalar_lea.vmem %s1, 14
      %v2063 = vld [vmem:[%s2062] sm:$0x3]
      %v2065 = vshrl.u32 %v1830, 16
      %v2067 = vrot.slane %v2065, 1
      %v2068 = vshll.u32 %v1830, 16
      %v2070 = vrot.slane %v2068, 2
      %v2071 = vor.u32 %v2067, %v2070
      %v2072 = vrot.slane %v1537, 1
      %v2073 = vrot.slane %v1533, 2
      %v2074 = vor.u32 %v2072, %v2073
      %v2075 = vsel %vm960, %v2071, %v2074
      %v2076 = vrot.slane %v1544, 1
      %v2077 = vrot.slane %v1540, 2
      %v2078 = vor.u32 %v2076, %v2077
      %v2079 = vsel %vm960, %v2074, %v2078
      %v2080 = vrot.slane %v1551, 1
      %v2081 = vrot.slane %v1547, 2
      %v2082 = vor.u32 %v2080, %v2081
      %v2083 = vsel %vm960, %v2078, %v2082
      %v2084 = vrot.slane %v1558, 1
      %v2085 = vrot.slane %v1554, 2
      %v2086 = vor.u32 %v2084, %v2085
      %v2087 = vsel %vm960, %v2082, %v2086
      %v2088 = vrot.slane %v1565, 1
      %v2089 = vrot.slane %v1561, 2
      %v2090 = vor.u32 %v2088, %v2089
      %v2091 = vsel %vm960, %v2086, %v2090
      %v2092 = vrot.slane %v1572, 1
      %v2093 = vrot.slane %v1568, 2
      %v2094 = vor.u32 %v2092, %v2093
      %v2095 = vsel %vm960, %v2090, %v2094
      %v2096 = vrot.slane %v1579, 1
      %v2097 = vrot.slane %v1575, 2
      %v2098 = vor.u32 %v2096, %v2097
      %v2099 = vsel %vm960, %v2094, %v2098
      %v2100 = vrot.slane %v1586, 1
      %v2101 = vrot.slane %v1582, 2
      %v2102 = vor.u32 %v2100, %v2101
      %v2103 = vsel %vm960, %v2098, %v2102
      %v2104 = vrot.slane %v1593, 1
      %v2105 = vrot.slane %v1589, 2
      %v2106 = vor.u32 %v2104, %v2105
      %v2107 = vsel %vm960, %v2102, %v2106
      %v2108 = vrot.slane %v1600, 1
      %v2109 = vrot.slane %v1596, 2
      %v2110 = vor.u32 %v2108, %v2109
      %v2111 = vsel %vm960, %v2106, %v2110
      %v2112 = vrot.slane %v1607, 1
      %v2113 = vrot.slane %v1603, 2
      %v2114 = vor.u32 %v2112, %v2113
      %v2115 = vsel %vm960, %v2110, %v2114
      %v2117 = vshrl.u32 %v1831, 16
      %v2119 = vrot.slane %v2117, 1
      %v2120 = vshll.u32 %v1831, 16
      %v2122 = vrot.slane %v2120, 2
      %v2123 = vor.u32 %v2119, %v2122
      %v2124 = vsel %vm960, %v2114, %v2123
      %v2126 = vsel %vm370, %v2075, 0
      %v2129 = vsel %vm370, %v2079, 0
      %v2132 = vsel %vm370, %v2083, 0
      %v2135 = vsel %vm370, %v2087, 0
      %v2138 = vsel %vm370, %v2091, 0
      %v2141 = vsel %vm370, %v2095, 0
      %v2144 = vsel %vm370, %v2099, 0
      %v2147 = vsel %vm370, %v2103, 0
      %v2150 = vsel %vm370, %v2107, 0
      %v2153 = vsel %vm370, %v2111, 0
      %v2156 = vsel %vm370, %v2115, 0
      %v2159 = vsel %vm370, %v2124, 0
      %v2162 = vsel %vm370, %v2123, 0
      %v2165 = vsel %vm410, %v2063, 0
      %2167 = vmatprep.subr.bf16.mxu0 0
      %2168 = vmatpush1.bf16.msra.mxu0 %v2165
      %2169 = vmatprep.subr.bf16.mxu0 0
      %2170 = vmatpush1.bf16.msra.mxu0 0
      %2171 = vmatprep.subr.bf16.mxu0 0
      %2172 = vmatpush1.bf16.msra.mxu0 0
      %2173 = vmatprep.subr.bf16.mxu0 0
      %2174 = vmatpush1.bf16.msra.mxu0 0
      %2175 = vmatprep.subr.bf16.mxu0 0
      %2176 = vmatpush1.bf16.msra.mxu0 0
      %2177 = vmatprep.subr.bf16.mxu0 0
      %2178 = vmatpush1.bf16.msra.mxu0 0
      %2179 = vmatprep.subr.bf16.mxu0 0
      %2180 = vmatpush1.bf16.msra.mxu0 0
      %2181 = vmatprep.subr.bf16.mxu0 0
      %2182 = vmatpush1.bf16.msra.mxu0 0
      %2183 = vmatprep.subr.bf16.mxu0 0
      %2184 = vmatpush1.bf16.msra.mxu0 0
      %2185 = vmatprep.subr.bf16.mxu0 0
      %2186 = vmatpush1.bf16.msra.mxu0 0
      %2187 = vmatprep.subr.bf16.mxu0 0
      %2188 = vmatpush1.bf16.msra.mxu0 0
      %2189 = vmatprep.subr.bf16.mxu0 0
      %2190 = vmatpush1.bf16.msra.mxu0 0
      %2191 = vmatprep.subr.bf16.mxu0 0
      %2192 = vmatpush1.bf16.msra.mxu0 0
      %2193 = vmatprep.subr.bf16.mxu0 0
      %2194 = vmatpush1.bf16.msra.mxu0 0
      %2195 = vmatprep.subr.bf16.mxu0 0
      %2196 = vmatpush1.bf16.msra.mxu0 0
      %2197 = vmatprep.subr.bf16.mxu0 0
      %2198 = vmatpush1.bf16.msra.mxu0 0
      %2199 = vmatprep.mubr.bf16.mxu0 0
      %2200 = vmatmul.mubr.bf16.gmra.mrb[0].mxu0 %v2126
      %v2201 = vpop.f32.mrb[0].mxu0
      %v2202 = vadd.f32 0.0, %v2201
      %v2203 = vpop.f32.mrb[0].mxu0
      %v2204 = vpop.f32.mrb[0].mxu0
      %v2205 = vadd.f32 0.0, %v2204
      %v2206 = vpop.f32.mrb[0].mxu0
      %2207 = vmatprep.mubr.bf16.mxu0 0
      %2208 = vmatmul.mubr.bf16.gmra.mrb[0].mxu0 %v2129
      %v2209 = vpop.f32.mrb[0].mxu0
      %v2210 = vadd.f32 0.0, %v2209
      %v2211 = vpop.f32.mrb[0].mxu0
      %v2212 = vpop.f32.mrb[0].mxu0
      %v2213 = vadd.f32 0.0, %v2212
      %v2214 = vpop.f32.mrb[0].mxu0
      %2215 = vmatprep.mubr.bf16.mxu0 0
      %2216 = vmatmul.mubr.bf16.gmra.mrb[0].mxu0 %v2132
      %v2217 = vpop.f32.mrb[0].mxu0
      %v2218 = vadd.f32 0.0, %v2217
      %v2219 = vpop.f32.mrb[0].mxu0
      %v2220 = vpop.f32.mrb[0].mxu0
      %v2221 = vadd.f32 0.0, %v2220
      %v2222 = vpop.f32.mrb[0].mxu0
      %2223 = vmatprep.mubr.bf16.mxu0 0
      %2224 = vmatmul.mubr.bf16.gmra.mrb[0].mxu0 %v2135
      %v2225 = vpop.f32.mrb[0].mxu0
      %v2226 = vadd.f32 0.0, %v2225
      %v2227 = vpop.f32.mrb[0].mxu0
      %v2228 = vpop.f32.mrb[0].mxu0
      %v2229 = vadd.f32 0.0, %v2228
      %v2230 = vpop.f32.mrb[0].mxu0
      %2231 = vmatprep.mubr.bf16.mxu0 0
      %2232 = vmatmul.mubr.bf16.gmra.mrb[0].mxu0 %v2138
      %v2233 = vpop.f32.mrb[0].mxu0
      %v2234 = vadd.f32 0.0, %v2233
      %v2235 = vpop.f32.mrb[0].mxu0
      %v2236 = vpop.f32.mrb[0].mxu0
      %v2237 = vadd.f32 0.0, %v2236
      %v2238 = vpop.f32.mrb[0].mxu0
      %2239 = vmatprep.mubr.bf16.mxu0 0
      %2240 = vmatmul.mubr.bf16.gmra.mrb[0].mxu0 %v2141
      %v2241 = vpop.f32.mrb[0].mxu0
      %v2242 = vadd.f32 0.0, %v2241
      %v2243 = vpop.f32.mrb[0].mxu0
      %v2244 = vpop.f32.mrb[0].mxu0
      %v2245 = vadd.f32 0.0, %v2244
      %v2246 = vpop.f32.mrb[0].mxu0
      %2247 = vmatprep.mubr.bf16.mxu0 0
      %2248 = vmatmul.mubr.bf16.gmra.mrb[0].mxu0 %v2144
      %v2249 = vpop.f32.mrb[0].mxu0
      %v2250 = vadd.f32 0.0, %v2249
      %v2251 = vpop.f32.mrb[0].mxu0
      %v2252 = vpop.f32.mrb[0].mxu0
      %v2253 = vadd.f32 0.0, %v2252
      %v2254 = vpop.f32.mrb[0].mxu0
      %2255 = vmatprep.mubr.bf16.mxu0 0
      %2256 = vmatmul.mubr.bf16.gmra.mrb[0].mxu0 %v2147
      %v2257 = vpop.f32.mrb[0].mxu0
      %v2258 = vadd.f32 0.0, %v2257
      %v2259 = vpop.f32.mrb[0].mxu0
      %v2260 = vpop.f32.mrb[0].mxu0
      %v2261 = vadd.f32 0.0, %v2260
      %v2262 = vpop.f32.mrb[0].mxu0
      %2263 = vmatprep.mubr.bf16.mxu0 0
      %2264 = vmatmul.mubr.bf16.gmra.mrb[0].mxu0 %v2150
      %v2265 = vpop.f32.mrb[0].mxu0
      %v2266 = vadd.f32 0.0, %v2265
      %v2267 = vpop.f32.mrb[0].mxu0
      %v2268 = vpop.f32.mrb[0].mxu0
      %v2269 = vadd.f32 0.0, %v2268
      %v2270 = vpop.f32.mrb[0].mxu0
      %2271 = vmatprep.mubr.bf16.mxu0 0
      %2272 = vmatmul.mubr.bf16.gmra.mrb[0].mxu0 %v2153
      %v2273 = vpop.f32.mrb[0].mxu0
      %v2274 = vadd.f32 0.0, %v2273
      %v2275 = vpop.f32.mrb[0].mxu0
      %v2276 = vpop.f32.mrb[0].mxu0
      %v2277 = vadd.f32 0.0, %v2276
      %v2278 = vpop.f32.mrb[0].mxu0
      %2279 = vmatprep.mubr.bf16.mxu0 0
      %2280 = vmatmul.mubr.bf16.gmra.mrb[0].mxu0 %v2156
      %v2281 = vpop.f32.mrb[0].mxu0
      %v2282 = vadd.f32 0.0, %v2281
      %v2283 = vpop.f32.mrb[0].mxu0
      %v2284 = vpop.f32.mrb[0].mxu0
      %v2285 = vadd.f32 0.0, %v2284
      %v2286 = vpop.f32.mrb[0].mxu0
      %2287 = vmatprep.mubr.bf16.mxu0 0
      %2288 = vmatmul.mubr.bf16.gmra.mrb[0].mxu0 %v2159
      %v2289 = vpop.f32.mrb[0].mxu0
      %v2290 = vadd.f32 0.0, %v2289
      %v2291 = vpop.f32.mrb[0].mxu0
      %v2292 = vpop.f32.mrb[0].mxu0
      %v2293 = vadd.f32 0.0, %v2292
      %v2294 = vpop.f32.mrb[0].mxu0
      %2295 = vmatprep.mubr.bf16.mxu0 0
      %2296 = vmatmul.mubr.bf16.gmra.mrb[0].mxu0 %v2162
      %v2297 = vpop.f32.mrb[0].mxu0
      %v2298 = vadd.f32 0.0, %v2297
      %v2299 = vpop.f32.mrb[0].mxu0
      %v2300 = vpop.f32.mrb[0].mxu0
      %v2301 = vadd.f32 0.0, %v2300
      %v2302 = vpop.f32.mrb[0].mxu0
      %2303 = vdwg.mxu0
      %v2304 = vadd.f32 %v2036, %v2202
      %v2305 = vadd.f32 %v2037, %v2205
      %v2306 = vadd.f32 %v2038, %v2210
      %v2307 = vadd.f32 %v2039, %v2213
      %v2308 = vadd.f32 %v2040, %v2218
      %v2309 = vadd.f32 %v2041, %v2221
      %v2310 = vadd.f32 %v2042, %v2226
      %v2311 = vadd.f32 %v2043, %v2229
      %v2312 = vadd.f32 %v2044, %v2234
      %v2313 = vadd.f32 %v2045, %v2237
      %v2314 = vadd.f32 %v2046, %v2242
      %v2315 = vadd.f32 %v2047, %v2245
      %v2316 = vadd.f32 %v2048, %v2250
      %v2317 = vadd.f32 %v2049, %v2253
      %v2318 = vadd.f32 %v2050, %v2258
      %v2319 = vadd.f32 %v2051, %v2261
      %v2320 = vadd.f32 %v2052, %v2266
      %v2321 = vadd.f32 %v2053, %v2269
      %v2322 = vadd.f32 %v2054, %v2274
      %v2323 = vadd.f32 %v2055, %v2277
      %v2324 = vadd.f32 %v2056, %v2282
      %v2325 = vadd.f32 %v2057, %v2285
      %v2326 = vadd.f32 %v2058, %v2290
      %v2327 = vadd.f32 %v2059, %v2293
      %v2328 = vadd.f32 %v2060, %v2298
      %v2329 = vadd.f32 %v2061, %v2301
      %v2330 = vld [vmem:[%s165 + $0x10] sm:$0xf]
      %v2331 = vld [vmem:[%s165 + $0x14] sm:$0xf]
      %v2332 = vld [vmem:[%s165 + $0x18] sm:$0xf]
      %v2333 = vld [vmem:[%s165 + $0x1c] sm:$0xf]
      %v2334 = vld [vmem:[%s165 + $0x20] sm:$0xf]
      %v2335 = vld [vmem:[%s165 + $0x24] sm:$0xf]
      %v2336 = vld [vmem:[%s165 + $0x28] sm:$0xf]
      %v2337 = vld [vmem:[%s165 + $0x2c] sm:$0xf]
      %v2338 = vld [vmem:[%s165 + $0x30] sm:$0xf]
      %v2339 = vld [vmem:[%s165 + $0x34] sm:$0xf]
      %v2340 = vld [vmem:[%s165 + $0x38] sm:$0xf]
      %v2341 = vld [vmem:[%s165 + $0x3c] sm:$0xf]
      %v2342 = vld [vmem:[%s165 + $0x40] sm:$0xf]
      %v2343 = vld [vmem:[%s165 + $0x44] sm:$0xf]
      %v2344 = vld [vmem:[%s165 + $0x48] sm:$0xf]
      %v2345 = vld [vmem:[%s165 + $0x4c] sm:$0xf]
      %v2346 = vld [vmem:[%s165 + $0x50] sm:$0xf]
      %v2347 = vld [vmem:[%s165 + $0x54] sm:$0xf]
      %v2348 = vld [vmem:[%s165 + $0x58] sm:$0xf]
      %v2349 = vld [vmem:[%s165 + $0x5c] sm:$0xf]
      %v2350 = vld [vmem:[%s165 + $0x60] sm:$0xf]
      %v2351 = vld [vmem:[%s165 + $0x64] sm:$0xf]
      %v2352 = vld [vmem:[%s165 + $0x68] sm:$0xf]
      %v2353 = vld [vmem:[%s165 + $0x6c] sm:$0xf]
      %v2354 = vld [vmem:[%s165 + $0x70] sm:$0xf]
      %v2355 = vld [vmem:[%s165 + $0x74] sm:$0x7]
      %s2356 = scalar_lea.vmem %s1, 16
      %v2357 = vld [vmem:[%s2356] sm:$0x3]
      %v2384 = vunpack.c.l.b16 %v2330
      %v2385 = vunpack.c.l.b16 %v2331
      %v2386 = vunpack.c.l.b16 %v2332
      %v2387 = vunpack.c.l.b16 %v2333
      %v2388 = vunpack.c.l.b16 %v2334
      %v2389 = vunpack.c.l.b16 %v2335
      %v2390 = vunpack.c.l.b16 %v2336
      %v2391 = vunpack.c.l.b16 %v2337
      %v2392 = vunpack.c.l.b16 %v2338
      %v2393 = vunpack.c.l.b16 %v2339
      %v2394 = vunpack.c.l.b16 %v2340
      %v2395 = vunpack.c.l.b16 %v2341
      %v2396 = vunpack.c.l.b16 %v2342
      %v2397 = vunpack.c.l.b16 %v2343
      %v2398 = vunpack.c.l.b16 %v2344
      %v2399 = vunpack.c.l.b16 %v2345
      %v2400 = vunpack.c.l.b16 %v2346
      %v2401 = vunpack.c.l.b16 %v2347
      %v2402 = vunpack.c.l.b16 %v2348
      %v2403 = vunpack.c.l.b16 %v2349
      %v2404 = vunpack.c.l.b16 %v2350
      %v2405 = vunpack.c.l.b16 %v2351
      %v2406 = vunpack.c.l.b16 %v2352
      %v2407 = vunpack.c.l.b16 %v2353
      %v2408 = vunpack.c.l.b16 %v2354
      %v2409 = vunpack.c.l.b16 %v2355
      %v2410 = vpack.c.b16 %v2385, %v2384
      %v2411 = vpack.c.b16 %v2387, %v2386
      %v2412 = vpack.c.b16 %v2389, %v2388
      %v2413 = vpack.c.b16 %v2391, %v2390
      %v2414 = vpack.c.b16 %v2393, %v2392
      %v2415 = vpack.c.b16 %v2395, %v2394
      %v2416 = vpack.c.b16 %v2397, %v2396
      %v2417 = vpack.c.b16 %v2399, %v2398
      %v2418 = vpack.c.b16 %v2401, %v2400
      %v2419 = vpack.c.b16 %v2403, %v2402
      %v2420 = vpack.c.b16 %v2405, %v2404
      %v2421 = vpack.c.b16 %v2407, %v2406
      %v2422 = vpack.c.b16 %v2409, %v2408
      %v2424 = vsel %vm370, %v2410, 0
      %v2427 = vsel %vm370, %v2411, 0
      %v2430 = vsel %vm370, %v2412, 0
      %v2433 = vsel %vm370, %v2413, 0
      %v2436 = vsel %vm370, %v2414, 0
      %v2439 = vsel %vm370, %v2415, 0
      %v2442 = vsel %vm370, %v2416, 0
      %v2445 = vsel %vm370, %v2417, 0
      %v2448 = vsel %vm370, %v2418, 0
      %v2451 = vsel %vm370, %v2419, 0
      %v2454 = vsel %vm370, %v2420, 0
      %v2457 = vsel %vm370, %v2421, 0
      %v2460 = vsel %vm370, %v2422, 0
      %v2463 = vsel %vm410, %v2357, 0
      %2465 = vmatprep.subr.bf16.mxu0 0
      %2466 = vmatpush1.bf16.msra.mxu0 %v2463
      %2467 = vmatprep.subr.bf16.mxu0 0
      %2468 = vmatpush1.bf16.msra.mxu0 0
      %2469 = vmatprep.subr.bf16.mxu0 0
      %2470 = vmatpush1.bf16.msra.mxu0 0
      %2471 = vmatprep.subr.bf16.mxu0 0
      %2472 = vmatpush1.bf16.msra.mxu0 0
      %2473 = vmatprep.subr.bf16.mxu0 0
      %2474 = vmatpush1.bf16.msra.mxu0 0
      %2475 = vmatprep.subr.bf16.mxu0 0
      %2476 = vmatpush1.bf16.msra.mxu0 0
      %2477 = vmatprep.subr.bf16.mxu0 0
      %2478 = vmatpush1.bf16.msra.mxu0 0
      %2479 = vmatprep.subr.bf16.mxu0 0
      %2480 = vmatpush1.bf16.msra.mxu0 0
      %2481 = vmatprep.subr.bf16.mxu0 0
      %2482 = vmatpush1.bf16.msra.mxu0 0
      %2483 = vmatprep.subr.bf16.mxu0 0
      %2484 = vmatpush1.bf16.msra.mxu0 0
      %2485 = vmatprep.subr.bf16.mxu0 0
      %2486 = vmatpush1.bf16.msra.mxu0 0
      %2487 = vmatprep.subr.bf16.mxu0 0
      %2488 = vmatpush1.bf16.msra.mxu0 0
      %2489 = vmatprep.subr.bf16.mxu0 0
      %2490 = vmatpush1.bf16.msra.mxu0 0
      %2491 = vmatprep.subr.bf16.mxu0 0
      %2492 = vmatpush1.bf16.msra.mxu0 0
      %2493 = vmatprep.subr.bf16.mxu0 0
      %2494 = vmatpush1.bf16.msra.mxu0 0
      %2495 = vmatprep.subr.bf16.mxu0 0
      %2496 = vmatpush1.bf16.msra.mxu0 0
      %2497 = vmatprep.mubr.bf16.mxu0 0
      %2498 = vmatmul.mubr.bf16.gmra.mrb[0].mxu0 %v2424
      %v2499 = vpop.f32.mrb[0].mxu0
      %v2500 = vadd.f32 0.0, %v2499
      %v2501 = vpop.f32.mrb[0].mxu0
      %v2502 = vpop.f32.mrb[0].mxu0
      %v2503 = vadd.f32 0.0, %v2502
      %v2504 = vpop.f32.mrb[0].mxu0
      %2505 = vmatprep.mubr.bf16.mxu0 0
      %2506 = vmatmul.mubr.bf16.gmra.mrb[0].mxu0 %v2427
      %v2507 = vpop.f32.mrb[0].mxu0
      %v2508 = vadd.f32 0.0, %v2507
      %v2509 = vpop.f32.mrb[0].mxu0
      %v2510 = vpop.f32.mrb[0].mxu0
      %v2511 = vadd.f32 0.0, %v2510
      %v2512 = vpop.f32.mrb[0].mxu0
      %2513 = vmatprep.mubr.bf16.mxu0 0
      %2514 = vmatmul.mubr.bf16.gmra.mrb[0].mxu0 %v2430
      %v2515 = vpop.f32.mrb[0].mxu0
      %v2516 = vadd.f32 0.0, %v2515
      %v2517 = vpop.f32.mrb[0].mxu0
      %v2518 = vpop.f32.mrb[0].mxu0
      %v2519 = vadd.f32 0.0, %v2518
      %v2520 = vpop.f32.mrb[0].mxu0
      %2521 = vmatprep.mubr.bf16.mxu0 0
      %2522 = vmatmul.mubr.bf16.gmra.mrb[0].mxu0 %v2433
      %v2523 = vpop.f32.mrb[0].mxu0
      %v2524 = vadd.f32 0.0, %v2523
      %v2525 = vpop.f32.mrb[0].mxu0
      %v2526 = vpop.f32.mrb[0].mxu0
      %v2527 = vadd.f32 0.0, %v2526
      %v2528 = vpop.f32.mrb[0].mxu0
      %2529 = vmatprep.mubr.bf16.mxu0 0
      %2530 = vmatmul.mubr.bf16.gmra.mrb[0].mxu0 %v2436
      %v2531 = vpop.f32.mrb[0].mxu0
      %v2532 = vadd.f32 0.0, %v2531
      %v2533 = vpop.f32.mrb[0].mxu0
      %v2534 = vpop.f32.mrb[0].mxu0
      %v2535 = vadd.f32 0.0, %v2534
      %v2536 = vpop.f32.mrb[0].mxu0
      %2537 = vmatprep.mubr.bf16.mxu0 0
      %2538 = vmatmul.mubr.bf16.gmra.mrb[0].mxu0 %v2439
      %v2539 = vpop.f32.mrb[0].mxu0
      %v2540 = vadd.f32 0.0, %v2539
      %v2541 = vpop.f32.mrb[0].mxu0
      %v2542 = vpop.f32.mrb[0].mxu0
      %v2543 = vadd.f32 0.0, %v2542
      %v2544 = vpop.f32.mrb[0].mxu0
      %2545 = vmatprep.mubr.bf16.mxu0 0
      %2546 = vmatmul.mubr.bf16.gmra.mrb[0].mxu0 %v2442
      %v2547 = vpop.f32.mrb[0].mxu0
      %v2548 = vadd.f32 0.0, %v2547
      %v2549 = vpop.f32.mrb[0].mxu0
      %v2550 = vpop.f32.mrb[0].mxu0
      %v2551 = vadd.f32 0.0, %v2550
      %v2552 = vpop.f32.mrb[0].mxu0
      %2553 = vmatprep.mubr.bf16.mxu0 0
      %2554 = vmatmul.mubr.bf16.gmra.mrb[0].mxu0 %v2445
      %v2555 = vpop.f32.mrb[0].mxu0
      %v2556 = vadd.f32 0.0, %v2555
      %v2557 = vpop.f32.mrb[0].mxu0
      %v2558 = vpop.f32.mrb[0].mxu0
      %v2559 = vadd.f32 0.0, %v2558
      %v2560 = vpop.f32.mrb[0].mxu0
      %2561 = vmatprep.mubr.bf16.mxu0 0
      %2562 = vmatmul.mubr.bf16.gmra.mrb[0].mxu0 %v2448
      %v2563 = vpop.f32.mrb[0].mxu0
      %v2564 = vadd.f32 0.0, %v2563
      %v2565 = vpop.f32.mrb[0].mxu0
      %v2566 = vpop.f32.mrb[0].mxu0
      %v2567 = vadd.f32 0.0, %v2566
      %v2568 = vpop.f32.mrb[0].mxu0
      %2569 = vmatprep.mubr.bf16.mxu0 0
      %2570 = vmatmul.mubr.bf16.gmra.mrb[0].mxu0 %v2451
      %v2571 = vpop.f32.mrb[0].mxu0
      %v2572 = vadd.f32 0.0, %v2571
      %v2573 = vpop.f32.mrb[0].mxu0
      %v2574 = vpop.f32.mrb[0].mxu0
      %v2575 = vadd.f32 0.0, %v2574
      %v2576 = vpop.f32.mrb[0].mxu0
      %2577 = vmatprep.mubr.bf16.mxu0 0
      %2578 = vmatmul.mubr.bf16.gmra.mrb[0].mxu0 %v2454
      %v2579 = vpop.f32.mrb[0].mxu0
      %v2580 = vadd.f32 0.0, %v2579
      %v2581 = vpop.f32.mrb[0].mxu0
      %v2582 = vpop.f32.mrb[0].mxu0
      %v2583 = vadd.f32 0.0, %v2582
      %v2584 = vpop.f32.mrb[0].mxu0
      %2585 = vmatprep.mubr.bf16.mxu0 0
      %2586 = vmatmul.mubr.bf16.gmra.mrb[0].mxu0 %v2457
      %v2587 = vpop.f32.mrb[0].mxu0
      %v2588 = vadd.f32 0.0, %v2587
      %v2589 = vpop.f32.mrb[0].mxu0
      %v2590 = vpop.f32.mrb[0].mxu0
      %v2591 = vadd.f32 0.0, %v2590
      %v2592 = vpop.f32.mrb[0].mxu0
      %2593 = vmatprep.mubr.bf16.mxu0 0
      %2594 = vmatmul.mubr.bf16.gmra.mrb[0].mxu0 %v2460
      %v2595 = vpop.f32.mrb[0].mxu0
      %v2596 = vadd.f32 0.0, %v2595
      %v2597 = vpop.f32.mrb[0].mxu0
      %v2598 = vpop.f32.mrb[0].mxu0
      %v2599 = vadd.f32 0.0, %v2598
      %v2600 = vpop.f32.mrb[0].mxu0
      %2601 = vdwg.mxu0
      %v2602 = vadd.f32 %v2304, %v2500
      %v2603 = vadd.f32 %v2305, %v2503
      %v2604 = vadd.f32 %v2306, %v2508
      %v2605 = vadd.f32 %v2307, %v2511
      %v2606 = vadd.f32 %v2308, %v2516
      %v2607 = vadd.f32 %v2309, %v2519
      %v2608 = vadd.f32 %v2310, %v2524
      %v2609 = vadd.f32 %v2311, %v2527
      %v2610 = vadd.f32 %v2312, %v2532
      %v2611 = vadd.f32 %v2313, %v2535
      %v2612 = vadd.f32 %v2314, %v2540
      %v2613 = vadd.f32 %v2315, %v2543
      %v2614 = vadd.f32 %v2316, %v2548
      %v2615 = vadd.f32 %v2317, %v2551
      %v2616 = vadd.f32 %v2318, %v2556
      %v2617 = vadd.f32 %v2319, %v2559
      %v2618 = vadd.f32 %v2320, %v2564
      %v2619 = vadd.f32 %v2321, %v2567
      %v2620 = vadd.f32 %v2322, %v2572
      %v2621 = vadd.f32 %v2323, %v2575
      %v2622 = vadd.f32 %v2324, %v2580
      %v2623 = vadd.f32 %v2325, %v2583
      %v2624 = vadd.f32 %v2326, %v2588
      %v2625 = vadd.f32 %v2327, %v2591
      %v2626 = vadd.f32 %v2328, %v2596
      %v2627 = vadd.f32 %v2329, %v2599
      %s2628 = scalar_lea.vmem %s1, 18
      %v2629 = vld [vmem:[%s2628] sm:$0x3]
      %v2630 = vshrl.u32 %v2410, 16
      %v2632 = vshll.u32 %v2410, 16
      %v2634 = vrot.slane %v2632, 1
      %v2635 = vor.u32 %v2630, %v2634
      %v2636 = vshll.u32 %v2411, 16
      %v2638 = vrot.slane %v2636, 1
      %v2639 = vsel %vm266, %v2635, %v2638
      %v2640 = vshrl.u32 %v2411, 16
      %v2642 = vor.u32 %v2640, %v2638
      %v2643 = vshll.u32 %v2412, 16
      %v2645 = vrot.slane %v2643, 1
      %v2646 = vsel %vm266, %v2642, %v2645
      %v2647 = vshrl.u32 %v2412, 16
      %v2649 = vor.u32 %v2647, %v2645
      %v2650 = vshll.u32 %v2413, 16
      %v2652 = vrot.slane %v2650, 1
      %v2653 = vsel %vm266, %v2649, %v2652
      %v2654 = vshrl.u32 %v2413, 16
      %v2656 = vor.u32 %v2654, %v2652
      %v2657 = vshll.u32 %v2414, 16
      %v2659 = vrot.slane %v2657, 1
      %v2660 = vsel %vm266, %v2656, %v2659
      %v2661 = vshrl.u32 %v2414, 16
      %v2663 = vor.u32 %v2661, %v2659
      %v2664 = vshll.u32 %v2415, 16
      %v2666 = vrot.slane %v2664, 1
      %v2667 = vsel %vm266, %v2663, %v2666
      %v2668 = vshrl.u32 %v2415, 16
      %v2670 = vor.u32 %v2668, %v2666
      %v2671 = vshll.u32 %v2416, 16
      %v2673 = vrot.slane %v2671, 1
      %v2674 = vsel %vm266, %v2670, %v2673
      %v2675 = vshrl.u32 %v2416, 16
      %v2677 = vor.u32 %v2675, %v2673
      %v2678 = vshll.u32 %v2417, 16
      %v2680 = vrot.slane %v2678, 1
      %v2681 = vsel %vm266, %v2677, %v2680
      %v2682 = vshrl.u32 %v2417, 16
      %v2684 = vor.u32 %v2682, %v2680
      %v2685 = vshll.u32 %v2418, 16
      %v2687 = vrot.slane %v2685, 1
      %v2688 = vsel %vm266, %v2684, %v2687
      %v2689 = vshrl.u32 %v2418, 16
      %v2691 = vor.u32 %v2689, %v2687
      %v2692 = vshll.u32 %v2419, 16
      %v2694 = vrot.slane %v2692, 1
      %v2695 = vsel %vm266, %v2691, %v2694
      %v2696 = vshrl.u32 %v2419, 16
      %v2698 = vor.u32 %v2696, %v2694
      %v2699 = vshll.u32 %v2420, 16
      %v2701 = vrot.slane %v2699, 1
      %v2702 = vsel %vm266, %v2698, %v2701
      %v2703 = vshrl.u32 %v2420, 16
      %v2705 = vor.u32 %v2703, %v2701
      %v2706 = vshll.u32 %v2421, 16
      %v2708 = vrot.slane %v2706, 1
      %v2709 = vsel %vm266, %v2705, %v2708
      %v2710 = vshrl.u32 %v2421, 16
      %v2712 = vor.u32 %v2710, %v2708
      %v2713 = vshll.u32 %v2422, 16
      %v2715 = vrot.slane %v2713, 1
      %v2716 = vsel %vm266, %v2712, %v2715
      %v2717 = vshrl.u32 %v2422, 16
      %v2719 = vor.u32 %v2717, %v2715
      %v2721 = vsel %vm370, %v2639, 0
      %v2724 = vsel %vm370, %v2646, 0
      %v2727 = vsel %vm370, %v2653, 0
      %v2730 = vsel %vm370, %v2660, 0
      %v2733 = vsel %vm370, %v2667, 0
      %v2736 = vsel %vm370, %v2674, 0
      %v2739 = vsel %vm370, %v2681, 0
      %v2742 = vsel %vm370, %v2688, 0
      %v2745 = vsel %vm370, %v2695, 0
      %v2748 = vsel %vm370, %v2702, 0
      %v2751 = vsel %vm370, %v2709, 0
      %v2754 = vsel %vm370, %v2716, 0
      %v2757 = vsel %vm370, %v2719, 0
      %v2760 = vsel %vm410, %v2629, 0
      %2762 = vmatprep.subr.bf16.mxu0 0
      %2763 = vmatpush1.bf16.msra.mxu0 %v2760
      %2764 = vmatprep.subr.bf16.mxu0 0
      %2765 = vmatpush1.bf16.msra.mxu0 0
      %2766 = vmatprep.subr.bf16.mxu0 0
      %2767 = vmatpush1.bf16.msra.mxu0 0
      %2768 = vmatprep.subr.bf16.mxu0 0
      %2769 = vmatpush1.bf16.msra.mxu0 0
      %2770 = vmatprep.subr.bf16.mxu0 0
      %2771 = vmatpush1.bf16.msra.mxu0 0
      %2772 = vmatprep.subr.bf16.mxu0 0
      %2773 = vmatpush1.bf16.msra.mxu0 0
      %2774 = vmatprep.subr.bf16.mxu0 0
      %2775 = vmatpush1.bf16.msra.mxu0 0
      %2776 = vmatprep.subr.bf16.mxu0 0
      %2777 = vmatpush1.bf16.msra.mxu0 0
      %2778 = vmatprep.subr.bf16.mxu0 0
      %2779 = vmatpush1.bf16.msra.mxu0 0
      %2780 = vmatprep.subr.bf16.mxu0 0
      %2781 = vmatpush1.bf16.msra.mxu0 0
      %2782 = vmatprep.subr.bf16.mxu0 0
      %2783 = vmatpush1.bf16.msra.mxu0 0
      %2784 = vmatprep.subr.bf16.mxu0 0
      %2785 = vmatpush1.bf16.msra.mxu0 0
      %2786 = vmatprep.subr.bf16.mxu0 0
      %2787 = vmatpush1.bf16.msra.mxu0 0
      %2788 = vmatprep.subr.bf16.mxu0 0
      %2789 = vmatpush1.bf16.msra.mxu0 0
      %2790 = vmatprep.subr.bf16.mxu0 0
      %2791 = vmatpush1.bf16.msra.mxu0 0
      %2792 = vmatprep.subr.bf16.mxu0 0
      %2793 = vmatpush1.bf16.msra.mxu0 0
      %2794 = vmatprep.mubr.bf16.mxu0 0
      %2795 = vmatmul.mubr.bf16.gmra.mrb[0].mxu0 %v2721
      %v2796 = vpop.f32.mrb[0].mxu0
      %v2797 = vadd.f32 0.0, %v2796
      %v2798 = vpop.f32.mrb[0].mxu0
      %v2799 = vpop.f32.mrb[0].mxu0
      %v2800 = vadd.f32 0.0, %v2799
      %v2801 = vpop.f32.mrb[0].mxu0
      %2802 = vmatprep.mubr.bf16.mxu0 0
      %2803 = vmatmul.mubr.bf16.gmra.mrb[0].mxu0 %v2724
      %v2804 = vpop.f32.mrb[0].mxu0
      %v2805 = vadd.f32 0.0, %v2804
      %v2806 = vpop.f32.mrb[0].mxu0
      %v2807 = vpop.f32.mrb[0].mxu0
      %v2808 = vadd.f32 0.0, %v2807
      %v2809 = vpop.f32.mrb[0].mxu0
      %2810 = vmatprep.mubr.bf16.mxu0 0
      %2811 = vmatmul.mubr.bf16.gmra.mrb[0].mxu0 %v2727
      %v2812 = vpop.f32.mrb[0].mxu0
      %v2813 = vadd.f32 0.0, %v2812
      %v2814 = vpop.f32.mrb[0].mxu0
      %v2815 = vpop.f32.mrb[0].mxu0
      %v2816 = vadd.f32 0.0, %v2815
      %v2817 = vpop.f32.mrb[0].mxu0
      %2818 = vmatprep.mubr.bf16.mxu0 0
      %2819 = vmatmul.mubr.bf16.gmra.mrb[0].mxu0 %v2730
      %v2820 = vpop.f32.mrb[0].mxu0
      %v2821 = vadd.f32 0.0, %v2820
      %v2822 = vpop.f32.mrb[0].mxu0
      %v2823 = vpop.f32.mrb[0].mxu0
      %v2824 = vadd.f32 0.0, %v2823
      %v2825 = vpop.f32.mrb[0].mxu0
      %2826 = vmatprep.mubr.bf16.mxu0 0
      %2827 = vmatmul.mubr.bf16.gmra.mrb[0].mxu0 %v2733
      %v2828 = vpop.f32.mrb[0].mxu0
      %v2829 = vadd.f32 0.0, %v2828
      %v2830 = vpop.f32.mrb[0].mxu0
      %v2831 = vpop.f32.mrb[0].mxu0
      %v2832 = vadd.f32 0.0, %v2831
      %v2833 = vpop.f32.mrb[0].mxu0
      %2834 = vmatprep.mubr.bf16.mxu0 0
      %2835 = vmatmul.mubr.bf16.gmra.mrb[0].mxu0 %v2736
      %v2836 = vpop.f32.mrb[0].mxu0
      %v2837 = vadd.f32 0.0, %v2836
      %v2838 = vpop.f32.mrb[0].mxu0
      %v2839 = vpop.f32.mrb[0].mxu0
      %v2840 = vadd.f32 0.0, %v2839
      %v2841 = vpop.f32.mrb[0].mxu0
      %2842 = vmatprep.mubr.bf16.mxu0 0
      %2843 = vmatmul.mubr.bf16.gmra.mrb[0].mxu0 %v2739
      %v2844 = vpop.f32.mrb[0].mxu0
      %v2845 = vadd.f32 0.0, %v2844
      %v2846 = vpop.f32.mrb[0].mxu0
      %v2847 = vpop.f32.mrb[0].mxu0
      %v2848 = vadd.f32 0.0, %v2847
      %v2849 = vpop.f32.mrb[0].mxu0
      %2850 = vmatprep.mubr.bf16.mxu0 0
      %2851 = vmatmul.mubr.bf16.gmra.mrb[0].mxu0 %v2742
      %v2852 = vpop.f32.mrb[0].mxu0
      %v2853 = vadd.f32 0.0, %v2852
      %v2854 = vpop.f32.mrb[0].mxu0
      %v2855 = vpop.f32.mrb[0].mxu0
      %v2856 = vadd.f32 0.0, %v2855
      %v2857 = vpop.f32.mrb[0].mxu0
      %2858 = vmatprep.mubr.bf16.mxu0 0
      %2859 = vmatmul.mubr.bf16.gmra.mrb[0].mxu0 %v2745
      %v2860 = vpop.f32.mrb[0].mxu0
      %v2861 = vadd.f32 0.0, %v2860
      %v2862 = vpop.f32.mrb[0].mxu0
      %v2863 = vpop.f32.mrb[0].mxu0
      %v2864 = vadd.f32 0.0, %v2863
      %v2865 = vpop.f32.mrb[0].mxu0
      %2866 = vmatprep.mubr.bf16.mxu0 0
      %2867 = vmatmul.mubr.bf16.gmra.mrb[0].mxu0 %v2748
      %v2868 = vpop.f32.mrb[0].mxu0
      %v2869 = vadd.f32 0.0, %v2868
      %v2870 = vpop.f32.mrb[0].mxu0
      %v2871 = vpop.f32.mrb[0].mxu0
      %v2872 = vadd.f32 0.0, %v2871
      %v2873 = vpop.f32.mrb[0].mxu0
      %2874 = vmatprep.mubr.bf16.mxu0 0
      %2875 = vmatmul.mubr.bf16.gmra.mrb[0].mxu0 %v2751
      %v2876 = vpop.f32.mrb[0].mxu0
      %v2877 = vadd.f32 0.0, %v2876
      %v2878 = vpop.f32.mrb[0].mxu0
      %v2879 = vpop.f32.mrb[0].mxu0
      %v2880 = vadd.f32 0.0, %v2879
      %v2881 = vpop.f32.mrb[0].mxu0
      %2882 = vmatprep.mubr.bf16.mxu0 0
      %2883 = vmatmul.mubr.bf16.gmra.mrb[0].mxu0 %v2754
      %v2884 = vpop.f32.mrb[0].mxu0
      %v2885 = vadd.f32 0.0, %v2884
      %v2886 = vpop.f32.mrb[0].mxu0
      %v2887 = vpop.f32.mrb[0].mxu0
      %v2888 = vadd.f32 0.0, %v2887
      %v2889 = vpop.f32.mrb[0].mxu0
      %2890 = vmatprep.mubr.bf16.mxu0 0
      %2891 = vmatmul.mubr.bf16.gmra.mrb[0].mxu0 %v2757
      %v2892 = vpop.f32.mrb[0].mxu0
      %v2893 = vadd.f32 0.0, %v2892
      %v2894 = vpop.f32.mrb[0].mxu0
      %v2895 = vpop.f32.mrb[0].mxu0
      %v2896 = vadd.f32 0.0, %v2895
      %v2897 = vpop.f32.mrb[0].mxu0
      %2898 = vdwg.mxu0
      %v2899 = vadd.f32 %v2602, %v2797
      %v2900 = vadd.f32 %v2603, %v2800
      %v2901 = vadd.f32 %v2604, %v2805
      %v2902 = vadd.f32 %v2605, %v2808
      %v2903 = vadd.f32 %v2606, %v2813
      %v2904 = vadd.f32 %v2607, %v2816
      %v2905 = vadd.f32 %v2608, %v2821
      %v2906 = vadd.f32 %v2609, %v2824
      %v2907 = vadd.f32 %v2610, %v2829
      %v2908 = vadd.f32 %v2611, %v2832
      %v2909 = vadd.f32 %v2612, %v2837
      %v2910 = vadd.f32 %v2613, %v2840
      %v2911 = vadd.f32 %v2614, %v2845
      %v2912 = vadd.f32 %v2615, %v2848
      %v2913 = vadd.f32 %v2616, %v2853
      %v2914 = vadd.f32 %v2617, %v2856
      %v2915 = vadd.f32 %v2618, %v2861
      %v2916 = vadd.f32 %v2619, %v2864
      %v2917 = vadd.f32 %v2620, %v2869
      %v2918 = vadd.f32 %v2621, %v2872
      %v2919 = vadd.f32 %v2622, %v2877
      %v2920 = vadd.f32 %v2623, %v2880
      %v2921 = vadd.f32 %v2624, %v2885
      %v2922 = vadd.f32 %v2625, %v2888
      %v2923 = vadd.f32 %v2626, %v2893
      %v2924 = vadd.f32 %v2627, %v2896
      %v2925 = vld [vmem:[%s165 + $0x10] sm:$0xe]
      %v2926 = vld [vmem:[%s165 + $0x74] sm:$0xf]
      %s2927 = scalar_lea.vmem %s1, 20
      %v2928 = vld [vmem:[%s2927] sm:$0x3]
      %v2931 = vunpack.c.l.b16 %v2925
      %v2932 = vunpack.c.l.b16 %v2926
      %v2933 = vpack.c.b16 %v2385, %v2931
      %v2934 = vpack.c.b16 %v2932, %v2408
      %v2935 = vrot.slane %v2933, 1
      %v2936 = vrot.slane %v2411, 1
      %v2937 = vsel %vm727, %v2935, %v2936
      %v2938 = vrot.slane %v2412, 1
      %v2939 = vsel %vm727, %v2936, %v2938
      %v2940 = vrot.slane %v2413, 1
      %v2941 = vsel %vm727, %v2938, %v2940
      %v2942 = vrot.slane %v2414, 1
      %v2943 = vsel %vm727, %v2940, %v2942
      %v2944 = vrot.slane %v2415, 1
      %v2945 = vsel %vm727, %v2942, %v2944
      %v2946 = vrot.slane %v2416, 1
      %v2947 = vsel %vm727, %v2944, %v2946
      %v2948 = vrot.slane %v2417, 1
      %v2949 = vsel %vm727, %v2946, %v2948
      %v2950 = vrot.slane %v2418, 1
      %v2951 = vsel %vm727, %v2948, %v2950
      %v2952 = vrot.slane %v2419, 1
      %v2953 = vsel %vm727, %v2950, %v2952
      %v2954 = vrot.slane %v2420, 1
      %v2955 = vsel %vm727, %v2952, %v2954
      %v2956 = vrot.slane %v2421, 1
      %v2957 = vsel %vm727, %v2954, %v2956
      %v2958 = vrot.slane %v2934, 1
      %v2959 = vsel %vm727, %v2956, %v2958
      %v2961 = vsel %vm370, %v2937, 0
      %v2964 = vsel %vm370, %v2939, 0
      %v2967 = vsel %vm370, %v2941, 0
      %v2970 = vsel %vm370, %v2943, 0
      %v2973 = vsel %vm370, %v2945, 0
      %v2976 = vsel %vm370, %v2947, 0
      %v2979 = vsel %vm370, %v2949, 0
      %v2982 = vsel %vm370, %v2951, 0
      %v2985 = vsel %vm370, %v2953, 0
      %v2988 = vsel %vm370, %v2955, 0
      %v2991 = vsel %vm370, %v2957, 0
      %v2994 = vsel %vm370, %v2959, 0
      %v2997 = vsel %vm370, %v2958, 0
      %v3000 = vsel %vm410, %v2928, 0
      %3002 = vmatprep.subr.bf16.mxu0 0
      %3003 = vmatpush1.bf16.msra.mxu0 %v3000
      %3004 = vmatprep.subr.bf16.mxu0 0
      %3005 = vmatpush1.bf16.msra.mxu0 0
      %3006 = vmatprep.subr.bf16.mxu0 0
      %3007 = vmatpush1.bf16.msra.mxu0 0
      %3008 = vmatprep.subr.bf16.mxu0 0
      %3009 = vmatpush1.bf16.msra.mxu0 0
      %3010 = vmatprep.subr.bf16.mxu0 0
      %3011 = vmatpush1.bf16.msra.mxu0 0
      %3012 = vmatprep.subr.bf16.mxu0 0
      %3013 = vmatpush1.bf16.msra.mxu0 0
      %3014 = vmatprep.subr.bf16.mxu0 0
      %3015 = vmatpush1.bf16.msra.mxu0 0
      %3016 = vmatprep.subr.bf16.mxu0 0
      %3017 = vmatpush1.bf16.msra.mxu0 0
      %3018 = vmatprep.subr.bf16.mxu0 0
      %3019 = vmatpush1.bf16.msra.mxu0 0
      %3020 = vmatprep.subr.bf16.mxu0 0
      %3021 = vmatpush1.bf16.msra.mxu0 0
      %3022 = vmatprep.subr.bf16.mxu0 0
      %3023 = vmatpush1.bf16.msra.mxu0 0
      %3024 = vmatprep.subr.bf16.mxu0 0
      %3025 = vmatpush1.bf16.msra.mxu0 0
      %3026 = vmatprep.subr.bf16.mxu0 0
      %3027 = vmatpush1.bf16.msra.mxu0 0
      %3028 = vmatprep.subr.bf16.mxu0 0
      %3029 = vmatpush1.bf16.msra.mxu0 0
      %3030 = vmatprep.subr.bf16.mxu0 0
      %3031 = vmatpush1.bf16.msra.mxu0 0
      %3032 = vmatprep.subr.bf16.mxu0 0
      %3033 = vmatpush1.bf16.msra.mxu0 0
      %3034 = vmatprep.mubr.bf16.mxu0 0
      %3035 = vmatmul.mubr.bf16.gmra.mrb[0].mxu0 %v2961
      %v3036 = vpop.f32.mrb[0].mxu0
      %v3037 = vadd.f32 0.0, %v3036
      %v3038 = vpop.f32.mrb[0].mxu0
      %v3039 = vpop.f32.mrb[0].mxu0
      %v3040 = vadd.f32 0.0, %v3039
      %v3041 = vpop.f32.mrb[0].mxu0
      %3042 = vmatprep.mubr.bf16.mxu0 0
      %3043 = vmatmul.mubr.bf16.gmra.mrb[0].mxu0 %v2964
      %v3044 = vpop.f32.mrb[0].mxu0
      %v3045 = vadd.f32 0.0, %v3044
      %v3046 = vpop.f32.mrb[0].mxu0
      %v3047 = vpop.f32.mrb[0].mxu0
      %v3048 = vadd.f32 0.0, %v3047
      %v3049 = vpop.f32.mrb[0].mxu0
      %3050 = vmatprep.mubr.bf16.mxu0 0
      %3051 = vmatmul.mubr.bf16.gmra.mrb[0].mxu0 %v2967
      %v3052 = vpop.f32.mrb[0].mxu0
      %v3053 = vadd.f32 0.0, %v3052
      %v3054 = vpop.f32.mrb[0].mxu0
      %v3055 = vpop.f32.mrb[0].mxu0
      %v3056 = vadd.f32 0.0, %v3055
      %v3057 = vpop.f32.mrb[0].mxu0
      %3058 = vmatprep.mubr.bf16.mxu0 0
      %3059 = vmatmul.mubr.bf16.gmra.mrb[0].mxu0 %v2970
      %v3060 = vpop.f32.mrb[0].mxu0
      %v3061 = vadd.f32 0.0, %v3060
      %v3062 = vpop.f32.mrb[0].mxu0
      %v3063 = vpop.f32.mrb[0].mxu0
      %v3064 = vadd.f32 0.0, %v3063
      %v3065 = vpop.f32.mrb[0].mxu0
      %3066 = vmatprep.mubr.bf16.mxu0 0
      %3067 = vmatmul.mubr.bf16.gmra.mrb[0].mxu0 %v2973
      %v3068 = vpop.f32.mrb[0].mxu0
      %v3069 = vadd.f32 0.0, %v3068
      %v3070 = vpop.f32.mrb[0].mxu0
      %v3071 = vpop.f32.mrb[0].mxu0
      %v3072 = vadd.f32 0.0, %v3071
      %v3073 = vpop.f32.mrb[0].mxu0
      %3074 = vmatprep.mubr.bf16.mxu0 0
      %3075 = vmatmul.mubr.bf16.gmra.mrb[0].mxu0 %v2976
      %v3076 = vpop.f32.mrb[0].mxu0
      %v3077 = vadd.f32 0.0, %v3076
      %v3078 = vpop.f32.mrb[0].mxu0
      %v3079 = vpop.f32.mrb[0].mxu0
      %v3080 = vadd.f32 0.0, %v3079
      %v3081 = vpop.f32.mrb[0].mxu0
      %3082 = vmatprep.mubr.bf16.mxu0 0
      %3083 = vmatmul.mubr.bf16.gmra.mrb[0].mxu0 %v2979
      %v3084 = vpop.f32.mrb[0].mxu0
      %v3085 = vadd.f32 0.0, %v3084
      %v3086 = vpop.f32.mrb[0].mxu0
      %v3087 = vpop.f32.mrb[0].mxu0
      %v3088 = vadd.f32 0.0, %v3087
      %v3089 = vpop.f32.mrb[0].mxu0
      %3090 = vmatprep.mubr.bf16.mxu0 0
      %3091 = vmatmul.mubr.bf16.gmra.mrb[0].mxu0 %v2982
      %v3092 = vpop.f32.mrb[0].mxu0
      %v3093 = vadd.f32 0.0, %v3092
      %v3094 = vpop.f32.mrb[0].mxu0
      %v3095 = vpop.f32.mrb[0].mxu0
      %v3096 = vadd.f32 0.0, %v3095
      %v3097 = vpop.f32.mrb[0].mxu0
      %3098 = vmatprep.mubr.bf16.mxu0 0
      %3099 = vmatmul.mubr.bf16.gmra.mrb[0].mxu0 %v2985
      %v3100 = vpop.f32.mrb[0].mxu0
      %v3101 = vadd.f32 0.0, %v3100
      %v3102 = vpop.f32.mrb[0].mxu0
      %v3103 = vpop.f32.mrb[0].mxu0
      %v3104 = vadd.f32 0.0, %v3103
      %v3105 = vpop.f32.mrb[0].mxu0
      %3106 = vmatprep.mubr.bf16.mxu0 0
      %3107 = vmatmul.mubr.bf16.gmra.mrb[0].mxu0 %v2988
      %v3108 = vpop.f32.mrb[0].mxu0
      %v3109 = vadd.f32 0.0, %v3108
      %v3110 = vpop.f32.mrb[0].mxu0
      %v3111 = vpop.f32.mrb[0].mxu0
      %v3112 = vadd.f32 0.0, %v3111
      %v3113 = vpop.f32.mrb[0].mxu0
      %3114 = vmatprep.mubr.bf16.mxu0 0
      %3115 = vmatmul.mubr.bf16.gmra.mrb[0].mxu0 %v2991
      %v3116 = vpop.f32.mrb[0].mxu0
      %v3117 = vadd.f32 0.0, %v3116
      %v3118 = vpop.f32.mrb[0].mxu0
      %v3119 = vpop.f32.mrb[0].mxu0
      %v3120 = vadd.f32 0.0, %v3119
      %v3121 = vpop.f32.mrb[0].mxu0
      %3122 = vmatprep.mubr.bf16.mxu0 0
      %3123 = vmatmul.mubr.bf16.gmra.mrb[0].mxu0 %v2994
      %v3124 = vpop.f32.mrb[0].mxu0
      %v3125 = vadd.f32 0.0, %v3124
      %v3126 = vpop.f32.mrb[0].mxu0
      %v3127 = vpop.f32.mrb[0].mxu0
      %v3128 = vadd.f32 0.0, %v3127
      %v3129 = vpop.f32.mrb[0].mxu0
      %3130 = vmatprep.mubr.bf16.mxu0 0
      %3131 = vmatmul.mubr.bf16.gmra.mrb[0].mxu0 %v2997
      %v3132 = vpop.f32.mrb[0].mxu0
      %v3133 = vadd.f32 0.0, %v3132
      %v3134 = vpop.f32.mrb[0].mxu0
      %v3135 = vpop.f32.mrb[0].mxu0
      %v3136 = vadd.f32 0.0, %v3135
      %v3137 = vpop.f32.mrb[0].mxu0
      %3138 = vdwg.mxu0
      %v3139 = vadd.f32 %v2899, %v3037
      %v3140 = vadd.f32 %v2900, %v3040
      %v3141 = vadd.f32 %v2901, %v3045
      %v3142 = vadd.f32 %v2902, %v3048
      %v3143 = vadd.f32 %v2903, %v3053
      %v3144 = vadd.f32 %v2904, %v3056
      %v3145 = vadd.f32 %v2905, %v3061
      %v3146 = vadd.f32 %v2906, %v3064
      %v3147 = vadd.f32 %v2907, %v3069
      %v3148 = vadd.f32 %v2908, %v3072
      %v3149 = vadd.f32 %v2909, %v3077
      %v3150 = vadd.f32 %v2910, %v3080
      %v3151 = vadd.f32 %v2911, %v3085
      %v3152 = vadd.f32 %v2912, %v3088
      %v3153 = vadd.f32 %v2913, %v3093
      %v3154 = vadd.f32 %v2914, %v3096
      %v3155 = vadd.f32 %v2915, %v3101
      %v3156 = vadd.f32 %v2916, %v3104
      %v3157 = vadd.f32 %v2917, %v3109
      %v3158 = vadd.f32 %v2918, %v3112
      %v3159 = vadd.f32 %v2919, %v3117
      %v3160 = vadd.f32 %v2920, %v3120
      %v3161 = vadd.f32 %v2921, %v3125
      %v3162 = vadd.f32 %v2922, %v3128
      %v3163 = vadd.f32 %v2923, %v3133
      %v3164 = vadd.f32 %v2924, %v3136
      %s3165 = scalar_lea.vmem %s1, 22
      %v3166 = vld [vmem:[%s3165] sm:$0x3]
      %v3168 = vshrl.u32 %v2933, 16
      %v3170 = vrot.slane %v3168, 1
      %v3171 = vshll.u32 %v2933, 16
      %v3173 = vrot.slane %v3171, 2
      %v3174 = vor.u32 %v3170, %v3173
      %v3175 = vrot.slane %v2640, 1
      %v3176 = vrot.slane %v2636, 2
      %v3177 = vor.u32 %v3175, %v3176
      %v3178 = vsel %vm960, %v3174, %v3177
      %v3179 = vrot.slane %v2647, 1
      %v3180 = vrot.slane %v2643, 2
      %v3181 = vor.u32 %v3179, %v3180
      %v3182 = vsel %vm960, %v3177, %v3181
      %v3183 = vrot.slane %v2654, 1
      %v3184 = vrot.slane %v2650, 2
      %v3185 = vor.u32 %v3183, %v3184
      %v3186 = vsel %vm960, %v3181, %v3185
      %v3187 = vrot.slane %v2661, 1
      %v3188 = vrot.slane %v2657, 2
      %v3189 = vor.u32 %v3187, %v3188
      %v3190 = vsel %vm960, %v3185, %v3189
      %v3191 = vrot.slane %v2668, 1
      %v3192 = vrot.slane %v2664, 2
      %v3193 = vor.u32 %v3191, %v3192
      %v3194 = vsel %vm960, %v3189, %v3193
      %v3195 = vrot.slane %v2675, 1
      %v3196 = vrot.slane %v2671, 2
      %v3197 = vor.u32 %v3195, %v3196
      %v3198 = vsel %vm960, %v3193, %v3197
      %v3199 = vrot.slane %v2682, 1
      %v3200 = vrot.slane %v2678, 2
      %v3201 = vor.u32 %v3199, %v3200
      %v3202 = vsel %vm960, %v3197, %v3201
      %v3203 = vrot.slane %v2689, 1
      %v3204 = vrot.slane %v2685, 2
      %v3205 = vor.u32 %v3203, %v3204
      %v3206 = vsel %vm960, %v3201, %v3205
      %v3207 = vrot.slane %v2696, 1
      %v3208 = vrot.slane %v2692, 2
      %v3209 = vor.u32 %v3207, %v3208
      %v3210 = vsel %vm960, %v3205, %v3209
      %v3211 = vrot.slane %v2703, 1
      %v3212 = vrot.slane %v2699, 2
      %v3213 = vor.u32 %v3211, %v3212
      %v3214 = vsel %vm960, %v3209, %v3213
      %v3215 = vrot.slane %v2710, 1
      %v3216 = vrot.slane %v2706, 2
      %v3217 = vor.u32 %v3215, %v3216
      %v3218 = vsel %vm960, %v3213, %v3217
      %v3220 = vshrl.u32 %v2934, 16
      %v3222 = vrot.slane %v3220, 1
      %v3223 = vshll.u32 %v2934, 16
      %v3225 = vrot.slane %v3223, 2
      %v3226 = vor.u32 %v3222, %v3225
      %v3227 = vsel %vm960, %v3217, %v3226
      %v3229 = vsel %vm370, %v3178, 0
      %v3232 = vsel %vm370, %v3182, 0
      %v3235 = vsel %vm370, %v3186, 0
      %v3238 = vsel %vm370, %v3190, 0
      %v3241 = vsel %vm370, %v3194, 0
      %v3244 = vsel %vm370, %v3198, 0
      %v3247 = vsel %vm370, %v3202, 0
      %v3250 = vsel %vm370, %v3206, 0
      %v3253 = vsel %vm370, %v3210, 0
      %v3256 = vsel %vm370, %v3214, 0
      %v3259 = vsel %vm370, %v3218, 0
      %v3262 = vsel %vm370, %v3227, 0
      %v3265 = vsel %vm370, %v3226, 0
      %v3268 = vsel %vm410, %v3166, 0
      %3270 = vmatprep.subr.bf16.mxu0 0
      %3271 = vmatpush1.bf16.msra.mxu0 %v3268
      %3272 = vmatprep.subr.bf16.mxu0 0
      %3273 = vmatpush1.bf16.msra.mxu0 0
      %3274 = vmatprep.subr.bf16.mxu0 0
      %3275 = vmatpush1.bf16.msra.mxu0 0
      %3276 = vmatprep.subr.bf16.mxu0 0
      %3277 = vmatpush1.bf16.msra.mxu0 0
      %3278 = vmatprep.subr.bf16.mxu0 0
      %3279 = vmatpush1.bf16.msra.mxu0 0
      %3280 = vmatprep.subr.bf16.mxu0 0
      %3281 = vmatpush1.bf16.msra.mxu0 0
      %3282 = vmatprep.subr.bf16.mxu0 0
      %3283 = vmatpush1.bf16.msra.mxu0 0
      %3284 = vmatprep.subr.bf16.mxu0 0
      %3285 = vmatpush1.bf16.msra.mxu0 0
      %3286 = vmatprep.subr.bf16.mxu0 0
      %3287 = vmatpush1.bf16.msra.mxu0 0
      %3288 = vmatprep.subr.bf16.mxu0 0
      %3289 = vmatpush1.bf16.msra.mxu0 0
      %3290 = vmatprep.subr.bf16.mxu0 0
      %3291 = vmatpush1.bf16.msra.mxu0 0
      %3292 = vmatprep.subr.bf16.mxu0 0
      %3293 = vmatpush1.bf16.msra.mxu0 0
      %3294 = vmatprep.subr.bf16.mxu0 0
      %3295 = vmatpush1.bf16.msra.mxu0 0
      %3296 = vmatprep.subr.bf16.mxu0 0
      %3297 = vmatpush1.bf16.msra.mxu0 0
      %3298 = vmatprep.subr.bf16.mxu0 0
      %3299 = vmatpush1.bf16.msra.mxu0 0
      %3300 = vmatprep.subr.bf16.mxu0 0
      %3301 = vmatpush1.bf16.msra.mxu0 0
      %3302 = vmatprep.mubr.bf16.mxu0 0
      %3303 = vmatmul.mubr.bf16.gmra.mrb[0].mxu0 %v3229
      %v3304 = vpop.f32.mrb[0].mxu0
      %v3305 = vadd.f32 0.0, %v3304
      %v3306 = vpop.f32.mrb[0].mxu0
      %v3307 = vpop.f32.mrb[0].mxu0
      %v3308 = vadd.f32 0.0, %v3307
      %v3309 = vpop.f32.mrb[0].mxu0
      %3310 = vmatprep.mubr.bf16.mxu0 0
      %3311 = vmatmul.mubr.bf16.gmra.mrb[0].mxu0 %v3232
      %v3312 = vpop.f32.mrb[0].mxu0
      %v3313 = vadd.f32 0.0, %v3312
      %v3314 = vpop.f32.mrb[0].mxu0
      %v3315 = vpop.f32.mrb[0].mxu0
      %v3316 = vadd.f32 0.0, %v3315
      %v3317 = vpop.f32.mrb[0].mxu0
      %3318 = vmatprep.mubr.bf16.mxu0 0
      %3319 = vmatmul.mubr.bf16.gmra.mrb[0].mxu0 %v3235
      %v3320 = vpop.f32.mrb[0].mxu0
      %v3321 = vadd.f32 0.0, %v3320
      %v3322 = vpop.f32.mrb[0].mxu0
      %v3323 = vpop.f32.mrb[0].mxu0
      %v3324 = vadd.f32 0.0, %v3323
      %v3325 = vpop.f32.mrb[0].mxu0
      %3326 = vmatprep.mubr.bf16.mxu0 0
      %3327 = vmatmul.mubr.bf16.gmra.mrb[0].mxu0 %v3238
      %v3328 = vpop.f32.mrb[0].mxu0
      %v3329 = vadd.f32 0.0, %v3328
      %v3330 = vpop.f32.mrb[0].mxu0
      %v3331 = vpop.f32.mrb[0].mxu0
      %v3332 = vadd.f32 0.0, %v3331
      %v3333 = vpop.f32.mrb[0].mxu0
      %3334 = vmatprep.mubr.bf16.mxu0 0
      %3335 = vmatmul.mubr.bf16.gmra.mrb[0].mxu0 %v3241
      %v3336 = vpop.f32.mrb[0].mxu0
      %v3337 = vadd.f32 0.0, %v3336
      %v3338 = vpop.f32.mrb[0].mxu0
      %v3339 = vpop.f32.mrb[0].mxu0
      %v3340 = vadd.f32 0.0, %v3339
      %v3341 = vpop.f32.mrb[0].mxu0
      %3342 = vmatprep.mubr.bf16.mxu0 0
      %3343 = vmatmul.mubr.bf16.gmra.mrb[0].mxu0 %v3244
      %v3344 = vpop.f32.mrb[0].mxu0
      %v3345 = vadd.f32 0.0, %v3344
      %v3346 = vpop.f32.mrb[0].mxu0
      %v3347 = vpop.f32.mrb[0].mxu0
      %v3348 = vadd.f32 0.0, %v3347
      %v3349 = vpop.f32.mrb[0].mxu0
      %3350 = vmatprep.mubr.bf16.mxu0 0
      %3351 = vmatmul.mubr.bf16.gmra.mrb[0].mxu0 %v3247
      %v3352 = vpop.f32.mrb[0].mxu0
      %v3353 = vadd.f32 0.0, %v3352
      %v3354 = vpop.f32.mrb[0].mxu0
      %v3355 = vpop.f32.mrb[0].mxu0
      %v3356 = vadd.f32 0.0, %v3355
      %v3357 = vpop.f32.mrb[0].mxu0
      %3358 = vmatprep.mubr.bf16.mxu0 0
      %3359 = vmatmul.mubr.bf16.gmra.mrb[0].mxu0 %v3250
      %v3360 = vpop.f32.mrb[0].mxu0
      %v3361 = vadd.f32 0.0, %v3360
      %v3362 = vpop.f32.mrb[0].mxu0
      %v3363 = vpop.f32.mrb[0].mxu0
      %v3364 = vadd.f32 0.0, %v3363
      %v3365 = vpop.f32.mrb[0].mxu0
      %3366 = vmatprep.mubr.bf16.mxu0 0
      %3367 = vmatmul.mubr.bf16.gmra.mrb[0].mxu0 %v3253
      %v3368 = vpop.f32.mrb[0].mxu0
      %v3369 = vadd.f32 0.0, %v3368
      %v3370 = vpop.f32.mrb[0].mxu0
      %v3371 = vpop.f32.mrb[0].mxu0
      %v3372 = vadd.f32 0.0, %v3371
      %v3373 = vpop.f32.mrb[0].mxu0
      %3374 = vmatprep.mubr.bf16.mxu0 0
      %3375 = vmatmul.mubr.bf16.gmra.mrb[0].mxu0 %v3256
      %v3376 = vpop.f32.mrb[0].mxu0
      %v3377 = vadd.f32 0.0, %v3376
      %v3378 = vpop.f32.mrb[0].mxu0
      %v3379 = vpop.f32.mrb[0].mxu0
      %v3380 = vadd.f32 0.0, %v3379
      %v3381 = vpop.f32.mrb[0].mxu0
      %3382 = vmatprep.mubr.bf16.mxu0 0
      %3383 = vmatmul.mubr.bf16.gmra.mrb[0].mxu0 %v3259
      %v3384 = vpop.f32.mrb[0].mxu0
      %v3385 = vadd.f32 0.0, %v3384
      %v3386 = vpop.f32.mrb[0].mxu0
      %v3387 = vpop.f32.mrb[0].mxu0
      %v3388 = vadd.f32 0.0, %v3387
      %v3389 = vpop.f32.mrb[0].mxu0
      %3390 = vmatprep.mubr.bf16.mxu0 0
      %3391 = vmatmul.mubr.bf16.gmra.mrb[0].mxu0 %v3262
      %v3392 = vpop.f32.mrb[0].mxu0
      %v3393 = vadd.f32 0.0, %v3392
      %v3394 = vpop.f32.mrb[0].mxu0
      %v3395 = vpop.f32.mrb[0].mxu0
      %v3396 = vadd.f32 0.0, %v3395
      %v3397 = vpop.f32.mrb[0].mxu0
      %3398 = vmatprep.mubr.bf16.mxu0 0
      %3399 = vmatmul.mubr.bf16.gmra.mrb[0].mxu0 %v3265
      %v3400 = vpop.f32.mrb[0].mxu0
      %v3401 = vadd.f32 0.0, %v3400
      %v3402 = vpop.f32.mrb[0].mxu0
      %v3403 = vpop.f32.mrb[0].mxu0
      %v3404 = vadd.f32 0.0, %v3403
      %v3405 = vpop.f32.mrb[0].mxu0
      %3406 = vdwg.mxu0
      %v3407 = vadd.f32 %v3139, %v3305
      %v3408 = vadd.f32 %v3140, %v3308
      %v3409 = vadd.f32 %v3141, %v3313
      %v3410 = vadd.f32 %v3142, %v3316
      %v3411 = vadd.f32 %v3143, %v3321
      %v3412 = vadd.f32 %v3144, %v3324
      %v3413 = vadd.f32 %v3145, %v3329
      %v3414 = vadd.f32 %v3146, %v3332
      %v3415 = vadd.f32 %v3147, %v3337
      %v3416 = vadd.f32 %v3148, %v3340
      %v3417 = vadd.f32 %v3149, %v3345
      %v3418 = vadd.f32 %v3150, %v3348
      %v3419 = vadd.f32 %v3151, %v3353
      %v3420 = vadd.f32 %v3152, %v3356
      %v3421 = vadd.f32 %v3153, %v3361
      %v3422 = vadd.f32 %v3154, %v3364
      %v3423 = vadd.f32 %v3155, %v3369
      %v3424 = vadd.f32 %v3156, %v3372
      %v3425 = vadd.f32 %v3157, %v3377
      %v3426 = vadd.f32 %v3158, %v3380
      %v3427 = vadd.f32 %v3159, %v3385
      %v3428 = vadd.f32 %v3160, %v3388
      %v3429 = vadd.f32 %v3161, %v3393
      %v3430 = vadd.f32 %v3162, %v3396
      %v3431 = vadd.f32 %v3163, %v3401
      %v3432 = vadd.f32 %v3164, %v3404
      %v3433 = vld [vmem:[%s165 + $0x18] sm:$0xf]
      %v3434 = vld [vmem:[%s165 + $0x1c] sm:$0xf]
      %v3435 = vld [vmem:[%s165 + $0x20] sm:$0xf]
      %v3436 = vld [vmem:[%s165 + $0x24] sm:$0xf]
      %v3437 = vld [vmem:[%s165 + $0x28] sm:$0xf]
      %v3438 = vld [vmem:[%s165 + $0x2c] sm:$0xf]
      %v3439 = vld [vmem:[%s165 + $0x30] sm:$0xf]
      %v3440 = vld [vmem:[%s165 + $0x34] sm:$0xf]
      %v3441 = vld [vmem:[%s165 + $0x38] sm:$0xf]
      %v3442 = vld [vmem:[%s165 + $0x3c] sm:$0xf]
      %v3443 = vld [vmem:[%s165 + $0x40] sm:$0xf]
      %v3444 = vld [vmem:[%s165 + $0x44] sm:$0xf]
      %v3445 = vld [vmem:[%s165 + $0x48] sm:$0xf]
      %v3446 = vld [vmem:[%s165 + $0x4c] sm:$0xf]
      %v3447 = vld [vmem:[%s165 + $0x50] sm:$0xf]
      %v3448 = vld [vmem:[%s165 + $0x54] sm:$0xf]
      %v3449 = vld [vmem:[%s165 + $0x58] sm:$0xf]
      %v3450 = vld [vmem:[%s165 + $0x5c] sm:$0xf]
      %v3451 = vld [vmem:[%s165 + $0x60] sm:$0xf]
      %v3452 = vld [vmem:[%s165 + $0x64] sm:$0xf]
      %v3453 = vld [vmem:[%s165 + $0x68] sm:$0xf]
      %v3454 = vld [vmem:[%s165 + $0x6c] sm:$0xf]
      %v3455 = vld [vmem:[%s165 + $0x70] sm:$0xf]
      %v3456 = vld [vmem:[%s165 + $0x74] sm:$0xf]
      %v3457 = vld [vmem:[%s165 + $0x78] sm:$0xf]
      %v3458 = vld [vmem:[%s165 + $0x7c] sm:$0x7]
      %s3459 = scalar_lea.vmem %s1, 24
      %v3460 = vld [vmem:[%s3459] sm:$0x3]
      %v3487 = vunpack.c.l.b16 %v3433
      %v3488 = vunpack.c.l.b16 %v3434
      %v3489 = vunpack.c.l.b16 %v3435
      %v3490 = vunpack.c.l.b16 %v3436
      %v3491 = vunpack.c.l.b16 %v3437
      %v3492 = vunpack.c.l.b16 %v3438
      %v3493 = vunpack.c.l.b16 %v3439
      %v3494 = vunpack.c.l.b16 %v3440
      %v3495 = vunpack.c.l.b16 %v3441
      %v3496 = vunpack.c.l.b16 %v3442
      %v3497 = vunpack.c.l.b16 %v3443
      %v3498 = vunpack.c.l.b16 %v3444
      %v3499 = vunpack.c.l.b16 %v3445
      %v3500 = vunpack.c.l.b16 %v3446
      %v3501 = vunpack.c.l.b16 %v3447
      %v3502 = vunpack.c.l.b16 %v3448
      %v3503 = vunpack.c.l.b16 %v3449
      %v3504 = vunpack.c.l.b16 %v3450
      %v3505 = vunpack.c.l.b16 %v3451
      %v3506 = vunpack.c.l.b16 %v3452
      %v3507 = vunpack.c.l.b16 %v3453
      %v3508 = vunpack.c.l.b16 %v3454
      %v3509 = vunpack.c.l.b16 %v3455
      %v3510 = vunpack.c.l.b16 %v3456
      %v3511 = vunpack.c.l.b16 %v3457
      %v3512 = vunpack.c.l.b16 %v3458
      %v3513 = vpack.c.b16 %v3488, %v3487
      %v3514 = vpack.c.b16 %v3490, %v3489
      %v3515 = vpack.c.b16 %v3492, %v3491
      %v3516 = vpack.c.b16 %v3494, %v3493
      %v3517 = vpack.c.b16 %v3496, %v3495
      %v3518 = vpack.c.b16 %v3498, %v3497
      %v3519 = vpack.c.b16 %v3500, %v3499
      %v3520 = vpack.c.b16 %v3502, %v3501
      %v3521 = vpack.c.b16 %v3504, %v3503
      %v3522 = vpack.c.b16 %v3506, %v3505
      %v3523 = vpack.c.b16 %v3508, %v3507
      %v3524 = vpack.c.b16 %v3510, %v3509
      %v3525 = vpack.c.b16 %v3512, %v3511
      %v3527 = vsel %vm370, %v3513, 0
      %v3530 = vsel %vm370, %v3514, 0
      %v3533 = vsel %vm370, %v3515, 0
      %v3536 = vsel %vm370, %v3516, 0
      %v3539 = vsel %vm370, %v3517, 0
      %v3542 = vsel %vm370, %v3518, 0
      %v3545 = vsel %vm370, %v3519, 0
      %v3548 = vsel %vm370, %v3520, 0
      %v3551 = vsel %vm370, %v3521, 0
      %v3554 = vsel %vm370, %v3522, 0
      %v3557 = vsel %vm370, %v3523, 0
      %v3560 = vsel %vm370, %v3524, 0
      %v3563 = vsel %vm370, %v3525, 0
      %v3566 = vsel %vm410, %v3460, 0
      %3568 = vmatprep.subr.bf16.mxu0 0
      %3569 = vmatpush1.bf16.msra.mxu0 %v3566
      %3570 = vmatprep.subr.bf16.mxu0 0
      %3571 = vmatpush1.bf16.msra.mxu0 0
      %3572 = vmatprep.subr.bf16.mxu0 0
      %3573 = vmatpush1.bf16.msra.mxu0 0
      %3574 = vmatprep.subr.bf16.mxu0 0
      %3575 = vmatpush1.bf16.msra.mxu0 0
      %3576 = vmatprep.subr.bf16.mxu0 0
      %3577 = vmatpush1.bf16.msra.mxu0 0
      %3578 = vmatprep.subr.bf16.mxu0 0
      %3579 = vmatpush1.bf16.msra.mxu0 0
      %3580 = vmatprep.subr.bf16.mxu0 0
      %3581 = vmatpush1.bf16.msra.mxu0 0
      %3582 = vmatprep.subr.bf16.mxu0 0
      %3583 = vmatpush1.bf16.msra.mxu0 0
      %3584 = vmatprep.subr.bf16.mxu0 0
      %3585 = vmatpush1.bf16.msra.mxu0 0
      %3586 = vmatprep.subr.bf16.mxu0 0
      %3587 = vmatpush1.bf16.msra.mxu0 0
      %3588 = vmatprep.subr.bf16.mxu0 0
      %3589 = vmatpush1.bf16.msra.mxu0 0
      %3590 = vmatprep.subr.bf16.mxu0 0
      %3591 = vmatpush1.bf16.msra.mxu0 0
      %3592 = vmatprep.subr.bf16.mxu0 0
      %3593 = vmatpush1.bf16.msra.mxu0 0
      %3594 = vmatprep.subr.bf16.mxu0 0
      %3595 = vmatpush1.bf16.msra.mxu0 0
      %3596 = vmatprep.subr.bf16.mxu0 0
      %3597 = vmatpush1.bf16.msra.mxu0 0
      %3598 = vmatprep.subr.bf16.mxu0 0
      %3599 = vmatpush1.bf16.msra.mxu0 0
      %3600 = vmatprep.mubr.bf16.mxu0 0
      %3601 = vmatmul.mubr.bf16.gmra.mrb[0].mxu0 %v3527
      %v3602 = vpop.f32.mrb[0].mxu0
      %v3603 = vadd.f32 0.0, %v3602
      %v3604 = vpop.f32.mrb[0].mxu0
      %v3605 = vpop.f32.mrb[0].mxu0
      %v3606 = vadd.f32 0.0, %v3605
      %v3607 = vpop.f32.mrb[0].mxu0
      %3608 = vmatprep.mubr.bf16.mxu0 0
      %3609 = vmatmul.mubr.bf16.gmra.mrb[0].mxu0 %v3530
      %v3610 = vpop.f32.mrb[0].mxu0
      %v3611 = vadd.f32 0.0, %v3610
      %v3612 = vpop.f32.mrb[0].mxu0
      %v3613 = vpop.f32.mrb[0].mxu0
      %v3614 = vadd.f32 0.0, %v3613
      %v3615 = vpop.f32.mrb[0].mxu0
      %3616 = vmatprep.mubr.bf16.mxu0 0
      %3617 = vmatmul.mubr.bf16.gmra.mrb[0].mxu0 %v3533
      %v3618 = vpop.f32.mrb[0].mxu0
      %v3619 = vadd.f32 0.0, %v3618
      %v3620 = vpop.f32.mrb[0].mxu0
      %v3621 = vpop.f32.mrb[0].mxu0
      %v3622 = vadd.f32 0.0, %v3621
      %v3623 = vpop.f32.mrb[0].mxu0
      %3624 = vmatprep.mubr.bf16.mxu0 0
      %3625 = vmatmul.mubr.bf16.gmra.mrb[0].mxu0 %v3536
      %v3626 = vpop.f32.mrb[0].mxu0
      %v3627 = vadd.f32 0.0, %v3626
      %v3628 = vpop.f32.mrb[0].mxu0
      %v3629 = vpop.f32.mrb[0].mxu0
      %v3630 = vadd.f32 0.0, %v3629
      %v3631 = vpop.f32.mrb[0].mxu0
      %3632 = vmatprep.mubr.bf16.mxu0 0
      %3633 = vmatmul.mubr.bf16.gmra.mrb[0].mxu0 %v3539
      %v3634 = vpop.f32.mrb[0].mxu0
      %v3635 = vadd.f32 0.0, %v3634
      %v3636 = vpop.f32.mrb[0].mxu0
      %v3637 = vpop.f32.mrb[0].mxu0
      %v3638 = vadd.f32 0.0, %v3637
      %v3639 = vpop.f32.mrb[0].mxu0
      %3640 = vmatprep.mubr.bf16.mxu0 0
      %3641 = vmatmul.mubr.bf16.gmra.mrb[0].mxu0 %v3542
      %v3642 = vpop.f32.mrb[0].mxu0
      %v3643 = vadd.f32 0.0, %v3642
      %v3644 = vpop.f32.mrb[0].mxu0
      %v3645 = vpop.f32.mrb[0].mxu0
      %v3646 = vadd.f32 0.0, %v3645
      %v3647 = vpop.f32.mrb[0].mxu0
      %3648 = vmatprep.mubr.bf16.mxu0 0
      %3649 = vmatmul.mubr.bf16.gmra.mrb[0].mxu0 %v3545
      %v3650 = vpop.f32.mrb[0].mxu0
      %v3651 = vadd.f32 0.0, %v3650
      %v3652 = vpop.f32.mrb[0].mxu0
      %v3653 = vpop.f32.mrb[0].mxu0
      %v3654 = vadd.f32 0.0, %v3653
      %v3655 = vpop.f32.mrb[0].mxu0
      %3656 = vmatprep.mubr.bf16.mxu0 0
      %3657 = vmatmul.mubr.bf16.gmra.mrb[0].mxu0 %v3548
      %v3658 = vpop.f32.mrb[0].mxu0
      %v3659 = vadd.f32 0.0, %v3658
      %v3660 = vpop.f32.mrb[0].mxu0
      %v3661 = vpop.f32.mrb[0].mxu0
      %v3662 = vadd.f32 0.0, %v3661
      %v3663 = vpop.f32.mrb[0].mxu0
      %3664 = vmatprep.mubr.bf16.mxu0 0
      %3665 = vmatmul.mubr.bf16.gmra.mrb[0].mxu0 %v3551
      %v3666 = vpop.f32.mrb[0].mxu0
      %v3667 = vadd.f32 0.0, %v3666
      %v3668 = vpop.f32.mrb[0].mxu0
      %v3669 = vpop.f32.mrb[0].mxu0
      %v3670 = vadd.f32 0.0, %v3669
      %v3671 = vpop.f32.mrb[0].mxu0
      %3672 = vmatprep.mubr.bf16.mxu0 0
      %3673 = vmatmul.mubr.bf16.gmra.mrb[0].mxu0 %v3554
      %v3674 = vpop.f32.mrb[0].mxu0
      %v3675 = vadd.f32 0.0, %v3674
      %v3676 = vpop.f32.mrb[0].mxu0
      %v3677 = vpop.f32.mrb[0].mxu0
      %v3678 = vadd.f32 0.0, %v3677
      %v3679 = vpop.f32.mrb[0].mxu0
      %3680 = vmatprep.mubr.bf16.mxu0 0
      %3681 = vmatmul.mubr.bf16.gmra.mrb[0].mxu0 %v3557
      %v3682 = vpop.f32.mrb[0].mxu0
      %v3683 = vadd.f32 0.0, %v3682
      %v3684 = vpop.f32.mrb[0].mxu0
      %v3685 = vpop.f32.mrb[0].mxu0
      %v3686 = vadd.f32 0.0, %v3685
      %v3687 = vpop.f32.mrb[0].mxu0
      %3688 = vmatprep.mubr.bf16.mxu0 0
      %3689 = vmatmul.mubr.bf16.gmra.mrb[0].mxu0 %v3560
      %v3690 = vpop.f32.mrb[0].mxu0
      %v3691 = vadd.f32 0.0, %v3690
      %v3692 = vpop.f32.mrb[0].mxu0
      %v3693 = vpop.f32.mrb[0].mxu0
      %v3694 = vadd.f32 0.0, %v3693
      %v3695 = vpop.f32.mrb[0].mxu0
      %3696 = vmatprep.mubr.bf16.mxu0 0
      %3697 = vmatmul.mubr.bf16.gmra.mrb[0].mxu0 %v3563
      %v3698 = vpop.f32.mrb[0].mxu0
      %v3699 = vadd.f32 0.0, %v3698
      %v3700 = vpop.f32.mrb[0].mxu0
      %v3701 = vpop.f32.mrb[0].mxu0
      %v3702 = vadd.f32 0.0, %v3701
      %v3703 = vpop.f32.mrb[0].mxu0
      %3704 = vdwg.mxu0
      %v3705 = vadd.f32 %v3407, %v3603
      %v3706 = vadd.f32 %v3408, %v3606
      %v3707 = vadd.f32 %v3409, %v3611
      %v3708 = vadd.f32 %v3410, %v3614
      %v3709 = vadd.f32 %v3411, %v3619
      %v3710 = vadd.f32 %v3412, %v3622
      %v3711 = vadd.f32 %v3413, %v3627
      %v3712 = vadd.f32 %v3414, %v3630
      %v3713 = vadd.f32 %v3415, %v3635
      %v3714 = vadd.f32 %v3416, %v3638
      %v3715 = vadd.f32 %v3417, %v3643
      %v3716 = vadd.f32 %v3418, %v3646
      %v3717 = vadd.f32 %v3419, %v3651
      %v3718 = vadd.f32 %v3420, %v3654
      %v3719 = vadd.f32 %v3421, %v3659
      %v3720 = vadd.f32 %v3422, %v3662
      %v3721 = vadd.f32 %v3423, %v3667
      %v3722 = vadd.f32 %v3424, %v3670
      %v3723 = vadd.f32 %v3425, %v3675
      %v3724 = vadd.f32 %v3426, %v3678
      %v3725 = vadd.f32 %v3427, %v3683
      %v3726 = vadd.f32 %v3428, %v3686
      %v3727 = vadd.f32 %v3429, %v3691
      %v3728 = vadd.f32 %v3430, %v3694
      %v3729 = vadd.f32 %v3431, %v3699
      %v3730 = vadd.f32 %v3432, %v3702
      %s3731 = scalar_lea.vmem %s1, 26
      %v3732 = vld [vmem:[%s3731] sm:$0x3]
      %v3733 = vshrl.u32 %v3513, 16
      %v3735 = vshll.u32 %v3513, 16
      %v3737 = vrot.slane %v3735, 1
      %v3738 = vor.u32 %v3733, %v3737
      %v3739 = vshll.u32 %v3514, 16
      %v3741 = vrot.slane %v3739, 1
      %v3742 = vsel %vm266, %v3738, %v3741
      %v3743 = vshrl.u32 %v3514, 16
      %v3745 = vor.u32 %v3743, %v3741
      %v3746 = vshll.u32 %v3515, 16
      %v3748 = vrot.slane %v3746, 1
      %v3749 = vsel %vm266, %v3745, %v3748
      %v3750 = vshrl.u32 %v3515, 16
      %v3752 = vor.u32 %v3750, %v3748
      %v3753 = vshll.u32 %v3516, 16
      %v3755 = vrot.slane %v3753, 1
      %v3756 = vsel %vm266, %v3752, %v3755
      %v3757 = vshrl.u32 %v3516, 16
      %v3759 = vor.u32 %v3757, %v3755
      %v3760 = vshll.u32 %v3517, 16
      %v3762 = vrot.slane %v3760, 1
      %v3763 = vsel %vm266, %v3759, %v3762
      %v3764 = vshrl.u32 %v3517, 16
      %v3766 = vor.u32 %v3764, %v3762
      %v3767 = vshll.u32 %v3518, 16
      %v3769 = vrot.slane %v3767, 1
      %v3770 = vsel %vm266, %v3766, %v3769
      %v3771 = vshrl.u32 %v3518, 16
      %v3773 = vor.u32 %v3771, %v3769
      %v3774 = vshll.u32 %v3519, 16
      %v3776 = vrot.slane %v3774, 1
      %v3777 = vsel %vm266, %v3773, %v3776
      %v3778 = vshrl.u32 %v3519, 16
      %v3780 = vor.u32 %v3778, %v3776
      %v3781 = vshll.u32 %v3520, 16
      %v3783 = vrot.slane %v3781, 1
      %v3784 = vsel %vm266, %v3780, %v3783
      %v3785 = vshrl.u32 %v3520, 16
      %v3787 = vor.u32 %v3785, %v3783
      %v3788 = vshll.u32 %v3521, 16
      %v3790 = vrot.slane %v3788, 1
      %v3791 = vsel %vm266, %v3787, %v3790
      %v3792 = vshrl.u32 %v3521, 16
      %v3794 = vor.u32 %v3792, %v3790
      %v3795 = vshll.u32 %v3522, 16
      %v3797 = vrot.slane %v3795, 1
      %v3798 = vsel %vm266, %v3794, %v3797
      %v3799 = vshrl.u32 %v3522, 16
      %v3801 = vor.u32 %v3799, %v3797
      %v3802 = vshll.u32 %v3523, 16
      %v3804 = vrot.slane %v3802, 1
      %v3805 = vsel %vm266, %v3801, %v3804
      %v3806 = vshrl.u32 %v3523, 16
      %v3808 = vor.u32 %v3806, %v3804
      %v3809 = vshll.u32 %v3524, 16
      %v3811 = vrot.slane %v3809, 1
      %v3812 = vsel %vm266, %v3808, %v3811
      %v3813 = vshrl.u32 %v3524, 16
      %v3815 = vor.u32 %v3813, %v3811
      %v3816 = vshll.u32 %v3525, 16
      %v3818 = vrot.slane %v3816, 1
      %v3819 = vsel %vm266, %v3815, %v3818
      %v3820 = vshrl.u32 %v3525, 16
      %v3822 = vor.u32 %v3820, %v3818
      %v3824 = vsel %vm370, %v3742, 0
      %v3827 = vsel %vm370, %v3749, 0
      %v3830 = vsel %vm370, %v3756, 0
      %v3833 = vsel %vm370, %v3763, 0
      %v3836 = vsel %vm370, %v3770, 0
      %v3839 = vsel %vm370, %v3777, 0
      %v3842 = vsel %vm370, %v3784, 0
      %v3845 = vsel %vm370, %v3791, 0
      %v3848 = vsel %vm370, %v3798, 0
      %v3851 = vsel %vm370, %v3805, 0
      %v3854 = vsel %vm370, %v3812, 0
      %v3857 = vsel %vm370, %v3819, 0
      %v3860 = vsel %vm370, %v3822, 0
      %v3863 = vsel %vm410, %v3732, 0
      %3865 = vmatprep.subr.bf16.mxu0 0
      %3866 = vmatpush1.bf16.msra.mxu0 %v3863
      %3867 = vmatprep.subr.bf16.mxu0 0
      %3868 = vmatpush1.bf16.msra.mxu0 0
      %3869 = vmatprep.subr.bf16.mxu0 0
      %3870 = vmatpush1.bf16.msra.mxu0 0
      %3871 = vmatprep.subr.bf16.mxu0 0
      %3872 = vmatpush1.bf16.msra.mxu0 0
      %3873 = vmatprep.subr.bf16.mxu0 0
      %3874 = vmatpush1.bf16.msra.mxu0 0
      %3875 = vmatprep.subr.bf16.mxu0 0
      %3876 = vmatpush1.bf16.msra.mxu0 0
      %3877 = vmatprep.subr.bf16.mxu0 0
      %3878 = vmatpush1.bf16.msra.mxu0 0
      %3879 = vmatprep.subr.bf16.mxu0 0
      %3880 = vmatpush1.bf16.msra.mxu0 0
      %3881 = vmatprep.subr.bf16.mxu0 0
      %3882 = vmatpush1.bf16.msra.mxu0 0
      %3883 = vmatprep.subr.bf16.mxu0 0
      %3884 = vmatpush1.bf16.msra.mxu0 0
      %3885 = vmatprep.subr.bf16.mxu0 0
      %3886 = vmatpush1.bf16.msra.mxu0 0
      %3887 = vmatprep.subr.bf16.mxu0 0
      %3888 = vmatpush1.bf16.msra.mxu0 0
      %3889 = vmatprep.subr.bf16.mxu0 0
      %3890 = vmatpush1.bf16.msra.mxu0 0
      %3891 = vmatprep.subr.bf16.mxu0 0
      %3892 = vmatpush1.bf16.msra.mxu0 0
      %3893 = vmatprep.subr.bf16.mxu0 0
      %3894 = vmatpush1.bf16.msra.mxu0 0
      %3895 = vmatprep.subr.bf16.mxu0 0
      %3896 = vmatpush1.bf16.msra.mxu0 0
      %3897 = vmatprep.mubr.bf16.mxu0 0
      %3898 = vmatmul.mubr.bf16.gmra.mrb[0].mxu0 %v3824
      %v3899 = vpop.f32.mrb[0].mxu0
      %v3900 = vadd.f32 0.0, %v3899
      %v3901 = vpop.f32.mrb[0].mxu0
      %v3902 = vpop.f32.mrb[0].mxu0
      %v3903 = vadd.f32 0.0, %v3902
      %v3904 = vpop.f32.mrb[0].mxu0
      %3905 = vmatprep.mubr.bf16.mxu0 0
      %3906 = vmatmul.mubr.bf16.gmra.mrb[0].mxu0 %v3827
      %v3907 = vpop.f32.mrb[0].mxu0
      %v3908 = vadd.f32 0.0, %v3907
      %v3909 = vpop.f32.mrb[0].mxu0
      %v3910 = vpop.f32.mrb[0].mxu0
      %v3911 = vadd.f32 0.0, %v3910
      %v3912 = vpop.f32.mrb[0].mxu0
      %3913 = vmatprep.mubr.bf16.mxu0 0
      %3914 = vmatmul.mubr.bf16.gmra.mrb[0].mxu0 %v3830
      %v3915 = vpop.f32.mrb[0].mxu0
      %v3916 = vadd.f32 0.0, %v3915
      %v3917 = vpop.f32.mrb[0].mxu0
      %v3918 = vpop.f32.mrb[0].mxu0
      %v3919 = vadd.f32 0.0, %v3918
      %v3920 = vpop.f32.mrb[0].mxu0
      %3921 = vmatprep.mubr.bf16.mxu0 0
      %3922 = vmatmul.mubr.bf16.gmra.mrb[0].mxu0 %v3833
      %v3923 = vpop.f32.mrb[0].mxu0
      %v3924 = vadd.f32 0.0, %v3923
      %v3925 = vpop.f32.mrb[0].mxu0
      %v3926 = vpop.f32.mrb[0].mxu0
      %v3927 = vadd.f32 0.0, %v3926
      %v3928 = vpop.f32.mrb[0].mxu0
      %3929 = vmatprep.mubr.bf16.mxu0 0
      %3930 = vmatmul.mubr.bf16.gmra.mrb[0].mxu0 %v3836
      %v3931 = vpop.f32.mrb[0].mxu0
      %v3932 = vadd.f32 0.0, %v3931
      %v3933 = vpop.f32.mrb[0].mxu0
      %v3934 = vpop.f32.mrb[0].mxu0
      %v3935 = vadd.f32 0.0, %v3934
      %v3936 = vpop.f32.mrb[0].mxu0
      %3937 = vmatprep.mubr.bf16.mxu0 0
      %3938 = vmatmul.mubr.bf16.gmra.mrb[0].mxu0 %v3839
      %v3939 = vpop.f32.mrb[0].mxu0
      %v3940 = vadd.f32 0.0, %v3939
      %v3941 = vpop.f32.mrb[0].mxu0
      %v3942 = vpop.f32.mrb[0].mxu0
      %v3943 = vadd.f32 0.0, %v3942
      %v3944 = vpop.f32.mrb[0].mxu0
      %3945 = vmatprep.mubr.bf16.mxu0 0
      %3946 = vmatmul.mubr.bf16.gmra.mrb[0].mxu0 %v3842
      %v3947 = vpop.f32.mrb[0].mxu0
      %v3948 = vadd.f32 0.0, %v3947
      %v3949 = vpop.f32.mrb[0].mxu0
      %v3950 = vpop.f32.mrb[0].mxu0
      %v3951 = vadd.f32 0.0, %v3950
      %v3952 = vpop.f32.mrb[0].mxu0
      %3953 = vmatprep.mubr.bf16.mxu0 0
      %3954 = vmatmul.mubr.bf16.gmra.mrb[0].mxu0 %v3845
      %v3955 = vpop.f32.mrb[0].mxu0
      %v3956 = vadd.f32 0.0, %v3955
      %v3957 = vpop.f32.mrb[0].mxu0
      %v3958 = vpop.f32.mrb[0].mxu0
      %v3959 = vadd.f32 0.0, %v3958
      %v3960 = vpop.f32.mrb[0].mxu0
      %3961 = vmatprep.mubr.bf16.mxu0 0
      %3962 = vmatmul.mubr.bf16.gmra.mrb[0].mxu0 %v3848
      %v3963 = vpop.f32.mrb[0].mxu0
      %v3964 = vadd.f32 0.0, %v3963
      %v3965 = vpop.f32.mrb[0].mxu0
      %v3966 = vpop.f32.mrb[0].mxu0
      %v3967 = vadd.f32 0.0, %v3966
      %v3968 = vpop.f32.mrb[0].mxu0
      %3969 = vmatprep.mubr.bf16.mxu0 0
      %3970 = vmatmul.mubr.bf16.gmra.mrb[0].mxu0 %v3851
      %v3971 = vpop.f32.mrb[0].mxu0
      %v3972 = vadd.f32 0.0, %v3971
      %v3973 = vpop.f32.mrb[0].mxu0
      %v3974 = vpop.f32.mrb[0].mxu0
      %v3975 = vadd.f32 0.0, %v3974
      %v3976 = vpop.f32.mrb[0].mxu0
      %3977 = vmatprep.mubr.bf16.mxu0 0
      %3978 = vmatmul.mubr.bf16.gmra.mrb[0].mxu0 %v3854
      %v3979 = vpop.f32.mrb[0].mxu0
      %v3980 = vadd.f32 0.0, %v3979
      %v3981 = vpop.f32.mrb[0].mxu0
      %v3982 = vpop.f32.mrb[0].mxu0
      %v3983 = vadd.f32 0.0, %v3982
      %v3984 = vpop.f32.mrb[0].mxu0
      %3985 = vmatprep.mubr.bf16.mxu0 0
      %3986 = vmatmul.mubr.bf16.gmra.mrb[0].mxu0 %v3857
      %v3987 = vpop.f32.mrb[0].mxu0
      %v3988 = vadd.f32 0.0, %v3987
      %v3989 = vpop.f32.mrb[0].mxu0
      %v3990 = vpop.f32.mrb[0].mxu0
      %v3991 = vadd.f32 0.0, %v3990
      %v3992 = vpop.f32.mrb[0].mxu0
      %3993 = vmatprep.mubr.bf16.mxu0 0
      %3994 = vmatmul.mubr.bf16.gmra.mrb[0].mxu0 %v3860
      %v3995 = vpop.f32.mrb[0].mxu0
      %v3996 = vadd.f32 0.0, %v3995
      %v3997 = vpop.f32.mrb[0].mxu0
      %v3998 = vpop.f32.mrb[0].mxu0
      %v3999 = vadd.f32 0.0, %v3998
      %v4000 = vpop.f32.mrb[0].mxu0
      %4001 = vdwg.mxu0
      %v4002 = vadd.f32 %v3705, %v3900
      %v4003 = vadd.f32 %v3706, %v3903
      %v4004 = vadd.f32 %v3707, %v3908
      %v4005 = vadd.f32 %v3708, %v3911
      %v4006 = vadd.f32 %v3709, %v3916
      %v4007 = vadd.f32 %v3710, %v3919
      %v4008 = vadd.f32 %v3711, %v3924
      %v4009 = vadd.f32 %v3712, %v3927
      %v4010 = vadd.f32 %v3713, %v3932
      %v4011 = vadd.f32 %v3714, %v3935
      %v4012 = vadd.f32 %v3715, %v3940
      %v4013 = vadd.f32 %v3716, %v3943
      %v4014 = vadd.f32 %v3717, %v3948
      %v4015 = vadd.f32 %v3718, %v3951
      %v4016 = vadd.f32 %v3719, %v3956
      %v4017 = vadd.f32 %v3720, %v3959
      %v4018 = vadd.f32 %v3721, %v3964
      %v4019 = vadd.f32 %v3722, %v3967
      %v4020 = vadd.f32 %v3723, %v3972
      %v4021 = vadd.f32 %v3724, %v3975
      %v4022 = vadd.f32 %v3725, %v3980
      %v4023 = vadd.f32 %v3726, %v3983
      %v4024 = vadd.f32 %v3727, %v3988
      %v4025 = vadd.f32 %v3728, %v3991
      %v4026 = vadd.f32 %v3729, %v3996
      %v4027 = vadd.f32 %v3730, %v3999
      %v4028 = vld [vmem:[%s165 + $0x18] sm:$0xe]
      %v4029 = vld [vmem:[%s165 + $0x7c] sm:$0xf]
      %s4030 = scalar_lea.vmem %s1, 28
      %v4031 = vld [vmem:[%s4030] sm:$0x3]
      %v4034 = vunpack.c.l.b16 %v4028
      %v4035 = vunpack.c.l.b16 %v4029
      %v4036 = vpack.c.b16 %v3488, %v4034
      %v4037 = vpack.c.b16 %v4035, %v3511
      %v4038 = vrot.slane %v4036, 1
      %v4039 = vrot.slane %v3514, 1
      %v4040 = vsel %vm727, %v4038, %v4039
      %v4041 = vrot.slane %v3515, 1
      %v4042 = vsel %vm727, %v4039, %v4041
      %v4043 = vrot.slane %v3516, 1
      %v4044 = vsel %vm727, %v4041, %v4043
      %v4045 = vrot.slane %v3517, 1
      %v4046 = vsel %vm727, %v4043, %v4045
      %v4047 = vrot.slane %v3518, 1
      %v4048 = vsel %vm727, %v4045, %v4047
      %v4049 = vrot.slane %v3519, 1
      %v4050 = vsel %vm727, %v4047, %v4049
      %v4051 = vrot.slane %v3520, 1
      %v4052 = vsel %vm727, %v4049, %v4051
      %v4053 = vrot.slane %v3521, 1
      %v4054 = vsel %vm727, %v4051, %v4053
      %v4055 = vrot.slane %v3522, 1
      %v4056 = vsel %vm727, %v4053, %v4055
      %v4057 = vrot.slane %v3523, 1
      %v4058 = vsel %vm727, %v4055, %v4057
      %v4059 = vrot.slane %v3524, 1
      %v4060 = vsel %vm727, %v4057, %v4059
      %v4061 = vrot.slane %v4037, 1
      %v4062 = vsel %vm727, %v4059, %v4061
      %v4064 = vsel %vm370, %v4040, 0
      %v4067 = vsel %vm370, %v4042, 0
      %v4070 = vsel %vm370, %v4044, 0
      %v4073 = vsel %vm370, %v4046, 0
      %v4076 = vsel %vm370, %v4048, 0
      %v4079 = vsel %vm370, %v4050, 0
      %v4082 = vsel %vm370, %v4052, 0
      %v4085 = vsel %vm370, %v4054, 0
      %v4088 = vsel %vm370, %v4056, 0
      %v4091 = vsel %vm370, %v4058, 0
      %v4094 = vsel %vm370, %v4060, 0
      %v4097 = vsel %vm370, %v4062, 0
      %v4100 = vsel %vm370, %v4061, 0
      %v4103 = vsel %vm410, %v4031, 0
      %4105 = vmatprep.subr.bf16.mxu0 0
      %4106 = vmatpush1.bf16.msra.mxu0 %v4103
      %4107 = vmatprep.subr.bf16.mxu0 0
      %4108 = vmatpush1.bf16.msra.mxu0 0
      %4109 = vmatprep.subr.bf16.mxu0 0
      %4110 = vmatpush1.bf16.msra.mxu0 0
      %4111 = vmatprep.subr.bf16.mxu0 0
      %4112 = vmatpush1.bf16.msra.mxu0 0
      %4113 = vmatprep.subr.bf16.mxu0 0
      %4114 = vmatpush1.bf16.msra.mxu0 0
      %4115 = vmatprep.subr.bf16.mxu0 0
      %4116 = vmatpush1.bf16.msra.mxu0 0
      %4117 = vmatprep.subr.bf16.mxu0 0
      %4118 = vmatpush1.bf16.msra.mxu0 0
      %4119 = vmatprep.subr.bf16.mxu0 0
      %4120 = vmatpush1.bf16.msra.mxu0 0
      %4121 = vmatprep.subr.bf16.mxu0 0
      %4122 = vmatpush1.bf16.msra.mxu0 0
      %4123 = vmatprep.subr.bf16.mxu0 0
      %4124 = vmatpush1.bf16.msra.mxu0 0
      %4125 = vmatprep.subr.bf16.mxu0 0
      %4126 = vmatpush1.bf16.msra.mxu0 0
      %4127 = vmatprep.subr.bf16.mxu0 0
      %4128 = vmatpush1.bf16.msra.mxu0 0
      %4129 = vmatprep.subr.bf16.mxu0 0
      %4130 = vmatpush1.bf16.msra.mxu0 0
      %4131 = vmatprep.subr.bf16.mxu0 0
      %4132 = vmatpush1.bf16.msra.mxu0 0
      %4133 = vmatprep.subr.bf16.mxu0 0
      %4134 = vmatpush1.bf16.msra.mxu0 0
      %4135 = vmatprep.subr.bf16.mxu0 0
      %4136 = vmatpush1.bf16.msra.mxu0 0
      %4137 = vmatprep.mubr.bf16.mxu0 0
      %4138 = vmatmul.mubr.bf16.gmra.mrb[0].mxu0 %v4064
      %v4139 = vpop.f32.mrb[0].mxu0
      %v4140 = vadd.f32 0.0, %v4139
      %v4141 = vpop.f32.mrb[0].mxu0
      %v4142 = vpop.f32.mrb[0].mxu0
      %v4143 = vadd.f32 0.0, %v4142
      %v4144 = vpop.f32.mrb[0].mxu0
      %4145 = vmatprep.mubr.bf16.mxu0 0
      %4146 = vmatmul.mubr.bf16.gmra.mrb[0].mxu0 %v4067
      %v4147 = vpop.f32.mrb[0].mxu0
      %v4148 = vadd.f32 0.0, %v4147
      %v4149 = vpop.f32.mrb[0].mxu0
      %v4150 = vpop.f32.mrb[0].mxu0
      %v4151 = vadd.f32 0.0, %v4150
      %v4152 = vpop.f32.mrb[0].mxu0
      %4153 = vmatprep.mubr.bf16.mxu0 0
      %4154 = vmatmul.mubr.bf16.gmra.mrb[0].mxu0 %v4070
      %v4155 = vpop.f32.mrb[0].mxu0
      %v4156 = vadd.f32 0.0, %v4155
      %v4157 = vpop.f32.mrb[0].mxu0
      %v4158 = vpop.f32.mrb[0].mxu0
      %v4159 = vadd.f32 0.0, %v4158
      %v4160 = vpop.f32.mrb[0].mxu0
      %4161 = vmatprep.mubr.bf16.mxu0 0
      %4162 = vmatmul.mubr.bf16.gmra.mrb[0].mxu0 %v4073
      %v4163 = vpop.f32.mrb[0].mxu0
      %v4164 = vadd.f32 0.0, %v4163
      %v4165 = vpop.f32.mrb[0].mxu0
      %v4166 = vpop.f32.mrb[0].mxu0
      %v4167 = vadd.f32 0.0, %v4166
      %v4168 = vpop.f32.mrb[0].mxu0
      %4169 = vmatprep.mubr.bf16.mxu0 0
      %4170 = vmatmul.mubr.bf16.gmra.mrb[0].mxu0 %v4076
      %v4171 = vpop.f32.mrb[0].mxu0
      %v4172 = vadd.f32 0.0, %v4171
      %v4173 = vpop.f32.mrb[0].mxu0
      %v4174 = vpop.f32.mrb[0].mxu0
      %v4175 = vadd.f32 0.0, %v4174
      %v4176 = vpop.f32.mrb[0].mxu0
      %4177 = vmatprep.mubr.bf16.mxu0 0
      %4178 = vmatmul.mubr.bf16.gmra.mrb[0].mxu0 %v4079
      %v4179 = vpop.f32.mrb[0].mxu0
      %v4180 = vadd.f32 0.0, %v4179
      %v4181 = vpop.f32.mrb[0].mxu0
      %v4182 = vpop.f32.mrb[0].mxu0
      %v4183 = vadd.f32 0.0, %v4182
      %v4184 = vpop.f32.mrb[0].mxu0
      %4185 = vmatprep.mubr.bf16.mxu0 0
      %4186 = vmatmul.mubr.bf16.gmra.mrb[0].mxu0 %v4082
      %v4187 = vpop.f32.mrb[0].mxu0
      %v4188 = vadd.f32 0.0, %v4187
      %v4189 = vpop.f32.mrb[0].mxu0
      %v4190 = vpop.f32.mrb[0].mxu0
      %v4191 = vadd.f32 0.0, %v4190
      %v4192 = vpop.f32.mrb[0].mxu0
      %4193 = vmatprep.mubr.bf16.mxu0 0
      %4194 = vmatmul.mubr.bf16.gmra.mrb[0].mxu0 %v4085
      %v4195 = vpop.f32.mrb[0].mxu0
      %v4196 = vadd.f32 0.0, %v4195
      %v4197 = vpop.f32.mrb[0].mxu0
      %v4198 = vpop.f32.mrb[0].mxu0
      %v4199 = vadd.f32 0.0, %v4198
      %v4200 = vpop.f32.mrb[0].mxu0
      %4201 = vmatprep.mubr.bf16.mxu0 0
      %4202 = vmatmul.mubr.bf16.gmra.mrb[0].mxu0 %v4088
      %v4203 = vpop.f32.mrb[0].mxu0
      %v4204 = vadd.f32 0.0, %v4203
      %v4205 = vpop.f32.mrb[0].mxu0
      %v4206 = vpop.f32.mrb[0].mxu0
      %v4207 = vadd.f32 0.0, %v4206
      %v4208 = vpop.f32.mrb[0].mxu0
      %4209 = vmatprep.mubr.bf16.mxu0 0
      %4210 = vmatmul.mubr.bf16.gmra.mrb[0].mxu0 %v4091
      %v4211 = vpop.f32.mrb[0].mxu0
      %v4212 = vadd.f32 0.0, %v4211
      %v4213 = vpop.f32.mrb[0].mxu0
      %v4214 = vpop.f32.mrb[0].mxu0
      %v4215 = vadd.f32 0.0, %v4214
      %v4216 = vpop.f32.mrb[0].mxu0
      %4217 = vmatprep.mubr.bf16.mxu0 0
      %4218 = vmatmul.mubr.bf16.gmra.mrb[0].mxu0 %v4094
      %v4219 = vpop.f32.mrb[0].mxu0
      %v4220 = vadd.f32 0.0, %v4219
      %v4221 = vpop.f32.mrb[0].mxu0
      %v4222 = vpop.f32.mrb[0].mxu0
      %v4223 = vadd.f32 0.0, %v4222
      %v4224 = vpop.f32.mrb[0].mxu0
      %4225 = vmatprep.mubr.bf16.mxu0 0
      %4226 = vmatmul.mubr.bf16.gmra.mrb[0].mxu0 %v4097
      %v4227 = vpop.f32.mrb[0].mxu0
      %v4228 = vadd.f32 0.0, %v4227
      %v4229 = vpop.f32.mrb[0].mxu0
      %v4230 = vpop.f32.mrb[0].mxu0
      %v4231 = vadd.f32 0.0, %v4230
      %v4232 = vpop.f32.mrb[0].mxu0
      %4233 = vmatprep.mubr.bf16.mxu0 0
      %4234 = vmatmul.mubr.bf16.gmra.mrb[0].mxu0 %v4100
      %v4235 = vpop.f32.mrb[0].mxu0
      %v4236 = vadd.f32 0.0, %v4235
      %v4237 = vpop.f32.mrb[0].mxu0
      %v4238 = vpop.f32.mrb[0].mxu0
      %v4239 = vadd.f32 0.0, %v4238
      %v4240 = vpop.f32.mrb[0].mxu0
      %4241 = vdwg.mxu0
      %v4242 = vadd.f32 %v4002, %v4140
      %v4243 = vadd.f32 %v4003, %v4143
      %v4244 = vadd.f32 %v4004, %v4148
      %v4245 = vadd.f32 %v4005, %v4151
      %v4246 = vadd.f32 %v4006, %v4156
      %v4247 = vadd.f32 %v4007, %v4159
      %v4248 = vadd.f32 %v4008, %v4164
      %v4249 = vadd.f32 %v4009, %v4167
      %v4250 = vadd.f32 %v4010, %v4172
      %v4251 = vadd.f32 %v4011, %v4175
      %v4252 = vadd.f32 %v4012, %v4180
      %v4253 = vadd.f32 %v4013, %v4183
      %v4254 = vadd.f32 %v4014, %v4188
      %v4255 = vadd.f32 %v4015, %v4191
      %v4256 = vadd.f32 %v4016, %v4196
      %v4257 = vadd.f32 %v4017, %v4199
      %v4258 = vadd.f32 %v4018, %v4204
      %v4259 = vadd.f32 %v4019, %v4207
      %v4260 = vadd.f32 %v4020, %v4212
      %v4261 = vadd.f32 %v4021, %v4215
      %v4262 = vadd.f32 %v4022, %v4220
      %v4263 = vadd.f32 %v4023, %v4223
      %v4264 = vadd.f32 %v4024, %v4228
      %v4265 = vadd.f32 %v4025, %v4231
      %v4266 = vadd.f32 %v4026, %v4236
      %v4267 = vadd.f32 %v4027, %v4239
      %s4268 = scalar_lea.vmem %s1, 30
      %v4269 = vld [vmem:[%s4268] sm:$0x3]
      %v4271 = vshrl.u32 %v4036, 16
      %v4273 = vrot.slane %v4271, 1
      %v4274 = vshll.u32 %v4036, 16
      %v4276 = vrot.slane %v4274, 2
      %v4277 = vor.u32 %v4273, %v4276
      %v4278 = vrot.slane %v3743, 1
      %v4279 = vrot.slane %v3739, 2
      %v4280 = vor.u32 %v4278, %v4279
      %v4281 = vsel %vm960, %v4277, %v4280
      %v4282 = vrot.slane %v3750, 1
      %v4283 = vrot.slane %v3746, 2
      %v4284 = vor.u32 %v4282, %v4283
      %v4285 = vsel %vm960, %v4280, %v4284
      %v4286 = vrot.slane %v3757, 1
      %v4287 = vrot.slane %v3753, 2
      %v4288 = vor.u32 %v4286, %v4287
      %v4289 = vsel %vm960, %v4284, %v4288
      %v4290 = vrot.slane %v3764, 1
      %v4291 = vrot.slane %v3760, 2
      %v4292 = vor.u32 %v4290, %v4291
      %v4293 = vsel %vm960, %v4288, %v4292
      %v4294 = vrot.slane %v3771, 1
      %v4295 = vrot.slane %v3767, 2
      %v4296 = vor.u32 %v4294, %v4295
      %v4297 = vsel %vm960, %v4292, %v4296
      %v4298 = vrot.slane %v3778, 1
      %v4299 = vrot.slane %v3774, 2
      %v4300 = vor.u32 %v4298, %v4299
      %v4301 = vsel %vm960, %v4296, %v4300
      %v4302 = vrot.slane %v3785, 1
      %v4303 = vrot.slane %v3781, 2
      %v4304 = vor.u32 %v4302, %v4303
      %v4305 = vsel %vm960, %v4300, %v4304
      %v4306 = vrot.slane %v3792, 1
      %v4307 = vrot.slane %v3788, 2
      %v4308 = vor.u32 %v4306, %v4307
      %v4309 = vsel %vm960, %v4304, %v4308
      %v4310 = vrot.slane %v3799, 1
      %v4311 = vrot.slane %v3795, 2
      %v4312 = vor.u32 %v4310, %v4311
      %v4313 = vsel %vm960, %v4308, %v4312
      %v4314 = vrot.slane %v3806, 1
      %v4315 = vrot.slane %v3802, 2
      %v4316 = vor.u32 %v4314, %v4315
      %v4317 = vsel %vm960, %v4312, %v4316
      %v4318 = vrot.slane %v3813, 1
      %v4319 = vrot.slane %v3809, 2
      %v4320 = vor.u32 %v4318, %v4319
      %v4321 = vsel %vm960, %v4316, %v4320
      %v4323 = vshrl.u32 %v4037, 16
      %v4325 = vrot.slane %v4323, 1
      %v4326 = vshll.u32 %v4037, 16
      %v4328 = vrot.slane %v4326, 2
      %v4329 = vor.u32 %v4325, %v4328
      %v4330 = vsel %vm960, %v4320, %v4329
      %v4332 = vsel %vm370, %v4281, 0
      %v4335 = vsel %vm370, %v4285, 0
      %v4338 = vsel %vm370, %v4289, 0
      %v4341 = vsel %vm370, %v4293, 0
      %v4344 = vsel %vm370, %v4297, 0
      %v4347 = vsel %vm370, %v4301, 0
      %v4350 = vsel %vm370, %v4305, 0
      %v4353 = vsel %vm370, %v4309, 0
      %v4356 = vsel %vm370, %v4313, 0
      %v4359 = vsel %vm370, %v4317, 0
      %v4362 = vsel %vm370, %v4321, 0
      %v4365 = vsel %vm370, %v4330, 0
      %v4368 = vsel %vm370, %v4329, 0
      %v4371 = vsel %vm410, %v4269, 0
      %4373 = vmatprep.subr.bf16.mxu0 0
      %4374 = vmatpush1.bf16.msra.mxu0 %v4371
      %4375 = vmatprep.subr.bf16.mxu0 0
      %4376 = vmatpush1.bf16.msra.mxu0 0
      %4377 = vmatprep.subr.bf16.mxu0 0
      %4378 = vmatpush1.bf16.msra.mxu0 0
      %4379 = vmatprep.subr.bf16.mxu0 0
      %4380 = vmatpush1.bf16.msra.mxu0 0
      %4381 = vmatprep.subr.bf16.mxu0 0
      %4382 = vmatpush1.bf16.msra.mxu0 0
      %4383 = vmatprep.subr.bf16.mxu0 0
      %4384 = vmatpush1.bf16.msra.mxu0 0
      %4385 = vmatprep.subr.bf16.mxu0 0
      %4386 = vmatpush1.bf16.msra.mxu0 0
      %4387 = vmatprep.subr.bf16.mxu0 0
      %4388 = vmatpush1.bf16.msra.mxu0 0
      %4389 = vmatprep.subr.bf16.mxu0 0
      %4390 = vmatpush1.bf16.msra.mxu0 0
      %4391 = vmatprep.subr.bf16.mxu0 0
      %4392 = vmatpush1.bf16.msra.mxu0 0
      %4393 = vmatprep.subr.bf16.mxu0 0
      %4394 = vmatpush1.bf16.msra.mxu0 0
      %4395 = vmatprep.subr.bf16.mxu0 0
      %4396 = vmatpush1.bf16.msra.mxu0 0
      %4397 = vmatprep.subr.bf16.mxu0 0
      %4398 = vmatpush1.bf16.msra.mxu0 0
      %4399 = vmatprep.subr.bf16.mxu0 0
      %4400 = vmatpush1.bf16.msra.mxu0 0
      %4401 = vmatprep.subr.bf16.mxu0 0
      %4402 = vmatpush1.bf16.msra.mxu0 0
      %4403 = vmatprep.subr.bf16.mxu0 0
      %4404 = vmatpush1.bf16.msra.mxu0 0
      %4405 = vmatprep.mubr.bf16.mxu0 0
      %4406 = vmatmul.mubr.bf16.gmra.mrb[0].mxu0 %v4332
      %v4407 = vpop.f32.mrb[0].mxu0
      %v4408 = vadd.f32 0.0, %v4407
      %v4409 = vpop.f32.mrb[0].mxu0
      %v4410 = vpop.f32.mrb[0].mxu0
      %v4411 = vadd.f32 0.0, %v4410
      %v4412 = vpop.f32.mrb[0].mxu0
      %4413 = vmatprep.mubr.bf16.mxu0 0
      %4414 = vmatmul.mubr.bf16.gmra.mrb[0].mxu0 %v4335
      %v4415 = vpop.f32.mrb[0].mxu0
      %v4416 = vadd.f32 0.0, %v4415
      %v4417 = vpop.f32.mrb[0].mxu0
      %v4418 = vpop.f32.mrb[0].mxu0
      %v4419 = vadd.f32 0.0, %v4418
      %v4420 = vpop.f32.mrb[0].mxu0
      %4421 = vmatprep.mubr.bf16.mxu0 0
      %4422 = vmatmul.mubr.bf16.gmra.mrb[0].mxu0 %v4338
      %v4423 = vpop.f32.mrb[0].mxu0
      %v4424 = vadd.f32 0.0, %v4423
      %v4425 = vpop.f32.mrb[0].mxu0
      %v4426 = vpop.f32.mrb[0].mxu0
      %v4427 = vadd.f32 0.0, %v4426
      %v4428 = vpop.f32.mrb[0].mxu0
      %4429 = vmatprep.mubr.bf16.mxu0 0
      %4430 = vmatmul.mubr.bf16.gmra.mrb[0].mxu0 %v4341
      %v4431 = vpop.f32.mrb[0].mxu0
      %v4432 = vadd.f32 0.0, %v4431
      %v4433 = vpop.f32.mrb[0].mxu0
      %v4434 = vpop.f32.mrb[0].mxu0
      %v4435 = vadd.f32 0.0, %v4434
      %v4436 = vpop.f32.mrb[0].mxu0
      %4437 = vmatprep.mubr.bf16.mxu0 0
      %4438 = vmatmul.mubr.bf16.gmra.mrb[0].mxu0 %v4344
      %v4439 = vpop.f32.mrb[0].mxu0
      %v4440 = vadd.f32 0.0, %v4439
      %v4441 = vpop.f32.mrb[0].mxu0
      %v4442 = vpop.f32.mrb[0].mxu0
      %v4443 = vadd.f32 0.0, %v4442
      %v4444 = vpop.f32.mrb[0].mxu0
      %4445 = vmatprep.mubr.bf16.mxu0 0
      %4446 = vmatmul.mubr.bf16.gmra.mrb[0].mxu0 %v4347
      %v4447 = vpop.f32.mrb[0].mxu0
      %v4448 = vadd.f32 0.0, %v4447
      %v4449 = vpop.f32.mrb[0].mxu0
      %v4450 = vpop.f32.mrb[0].mxu0
      %v4451 = vadd.f32 0.0, %v4450
      %v4452 = vpop.f32.mrb[0].mxu0
      %4453 = vmatprep.mubr.bf16.mxu0 0
      %4454 = vmatmul.mubr.bf16.gmra.mrb[0].mxu0 %v4350
      %v4455 = vpop.f32.mrb[0].mxu0
      %v4456 = vadd.f32 0.0, %v4455
      %v4457 = vpop.f32.mrb[0].mxu0
      %v4458 = vpop.f32.mrb[0].mxu0
      %v4459 = vadd.f32 0.0, %v4458
      %v4460 = vpop.f32.mrb[0].mxu0
      %4461 = vmatprep.mubr.bf16.mxu0 0
      %4462 = vmatmul.mubr.bf16.gmra.mrb[0].mxu0 %v4353
      %v4463 = vpop.f32.mrb[0].mxu0
      %v4464 = vadd.f32 0.0, %v4463
      %v4465 = vpop.f32.mrb[0].mxu0
      %v4466 = vpop.f32.mrb[0].mxu0
      %v4467 = vadd.f32 0.0, %v4466
      %v4468 = vpop.f32.mrb[0].mxu0
      %4469 = vmatprep.mubr.bf16.mxu0 0
      %4470 = vmatmul.mubr.bf16.gmra.mrb[0].mxu0 %v4356
      %v4471 = vpop.f32.mrb[0].mxu0
      %v4472 = vadd.f32 0.0, %v4471
      %v4473 = vpop.f32.mrb[0].mxu0
      %v4474 = vpop.f32.mrb[0].mxu0
      %v4475 = vadd.f32 0.0, %v4474
      %v4476 = vpop.f32.mrb[0].mxu0
      %4477 = vmatprep.mubr.bf16.mxu0 0
      %4478 = vmatmul.mubr.bf16.gmra.mrb[0].mxu0 %v4359
      %v4479 = vpop.f32.mrb[0].mxu0
      %v4480 = vadd.f32 0.0, %v4479
      %v4481 = vpop.f32.mrb[0].mxu0
      %v4482 = vpop.f32.mrb[0].mxu0
      %v4483 = vadd.f32 0.0, %v4482
      %v4484 = vpop.f32.mrb[0].mxu0
      %4485 = vmatprep.mubr.bf16.mxu0 0
      %4486 = vmatmul.mubr.bf16.gmra.mrb[0].mxu0 %v4362
      %v4487 = vpop.f32.mrb[0].mxu0
      %v4488 = vadd.f32 0.0, %v4487
      %v4489 = vpop.f32.mrb[0].mxu0
      %v4490 = vpop.f32.mrb[0].mxu0
      %v4491 = vadd.f32 0.0, %v4490
      %v4492 = vpop.f32.mrb[0].mxu0
      %4493 = vmatprep.mubr.bf16.mxu0 0
      %4494 = vmatmul.mubr.bf16.gmra.mrb[0].mxu0 %v4365
      %v4495 = vpop.f32.mrb[0].mxu0
      %v4496 = vadd.f32 0.0, %v4495
      %v4497 = vpop.f32.mrb[0].mxu0
      %v4498 = vpop.f32.mrb[0].mxu0
      %v4499 = vadd.f32 0.0, %v4498
      %v4500 = vpop.f32.mrb[0].mxu0
      %4501 = vmatprep.mubr.bf16.mxu0 0
      %4502 = vmatmul.mubr.bf16.gmra.mrb[0].mxu0 %v4368
      %v4503 = vpop.f32.mrb[0].mxu0
      %v4504 = vadd.f32 0.0, %v4503
      %v4505 = vpop.f32.mrb[0].mxu0
      %v4506 = vpop.f32.mrb[0].mxu0
      %v4507 = vadd.f32 0.0, %v4506
      %v4508 = vpop.f32.mrb[0].mxu0
      %4509 = vdwg.mxu0
      %v4510 = vadd.f32 %v4242, %v4408
      %v4511 = vadd.f32 %v4243, %v4411
      %v4512 = vadd.f32 %v4244, %v4416
      %v4513 = vadd.f32 %v4245, %v4419
      %v4514 = vadd.f32 %v4246, %v4424
      %v4515 = vadd.f32 %v4247, %v4427
      %v4516 = vadd.f32 %v4248, %v4432
      %v4517 = vadd.f32 %v4249, %v4435
      %v4518 = vadd.f32 %v4250, %v4440
      %v4519 = vadd.f32 %v4251, %v4443
      %v4520 = vadd.f32 %v4252, %v4448
      %v4521 = vadd.f32 %v4253, %v4451
      %v4522 = vadd.f32 %v4254, %v4456
      %v4523 = vadd.f32 %v4255, %v4459
      %v4524 = vadd.f32 %v4256, %v4464
      %v4525 = vadd.f32 %v4257, %v4467
      %v4526 = vadd.f32 %v4258, %v4472
      %v4527 = vadd.f32 %v4259, %v4475
      %v4528 = vadd.f32 %v4260, %v4480
      %v4529 = vadd.f32 %v4261, %v4483
      %v4530 = vadd.f32 %v4262, %v4488
      %v4531 = vadd.f32 %v4263, %v4491
      %v4532 = vadd.f32 %v4264, %v4496
      %v4533 = vadd.f32 %v4265, %v4499
      %v4534 = vadd.f32 %v4266, %v4504
      %v4535 = vadd.f32 %v4267, %v4507
      %v4536 = vld [vmem:[%s2] sm:$0x1]
      %v4538 = vlaneseq
      %v4539 = vshrl.u32 %v4538, 7
      %v4540 = vsub.s32 0, %v4539
      %v4541 = vrot.slane %v4536, %v4540
      %v4543 = vadd.f32 %v4510, %v4541
      %v4544 = vadd.f32 %v4511, %v4541
      %v4545 = vadd.f32 %v4512, %v4541
      %v4546 = vadd.f32 %v4513, %v4541
      %v4547 = vadd.f32 %v4514, %v4541
      %v4548 = vadd.f32 %v4515, %v4541
      %v4549 = vadd.f32 %v4516, %v4541
      %v4550 = vadd.f32 %v4517, %v4541
      %v4551 = vadd.f32 %v4518, %v4541
      %v4552 = vadd.f32 %v4519, %v4541
      %v4553 = vadd.f32 %v4520, %v4541
      %v4554 = vadd.f32 %v4521, %v4541
      %v4555 = vadd.f32 %v4522, %v4541
      %v4556 = vadd.f32 %v4523, %v4541
      %v4557 = vadd.f32 %v4524, %v4541
      %v4558 = vadd.f32 %v4525, %v4541
      %v4559 = vadd.f32 %v4526, %v4541
      %v4560 = vadd.f32 %v4527, %v4541
      %v4561 = vadd.f32 %v4528, %v4541
      %v4562 = vadd.f32 %v4529, %v4541
      %v4563 = vadd.f32 %v4530, %v4541
      %v4564 = vadd.f32 %v4531, %v4541
      %v4565 = vadd.f32 %v4532, %v4541
      %v4566 = vadd.f32 %v4533, %v4541
      %v4567 = vadd.f32 %v4534, %v4541
      %v4568 = vadd.f32 %v4535, %v4541
      %vm4569 = vcmp.ge.f32.partialorder %v4543, 0.0
      %vm4570 = vcmp.ge.f32.partialorder %v4544, 0.0
      %vm4571 = vcmp.ge.f32.partialorder %v4545, 0.0
      %vm4572 = vcmp.ge.f32.partialorder %v4546, 0.0
      %vm4573 = vcmp.ge.f32.partialorder %v4547, 0.0
      %vm4574 = vcmp.ge.f32.partialorder %v4548, 0.0
      %vm4575 = vcmp.ge.f32.partialorder %v4549, 0.0
      %vm4576 = vcmp.ge.f32.partialorder %v4550, 0.0
      %vm4577 = vcmp.ge.f32.partialorder %v4551, 0.0
      %vm4578 = vcmp.ge.f32.partialorder %v4552, 0.0
      %vm4579 = vcmp.ge.f32.partialorder %v4553, 0.0
      %vm4580 = vcmp.ge.f32.partialorder %v4554, 0.0
      %vm4581 = vcmp.ge.f32.partialorder %v4555, 0.0
      %vm4582 = vcmp.ge.f32.partialorder %v4556, 0.0
      %vm4583 = vcmp.ge.f32.partialorder %v4557, 0.0
      %vm4584 = vcmp.ge.f32.partialorder %v4558, 0.0
      %vm4585 = vcmp.ge.f32.partialorder %v4559, 0.0
      %vm4586 = vcmp.ge.f32.partialorder %v4560, 0.0
      %vm4587 = vcmp.ge.f32.partialorder %v4561, 0.0
      %vm4588 = vcmp.ge.f32.partialorder %v4562, 0.0
      %vm4589 = vcmp.ge.f32.partialorder %v4563, 0.0
      %vm4590 = vcmp.ge.f32.partialorder %v4564, 0.0
      %vm4591 = vcmp.ge.f32.partialorder %v4565, 0.0
      %vm4592 = vcmp.ge.f32.partialorder %v4566, 0.0
      %vm4593 = vcmp.ge.f32.partialorder %v4567, 0.0
      %vm4594 = vcmp.ge.f32.partialorder %v4568, 0.0
      %v4595 = vmul.f32 %v4543, 0.2
      %v4596 = vmul.f32 %v4544, 0.2
      %v4597 = vmul.f32 %v4545, 0.2
      %v4598 = vmul.f32 %v4546, 0.2
      %v4599 = vmul.f32 %v4547, 0.2
      %v4600 = vmul.f32 %v4548, 0.2
      %v4601 = vmul.f32 %v4549, 0.2
      %v4602 = vmul.f32 %v4550, 0.2
      %v4603 = vmul.f32 %v4551, 0.2
      %v4604 = vmul.f32 %v4552, 0.2
      %v4605 = vmul.f32 %v4553, 0.2
      %v4606 = vmul.f32 %v4554, 0.2
      %v4607 = vmul.f32 %v4555, 0.2
      %v4608 = vmul.f32 %v4556, 0.2
      %v4609 = vmul.f32 %v4557, 0.2
      %v4610 = vmul.f32 %v4558, 0.2
      %v4611 = vmul.f32 %v4559, 0.2
      %v4612 = vmul.f32 %v4560, 0.2
      %v4613 = vmul.f32 %v4561, 0.2
      %v4614 = vmul.f32 %v4562, 0.2
      %v4615 = vmul.f32 %v4563, 0.2
      %v4616 = vmul.f32 %v4564, 0.2
      %v4617 = vmul.f32 %v4565, 0.2
      %v4618 = vmul.f32 %v4566, 0.2
      %v4619 = vmul.f32 %v4567, 0.2
      %v4620 = vmul.f32 %v4568, 0.2
      %v4621 = vsel %vm4569, %v4543, %v4595
      %v4622 = vsel %vm4570, %v4544, %v4596
      %v4623 = vsel %vm4571, %v4545, %v4597
      %v4624 = vsel %vm4572, %v4546, %v4598
      %v4625 = vsel %vm4573, %v4547, %v4599
      %v4626 = vsel %vm4574, %v4548, %v4600
      %v4627 = vsel %vm4575, %v4549, %v4601
      %v4628 = vsel %vm4576, %v4550, %v4602
      %v4629 = vsel %vm4577, %v4551, %v4603
      %v4630 = vsel %vm4578, %v4552, %v4604
      %v4631 = vsel %vm4579, %v4553, %v4605
      %v4632 = vsel %vm4580, %v4554, %v4606
      %v4633 = vsel %vm4581, %v4555, %v4607
      %v4634 = vsel %vm4582, %v4556, %v4608
      %v4635 = vsel %vm4583, %v4557, %v4609
      %v4636 = vsel %vm4584, %v4558, %v4610
      %v4637 = vsel %vm4585, %v4559, %v4611
      %v4638 = vsel %vm4586, %v4560, %v4612
      %v4639 = vsel %vm4587, %v4561, %v4613
      %v4640 = vsel %vm4588, %v4562, %v4614
      %v4641 = vsel %vm4589, %v4563, %v4615
      %v4642 = vsel %vm4590, %v4564, %v4616
      %v4643 = vsel %vm4591, %v4565, %v4617
      %v4644 = vsel %vm4592, %v4566, %v4618
      %v4645 = vsel %vm4593, %v4567, %v4619
      %v4646 = vsel %vm4594, %v4568, %v4620
      %vm4647 = vcmask 130048
      %4648 = vst.msk [vmem:[#allocation2] sm:$0xff] %vm4647, %v4621
      %4649 = vst.msk [vmem:[#allocation2 + $0x8] sm:$0xff] %vm4647, %v4622
      %4650 = vst.msk [vmem:[#allocation2 + $0x10] sm:$0xff] %vm4647, %v4623
      %4651 = vst.msk [vmem:[#allocation2 + $0x18] sm:$0xff] %vm4647, %v4624
      %4652 = vst.msk [vmem:[#allocation2 + $0x20] sm:$0xff] %vm4647, %v4625
      %4653 = vst.msk [vmem:[#allocation2 + $0x28] sm:$0xff] %vm4647, %v4626
      %4654 = vst.msk [vmem:[#allocation2 + $0x30] sm:$0xff] %vm4647, %v4627
      %4655 = vst.msk [vmem:[#allocation2 + $0x38] sm:$0xff] %vm4647, %v4628
      %4656 = vst.msk [vmem:[#allocation2 + $0x40] sm:$0xff] %vm4647, %v4629
      %4657 = vst.msk [vmem:[#allocation2 + $0x48] sm:$0xff] %vm4647, %v4630
      %4658 = vst.msk [vmem:[#allocation2 + $0x50] sm:$0xff] %vm4647, %v4631
      %4659 = vst.msk [vmem:[#allocation2 + $0x58] sm:$0xff] %vm4647, %v4632
      %4660 = vst.msk [vmem:[#allocation2 + $0x60] sm:$0xff] %vm4647, %v4633
      %4661 = vst.msk [vmem:[#allocation2 + $0x68] sm:$0xff] %vm4647, %v4634
      %4662 = vst.msk [vmem:[#allocation2 + $0x70] sm:$0xff] %vm4647, %v4635
      %4663 = vst.msk [vmem:[#allocation2 + $0x78] sm:$0xff] %vm4647, %v4636
      %4664 = vst.msk [vmem:[#allocation2 + $0x80] sm:$0xff] %vm4647, %v4637
      %4665 = vst.msk [vmem:[#allocation2 + $0x88] sm:$0xff] %vm4647, %v4638
      %4666 = vst.msk [vmem:[#allocation2 + $0x90] sm:$0xff] %vm4647, %v4639
      %4667 = vst.msk [vmem:[#allocation2 + $0x98] sm:$0xff] %vm4647, %v4640
      %4668 = vst.msk [vmem:[#allocation2 + $0xa0] sm:$0xff] %vm4647, %v4641
      %4669 = vst.msk [vmem:[#allocation2 + $0xa8] sm:$0xff] %vm4647, %v4642
      %4670 = vst.msk [vmem:[#allocation2 + $0xb0] sm:$0xff] %vm4647, %v4643
      %4671 = vst.msk [vmem:[#allocation2 + $0xb8] sm:$0xff] %vm4647, %v4644
      %4672 = vst.msk [vmem:[#allocation2 + $0xc0] sm:$0xff] %vm4647, %v4645
      %vm4673 = vcmask 126976
      %4674 = vst.msk [vmem:[#allocation2 + $0xc8] sm:$0x1f] %vm4673, %v4646
      %v4675 = vld [vmem:[#allocation2] ss:$2 sm:$0x3f]
      %s4676 = scalar_lea.vmem [#allocation2], 1
      %v4677 = vld [vmem:[%s4676] ss:$2 sm:$0x3f]
      %v4678 = vadd.f32 %v4675, %v4677
      %s4679 = scalar_lea.vmem [#allocation2], 16
      %v4680 = vld [vmem:[%s4679] ss:$2 sm:$0x3f]
      %v4681 = vadd.f32 %v4678, %v4680
      %s4682 = scalar_lea.vmem [#allocation2], 17
      %v4683 = vld [vmem:[%s4682] ss:$2 sm:$0x3f]
      %v4684 = vadd.f32 %v4681, %v4683
      %v4685 = vmul.f32 %v4684, 0.25
      %v4686 = vpack.c.bf16 %v4685, %v4685
      %vm4687 = vcmask 124928
      %4688 = vst.msk [vmem:[%s170] sm:$0x7] %vm4687, %v4686
      %s4689 = scalar_lea.vmem [#allocation2], 32
      %v4690 = vld [vmem:[%s4689] ss:$2 sm:$0x3f]
      %s4691 = scalar_lea.vmem [#allocation2], 33
      %v4692 = vld [vmem:[%s4691] ss:$2 sm:$0x3f]
      %v4693 = vadd.f32 %v4690, %v4692
      %s4694 = scalar_lea.vmem [#allocation2], 48
      %v4695 = vld [vmem:[%s4694] ss:$2 sm:$0x3f]
      %v4696 = vadd.f32 %v4693, %v4695
      %s4697 = scalar_lea.vmem [#allocation2], 49
      %v4698 = vld [vmem:[%s4697] ss:$2 sm:$0x3f]
      %v4699 = vadd.f32 %v4696, %v4698
      %v4700 = vmul.f32 %v4699, 0.25
      %v4701 = vpack.c.bf16 %v4700, %v4700
      %v4703 = vunpack.c.l.b16 %v4701
      %v4704 = vpack.c.b16 %v4703, %v4703
      %v4705 = vrot.slane %v4704, 5
      %v4706 = vrot.slane %v4705, 4
      %vm4709 = vcmask 125955
      %4710 = vst.msk [vmem:[%s170] sm:$0x8] %vm4709, %v4705
      %vm4711 = vcmask 123904
      %4712 = vst.msk [vmem:[%s170 + $0x4] sm:$0x3] %vm4711, %v4706
      %s4713 = scalar_lea.vmem [#allocation2], 64
      %v4714 = vld [vmem:[%s4713] ss:$2 sm:$0x3f]
      %s4715 = scalar_lea.vmem [#allocation2], 65
      %v4716 = vld [vmem:[%s4715] ss:$2 sm:$0x3f]
      %v4717 = vadd.f32 %v4714, %v4716
      %s4718 = scalar_lea.vmem [#allocation2], 80
      %v4719 = vld [vmem:[%s4718] ss:$2 sm:$0x3f]
      %v4720 = vadd.f32 %v4717, %v4719
      %s4721 = scalar_lea.vmem [#allocation2], 81
      %v4722 = vld [vmem:[%s4721] ss:$2 sm:$0x3f]
      %v4723 = vadd.f32 %v4720, %v4722
      %v4724 = vmul.f32 %v4723, 0.25
      %v4725 = vpack.c.bf16 %v4724, %v4724
      %v4727 = vunpack.c.l.b16 %v4725
      %v4728 = vpack.c.b16 %v4727, %v4727
      %v4729 = vrot.slane %v4728, 6
      %v4730 = vrot.slane %v4729, 4
      %vm4733 = vcmask 125954
      %4734 = vst.msk [vmem:[%s170 + $0x4] sm:$0xc] %vm4733, %v4729
      %vm4735 = vcmask 122880
      %4736 = vst.msk [vmem:[%s170 + $0x8] sm:$0x1] %vm4735, %v4730
      %s4737 = scalar_lea.vmem [#allocation2], 96
      %v4738 = vld [vmem:[%s4737] ss:$2 sm:$0x3f]
      %s4739 = scalar_lea.vmem [#allocation2], 97
      %v4740 = vld [vmem:[%s4739] ss:$2 sm:$0x3f]
      %v4741 = vadd.f32 %v4738, %v4740
      %s4742 = scalar_lea.vmem [#allocation2], 112
      %v4743 = vld [vmem:[%s4742] ss:$2 sm:$0x3f]
      %v4744 = vadd.f32 %v4741, %v4743
      %s4745 = scalar_lea.vmem [#allocation2], 113
      %v4746 = vld [vmem:[%s4745] ss:$2 sm:$0x3f]
      %v4747 = vadd.f32 %v4744, %v4746
      %v4748 = vmul.f32 %v4747, 0.25
      %v4749 = vpack.c.bf16 %v4748, %v4748
      %v4751 = vunpack.c.l.b16 %v4749
      %v4752 = vpack.c.b16 %v4751, %v4751
      %v4753 = vrot.slane %v4752, 7
      %vm4755 = vcmask 125953
      %4756 = vst.msk [vmem:[%s170 + $0x8] sm:$0xe] %vm4755, %v4753
      %s4757 = scalar_lea.vmem [#allocation2], 128
      %v4758 = vld [vmem:[%s4757] ss:$2 sm:$0x3f]
      %s4759 = scalar_lea.vmem [#allocation2], 129
      %v4760 = vld [vmem:[%s4759] ss:$2 sm:$0x3f]
      %v4761 = vadd.f32 %v4758, %v4760
      %s4762 = scalar_lea.vmem [#allocation2], 144
      %v4763 = vld [vmem:[%s4762] ss:$2 sm:$0x3f]
      %v4764 = vadd.f32 %v4761, %v4763
      %s4765 = scalar_lea.vmem [#allocation2], 145
      %v4766 = vld [vmem:[%s4765] ss:$2 sm:$0x3f]
      %v4767 = vadd.f32 %v4764, %v4766
      %v4768 = vmul.f32 %v4767, 0.25
      %v4769 = vpack.c.bf16 %v4768, %v4768
      %4770 = vst.msk [vmem:[%s170 + $0xc] sm:$0x7] %vm4687, %v4769
      %s4771 = scalar_lea.vmem [#allocation2], 160
      %v4772 = vld [vmem:[%s4771] ss:$2 sm:$0x3f]
      %s4773 = scalar_lea.vmem [#allocation2], 161
      %v4774 = vld [vmem:[%s4773] ss:$2 sm:$0x3f]
      %v4775 = vadd.f32 %v4772, %v4774
      %s4776 = scalar_lea.vmem [#allocation2], 176
      %v4777 = vld [vmem:[%s4776] ss:$2 sm:$0x3f]
      %v4778 = vadd.f32 %v4775, %v4777
      %s4779 = scalar_lea.vmem [#allocation2], 177
      %v4780 = vld [vmem:[%s4779] ss:$2 sm:$0x3f]
      %v4781 = vadd.f32 %v4778, %v4780
      %v4782 = vmul.f32 %v4781, 0.25
      %v4783 = vpack.c.bf16 %v4782, %v4782
      %v4785 = vunpack.c.l.b16 %v4783
      %v4786 = vpack.c.b16 %v4785, %v4785
      %v4787 = vrot.slane %v4786, 5
      %v4788 = vrot.slane %v4787, 4
      %4791 = vst.msk [vmem:[%s170 + $0xc] sm:$0x8] %vm4709, %v4787
      %4792 = vst.msk [vmem:[%s170 + $0x10] sm:$0x3] %vm4711, %v4788
      %p4793 = scmp.lt.s32.totalorder %s14, 1
      %s4794 = scalar_select %p4793, %s14, 1
      %s4795 = smul.addr %s4794, 5
      %s4796 = smul.addr %s4795, 4
      %s4797 = scalar_lea.vmem %s3, %s4796
      // Predicated region
      $region33: #{_lambda_.2} parent=31 // pred_check
        %p4798 = pneg %p100
      $region34: #{_lambda_.2} parent=31 // pred_check_branch
        %4800 = sbr.rel (%p4798) target = $region36
      $region35: #{_lambda_.2} parent=31 // pred_region
        _
      $region36: #{_lambda_.2} parent=31 // pred_fallthru
        _
    $region32: #{_lambda_.2} parent=5 // pred_fallthru
      _
    %p4801 = scmp.le.s32.totalorder 2, %s9
    // Predicated region
    $region37: #{_lambda_.2} parent=5 // pred_check
      %p4802 = pneg %p4801
    $region38: #{_lambda_.2} parent=5 // pred_check_branch
      %4804 = sbr.rel (%p4802) target = $region40
    $region39: #{_lambda_.2} parent=5 // pred_region
      %s4805 = ssub.s32 %s9, 2
      // Predicated region
      $region41: #{_lambda_.2} parent=39 // pred_check
        %p4806 = pneg %p106
      $region42: #{_lambda_.2} parent=39 // pred_check_branch
        %4808 = sbr.rel (%p4806) target = $region44
      $region43: #{_lambda_.2} parent=39 // pred_region
        %p4809 = scmp.lt.s32.totalorder %s15, 1
        %s4810 = scalar_select %p4809, %s15, 1
        %s4811 = smul.addr %s4810, 5
        %s4812 = smul.addr %s4811, 4
        %s4813 = scalar_lea.vmem %s3, %s4812
      $region44: #{_lambda_.2} parent=39 // pred_fallthru
        _
    $region40: #{_lambda_.2} parent=5 // pred_fallthru
      _
  $region6: #{_lambda_.2} parent=0 // loop_footer
    %s13 = sadd.s32 1, %s9
  $region7: #{_lambda_.2} parent=0 // loop_footer_branch
    %8 = sbr.rel target = $region3
  $region8: #{_lambda_.2} parent=0 // loop_exit
    _

</llo_original>
